<compile_context>
chip_gen: v7x
topology: tpu7x:2x2x1
jax: 0.10.0
libtpu: 0.0.40
codegen_flags: <defaults>
</compile_context>

<pallas_src>
import math
import functools

import jax
import jax.numpy as jnp
from jax.experimental import pallas as pl
from jax.experimental.pallas import tpu as pltpu


# ------------------------------ in-kernel math ------------------------------

def _erf(x, approx_recip=False):
    # Abramowitz & Stegun 7.1.26 (|err| < 1.5e-7) -> exact-GELU semantics,
    # built only from exp/abs/where/reciprocal so it always lowers on Mosaic.
    a1, a2, a3, a4, a5 = (0.254829592, -0.284496736, 1.421413741,
                          -1.453152027, 1.061405429)
    p = 0.3275911
    sign = jnp.where(x >= 0.0, 1.0, -1.0)
    ax = jnp.abs(x)
    # Exact reciprocal on the f32 path; EUP vrcp (approx) on the bf16 path.
    tt = pl.reciprocal(1.0 + p * ax, approx=approx_recip)
    poly = tt * (a1 + tt * (a2 + tt * (a3 + tt * (a4 + tt * a5))))
    return sign * (1.0 - poly * jnp.exp(-ax * ax))


def _gelu_exact(v, approx_recip=False):
    # PyTorch nn.GELU() default = exact erf GELU.
    return 0.5 * v * (1.0 + _erf(v * (1.0 / math.sqrt(2.0)), approx_recip))


def _layernorm(v, eps=1e-6):
    # elementwise_affine=False LayerNorm over last dim (biased variance), f32.
    mean = jnp.mean(v, axis=-1, keepdims=True)
    var = jnp.mean((v - mean) ** 2, axis=-1, keepdims=True)
    return (v - mean) * jax.lax.rsqrt(var + eps)


# --------------------------------- kernel -----------------------------------

def _transformer_block_kernel(num_heads,
                              x_ref, mod_ref,
                              wqkv_ref, bqkv_ref, wo_ref, bo_ref,
                              w1_ref, b1_ref, w2_ref, b2_ref,
                              o_ref):
    cdt = wqkv_ref.dtype                      # matmul compute dtype (f32/bf16)
    approx = bool(jnp.dtype(cdt) == jnp.dtype(jnp.bfloat16))

    x = x_ref[...].astype(jnp.float32)        # (Bb, N, D) residual stream in f32
    Bb, N, D = x.shape
    M = Bb * N
    hd = D // num_heads
    scale = 1.0 / math.sqrt(hd)

    # Pre-computed AdaLN-zero modulation rows (padded to 8 sublanes):
    # [a1, mu1, s1, a2, mu2, s2, 0, 0]
    m = mod_ref[...].astype(jnp.float32)      # (Bb, 8, D)
    a1, mu1, s1 = m[:, 0:1, :], m[:, 1:2, :], m[:, 2:3, :]
    a2, mu2, s2 = m[:, 3:4, :], m[:, 4:5, :], m[:, 5:6, :]

    # Flatten batch x seq for the dense projections -> MXU M dim = Bb*N.
    xf = x.reshape(M, D)

    # ---- attention branch: att, _ = MHA(norm1(x), norm1(x), norm1(x)) ----
    # TODO(synk): attention-weight dropout (mha_dropout) omitted — eval semantics.
    xn = _layernorm(xf)
    qkv = jnp.dot(xn.astype(cdt), wqkv_ref[...],
                  preferred_element_type=jnp.float32) + bqkv_ref[...]   # (M, 3D)
    q = (qkv[:, :D] * scale).astype(cdt)      # fold 1/sqrt(hd) into q once
    k = qkv[:, D:2 * D].astype(cdt)
    v = qkv[:, 2 * D:].astype(cdt)

    # Per-head scores/softmax/values, batched over the Bb batch dim with a
    # single-batch-dim einsum (MXU-native transposed contraction, no .T).
    # Heads are concatenated once and hit the output projection with one
    # K = D matmul instead of num_heads K = hd matmuls.
    # TODO(synk): for large num_heads switch this static loop to
    # lax.fori_loop(..., unroll=True) + a VMEM scratch to bound live ranges.
    att_heads = []
    for h in range(num_heads):                # static unroll (small num_heads)
        col = slice(h * hd, (h + 1) * hd)
        qh = q[:, col].reshape(Bb, N, hd)
        kh = k[:, col].reshape(Bb, N, hd)
        vh = v[:, col].reshape(Bb, N, hd)
        s = jnp.einsum('bqd,bkd->bqk', qh, kh,
                       preferred_element_type=jnp.float32)              # (Bb,N,N)
        s = s - jnp.max(s, axis=-1, keepdims=True)
        p = jnp.exp(s)
        p = p * pl.reciprocal(jnp.sum(p, axis=-1, keepdims=True), approx=approx)
        oh = jnp.einsum('bqk,bkd->bqd', p.astype(cdt), vh,
                        preferred_element_type=jnp.float32)             # (Bb,N,hd)
        att_heads.append(oh.reshape(M, hd))
    att = jnp.concatenate(att_heads, axis=-1)                           # (M, D)
    att = jnp.dot(att.astype(cdt), wo_ref[...],
                  preferred_element_type=jnp.float32) + bo_ref[...]     # (M, D)
    att = att.reshape(Bb, N, D)

    # AdaLN-zero modulation 1 (applied to the branch output, per the module)
    # + residual.
    att_mod = att + a1 * (att * (1.0 + s1) + mu1)
    x1 = x + att_mod                                                    # (Bb,N,D)

    # ---- MLP branch: Linear -> GELU -> Linear on norm2(x1) ----
    xn2 = _layernorm(x1.reshape(M, D))
    hmid = jnp.dot(xn2.astype(cdt), w1_ref[...],
                   preferred_element_type=jnp.float32) + b1_ref[...]    # (M, H)
    hmid = _gelu_exact(hmid, approx)                                    # f32
    y = jnp.dot(hmid.astype(cdt), w2_ref[...],
                preferred_element_type=jnp.float32) + b2_ref[...]       # (M, D)
    y = y.reshape(Bb, N, D)

    # AdaLN-zero modulation 2 + residual.
    y_mod = y + a2 * (y * (1.0 + s2) + mu2)
    o_ref[...] = (x1 + y_mod).astype(o_ref.dtype)


# -------------------------------- wrapper ------------------------------------

def transformer_block(x, t, params, num_heads, *, out_dtype=None,
                      batch_block=None):
    B, N, D = x.shape
    H = params["w1_t"].shape[1]
    if out_dtype is None:
        out_dtype = x.dtype

    # Hoist the AdaLN-zero projections: silu(t) @ W_ada + b is only (B, 3D)
    # with M=1 per batch element (<1% MXU utilization in-kernel) and would
    # otherwise pull two (D, 3D) weight tensors into VMEM. Pack the six
    # modulation vectors as sublane rows of a lane-dense (B, 8, D) slab
    # (padded to the 8-row sublane tile).
    st = jax.nn.silu(t.astype(jnp.float32))
    proj1 = st @ params["ada1_w_t"] + params["ada1_b"][0]
    proj2 = st @ params["ada2_w_t"] + params["ada2_b"][0]
    a1, mu1, s1 = jnp.split(proj1, 3, axis=-1)
    a2, mu2, s2 = jnp.split(proj2, 3, axis=-1)
    mod = jnp.stack([a1, mu1, s1, a2, mu2, s2], axis=1)          # (B, 6, D)
    mod = jnp.concatenate([mod, jnp.zeros((B, 2, D), mod.dtype)], axis=1)

    # Batch-chunk size per grid step: raise the MXU M dim (Bb*N rows) while
    # dividing B evenly. The batch axis is fully independent -> "parallel".
    if batch_block is None:
        batch_block = max(1, min(B, -(-256 // N)))   # aim for Bb*N >= 256
    while B % batch_block:
        batch_block -= 1
    Bb = batch_block
    nb = B // Bb

    # VMEM budget: ~75% of physical VMEM, capped (48 MiB on v7x's 64 MiB,
    # 96 MiB on v5e/v6e's 128 MiB). Conservative fallback if query fails.
    try:
        vmem_cap = pltpu.get_tpu_info().vmem_capacity_bytes
    except Exception:
        vmem_cap = 64 * 1024 * 1024
    vmem_limit = min(int(vmem_cap * 3 // 4), 100 * 1024 * 1024)

    def w_spec(shape, single_buffer):
        # Constant-index weight block (whole tensor resident each grid step).
        # With a constant block index, multi-buffering is wasted VMEM: ask for
        # a single buffer so realistic D/H fit v7x's 64 MiB VMEM.
        idx = lambda g: (0,) * len(shape)
        if single_buffer:
            try:
                return pl.BlockSpec(shape, idx, pipeline_mode=pl.Buffered(1))
            except (TypeError, ValueError):
                pass
        return pl.BlockSpec(shape, idx)

    def build(single_buffer_weights):
        in_specs = [
            pl.BlockSpec((Bb, N, D), lambda g: (g, 0, 0)),   # x (residual, f32)
            pl.BlockSpec((Bb, 8, D), lambda g: (g, 0, 0)),   # AdaLN modulation
            w_spec((D, 3 * D), single_buffer_weights),       # in_proj W^T
            w_spec((1, 3 * D), single_buffer_weights),       # in_proj bias
            w_spec((D, D), single_buffer_weights),           # out_proj W^T
            w_spec((1, D), single_buffer_weights),           # out_proj bias
            w_spec((D, H), single_buffer_weights),           # mlp fc1 W^T
            w_spec((1, H), single_buffer_weights),           # mlp fc1 bias
            w_spec((H, D), single_buffer_weights),           # mlp fc2 W^T
            w_spec((1, D), single_buffer_weights),           # mlp fc2 bias
        ]
        out_spec = pl.BlockSpec((Bb, N, D), lambda g: (g, 0, 0))
        return pl.pallas_call(
            functools.partial(_transformer_block_kernel, num_heads),
            out_shape=jax.ShapeDtypeStruct((B, N, D), out_dtype),
            grid_spec=pltpu.PrefetchScalarGridSpec(
                num_scalar_prefetch=0,
                grid=(nb,),
                in_specs=in_specs,
                out_specs=out_spec,
            ),
            compiler_params=pltpu.CompilerParams(
                dimension_semantics=("parallel",),
                vmem_limit_bytes=vmem_limit,
            ),
        )

    args = (x, mod,
            params["wqkv_t"], params["bqkv"], params["wo_t"], params["bo"],
            params["w1_t"], params["b1"], params["w2_t"], params["b2"])
    try:
        return build(True)(*args)
    except Exception:
        # Fallback if single-buffered weight specs (pl.Buffered(1)) are not
        # supported by this jax/Mosaic version.
        return build(False)(*args)


# --------------------------- pure-JAX reference -------------------------------

def reference(x, t, params, num_heads):
    B, N, D = x.shape
    hd = D // num_heads

    def ln(v):
        m = jnp.mean(v, axis=-1, keepdims=True)
        var = jnp.mean((v - m) ** 2, axis=-1, keepdims=True)
        return (v - m) / jnp.sqrt(var + 1e-6)

    xn = ln(x)
    qkv = xn @ params["wqkv_t"] + params["bqkv"][0]
    q, k, v = jnp.split(qkv, 3, axis=-1)

    def heads(z):
        return z.reshape(B, N, num_heads, hd).transpose(0, 2, 1, 3)

    qh, kh, vh = heads(q), heads(k), heads(v)
    s = jnp.einsum('bhnd,bhmd->bhnm', qh, kh) / math.sqrt(hd)
    p = jax.nn.softmax(s, axis=-1)
    att = jnp.einsum('bhnm,bhmd->bhnd', p, vh).transpose(0, 2, 1, 3).reshape(B, N, D)
    att = att @ params["wo_t"] + params["bo"][0]

    def adaln(w_t, b):
        proj = (t * jax.nn.sigmoid(t)) @ w_t + b[0]
        return jnp.split(proj, 3, axis=-1)

    a1, mu1, s1 = adaln(params["ada1_w_t"], params["ada1_b"])
    att_mod = att + a1[:, None, :] * (att * (1 + s1[:, None, :]) + mu1[:, None, :])
    x1 = x + att_mod

    h = ln(x1) @ params["w1_t"] + params["b1"][0]
    h = jax.nn.gelu(h, approximate=False)
    y = h @ params["w2_t"] + params["b2"][0]

    a2, mu2, s2 = adaln(params["ada2_w_t"], params["ada2_b"])
    y_mod = y + a2[:, None, :] * (y * (1 + s2[:, None, :]) + mu2[:, None, :])
    return x1 + y_mod


# ----------------------------------- main -------------------------------------

if __name__ == "__main__":
    # Lane-dense small shapes: embed_dim=128, hidden_dim=256, heads=4 (hd=32).
    B, N, D, H, NUM_HEADS = 2, 16, 128, 256, 4

    key = jax.random.PRNGKey(0)
    keys = jax.random.split(key, 16)

    def rnd(k, shape, scale=0.05):
        return scale * jax.random.normal(k, shape, jnp.float32)

    # NOTE: PyTorch zero-inits the AdaLN projections (AdaLNZeroLayer); we use
    # small deterministic nonzero values here so the modulation path is
    # actually exercised.
    params = {
        "wqkv_t":   rnd(keys[0],  (D, 3 * D)),
        "bqkv":     rnd(keys[1],  (1, 3 * D)),
        "wo_t":     rnd(keys[2],  (D, D)),
        "bo":       rnd(keys[3],  (1, D)),
        "ada1_w_t": rnd(keys[4],  (D, 3 * D)),
        "ada1_b":   rnd(keys[5],  (1, 3 * D)),
        "w1_t":     rnd(keys[6],  (D, H)),
        "b1":       rnd(keys[7],  (1, H)),
        "w2_t":     rnd(keys[8],  (H, D)),
        "b2":       rnd(keys[9],  (1, D)),
        "ada2_w_t": rnd(keys[10], (D, 3 * D)),
        "ada2_b":   rnd(keys[11], (1, 3 * D)),
    }

    x = jax.random.normal(keys[12], (B, N, D), jnp.float32)
    t = jax.random.normal(keys[13], (B, D), jnp.float32)

    with jax.default_matmul_precision("highest"):
        ref = reference(x, t, params, NUM_HEADS)
    ref = jax.block_until_ready(ref)

    # f32 compute path (exact reciprocals in softmax / erf).
    out = transformer_block(x, t, params, NUM_HEADS)
    out = jax.block_until_ready(out)
    assert out.shape == (B, N, D), out.shape
    err_f32 = float(jnp.max(jnp.abs(out - ref)))
    assert err_f32 < 2e-3, f"f32 max abs error {err_f32}"

    # bf16 matmul path: weights pre-cast ONCE (no per-call astype pass over
    # the weights), residual stream stays f32 into the kernel, bf16 output
    # writeback. Looser tolerance.
    params_bf16 = dict(params)
    for kname in ("wqkv_t", "wo_t", "w1_t", "w2_t"):
        params_bf16[kname] = params[kname].astype(jnp.bfloat16)
    out_bf16 = transformer_block(x, t, params_bf16, NUM_HEADS,
                                 out_dtype=jnp.bfloat16)
    out_bf16 = jax.block_until_ready(out_bf16)
    err_bf16 = float(jnp.max(jnp.abs(out_bf16.astype(jnp.float32) - ref)))
    assert err_bf16 < 1e-1, f"bf16 max abs error {err_bf16}"

    print("KERNEL_OK")
</pallas_src>

<mosaic_0001>
module attributes {stable_mosaic.version = 11 : i64} {
  func.func @_transformer_block_kernel(%arg0: i32, %arg1: memref<2x16x128xf32, #tpu.memory_space<vmem>>, %arg2: memref<2x8x128xf32, #tpu.memory_space<vmem>>, %arg3: memref<128x384xf32, #tpu.memory_space<vmem>>, %arg4: memref<1x384xf32, #tpu.memory_space<vmem>>, %arg5: memref<128x128xf32, #tpu.memory_space<vmem>>, %arg6: memref<1x128xf32, #tpu.memory_space<vmem>>, %arg7: memref<128x256xf32, #tpu.memory_space<vmem>>, %arg8: memref<1x256xf32, #tpu.memory_space<vmem>>, %arg9: memref<256x128xf32, #tpu.memory_space<vmem>>, %arg10: memref<1x128xf32, #tpu.memory_space<vmem>>, %arg11: memref<2x16x128xf32, #tpu.memory_space<vmem>>) attributes {dimension_semantics = [#tpu.dimension_semantics<parallel>], iteration_bounds = array<i64: 1>, scalar_prefetch = 0 : i64, scratch_operands = 0 : i64, tpu.core_type = #tpu.core_type<tc>, window_params = [{transform_indices = @transform_0, window_bounds = array<i64: 2, 16, 128>}, {transform_indices = @transform_1, window_bounds = array<i64: 2, 8, 128>}, {pipeline_mode = #tpu.pipeline_mode<synchronous>, transform_indices = @transform_2, window_bounds = array<i64: 128, 384>}, {pipeline_mode = #tpu.pipeline_mode<synchronous>, transform_indices = @transform_3, window_bounds = array<i64: 1, 384>}, {pipeline_mode = #tpu.pipeline_mode<synchronous>, transform_indices = @transform_4, window_bounds = array<i64: 128, 128>}, {pipeline_mode = #tpu.pipeline_mode<synchronous>, transform_indices = @transform_5, window_bounds = array<i64: 1, 128>}, {pipeline_mode = #tpu.pipeline_mode<synchronous>, transform_indices = @transform_6, window_bounds = array<i64: 128, 256>}, {pipeline_mode = #tpu.pipeline_mode<synchronous>, transform_indices = @transform_7, window_bounds = array<i64: 1, 256>}, {pipeline_mode = #tpu.pipeline_mode<synchronous>, transform_indices = @transform_8, window_bounds = array<i64: 256, 128>}, {pipeline_mode = #tpu.pipeline_mode<synchronous>, transform_indices = @transform_9, window_bounds = array<i64: 1, 128>}, {transform_indices = @transform_10, window_bounds = array<i64: 2, 16, 128>}]} {
    %c0 = arith.constant 0 : index
    %c0_0 = arith.constant 0 : index
    %c0_1 = arith.constant 0 : index
    %0 = vector.load %arg1[%c0, %c0_0, %c0_1] : memref<2x16x128xf32, #tpu.memory_space<vmem>>, vector<2x16x128xf32>
    %c0_2 = arith.constant 0 : index
    %c0_3 = arith.constant 0 : index
    %c0_4 = arith.constant 0 : index
    %1 = vector.load %arg2[%c0_2, %c0_3, %c0_4] : memref<2x8x128xf32, #tpu.memory_space<vmem>>, vector<2x8x128xf32>
    %2 = vector.extract_strided_slice %1 {offsets = [0, 0, 0], sizes = [2, 1, 128], strides = [1, 1, 1]} : vector<2x8x128xf32> to vector<2x1x128xf32>
    %3 = vector.extract_strided_slice %1 {offsets = [0, 1, 0], sizes = [2, 1, 128], strides = [1, 1, 1]} : vector<2x8x128xf32> to vector<2x1x128xf32>
    %4 = vector.extract_strided_slice %1 {offsets = [0, 2, 0], sizes = [2, 1, 128], strides = [1, 1, 1]} : vector<2x8x128xf32> to vector<2x1x128xf32>
    %5 = vector.extract_strided_slice %1 {offsets = [0, 3, 0], sizes = [2, 1, 128], strides = [1, 1, 1]} : vector<2x8x128xf32> to vector<2x1x128xf32>
    %6 = vector.extract_strided_slice %1 {offsets = [0, 4, 0], sizes = [2, 1, 128], strides = [1, 1, 1]} : vector<2x8x128xf32> to vector<2x1x128xf32>
    %7 = vector.extract_strided_slice %1 {offsets = [0, 5, 0], sizes = [2, 1, 128], strides = [1, 1, 1]} : vector<2x8x128xf32> to vector<2x1x128xf32>
    %8 = vector.shape_cast %0 : vector<2x16x128xf32> to vector<32x128xf32>
    %cst = arith.constant dense<0.000000e+00> : vector<32xf32>
    %9 = vector.multi_reduction <add>, %8, %cst [1] : vector<32x128xf32> to vector<32xf32>
    %10 = vector.shape_cast %9 : vector<32xf32> to vector<32x1xf32>
    %cst_5 = arith.constant 1.280000e+02 : f32
    %11 = vector.broadcast %cst_5 : f32 to vector<32x1xf32>
    %12 = arith.divf %10, %11 : vector<32x1xf32>
    %13 = vector.broadcast %12 : vector<32x1xf32> to vector<32x128xf32>
    %14 = arith.subf %8, %13 : vector<32x128xf32>
    %15 = arith.mulf %14, %14 : vector<32x128xf32>
    %cst_6 = arith.constant dense<0.000000e+00> : vector<32xf32>
    %16 = vector.multi_reduction <add>, %15, %cst_6 [1] : vector<32x128xf32> to vector<32xf32>
    %17 = vector.shape_cast %16 : vector<32xf32> to vector<32x1xf32>
    %cst_7 = arith.constant 1.280000e+02 : f32
    %18 = vector.broadcast %cst_7 : f32 to vector<32x1xf32>
    %19 = arith.divf %17, %18 : vector<32x1xf32>
    %20 = vector.broadcast %12 : vector<32x1xf32> to vector<32x128xf32>
    %21 = arith.subf %8, %20 : vector<32x128xf32>
    %cst_8 = arith.constant 9.99999997E-7 : f32
    %22 = vector.broadcast %cst_8 : f32 to vector<32x1xf32>
    %23 = arith.addf %19, %22 : vector<32x1xf32>
    %24 = math.rsqrt %23 : vector<32x1xf32>
    %25 = vector.broadcast %24 : vector<32x1xf32> to vector<32x128xf32>
    %26 = arith.mulf %21, %25 : vector<32x128xf32>
    %c0_9 = arith.constant 0 : index
    %c0_10 = arith.constant 0 : index
    %27 = vector.load %arg3[%c0_9, %c0_10] : memref<128x384xf32, #tpu.memory_space<vmem>>, vector<128x384xf32>
    %cst_11 = arith.constant dense<0.000000e+00> : vector<32x384xf32>
    %28 = tpu.matmul %26, %27, %cst_11 {dimension_numbers = #tpu.dot_dimension_numbers<[1], [0], [0], [1], [0, 0, 1, 1], [], []>} : vector<32x128xf32>, vector<128x384xf32>, vector<32x384xf32> -> vector<32x384xf32>
    %c0_12 = arith.constant 0 : index
    %c0_13 = arith.constant 0 : index
    %29 = vector.load %arg4[%c0_12, %c0_13] : memref<1x384xf32, #tpu.memory_space<vmem>>, vector<1x384xf32>
    %30 = vector.broadcast %29 : vector<1x384xf32> to vector<32x384xf32>
    %31 = arith.addf %28, %30 : vector<32x384xf32>
    %32 = vector.extract_strided_slice %31 {offsets = [0, 0], sizes = [32, 128], strides = [1, 1]} : vector<32x384xf32> to vector<32x128xf32>
    %cst_14 = arith.constant 0.176776692 : f32
    %33 = vector.broadcast %cst_14 : f32 to vector<32x128xf32>
    %34 = arith.mulf %32, %33 : vector<32x128xf32>
    %35 = vector.extract_strided_slice %31 {offsets = [0, 128], sizes = [32, 128], strides = [1, 1]} : vector<32x384xf32> to vector<32x128xf32>
    %36 = vector.extract_strided_slice %31 {offsets = [0, 256], sizes = [32, 128], strides = [1, 1]} : vector<32x384xf32> to vector<32x128xf32>
    %37 = vector.extract_strided_slice %34 {offsets = [0, 0], sizes = [32, 32], strides = [1, 1]} : vector<32x128xf32> to vector<32x32xf32>
    %38 = vector.shape_cast %37 : vector<32x32xf32> to vector<2x16x32xf32>
    %39 = vector.extract_strided_slice %35 {offsets = [0, 0], sizes = [32, 32], strides = [1, 1]} : vector<32x128xf32> to vector<32x32xf32>
    %40 = vector.shape_cast %39 : vector<32x32xf32> to vector<2x16x32xf32>
    %41 = vector.extract_strided_slice %36 {offsets = [0, 0], sizes = [32, 32], strides = [1, 1]} : vector<32x128xf32> to vector<32x32xf32>
    %42 = vector.shape_cast %41 : vector<32x32xf32> to vector<2x16x32xf32>
    "tpu.trace_start"() <{level = 10 : i32, message = "bqd,bkd->bqk"}> : () -> ()
    %cst_15 = arith.constant dense<0.000000e+00> : vector<2x16x16xf32>
    %43 = tpu.matmul %38, %40, %cst_15 {dimension_numbers = #tpu.dot_dimension_numbers<[2], [2], [1], [1], [0, 0, 0, 1, 1, 1], [0], [0]>} : vector<2x16x32xf32>, vector<2x16x32xf32>, vector<2x16x16xf32> -> vector<2x16x16xf32>
    "tpu.trace_stop"() : () -> ()
    %cst_16 = arith.constant dense<0xFF800000> : vector<2x16xf32>
    %44 = vector.multi_reduction <maximumf>, %43, %cst_16 [2] : vector<2x16x16xf32> to vector<2x16xf32>
    %45 = vector.shape_cast %44 : vector<2x16xf32> to vector<2x16x1xf32>
    %46 = vector.broadcast %45 : vector<2x16x1xf32> to vector<2x16x16xf32>
    %47 = arith.subf %43, %46 : vector<2x16x16xf32>
    %48 = math.exp %47 : vector<2x16x16xf32>
    %cst_17 = arith.constant dense<0.000000e+00> : vector<2x16xf32>
    %49 = vector.multi_reduction <add>, %48, %cst_17 [2] : vector<2x16x16xf32> to vector<2x16xf32>
    %50 = vector.shape_cast %49 : vector<2x16xf32> to vector<2x16x1xf32>
    %51 = tpu.reciprocal %50 : vector<2x16x1xf32> -> vector<2x16x1xf32>
    %52 = vector.broadcast %51 : vector<2x16x1xf32> to vector<2x16x16xf32>
    %53 = arith.mulf %48, %52 : vector<2x16x16xf32>
    "tpu.trace_start"() <{level = 10 : i32, message = "bqk,bkd->bqd"}> : () -> ()
    %cst_18 = arith.constant dense<0.000000e+00> : vector<2x16x32xf32>
    %54 = tpu.matmul %53, %42, %cst_18 {dimension_numbers = #tpu.dot_dimension_numbers<[2], [1], [1], [2], [0, 0, 0, 1, 1, 2], [0], [0]>} : vector<2x16x16xf32>, vector<2x16x32xf32>, vector<2x16x32xf32> -> vector<2x16x32xf32>
    "tpu.trace_stop"() : () -> ()
    %55 = vector.shape_cast %54 : vector<2x16x32xf32> to vector<32x32xf32>
    %56 = vector.extract_strided_slice %34 {offsets = [0, 32], sizes = [32, 32], strides = [1, 1]} : vector<32x128xf32> to vector<32x32xf32>
    %57 = vector.shape_cast %56 : vector<32x32xf32> to vector<2x16x32xf32>
    %58 = vector.extract_strided_slice %35 {offsets = [0, 32], sizes = [32, 32], strides = [1, 1]} : vector<32x128xf32> to vector<32x32xf32>
    %59 = vector.shape_cast %58 : vector<32x32xf32> to vector<2x16x32xf32>
    %60 = vector.extract_strided_slice %36 {offsets = [0, 32], sizes = [32, 32], strides = [1, 1]} : vector<32x128xf32> to vector<32x32xf32>
    %61 = vector.shape_cast %60 : vector<32x32xf32> to vector<2x16x32xf32>
    "tpu.trace_start"() <{level = 10 : i32, message = "bqd,bkd->bqk"}> : () -> ()
    %cst_19 = arith.constant dense<0.000000e+00> : vector<2x16x16xf32>
    %62 = tpu.matmul %57, %59, %cst_19 {dimension_numbers = #tpu.dot_dimension_numbers<[2], [2], [1], [1], [0, 0, 0, 1, 1, 1], [0], [0]>} : vector<2x16x32xf32>, vector<2x16x32xf32>, vector<2x16x16xf32> -> vector<2x16x16xf32>
    "tpu.trace_stop"() : () -> ()
    %cst_20 = arith.constant dense<0xFF800000> : vector<2x16xf32>
    %63 = vector.multi_reduction <maximumf>, %62, %cst_20 [2] : vector<2x16x16xf32> to vector<2x16xf32>
    %64 = vector.shape_cast %63 : vector<2x16xf32> to vector<2x16x1xf32>
    %65 = vector.broadcast %64 : vector<2x16x1xf32> to vector<2x16x16xf32>
    %66 = arith.subf %62, %65 : vector<2x16x16xf32>
    %67 = math.exp %66 : vector<2x16x16xf32>
    %cst_21 = arith.constant dense<0.000000e+00> : vector<2x16xf32>
    %68 = vector.multi_reduction <add>, %67, %cst_21 [2] : vector<2x16x16xf32> to vector<2x16xf32>
    %69 = vector.shape_cast %68 : vector<2x16xf32> to vector<2x16x1xf32>
    %70 = tpu.reciprocal %69 : vector<2x16x1xf32> -> vector<2x16x1xf32>
    %71 = vector.broadcast %70 : vector<2x16x1xf32> to vector<2x16x16xf32>
    %72 = arith.mulf %67, %71 : vector<2x16x16xf32>
    "tpu.trace_start"() <{level = 10 : i32, message = "bqk,bkd->bqd"}> : () -> ()
    %cst_22 = arith.constant dense<0.000000e+00> : vector<2x16x32xf32>
    %73 = tpu.matmul %72, %61, %cst_22 {dimension_numbers = #tpu.dot_dimension_numbers<[2], [1], [1], [2], [0, 0, 0, 1, 1, 2], [0], [0]>} : vector<2x16x16xf32>, vector<2x16x32xf32>, vector<2x16x32xf32> -> vector<2x16x32xf32>
    "tpu.trace_stop"() : () -> ()
    %74 = vector.shape_cast %73 : vector<2x16x32xf32> to vector<32x32xf32>
    %75 = vector.extract_strided_slice %34 {offsets = [0, 64], sizes = [32, 32], strides = [1, 1]} : vector<32x128xf32> to vector<32x32xf32>
    %76 = vector.shape_cast %75 : vector<32x32xf32> to vector<2x16x32xf32>
    %77 = vector.extract_strided_slice %35 {offsets = [0, 64], sizes = [32, 32], strides = [1, 1]} : vector<32x128xf32> to vector<32x32xf32>
    %78 = vector.shape_cast %77 : vector<32x32xf32> to vector<2x16x32xf32>
    %79 = vector.extract_strided_slice %36 {offsets = [0, 64], sizes = [32, 32], strides = [1, 1]} : vector<32x128xf32> to vector<32x32xf32>
    %80 = vector.shape_cast %79 : vector<32x32xf32> to vector<2x16x32xf32>
    "tpu.trace_start"() <{level = 10 : i32, message = "bqd,bkd->bqk"}> : () -> ()
    %cst_23 = arith.constant dense<0.000000e+00> : vector<2x16x16xf32>
    %81 = tpu.matmul %76, %78, %cst_23 {dimension_numbers = #tpu.dot_dimension_numbers<[2], [2], [1], [1], [0, 0, 0, 1, 1, 1], [0], [0]>} : vector<2x16x32xf32>, vector<2x16x32xf32>, vector<2x16x16xf32> -> vector<2x16x16xf32>
    "tpu.trace_stop"() : () -> ()
    %cst_24 = arith.constant dense<0xFF800000> : vector<2x16xf32>
    %82 = vector.multi_reduction <maximumf>, %81, %cst_24 [2] : vector<2x16x16xf32> to vector<2x16xf32>
    %83 = vector.shape_cast %82 : vector<2x16xf32> to vector<2x16x1xf32>
    %84 = vector.broadcast %83 : vector<2x16x1xf32> to vector<2x16x16xf32>
    %85 = arith.subf %81, %84 : vector<2x16x16xf32>
    %86 = math.exp %85 : vector<2x16x16xf32>
    %cst_25 = arith.constant dense<0.000000e+00> : vector<2x16xf32>
    %87 = vector.multi_reduction <add>, %86, %cst_25 [2] : vector<2x16x16xf32> to vector<2x16xf32>
    %88 = vector.shape_cast %87 : vector<2x16xf32> to vector<2x16x1xf32>
    %89 = tpu.reciprocal %88 : vector<2x16x1xf32> -> vector<2x16x1xf32>
    %90 = vector.broadcast %89 : vector<2x16x1xf32> to vector<2x16x16xf32>
    %91 = arith.mulf %86, %90 : vector<2x16x16xf32>
    "tpu.trace_start"() <{level = 10 : i32, message = "bqk,bkd->bqd"}> : () -> ()
    %cst_26 = arith.constant dense<0.000000e+00> : vector<2x16x32xf32>
    %92 = tpu.matmul %91, %80, %cst_26 {dimension_numbers = #tpu.dot_dimension_numbers<[2], [1], [1], [2], [0, 0, 0, 1, 1, 2], [0], [0]>} : vector<2x16x16xf32>, vector<2x16x32xf32>, vector<2x16x32xf32> -> vector<2x16x32xf32>
    "tpu.trace_stop"() : () -> ()
    %93 = vector.shape_cast %92 : vector<2x16x32xf32> to vector<32x32xf32>
    %94 = vector.extract_strided_slice %34 {offsets = [0, 96], sizes = [32, 32], strides = [1, 1]} : vector<32x128xf32> to vector<32x32xf32>
    %95 = vector.shape_cast %94 : vector<32x32xf32> to vector<2x16x32xf32>
    %96 = vector.extract_strided_slice %35 {offsets = [0, 96], sizes = [32, 32], strides = [1, 1]} : vector<32x128xf32> to vector<32x32xf32>
    %97 = vector.shape_cast %96 : vector<32x32xf32> to vector<2x16x32xf32>
    %98 = vector.extract_strided_slice %36 {offsets = [0, 96], sizes = [32, 32], strides = [1, 1]} : vector<32x128xf32> to vector<32x32xf32>
    %99 = vector.shape_cast %98 : vector<32x32xf32> to vector<2x16x32xf32>
    "tpu.trace_start"() <{level = 10 : i32, message = "bqd,bkd->bqk"}> : () -> ()
    %cst_27 = arith.constant dense<0.000000e+00> : vector<2x16x16xf32>
    %100 = tpu.matmul %95, %97, %cst_27 {dimension_numbers = #tpu.dot_dimension_numbers<[2], [2], [1], [1], [0, 0, 0, 1, 1, 1], [0], [0]>} : vector<2x16x32xf32>, vector<2x16x32xf32>, vector<2x16x16xf32> -> vector<2x16x16xf32>
    "tpu.trace_stop"() : () -> ()
    %cst_28 = arith.constant dense<0xFF800000> : vector<2x16xf32>
    %101 = vector.multi_reduction <maximumf>, %100, %cst_28 [2] : vector<2x16x16xf32> to vector<2x16xf32>
    %102 = vector.shape_cast %101 : vector<2x16xf32> to vector<2x16x1xf32>
    %103 = vector.broadcast %102 : vector<2x16x1xf32> to vector<2x16x16xf32>
    %104 = arith.subf %100, %103 : vector<2x16x16xf32>
    %105 = math.exp %104 : vector<2x16x16xf32>
    %cst_29 = arith.constant dense<0.000000e+00> : vector<2x16xf32>
    %106 = vector.multi_reduction <add>, %105, %cst_29 [2] : vector<2x16x16xf32> to vector<2x16xf32>
    %107 = vector.shape_cast %106 : vector<2x16xf32> to vector<2x16x1xf32>
    %108 = tpu.reciprocal %107 : vector<2x16x1xf32> -> vector<2x16x1xf32>
    %109 = vector.broadcast %108 : vector<2x16x1xf32> to vector<2x16x16xf32>
    %110 = arith.mulf %105, %109 : vector<2x16x16xf32>
    "tpu.trace_start"() <{level = 10 : i32, message = "bqk,bkd->bqd"}> : () -> ()
    %cst_30 = arith.constant dense<0.000000e+00> : vector<2x16x32xf32>
    %111 = tpu.matmul %110, %99, %cst_30 {dimension_numbers = #tpu.dot_dimension_numbers<[2], [1], [1], [2], [0, 0, 0, 1, 1, 2], [0], [0]>} : vector<2x16x16xf32>, vector<2x16x32xf32>, vector<2x16x32xf32> -> vector<2x16x32xf32>
    "tpu.trace_stop"() : () -> ()
    %112 = vector.shape_cast %111 : vector<2x16x32xf32> to vector<32x32xf32>
    %113 = tpu.concatenate %55, %74, %93, %112 in 1 : vector<32x32xf32>, vector<32x32xf32>, vector<32x32xf32>, vector<32x32xf32> -> vector<32x128xf32>
    %c0_31 = arith.constant 0 : index
    %c0_32 = arith.constant 0 : index
    %114 = vector.load %arg5[%c0_31, %c0_32] : memref<128x128xf32, #tpu.memory_space<vmem>>, vector<128x128xf32>
    %cst_33 = arith.constant dense<0.000000e+00> : vector<32x128xf32>
    %115 = tpu.matmul %113, %114, %cst_33 {dimension_numbers = #tpu.dot_dimension_numbers<[1], [0], [0], [1], [0, 0, 1, 1], [], []>} : vector<32x128xf32>, vector<128x128xf32>, vector<32x128xf32> -> vector<32x128xf32>
    %c0_34 = arith.constant 0 : index
    %c0_35 = arith.constant 0 : index
    %116 = vector.load %arg6[%c0_34, %c0_35] : memref<1x128xf32, #tpu.memory_space<vmem>>, vector<1x128xf32>
    %117 = vector.broadcast %116 : vector<1x128xf32> to vector<32x128xf32>
    %118 = arith.addf %115, %117 : vector<32x128xf32>
    %119 = vector.shape_cast %118 : vector<32x128xf32> to vector<2x16x128xf32>
    %cst_36 = arith.constant 1.000000e+00 : f32
    %120 = vector.broadcast %cst_36 : f32 to vector<2x1x128xf32>
    %121 = arith.addf %120, %4 : vector<2x1x128xf32>
    %122 = vector.broadcast %121 : vector<2x1x128xf32> to vector<2x16x128xf32>
    %123 = arith.mulf %119, %122 : vector<2x16x128xf32>
    %124 = vector.broadcast %3 : vector<2x1x128xf32> to vector<2x16x128xf32>
    %125 = arith.addf %123, %124 : vector<2x16x128xf32>
    %126 = vector.broadcast %2 : vector<2x1x128xf32> to vector<2x16x128xf32>
    %127 = arith.mulf %126, %125 : vector<2x16x128xf32>
    %128 = arith.addf %119, %127 : vector<2x16x128xf32>
    %129 = arith.addf %0, %128 : vector<2x16x128xf32>
    %130 = vector.shape_cast %129 : vector<2x16x128xf32> to vector<32x128xf32>
    %cst_37 = arith.constant dense<0.000000e+00> : vector<32xf32>
    %131 = vector.multi_reduction <add>, %130, %cst_37 [1] : vector<32x128xf32> to vector<32xf32>
    %132 = vector.shape_cast %131 : vector<32xf32> to vector<32x1xf32>
    %cst_38 = arith.constant 1.280000e+02 : f32
    %133 = vector.broadcast %cst_38 : f32 to vector<32x1xf32>
    %134 = arith.divf %132, %133 : vector<32x1xf32>
    %135 = vector.broadcast %134 : vector<32x1xf32> to vector<32x128xf32>
    %136 = arith.subf %130, %135 : vector<32x128xf32>
    %137 = arith.mulf %136, %136 : vector<32x128xf32>
    %cst_39 = arith.constant dense<0.000000e+00> : vector<32xf32>
    %138 = vector.multi_reduction <add>, %137, %cst_39 [1] : vector<32x128xf32> to vector<32xf32>
    %139 = vector.shape_cast %138 : vector<32xf32> to vector<32x1xf32>
    %cst_40 = arith.constant 1.280000e+02 : f32
    %140 = vector.broadcast %cst_40 : f32 to vector<32x1xf32>
    %141 = arith.divf %139, %140 : vector<32x1xf32>
    %142 = vector.broadcast %134 : vector<32x1xf32> to vector<32x128xf32>
    %143 = arith.subf %130, %142 : vector<32x128xf32>
    %cst_41 = arith.constant 9.99999997E-7 : f32
    %144 = vector.broadcast %cst_41 : f32 to vector<32x1xf32>
    %145 = arith.addf %141, %144 : vector<32x1xf32>
    %146 = math.rsqrt %145 : vector<32x1xf32>
    %147 = vector.broadcast %146 : vector<32x1xf32> to vector<32x128xf32>
    %148 = arith.mulf %143, %147 : vector<32x128xf32>
    %c0_42 = arith.constant 0 : index
    %c0_43 = arith.constant 0 : index
    %149 = vector.load %arg7[%c0_42, %c0_43] : memref<128x256xf32, #tpu.memory_space<vmem>>, vector<128x256xf32>
    %cst_44 = arith.constant dense<0.000000e+00> : vector<32x256xf32>
    %150 = tpu.matmul %148, %149, %cst_44 {dimension_numbers = #tpu.dot_dimension_numbers<[1], [0], [0], [1], [0, 0, 1, 1], [], []>} : vector<32x128xf32>, vector<128x256xf32>, vector<32x256xf32> -> vector<32x256xf32>
    %c0_45 = arith.constant 0 : index
    %c0_46 = arith.constant 0 : index
    %151 = vector.load %arg8[%c0_45, %c0_46] : memref<1x256xf32, #tpu.memory_space<vmem>>, vector<1x256xf32>
    %152 = vector.broadcast %151 : vector<1x256xf32> to vector<32x256xf32>
    %153 = arith.addf %150, %152 : vector<32x256xf32>
    %cst_47 = arith.constant 5.000000e-01 : f32
    %154 = vector.broadcast %cst_47 : f32 to vector<32x256xf32>
    %155 = arith.mulf %154, %153 : vector<32x256xf32>
    %cst_48 = arith.constant 0.707106769 : f32
    %156 = vector.broadcast %cst_48 : f32 to vector<32x256xf32>
    %157 = arith.mulf %153, %156 : vector<32x256xf32>
    %cst_49 = arith.constant 0.000000e+00 : f32
    %158 = vector.broadcast %cst_49 : f32 to vector<32x256xf32>
    %159 = arith.cmpf oge, %157, %158 : vector<32x256xf32>
    %cst_50 = arith.constant 1.000000e+00 : f32
    %cst_51 = arith.constant -1.000000e+00 : f32
    %160 = vector.broadcast %cst_50 : f32 to vector<32x256xf32>
    %161 = vector.broadcast %cst_51 : f32 to vector<32x256xf32>
    %162 = arith.select %159, %160, %161 : vector<32x256xi1>, vector<32x256xf32>
    %163 = math.absf %157 : vector<32x256xf32>
    %cst_52 = arith.constant 0.327591091 : f32
    %164 = vector.broadcast %cst_52 : f32 to vector<32x256xf32>
    %165 = arith.mulf %164, %163 : vector<32x256xf32>
    %cst_53 = arith.constant 1.000000e+00 : f32
    %166 = vector.broadcast %cst_53 : f32 to vector<32x256xf32>
    %167 = arith.addf %166, %165 : vector<32x256xf32>
    %168 = tpu.reciprocal %167 : vector<32x256xf32> -> vector<32x256xf32>
    %cst_54 = arith.constant 1.06140542 : f32
    %169 = vector.broadcast %cst_54 : f32 to vector<32x256xf32>
    %170 = arith.mulf %168, %169 : vector<32x256xf32>
    %cst_55 = arith.constant -1.45315206 : f32
    %171 = vector.broadcast %cst_55 : f32 to vector<32x256xf32>
    %172 = arith.addf %171, %170 : vector<32x256xf32>
    %173 = arith.mulf %168, %172 : vector<32x256xf32>
    %cst_56 = arith.constant 1.42141378 : f32
    %174 = vector.broadcast %cst_56 : f32 to vector<32x256xf32>
    %175 = arith.addf %174, %173 : vector<32x256xf32>
    %176 = arith.mulf %168, %175 : vector<32x256xf32>
    %cst_57 = arith.constant -0.284496725 : f32
    %177 = vector.broadcast %cst_57 : f32 to vector<32x256xf32>
    %178 = arith.addf %177, %176 : vector<32x256xf32>
    %179 = arith.mulf %168, %178 : vector<32x256xf32>
    %cst_58 = arith.constant 0.254829586 : f32
    %180 = vector.broadcast %cst_58 : f32 to vector<32x256xf32>
    %181 = arith.addf %180, %179 : vector<32x256xf32>
    %182 = arith.mulf %168, %181 : vector<32x256xf32>
    %cst_59 = arith.constant 0.000000e+00 : f32
    %183 = vector.broadcast %cst_59 : f32 to vector<32x256xf32>
    %184 = arith.subf %183, %163 : vector<32x256xf32>
    %185 = arith.mulf %184, %163 : vector<32x256xf32>
    %186 = math.exp %185 : vector<32x256xf32>
    %187 = arith.mulf %182, %186 : vector<32x256xf32>
    %cst_60 = arith.constant 1.000000e+00 : f32
    %188 = vector.broadcast %cst_60 : f32 to vector<32x256xf32>
    %189 = arith.subf %188, %187 : vector<32x256xf32>
    %190 = arith.mulf %162, %189 : vector<32x256xf32>
    %cst_61 = arith.constant 1.000000e+00 : f32
    %191 = vector.broadcast %cst_61 : f32 to vector<32x256xf32>
    %192 = arith.addf %191, %190 : vector<32x256xf32>
    %193 = arith.mulf %155, %192 : vector<32x256xf32>
    %c0_62 = arith.constant 0 : index
    %c0_63 = arith.constant 0 : index
    %194 = vector.load %arg9[%c0_62, %c0_63] : memref<256x128xf32, #tpu.memory_space<vmem>>, vector<256x128xf32>
    %cst_64 = arith.constant dense<0.000000e+00> : vector<32x128xf32>
    %195 = tpu.matmul %193, %194, %cst_64 {dimension_numbers = #tpu.dot_dimension_numbers<[1], [0], [0], [1], [0, 0, 1, 1], [], []>} : vector<32x256xf32>, vector<256x128xf32>, vector<32x128xf32> -> vector<32x128xf32>
    %c0_65 = arith.constant 0 : index
    %c0_66 = arith.constant 0 : index
    %196 = vector.load %arg10[%c0_65, %c0_66] : memref<1x128xf32, #tpu.memory_space<vmem>>, vector<1x128xf32>
    %197 = vector.broadcast %196 : vector<1x128xf32> to vector<32x128xf32>
    %198 = arith.addf %195, %197 : vector<32x128xf32>
    %199 = vector.shape_cast %198 : vector<32x128xf32> to vector<2x16x128xf32>
    %cst_67 = arith.constant 1.000000e+00 : f32
    %200 = vector.broadcast %cst_67 : f32 to vector<2x1x128xf32>
    %201 = arith.addf %200, %7 : vector<2x1x128xf32>
    %202 = vector.broadcast %201 : vector<2x1x128xf32> to vector<2x16x128xf32>
    %203 = arith.mulf %199, %202 : vector<2x16x128xf32>
    %204 = vector.broadcast %6 : vector<2x1x128xf32> to vector<2x16x128xf32>
    %205 = arith.addf %203, %204 : vector<2x16x128xf32>
    %206 = vector.broadcast %5 : vector<2x1x128xf32> to vector<2x16x128xf32>
    %207 = arith.mulf %206, %205 : vector<2x16x128xf32>
    %208 = arith.addf %199, %207 : vector<2x16x128xf32>
    %209 = arith.addf %129, %208 : vector<2x16x128xf32>
    %c0_68 = arith.constant 0 : index
    %c0_69 = arith.constant 0 : index
    %c0_70 = arith.constant 0 : index
    %210 = vector.load %arg11[%c0_68, %c0_69, %c0_70] : memref<2x16x128xf32, #tpu.memory_space<vmem>>, vector<2x16x128xf32>
    tpu.vector_store %arg11[%c0_68, %c0_69, %c0_70], %209 {strides = array<i32>} : memref<2x16x128xf32, #tpu.memory_space<vmem>>, vector<2x16x128xf32>,
    return
  }
  func.func @transform_0(%arg0: i32) -> (i32, i32, i32) {
    %c0_i32 = arith.constant 0 : i32
    %c0_i32_0 = arith.constant 0 : i32
    %c0_i32_1 = arith.constant 0 : i32
    return %arg0, %c0_i32, %c0_i32_0 : i32, i32, i32
  }
  func.func @transform_1(%arg0: i32) -> (i32, i32, i32) {
    %c0_i32 = arith.constant 0 : i32
    %c0_i32_0 = arith.constant 0 : i32
    %c0_i32_1 = arith.constant 0 : i32
    return %arg0, %c0_i32, %c0_i32_0 : i32, i32, i32
  }
  func.func @transform_2(%arg0: i32) -> (i32, i32) {
    %c0_i32 = arith.constant 0 : i32
    %c0_i32_0 = arith.constant 0 : i32
    %c0_i32_1 = arith.constant 0 : i32
    return %c0_i32, %c0_i32_0 : i32, i32
  }
  func.func @transform_3(%arg0: i32) -> (i32, i32) {
    %c0_i32 = arith.constant 0 : i32
    %c0_i32_0 = arith.constant 0 : i32
    %c0_i32_1 = arith.constant 0 : i32
    return %c0_i32, %c0_i32_0 : i32, i32
  }
  func.func @transform_4(%arg0: i32) -> (i32, i32) {
    %c0_i32 = arith.constant 0 : i32
    %c0_i32_0 = arith.constant 0 : i32
    %c0_i32_1 = arith.constant 0 : i32
    return %c0_i32, %c0_i32_0 : i32, i32
  }
  func.func @transform_5(%arg0: i32) -> (i32, i32) {
    %c0_i32 = arith.constant 0 : i32
    %c0_i32_0 = arith.constant 0 : i32
    %c0_i32_1 = arith.constant 0 : i32
    return %c0_i32, %c0_i32_0 : i32, i32
  }
  func.func @transform_6(%arg0: i32) -> (i32, i32) {
    %c0_i32 = arith.constant 0 : i32
    %c0_i32_0 = arith.constant 0 : i32
    %c0_i32_1 = arith.constant 0 : i32
    return %c0_i32, %c0_i32_0 : i32, i32
  }
  func.func @transform_7(%arg0: i32) -> (i32, i32) {
    %c0_i32 = arith.constant 0 : i32
    %c0_i32_0 = arith.constant 0 : i32
    %c0_i32_1 = arith.constant 0 : i32
    return %c0_i32, %c0_i32_0 : i32, i32
  }
  func.func @transform_8(%arg0: i32) -> (i32, i32) {
    %c0_i32 = arith.constant 0 : i32
    %c0_i32_0 = arith.constant 0 : i32
    %c0_i32_1 = arith.constant 0 : i32
    return %c0_i32, %c0_i32_0 : i32, i32
  }
  func.func @transform_9(%arg0: i32) -> (i32, i32) {
    %c0_i32 = arith.constant 0 : i32
    %c0_i32_0 = arith.constant 0 : i32
    %c0_i32_1 = arith.constant 0 : i32
    return %c0_i32, %c0_i32_0 : i32, i32
  }
  func.func @transform_10(%arg0: i32) -> (i32, i32, i32) {
    %c0_i32 = arith.constant 0 : i32
    %c0_i32_0 = arith.constant 0 : i32
    %c0_i32_1 = arith.constant 0 : i32
    return %arg0, %c0_i32, %c0_i32_0 : i32, i32, i32
  }
}

module attributes {stable_mosaic.version = 11 : i64} {
  func.func @_transformer_block_kernel(%arg0: i32, %arg1: memref<2x16x128xf32, #tpu.memory_space<vmem>>, %arg2: memref<2x8x128xf32, #tpu.memory_space<vmem>>, %arg3: memref<128x384xf32, #tpu.memory_space<vmem>>, %arg4: memref<1x384xf32, #tpu.memory_space<vmem>>, %arg5: memref<128x128xf32, #tpu.memory_space<vmem>>, %arg6: memref<1x128xf32, #tpu.memory_space<vmem>>, %arg7: memref<128x256xf32, #tpu.memory_space<vmem>>, %arg8: memref<1x256xf32, #tpu.memory_space<vmem>>, %arg9: memref<256x128xf32, #tpu.memory_space<vmem>>, %arg10: memref<1x128xf32, #tpu.memory_space<vmem>>, %arg11: memref<2x16x128xf32, #tpu.memory_space<vmem>>) attributes {dimension_semantics = [#tpu.dimension_semantics<parallel>], iteration_bounds = array<i64: 1>, scalar_prefetch = 0 : i64, scratch_operands = 0 : i64, tpu.core_type = #tpu.core_type<tc>, window_params = [{transform_indices = @transform_0, window_bounds = array<i64: 2, 16, 128>}, {transform_indices = @transform_1, window_bounds = array<i64: 2, 8, 128>}, {pipeline_mode = #tpu.pipeline_mode<synchronous>, transform_indices = @transform_2, window_bounds = array<i64: 128, 384>}, {pipeline_mode = #tpu.pipeline_mode<synchronous>, transform_indices = @transform_3, window_bounds = array<i64: 1, 384>}, {pipeline_mode = #tpu.pipeline_mode<synchronous>, transform_indices = @transform_4, window_bounds = array<i64: 128, 128>}, {pipeline_mode = #tpu.pipeline_mode<synchronous>, transform_indices = @transform_5, window_bounds = array<i64: 1, 128>}, {pipeline_mode = #tpu.pipeline_mode<synchronous>, transform_indices = @transform_6, window_bounds = array<i64: 128, 256>}, {pipeline_mode = #tpu.pipeline_mode<synchronous>, transform_indices = @transform_7, window_bounds = array<i64: 1, 256>}, {pipeline_mode = #tpu.pipeline_mode<synchronous>, transform_indices = @transform_8, window_bounds = array<i64: 256, 128>}, {pipeline_mode = #tpu.pipeline_mode<synchronous>, transform_indices = @transform_9, window_bounds = array<i64: 1, 128>}, {transform_indices = @transform_10, window_bounds = array<i64: 2, 16, 128>}]} {
    %c0 = arith.constant 0 : index
    %c0_0 = arith.constant 0 : index
    %c0_1 = arith.constant 0 : index
    %0 = vector.load %arg1[%c0, %c0_0, %c0_1] : memref<2x16x128xf32, #tpu.memory_space<vmem>>, vector<2x16x128xf32>
    %c0_2 = arith.constant 0 : index
    %c0_3 = arith.constant 0 : index
    %c0_4 = arith.constant 0 : index
    %1 = vector.load %arg2[%c0_2, %c0_3, %c0_4] : memref<2x8x128xf32, #tpu.memory_space<vmem>>, vector<2x8x128xf32>
    %2 = vector.extract_strided_slice %1 {offsets = [0, 0, 0], sizes = [2, 1, 128], strides = [1, 1, 1]} : vector<2x8x128xf32> to vector<2x1x128xf32>
    %3 = vector.extract_strided_slice %1 {offsets = [0, 1, 0], sizes = [2, 1, 128], strides = [1, 1, 1]} : vector<2x8x128xf32> to vector<2x1x128xf32>
    %4 = vector.extract_strided_slice %1 {offsets = [0, 2, 0], sizes = [2, 1, 128], strides = [1, 1, 1]} : vector<2x8x128xf32> to vector<2x1x128xf32>
    %5 = vector.extract_strided_slice %1 {offsets = [0, 3, 0], sizes = [2, 1, 128], strides = [1, 1, 1]} : vector<2x8x128xf32> to vector<2x1x128xf32>
    %6 = vector.extract_strided_slice %1 {offsets = [0, 4, 0], sizes = [2, 1, 128], strides = [1, 1, 1]} : vector<2x8x128xf32> to vector<2x1x128xf32>
    %7 = vector.extract_strided_slice %1 {offsets = [0, 5, 0], sizes = [2, 1, 128], strides = [1, 1, 1]} : vector<2x8x128xf32> to vector<2x1x128xf32>
    %8 = vector.shape_cast %0 : vector<2x16x128xf32> to vector<32x128xf32>
    %cst = arith.constant dense<0.000000e+00> : vector<32xf32>
    %9 = vector.multi_reduction <add>, %8, %cst [1] : vector<32x128xf32> to vector<32xf32>
    %10 = vector.shape_cast %9 : vector<32xf32> to vector<32x1xf32>
    %cst_5 = arith.constant 1.280000e+02 : f32
    %11 = vector.broadcast %cst_5 : f32 to vector<32x1xf32>
    %12 = arith.divf %10, %11 : vector<32x1xf32>
    %13 = vector.broadcast %12 : vector<32x1xf32> to vector<32x128xf32>
    %14 = arith.subf %8, %13 : vector<32x128xf32>
    %15 = arith.mulf %14, %14 : vector<32x128xf32>
    %cst_6 = arith.constant dense<0.000000e+00> : vector<32xf32>
    %16 = vector.multi_reduction <add>, %15, %cst_6 [1] : vector<32x128xf32> to vector<32xf32>
    %17 = vector.shape_cast %16 : vector<32xf32> to vector<32x1xf32>
    %cst_7 = arith.constant 1.280000e+02 : f32
    %18 = vector.broadcast %cst_7 : f32 to vector<32x1xf32>
    %19 = arith.divf %17, %18 : vector<32x1xf32>
    %20 = vector.broadcast %12 : vector<32x1xf32> to vector<32x128xf32>
    %21 = arith.subf %8, %20 : vector<32x128xf32>
    %cst_8 = arith.constant 9.99999997E-7 : f32
    %22 = vector.broadcast %cst_8 : f32 to vector<32x1xf32>
    %23 = arith.addf %19, %22 : vector<32x1xf32>
    %24 = math.rsqrt %23 : vector<32x1xf32>
    %25 = vector.broadcast %24 : vector<32x1xf32> to vector<32x128xf32>
    %26 = arith.mulf %21, %25 : vector<32x128xf32>
    %c0_9 = arith.constant 0 : index
    %c0_10 = arith.constant 0 : index
    %27 = vector.load %arg3[%c0_9, %c0_10] : memref<128x384xf32, #tpu.memory_space<vmem>>, vector<128x384xf32>
    %cst_11 = arith.constant dense<0.000000e+00> : vector<32x384xf32>
    %28 = tpu.matmul %26, %27, %cst_11 {dimension_numbers = #tpu.dot_dimension_numbers<[1], [0], [0], [1], [0, 0, 1, 1], [], []>} : vector<32x128xf32>, vector<128x384xf32>, vector<32x384xf32> -> vector<32x384xf32>
    %c0_12 = arith.constant 0 : index
    %c0_13 = arith.constant 0 : index
    %29 = vector.load %arg4[%c0_12, %c0_13] : memref<1x384xf32, #tpu.memory_space<vmem>>, vector<1x384xf32>
    %30 = vector.broadcast %29 : vector<1x384xf32> to vector<32x384xf32>
    %31 = arith.addf %28, %30 : vector<32x384xf32>
    %32 = vector.extract_strided_slice %31 {offsets = [0, 0], sizes = [32, 128], strides = [1, 1]} : vector<32x384xf32> to vector<32x128xf32>
    %cst_14 = arith.constant 0.176776692 : f32
    %33 = vector.broadcast %cst_14 : f32 to vector<32x128xf32>
    %34 = arith.mulf %32, %33 : vector<32x128xf32>
    %35 = vector.extract_strided_slice %31 {offsets = [0, 128], sizes = [32, 128], strides = [1, 1]} : vector<32x384xf32> to vector<32x128xf32>
    %36 = vector.extract_strided_slice %31 {offsets = [0, 256], sizes = [32, 128], strides = [1, 1]} : vector<32x384xf32> to vector<32x128xf32>
    %37 = vector.extract_strided_slice %34 {offsets = [0, 0], sizes = [32, 32], strides = [1, 1]} : vector<32x128xf32> to vector<32x32xf32>
    %38 = vector.shape_cast %37 : vector<32x32xf32> to vector<2x16x32xf32>
    %39 = vector.extract_strided_slice %35 {offsets = [0, 0], sizes = [32, 32], strides = [1, 1]} : vector<32x128xf32> to vector<32x32xf32>
    %40 = vector.shape_cast %39 : vector<32x32xf32> to vector<2x16x32xf32>
    %41 = vector.extract_strided_slice %36 {offsets = [0, 0], sizes = [32, 32], strides = [1, 1]} : vector<32x128xf32> to vector<32x32xf32>
    %42 = vector.shape_cast %41 : vector<32x32xf32> to vector<2x16x32xf32>
    "tpu.trace_start"() <{level = 10 : i32, message = "bqd,bkd->bqk"}> : () -> ()
    %cst_15 = arith.constant dense<0.000000e+00> : vector<2x16x16xf32>
    %43 = tpu.matmul %38, %40, %cst_15 {dimension_numbers = #tpu.dot_dimension_numbers<[2], [2], [1], [1], [0, 0, 0, 1, 1, 1], [0], [0]>} : vector<2x16x32xf32>, vector<2x16x32xf32>, vector<2x16x16xf32> -> vector<2x16x16xf32>
    "tpu.trace_stop"() : () -> ()
    %cst_16 = arith.constant dense<0xFF800000> : vector<2x16xf32>
    %44 = vector.multi_reduction <maximumf>, %43, %cst_16 [2] : vector<2x16x16xf32> to vector<2x16xf32>
    %45 = vector.shape_cast %44 : vector<2x16xf32> to vector<2x16x1xf32>
    %46 = vector.broadcast %45 : vector<2x16x1xf32> to vector<2x16x16xf32>
    %47 = arith.subf %43, %46 : vector<2x16x16xf32>
    %48 = math.exp %47 : vector<2x16x16xf32>
    %cst_17 = arith.constant dense<0.000000e+00> : vector<2x16xf32>
    %49 = vector.multi_reduction <add>, %48, %cst_17 [2] : vector<2x16x16xf32> to vector<2x16xf32>
    %50 = vector.shape_cast %49 : vector<2x16xf32> to vector<2x16x1xf32>
    %51 = tpu.reciprocal %50 : vector<2x16x1xf32> -> vector<2x16x1xf32>
    %52 = vector.broadcast %51 : vector<2x16x1xf32> to vector<2x16x16xf32>
    %53 = arith.mulf %48, %52 : vector<2x16x16xf32>
    "tpu.trace_start"() <{level = 10 : i32, message = "bqk,bkd->bqd"}> : () -> ()
    %cst_18 = arith.constant dense<0.000000e+00> : vector<2x16x32xf32>
    %54 = tpu.matmul %53, %42, %cst_18 {dimension_numbers = #tpu.dot_dimension_numbers<[2], [1], [1], [2], [0, 0, 0, 1, 1, 2], [0], [0]>} : vector<2x16x16xf32>, vector<2x16x32xf32>, vector<2x16x32xf32> -> vector<2x16x32xf32>
    "tpu.trace_stop"() : () -> ()
    %55 = vector.shape_cast %54 : vector<2x16x32xf32> to vector<32x32xf32>
    %56 = vector.extract_strided_slice %34 {offsets = [0, 32], sizes = [32, 32], strides = [1, 1]} : vector<32x128xf32> to vector<32x32xf32>
    %57 = vector.shape_cast %56 : vector<32x32xf32> to vector<2x16x32xf32>
    %58 = vector.extract_strided_slice %35 {offsets = [0, 32], sizes = [32, 32], strides = [1, 1]} : vector<32x128xf32> to vector<32x32xf32>
    %59 = vector.shape_cast %58 : vector<32x32xf32> to vector<2x16x32xf32>
    %60 = vector.extract_strided_slice %36 {offsets = [0, 32], sizes = [32, 32], strides = [1, 1]} : vector<32x128xf32> to vector<32x32xf32>
    %61 = vector.shape_cast %60 : vector<32x32xf32> to vector<2x16x32xf32>
    "tpu.trace_start"() <{level = 10 : i32, message = "bqd,bkd->bqk"}> : () -> ()
    %cst_19 = arith.constant dense<0.000000e+00> : vector<2x16x16xf32>
    %62 = tpu.matmul %57, %59, %cst_19 {dimension_numbers = #tpu.dot_dimension_numbers<[2], [2], [1], [1], [0, 0, 0, 1, 1, 1], [0], [0]>} : vector<2x16x32xf32>, vector<2x16x32xf32>, vector<2x16x16xf32> -> vector<2x16x16xf32>
    "tpu.trace_stop"() : () -> ()
    %cst_20 = arith.constant dense<0xFF800000> : vector<2x16xf32>
    %63 = vector.multi_reduction <maximumf>, %62, %cst_20 [2] : vector<2x16x16xf32> to vector<2x16xf32>
    %64 = vector.shape_cast %63 : vector<2x16xf32> to vector<2x16x1xf32>
    %65 = vector.broadcast %64 : vector<2x16x1xf32> to vector<2x16x16xf32>
    %66 = arith.subf %62, %65 : vector<2x16x16xf32>
    %67 = math.exp %66 : vector<2x16x16xf32>
    %cst_21 = arith.constant dense<0.000000e+00> : vector<2x16xf32>
    %68 = vector.multi_reduction <add>, %67, %cst_21 [2] : vector<2x16x16xf32> to vector<2x16xf32>
    %69 = vector.shape_cast %68 : vector<2x16xf32> to vector<2x16x1xf32>
    %70 = tpu.reciprocal %69 : vector<2x16x1xf32> -> vector<2x16x1xf32>
    %71 = vector.broadcast %70 : vector<2x16x1xf32> to vector<2x16x16xf32>
    %72 = arith.mulf %67, %71 : vector<2x16x16xf32>
    "tpu.trace_start"() <{level = 10 : i32, message = "bqk,bkd->bqd"}> : () -> ()
    %cst_22 = arith.constant dense<0.000000e+00> : vector<2x16x32xf32>
    %73 = tpu.matmul %72, %61, %cst_22 {dimension_numbers = #tpu.dot_dimension_numbers<[2], [1], [1], [2], [0, 0, 0, 1, 1, 2], [0], [0]>} : vector<2x16x16xf32>, vector<2x16x32xf32>, vector<2x16x32xf32> -> vector<2x16x32xf32>
    "tpu.trace_stop"() : () -> ()
    %74 = vector.shape_cast %73 : vector<2x16x32xf32> to vector<32x32xf32>
    %75 = vector.extract_strided_slice %34 {offsets = [0, 64], sizes = [32, 32], strides = [1, 1]} : vector<32x128xf32> to vector<32x32xf32>
    %76 = vector.shape_cast %75 : vector<32x32xf32> to vector<2x16x32xf32>
    %77 = vector.extract_strided_slice %35 {offsets = [0, 64], sizes = [32, 32], strides = [1, 1]} : vector<32x128xf32> to vector<32x32xf32>
    %78 = vector.shape_cast %77 : vector<32x32xf32> to vector<2x16x32xf32>
    %79 = vector.extract_strided_slice %36 {offsets = [0, 64], sizes = [32, 32], strides = [1, 1]} : vector<32x128xf32> to vector<32x32xf32>
    %80 = vector.shape_cast %79 : vector<32x32xf32> to vector<2x16x32xf32>
    "tpu.trace_start"() <{level = 10 : i32, message = "bqd,bkd->bqk"}> : () -> ()
    %cst_23 = arith.constant dense<0.000000e+00> : vector<2x16x16xf32>
    %81 = tpu.matmul %76, %78, %cst_23 {dimension_numbers = #tpu.dot_dimension_numbers<[2], [2], [1], [1], [0, 0, 0, 1, 1, 1], [0], [0]>} : vector<2x16x32xf32>, vector<2x16x32xf32>, vector<2x16x16xf32> -> vector<2x16x16xf32>
    "tpu.trace_stop"() : () -> ()
    %cst_24 = arith.constant dense<0xFF800000> : vector<2x16xf32>
    %82 = vector.multi_reduction <maximumf>, %81, %cst_24 [2] : vector<2x16x16xf32> to vector<2x16xf32>
    %83 = vector.shape_cast %82 : vector<2x16xf32> to vector<2x16x1xf32>
    %84 = vector.broadcast %83 : vector<2x16x1xf32> to vector<2x16x16xf32>
    %85 = arith.subf %81, %84 : vector<2x16x16xf32>
    %86 = math.exp %85 : vector<2x16x16xf32>
    %cst_25 = arith.constant dense<0.000000e+00> : vector<2x16xf32>
    %87 = vector.multi_reduction <add>, %86, %cst_25 [2] : vector<2x16x16xf32> to vector<2x16xf32>
    %88 = vector.shape_cast %87 : vector<2x16xf32> to vector<2x16x1xf32>
    %89 = tpu.reciprocal %88 : vector<2x16x1xf32> -> vector<2x16x1xf32>
    %90 = vector.broadcast %89 : vector<2x16x1xf32> to vector<2x16x16xf32>
    %91 = arith.mulf %86, %90 : vector<2x16x16xf32>
    "tpu.trace_start"() <{level = 10 : i32, message = "bqk,bkd->bqd"}> : () -> ()
    %cst_26 = arith.constant dense<0.000000e+00> : vector<2x16x32xf32>
    %92 = tpu.matmul %91, %80, %cst_26 {dimension_numbers = #tpu.dot_dimension_numbers<[2], [1], [1], [2], [0, 0, 0, 1, 1, 2], [0], [0]>} : vector<2x16x16xf32>, vector<2x16x32xf32>, vector<2x16x32xf32> -> vector<2x16x32xf32>
    "tpu.trace_stop"() : () -> ()
    %93 = vector.shape_cast %92 : vector<2x16x32xf32> to vector<32x32xf32>
    %94 = vector.extract_strided_slice %34 {offsets = [0, 96], sizes = [32, 32], strides = [1, 1]} : vector<32x128xf32> to vector<32x32xf32>
    %95 = vector.shape_cast %94 : vector<32x32xf32> to vector<2x16x32xf32>
    %96 = vector.extract_strided_slice %35 {offsets = [0, 96], sizes = [32, 32], strides = [1, 1]} : vector<32x128xf32> to vector<32x32xf32>
    %97 = vector.shape_cast %96 : vector<32x32xf32> to vector<2x16x32xf32>
    %98 = vector.extract_strided_slice %36 {offsets = [0, 96], sizes = [32, 32], strides = [1, 1]} : vector<32x128xf32> to vector<32x32xf32>
    %99 = vector.shape_cast %98 : vector<32x32xf32> to vector<2x16x32xf32>
    "tpu.trace_start"() <{level = 10 : i32, message = "bqd,bkd->bqk"}> : () -> ()
    %cst_27 = arith.constant dense<0.000000e+00> : vector<2x16x16xf32>
    %100 = tpu.matmul %95, %97, %cst_27 {dimension_numbers = #tpu.dot_dimension_numbers<[2], [2], [1], [1], [0, 0, 0, 1, 1, 1], [0], [0]>} : vector<2x16x32xf32>, vector<2x16x32xf32>, vector<2x16x16xf32> -> vector<2x16x16xf32>
    "tpu.trace_stop"() : () -> ()
    %cst_28 = arith.constant dense<0xFF800000> : vector<2x16xf32>
    %101 = vector.multi_reduction <maximumf>, %100, %cst_28 [2] : vector<2x16x16xf32> to vector<2x16xf32>
    %102 = vector.shape_cast %101 : vector<2x16xf32> to vector<2x16x1xf32>
    %103 = vector.broadcast %102 : vector<2x16x1xf32> to vector<2x16x16xf32>
    %104 = arith.subf %100, %103 : vector<2x16x16xf32>
    %105 = math.exp %104 : vector<2x16x16xf32>
    %cst_29 = arith.constant dense<0.000000e+00> : vector<2x16xf32>
    %106 = vector.multi_reduction <add>, %105, %cst_29 [2] : vector<2x16x16xf32> to vector<2x16xf32>
    %107 = vector.shape_cast %106 : vector<2x16xf32> to vector<2x16x1xf32>
    %108 = tpu.reciprocal %107 : vector<2x16x1xf32> -> vector<2x16x1xf32>
    %109 = vector.broadcast %108 : vector<2x16x1xf32> to vector<2x16x16xf32>
    %110 = arith.mulf %105, %109 : vector<2x16x16xf32>
    "tpu.trace_start"() <{level = 10 : i32, message = "bqk,bkd->bqd"}> : () -> ()
    %cst_30 = arith.constant dense<0.000000e+00> : vector<2x16x32xf32>
    %111 = tpu.matmul %110, %99, %cst_30 {dimension_numbers = #tpu.dot_dimension_numbers<[2], [1], [1], [2], [0, 0, 0, 1, 1, 2], [0], [0]>} : vector<2x16x16xf32>, vector<2x16x32xf32>, vector<2x16x32xf32> -> vector<2x16x32xf32>
    "tpu.trace_stop"() : () -> ()
    %112 = vector.shape_cast %111 : vector<2x16x32xf32> to vector<32x32xf32>
    %113 = tpu.concatenate %55, %74, %93, %112 in 1 : vector<32x32xf32>, vector<32x32xf32>, vector<32x32xf32>, vector<32x32xf32> -> vector<32x128xf32>
    %c0_31 = arith.constant 0 : index
    %c0_32 = arith.constant 0 : index
    %114 = vector.load %arg5[%c0_31, %c0_32] : memref<128x128xf32, #tpu.memory_space<vmem>>, vector<128x128xf32>
    %cst_33 = arith.constant dense<0.000000e+00> : vector<32x128xf32>
    %115 = tpu.matmul %113, %114, %cst_33 {dimension_numbers = #tpu.dot_dimension_numbers<[1], [0], [0], [1], [0, 0, 1, 1], [], []>} : vector<32x128xf32>, vector<128x128xf32>, vector<32x128xf32> -> vector<32x128xf32>
    %c0_34 = arith.constant 0 : index
    %c0_35 = arith.constant 0 : index
    %116 = vector.load %arg6[%c0_34, %c0_35] : memref<1x128xf32, #tpu.memory_space<vmem>>, vector<1x128xf32>
    %117 = vector.broadcast %116 : vector<1x128xf32> to vector<32x128xf32>
    %118 = arith.addf %115, %117 : vector<32x128xf32>
    %119 = vector.shape_cast %118 : vector<32x128xf32> to vector<2x16x128xf32>
    %cst_36 = arith.constant 1.000000e+00 : f32
    %120 = vector.broadcast %cst_36 : f32 to vector<2x1x128xf32>
    %121 = arith.addf %120, %4 : vector<2x1x128xf32>
    %122 = vector.broadcast %121 : vector<2x1x128xf32> to vector<2x16x128xf32>
    %123 = arith.mulf %119, %122 : vector<2x16x128xf32>
    %124 = vector.broadcast %3 : vector<2x1x128xf32> to vector<2x16x128xf32>
    %125 = arith.addf %123, %124 : vector<2x16x128xf32>
    %126 = vector.broadcast %2 : vector<2x1x128xf32> to vector<2x16x128xf32>
    %127 = arith.mulf %126, %125 : vector<2x16x128xf32>
    %128 = arith.addf %119, %127 : vector<2x16x128xf32>
    %129 = arith.addf %0, %128 : vector<2x16x128xf32>
    %130 = vector.shape_cast %129 : vector<2x16x128xf32> to vector<32x128xf32>
    %cst_37 = arith.constant dense<0.000000e+00> : vector<32xf32>
    %131 = vector.multi_reduction <add>, %130, %cst_37 [1] : vector<32x128xf32> to vector<32xf32>
    %132 = vector.shape_cast %131 : vector<32xf32> to vector<32x1xf32>
    %cst_38 = arith.constant 1.280000e+02 : f32
    %133 = vector.broadcast %cst_38 : f32 to vector<32x1xf32>
    %134 = arith.divf %132, %133 : vector<32x1xf32>
    %135 = vector.broadcast %134 : vector<32x1xf32> to vector<32x128xf32>
    %136 = arith.subf %130, %135 : vector<32x128xf32>
    %137 = arith.mulf %136, %136 : vector<32x128xf32>
    %cst_39 = arith.constant dense<0.000000e+00> : vector<32xf32>
    %138 = vector.multi_reduction <add>, %137, %cst_39 [1] : vector<32x128xf32> to vector<32xf32>
    %139 = vector.shape_cast %138 : vector<32xf32> to vector<32x1xf32>
    %cst_40 = arith.constant 1.280000e+02 : f32
    %140 = vector.broadcast %cst_40 : f32 to vector<32x1xf32>
    %141 = arith.divf %139, %140 : vector<32x1xf32>
    %142 = vector.broadcast %134 : vector<32x1xf32> to vector<32x128xf32>
    %143 = arith.subf %130, %142 : vector<32x128xf32>
    %cst_41 = arith.constant 9.99999997E-7 : f32
    %144 = vector.broadcast %cst_41 : f32 to vector<32x1xf32>
    %145 = arith.addf %141, %144 : vector<32x1xf32>
    %146 = math.rsqrt %145 : vector<32x1xf32>
    %147 = vector.broadcast %146 : vector<32x1xf32> to vector<32x128xf32>
    %148 = arith.mulf %143, %147 : vector<32x128xf32>
    %c0_42 = arith.constant 0 : index
    %c0_43 = arith.constant 0 : index
    %149 = vector.load %arg7[%c0_42, %c0_43] : memref<128x256xf32, #tpu.memory_space<vmem>>, vector<128x256xf32>
    %cst_44 = arith.constant dense<0.000000e+00> : vector<32x256xf32>
    %150 = tpu.matmul %148, %149, %cst_44 {dimension_numbers = #tpu.dot_dimension_numbers<[1], [0], [0], [1], [0, 0, 1, 1], [], []>} : vector<32x128xf32>, vector<128x256xf32>, vector<32x256xf32> -> vector<32x256xf32>
    %c0_45 = arith.constant 0 : index
    %c0_46 = arith.constant 0 : index
    %151 = vector.load %arg8[%c0_45, %c0_46] : memref<1x256xf32, #tpu.memory_space<vmem>>, vector<1x256xf32>
    %152 = vector.broadcast %151 : vector<1x256xf32> to vector<32x256xf32>
    %153 = arith.addf %150, %152 : vector<32x256xf32>
    %cst_47 = arith.constant 5.000000e-01 : f32
    %154 = vector.broadcast %cst_47 : f32 to vector<32x256xf32>
    %155 = arith.mulf %154, %153 : vector<32x256xf32>
    %cst_48 = arith.constant 0.707106769 : f32
    %156 = vector.broadcast %cst_48 : f32 to vector<32x256xf32>
    %157 = arith.mulf %153, %156 : vector<32x256xf32>
    %cst_49 = arith.constant 0.000000e+00 : f32
    %158 = vector.broadcast %cst_49 : f32 to vector<32x256xf32>
    %159 = arith.cmpf oge, %157, %158 : vector<32x256xf32>
    %cst_50 = arith.constant 1.000000e+00 : f32
    %cst_51 = arith.constant -1.000000e+00 : f32
    %160 = vector.broadcast %cst_50 : f32 to vector<32x256xf32>
    %161 = vector.broadcast %cst_51 : f32 to vector<32x256xf32>
    %162 = arith.select %159, %160, %161 : vector<32x256xi1>, vector<32x256xf32>
    %163 = math.absf %157 : vector<32x256xf32>
    %cst_52 = arith.constant 0.327591091 : f32
    %164 = vector.broadcast %cst_52 : f32 to vector<32x256xf32>
    %165 = arith.mulf %164, %163 : vector<32x256xf32>
    %cst_53 = arith.constant 1.000000e+00 : f32
    %166 = vector.broadcast %cst_53 : f32 to vector<32x256xf32>
    %167 = arith.addf %166, %165 : vector<32x256xf32>
    %168 = tpu.reciprocal %167 : vector<32x256xf32> -> vector<32x256xf32>
    %cst_54 = arith.constant 1.06140542 : f32
    %169 = vector.broadcast %cst_54 : f32 to vector<32x256xf32>
    %170 = arith.mulf %168, %169 : vector<32x256xf32>
    %cst_55 = arith.constant -1.45315206 : f32
    %171 = vector.broadcast %cst_55 : f32 to vector<32x256xf32>
    %172 = arith.addf %171, %170 : vector<32x256xf32>
    %173 = arith.mulf %168, %172 : vector<32x256xf32>
    %cst_56 = arith.constant 1.42141378 : f32
    %174 = vector.broadcast %cst_56 : f32 to vector<32x256xf32>
    %175 = arith.addf %174, %173 : vector<32x256xf32>
    %176 = arith.mulf %168, %175 : vector<32x256xf32>
    %cst_57 = arith.constant -0.284496725 : f32
    %177 = vector.broadcast %cst_57 : f32 to vector<32x256xf32>
    %178 = arith.addf %177, %176 : vector<32x256xf32>
    %179 = arith.mulf %168, %178 : vector<32x256xf32>
    %cst_58 = arith.constant 0.254829586 : f32
    %180 = vector.broadcast %cst_58 : f32 to vector<32x256xf32>
    %181 = arith.addf %180, %179 : vector<32x256xf32>
    %182 = arith.mulf %168, %181 : vector<32x256xf32>
    %cst_59 = arith.constant 0.000000e+00 : f32
    %183 = vector.broadcast %cst_59 : f32 to vector<32x256xf32>
    %184 = arith.subf %183, %163 : vector<32x256xf32>
    %185 = arith.mulf %184, %163 : vector<32x256xf32>
    %186 = math.exp %185 : vector<32x256xf32>
    %187 = arith.mulf %182, %186 : vector<32x256xf32>
    %cst_60 = arith.constant 1.000000e+00 : f32
    %188 = vector.broadcast %cst_60 : f32 to vector<32x256xf32>
    %189 = arith.subf %188, %187 : vector<32x256xf32>
    %190 = arith.mulf %162, %189 : vector<32x256xf32>
    %cst_61 = arith.constant 1.000000e+00 : f32
    %191 = vector.broadcast %cst_61 : f32 to vector<32x256xf32>
    %192 = arith.addf %191, %190 : vector<32x256xf32>
    %193 = arith.mulf %155, %192 : vector<32x256xf32>
    %c0_62 = arith.constant 0 : index
    %c0_63 = arith.constant 0 : index
    %194 = vector.load %arg9[%c0_62, %c0_63] : memref<256x128xf32, #tpu.memory_space<vmem>>, vector<256x128xf32>
    %cst_64 = arith.constant dense<0.000000e+00> : vector<32x128xf32>
    %195 = tpu.matmul %193, %194, %cst_64 {dimension_numbers = #tpu.dot_dimension_numbers<[1], [0], [0], [1], [0, 0, 1, 1], [], []>} : vector<32x256xf32>, vector<256x128xf32>, vector<32x128xf32> -> vector<32x128xf32>
    %c0_65 = arith.constant 0 : index
    %c0_66 = arith.constant 0 : index
    %196 = vector.load %arg10[%c0_65, %c0_66] : memref<1x128xf32, #tpu.memory_space<vmem>>, vector<1x128xf32>
    %197 = vector.broadcast %196 : vector<1x128xf32> to vector<32x128xf32>
    %198 = arith.addf %195, %197 : vector<32x128xf32>
    %199 = vector.shape_cast %198 : vector<32x128xf32> to vector<2x16x128xf32>
    %cst_67 = arith.constant 1.000000e+00 : f32
    %200 = vector.broadcast %cst_67 : f32 to vector<2x1x128xf32>
    %201 = arith.addf %200, %7 : vector<2x1x128xf32>
    %202 = vector.broadcast %201 : vector<2x1x128xf32> to vector<2x16x128xf32>
    %203 = arith.mulf %199, %202 : vector<2x16x128xf32>
    %204 = vector.broadcast %6 : vector<2x1x128xf32> to vector<2x16x128xf32>
    %205 = arith.addf %203, %204 : vector<2x16x128xf32>
    %206 = vector.broadcast %5 : vector<2x1x128xf32> to vector<2x16x128xf32>
    %207 = arith.mulf %206, %205 : vector<2x16x128xf32>
    %208 = arith.addf %199, %207 : vector<2x16x128xf32>
    %209 = arith.addf %129, %208 : vector<2x16x128xf32>
    %c0_68 = arith.constant 0 : index
    %c0_69 = arith.constant 0 : index
    %c0_70 = arith.constant 0 : index
    %210 = vector.load %arg11[%c0_68, %c0_69, %c0_70] : memref<2x16x128xf32, #tpu.memory_space<vmem>>, vector<2x16x128xf32>
    tpu.vector_store %arg11[%c0_68, %c0_69, %c0_70], %209 {strides = array<i32>} : memref<2x16x128xf32, #tpu.memory_space<vmem>>, vector<2x16x128xf32>,
    return
  }
  func.func @transform_0(%arg0: i32) -> (i32, i32, i32) {
    %c0_i32 = arith.constant 0 : i32
    %c0_i32_0 = arith.constant 0 : i32
    %c0_i32_1 = arith.constant 0 : i32
    return %arg0, %c0_i32, %c0_i32_0 : i32, i32, i32
  }
  func.func @transform_1(%arg0: i32) -> (i32, i32, i32) {
    %c0_i32 = arith.constant 0 : i32
    %c0_i32_0 = arith.constant 0 : i32
    %c0_i32_1 = arith.constant 0 : i32
    return %arg0, %c0_i32, %c0_i32_0 : i32, i32, i32
  }
  func.func @transform_2(%arg0: i32) -> (i32, i32) {
    %c0_i32 = arith.constant 0 : i32
    %c0_i32_0 = arith.constant 0 : i32
    %c0_i32_1 = arith.constant 0 : i32
    return %c0_i32, %c0_i32_0 : i32, i32
  }
  func.func @transform_3(%arg0: i32) -> (i32, i32) {
    %c0_i32 = arith.constant 0 : i32
    %c0_i32_0 = arith.constant 0 : i32
    %c0_i32_1 = arith.constant 0 : i32
    return %c0_i32, %c0_i32_0 : i32, i32
  }
  func.func @transform_4(%arg0: i32) -> (i32, i32) {
    %c0_i32 = arith.constant 0 : i32
    %c0_i32_0 = arith.constant 0 : i32
    %c0_i32_1 = arith.constant 0 : i32
    return %c0_i32, %c0_i32_0 : i32, i32
  }
  func.func @transform_5(%arg0: i32) -> (i32, i32) {
    %c0_i32 = arith.constant 0 : i32
    %c0_i32_0 = arith.constant 0 : i32
    %c0_i32_1 = arith.constant 0 : i32
    return %c0_i32, %c0_i32_0 : i32, i32
  }
  func.func @transform_6(%arg0: i32) -> (i32, i32) {
    %c0_i32 = arith.constant 0 : i32
    %c0_i32_0 = arith.constant 0 : i32
    %c0_i32_1 = arith.constant 0 : i32
    return %c0_i32, %c0_i32_0 : i32, i32
  }
  func.func @transform_7(%arg0: i32) -> (i32, i32) {
    %c0_i32 = arith.constant 0 : i32
    %c0_i32_0 = arith.constant 0 : i32
    %c0_i32_1 = arith.constant 0 : i32
    return %c0_i32, %c0_i32_0 : i32, i32
  }
  func.func @transform_8(%arg0: i32) -> (i32, i32) {
    %c0_i32 = arith.constant 0 : i32
    %c0_i32_0 = arith.constant 0 : i32
    %c0_i32_1 = arith.constant 0 : i32
    return %c0_i32, %c0_i32_0 : i32, i32
  }
  func.func @transform_9(%arg0: i32) -> (i32, i32) {
    %c0_i32 = arith.constant 0 : i32
    %c0_i32_0 = arith.constant 0 : i32
    %c0_i32_1 = arith.constant 0 : i32
    return %c0_i32, %c0_i32_0 : i32, i32
  }
  func.func @transform_10(%arg0: i32) -> (i32, i32, i32) {
    %c0_i32 = arith.constant 0 : i32
    %c0_i32_0 = arith.constant 0 : i32
    %c0_i32_1 = arith.constant 0 : i32
    return %arg0, %c0_i32, %c0_i32_0 : i32, i32, i32
  }
}

</mosaic_0001>

<llo_original>
// kernel: tpu_custom_call.1
$region0: #{tpu_custom_call.1}
  #allocation0 [shape = 'u32[]', space=smem, size = 0x4, offset = 0x4, fixed_abs, tag = 'smem constant byte address 0x4 - core index']
  #allocation1 [shape = 'u32[144,128]{1,0:T(1,128)}', space=vmem, size = 0x12000, scoped, tag = 'internal scratch']
  %s0 = inlined_call_operand.hbm [shape: f32[2,16,128], index: 0, kind: input, shape index: {}]
  %s1 = inlined_call_operand.hbm [shape: f32[2,8,128], index: 1, kind: input, shape index: {}]
  %s2 = inlined_call_operand.hbm [shape: f32[128,384], index: 2, kind: input, shape index: {}]
  %s3 = inlined_call_operand.vmem [shape: f32[1,384], index: 3, kind: input, shape index: {}]
  %s4 = inlined_call_operand.hbm [shape: f32[128,128], index: 4, kind: input, shape index: {}]
  %s5 = inlined_call_operand.vmem [shape: f32[1,128], index: 5, kind: input, shape index: {}]
  %s6 = inlined_call_operand.hbm [shape: f32[128,256], index: 6, kind: input, shape index: {}]
  %s7 = inlined_call_operand.vmem [shape: f32[1,256], index: 7, kind: input, shape index: {}]
  %s8 = inlined_call_operand.hbm [shape: f32[256,128], index: 8, kind: input, shape index: {}]
  %s9 = inlined_call_operand.vmem [shape: f32[1,128], index: 9, kind: input, shape index: {}]
  %s10 = inlined_call_operand.hbm [shape: f32[2,16,128], index: 10, kind: output, shape index: {}]
  %s11 = sld [smem:[#allocation0]]
  $region74: #{tpu_custom_call.1} parent=0
    _
  %s13 = ssub.s32 1, %s11
  %s14 = scalar_select 0, %s13, %s11
  $region1: #{tpu_custom_call.1} parent=0
    #allocation2 [shape = 'u8[16384]{0}', space=vmem, size = 0x4000, scoped, tag = 'input window, operand 0, single buffered']
    #allocation3 [shape = 's32[1]{0}', space=sflag, size = 0x4, scoped, tag = 'scoped memory for tpu_custom_call.1']
    #allocation4 [shape = 's32[1]{0}', space=sflag, size = 0x4, scoped, tag = 'scoped memory for tpu_custom_call.1']
    #allocation5 [shape = 'u8[8192]{0}', space=vmem, size = 0x2000, scoped, tag = 'input window, operand 1, single buffered']
    #allocation6 [shape = 's32[1]{0}', space=sflag, size = 0x4, scoped, tag = 'scoped memory for tpu_custom_call.1']
    #allocation7 [shape = 'u8[196608]{0}', space=vmem, size = 0x30000, scoped, tag = 'input window, operand 2, single buffered']
    #allocation8 [shape = 'u8[65536]{0}', space=vmem, size = 0x10000, scoped, tag = 'input window, operand 4, single buffered']
    #allocation9 [shape = 's32[1]{0}', space=sflag, size = 0x4, scoped, tag = 'scoped memory for tpu_custom_call.1']
    #allocation10 [shape = 'u8[131072]{0}', space=vmem, size = 0x20000, scoped, tag = 'input window, operand 6, single buffered']
    #allocation11 [shape = 'u8[131072]{0}', space=vmem, size = 0x20000, scoped, tag = 'input window, operand 8, single buffered']
    #allocation12 [shape = 's32[1]{0}', space=sflag, size = 0x4, scoped, tag = 'scoped memory for tpu_custom_call.1']
    #allocation13 [shape = 'u8[16384]{0}', space=vmem, size = 0x4000, scoped, tag = 'output window, operand 0, single buffered']
    %15 = vsyncpa [#allocation3], 0
    %16 = vsyncpa [#allocation6], 0
    %17 = vsyncpa [#allocation9], 0
    %18 = vsyncpa [#allocation12], 0
    %19 = vsyncpa [#allocation4], 0
    // Predicated region
    $region2: #{tpu_custom_call.1} parent=1 // pred_check
      _
    $region3: #{tpu_custom_call.1} parent=1 // pred_check_branch
      %21 = sbr.rel (0) target = $region5
    $region4: #{tpu_custom_call.1} parent=1 // pred_region
      %s23 = ssub.s32 512, 512
      %24 = vsyncadd [#allocation3], %s23
      %s25 = sshll.u32 [#allocation2], 4
      %s26 = int_to_ptr.vmem [resolvable:$true] %s25
      %31 = dma.hbm_to_vmem [thread:$0]  %s0, 512, %s26, [#allocation3], 128, 128, 8
    $region5: #{tpu_custom_call.1} parent=1 // pred_fallthru
      _
    // Predicated region
    $region6: #{tpu_custom_call.1} parent=1 // pred_check
      _
    $region7: #{tpu_custom_call.1} parent=1 // pred_check_branch
      %33 = sbr.rel (0) target = $region9
    $region8: #{tpu_custom_call.1} parent=1 // pred_region
      %s35 = ssub.s32 256, 256
      %36 = vsyncadd [#allocation6], %s35
      %s37 = sshll.u32 [#allocation5], 4
      %s38 = int_to_ptr.vmem [resolvable:$true] %s37
      %43 = dma.hbm_to_vmem [thread:$0]  %s1, 256, %s38, [#allocation6], 128, 128, 8
    $region9: #{tpu_custom_call.1} parent=1 // pred_fallthru
      _
    // Predicated region
    $region10: #{tpu_custom_call.1} parent=1 // pred_check
      _
    $region11: #{tpu_custom_call.1} parent=1 // pred_check_branch
      %45 = sbr.rel (0) target = $region13
    $region12: #{tpu_custom_call.1} parent=1 // pred_region
      %s47 = ssub.s32 6144, 6144
      %48 = vsyncadd [#allocation6], %s47
      %s49 = sshll.u32 [#allocation7], 4
      %s50 = int_to_ptr.vmem [resolvable:$true] %s49
      %55 = dma.hbm_to_vmem [thread:$0]  %s2, 6144, %s50, [#allocation6], 384, 384, 24
    $region13: #{tpu_custom_call.1} parent=1 // pred_fallthru
      _
    // Predicated region
    $region14: #{tpu_custom_call.1} parent=1 // pred_check
      _
    $region15: #{tpu_custom_call.1} parent=1 // pred_check_branch
      %57 = sbr.rel (0) target = $region17
    $region16: #{tpu_custom_call.1} parent=1 // pred_region
      _
    $region17: #{tpu_custom_call.1} parent=1 // pred_fallthru
      _
    // Predicated region
    $region18: #{tpu_custom_call.1} parent=1 // pred_check
      _
    $region19: #{tpu_custom_call.1} parent=1 // pred_check_branch
      %59 = sbr.rel (0) target = $region21
    $region20: #{tpu_custom_call.1} parent=1 // pred_region
      %s61 = ssub.s32 2048, 2048
      %62 = vsyncadd [#allocation9], %s61
      %s63 = sshll.u32 [#allocation8], 4
      %s64 = int_to_ptr.vmem [resolvable:$true] %s63
      %69 = dma.hbm_to_vmem [thread:$0]  %s4, 2048, %s64, [#allocation9], 128, 128, 8
    $region21: #{tpu_custom_call.1} parent=1 // pred_fallthru
      _
    // Predicated region
    $region22: #{tpu_custom_call.1} parent=1 // pred_check
      _
    $region23: #{tpu_custom_call.1} parent=1 // pred_check_branch
      %71 = sbr.rel (0) target = $region25
    $region24: #{tpu_custom_call.1} parent=1 // pred_region
      _
    $region25: #{tpu_custom_call.1} parent=1 // pred_fallthru
      _
    // Predicated region
    $region26: #{tpu_custom_call.1} parent=1 // pred_check
      _
    $region27: #{tpu_custom_call.1} parent=1 // pred_check_branch
      %73 = sbr.rel (0) target = $region29
    $region28: #{tpu_custom_call.1} parent=1 // pred_region
      %s75 = ssub.s32 4096, 4096
      %76 = vsyncadd [#allocation9], %s75
      %s77 = sshll.u32 [#allocation10], 4
      %s78 = int_to_ptr.vmem [resolvable:$true] %s77
      %83 = dma.hbm_to_vmem [thread:$0]  %s6, 4096, %s78, [#allocation9], 256, 256, 16
    $region29: #{tpu_custom_call.1} parent=1 // pred_fallthru
      _
    // Predicated region
    $region30: #{tpu_custom_call.1} parent=1 // pred_check
      _
    $region31: #{tpu_custom_call.1} parent=1 // pred_check_branch
      %85 = sbr.rel (0) target = $region33
    $region32: #{tpu_custom_call.1} parent=1 // pred_region
      _
    $region33: #{tpu_custom_call.1} parent=1 // pred_fallthru
      _
    // Predicated region
    $region34: #{tpu_custom_call.1} parent=1 // pred_check
      _
    $region35: #{tpu_custom_call.1} parent=1 // pred_check_branch
      %87 = sbr.rel (0) target = $region37
    $region36: #{tpu_custom_call.1} parent=1 // pred_region
      %s89 = ssub.s32 4096, 4096
      %90 = vsyncadd [#allocation12], %s89
      %s91 = sshll.u32 [#allocation11], 4
      %s92 = int_to_ptr.vmem [resolvable:$true] %s91
      %97 = dma.hbm_to_vmem [thread:$0]  %s8, 4096, %s92, [#allocation12], 128, 128, 8
    $region37: #{tpu_custom_call.1} parent=1 // pred_fallthru
      _
    // Predicated region
    $region38: #{tpu_custom_call.1} parent=1 // pred_check
      _
    $region39: #{tpu_custom_call.1} parent=1 // pred_check_branch
      %99 = sbr.rel (0) target = $region41
    $region40: #{tpu_custom_call.1} parent=1 // pred_region
      _
    $region41: #{tpu_custom_call.1} parent=1 // pred_fallthru
      _
    // Predicated region
    $region42: #{tpu_custom_call.1} parent=1 // pred_check
      _
    $region43: #{tpu_custom_call.1} parent=1 // pred_check_branch
      %101 = sbr.rel (0) target = $region45
    $region44: #{tpu_custom_call.1} parent=1 // pred_region
      %102 = dma.done [#allocation3], 512
    $region45: #{tpu_custom_call.1} parent=1 // pred_fallthru
      _
    // Predicated region
    $region46: #{tpu_custom_call.1} parent=1 // pred_check
      _
    $region47: #{tpu_custom_call.1} parent=1 // pred_check_branch
      %104 = sbr.rel (0) target = $region49
    $region48: #{tpu_custom_call.1} parent=1 // pred_region
      %105 = dma.done [#allocation6], 256
    $region49: #{tpu_custom_call.1} parent=1 // pred_fallthru
      _
    // Predicated region
    $region50: #{tpu_custom_call.1} parent=1 // pred_check
      _
    $region51: #{tpu_custom_call.1} parent=1 // pred_check_branch
      %107 = sbr.rel (0) target = $region53
    $region52: #{tpu_custom_call.1} parent=1 // pred_region
      %108 = dma.done [#allocation6], 6144
    $region53: #{tpu_custom_call.1} parent=1 // pred_fallthru
      _
    // Predicated region
    $region54: #{tpu_custom_call.1} parent=1 // pred_check
      _
    $region55: #{tpu_custom_call.1} parent=1 // pred_check_branch
      %110 = sbr.rel (0) target = $region57
    $region56: #{tpu_custom_call.1} parent=1 // pred_region
      %111 = dma.done [#allocation9], 2048
    $region57: #{tpu_custom_call.1} parent=1 // pred_fallthru
      _
    // Predicated region
    $region58: #{tpu_custom_call.1} parent=1 // pred_check
      _
    $region59: #{tpu_custom_call.1} parent=1 // pred_check_branch
      %113 = sbr.rel (0) target = $region61
    $region60: #{tpu_custom_call.1} parent=1 // pred_region
      %114 = dma.done [#allocation9], 4096
    $region61: #{tpu_custom_call.1} parent=1 // pred_fallthru
      _
    // Predicated region
    $region62: #{tpu_custom_call.1} parent=1 // pred_check
      _
    $region63: #{tpu_custom_call.1} parent=1 // pred_check_branch
      %116 = sbr.rel (0) target = $region65
    $region64: #{tpu_custom_call.1} parent=1 // pred_region
      %117 = dma.done [#allocation12], 4096
    $region65: #{tpu_custom_call.1} parent=1 // pred_fallthru
      _
    %v118 = vld [vmem:[#allocation2] sm:$0xff]
    %v119 = vld [vmem:[#allocation2 + $0x8] sm:$0xff]
    %v120 = vld [vmem:[#allocation2 + $0x10] sm:$0xff]
    %v121 = vld [vmem:[#allocation2 + $0x18] sm:$0xff]
    %v122 = vld [vmem:[#allocation5] sm:$0xff]
    %v123 = vld [vmem:[#allocation5 + $0x8] sm:$0xff]
    %124 = vadd.xlane.f32.xlu0 %v118
    %v125 = vpop.xlane.xlu0 %124
    %126 = vadd.xlane.f32.xlu0 %v119
    %v127 = vpop.xlane.xlu0 %126
    %128 = vadd.xlane.f32.xlu0 %v120
    %v129 = vpop.xlane.xlu0 %128
    %130 = vadd.xlane.f32.xlu0 %v121
    %v131 = vpop.xlane.xlu0 %130
    %v132 = vrcp.pop 128.0
    %v133 = vmul.f32 %v125, %v132
    %v134 = vmul.f32 %v127, %v132
    %v135 = vmul.f32 %v129, %v132
    %v136 = vmul.f32 %v131, %v132
    %v137 = vsub.f32 %v118, %v133
    %v138 = vsub.f32 %v119, %v134
    %v139 = vsub.f32 %v120, %v135
    %v140 = vsub.f32 %v121, %v136
    %v141 = vmul.f32 %v137, %v137
    %v142 = vmul.f32 %v138, %v138
    %v143 = vmul.f32 %v139, %v139
    %v144 = vmul.f32 %v140, %v140
    %145 = vadd.xlane.f32.xlu0 %v141
    %v146 = vpop.xlane.xlu0 %145
    %147 = vadd.xlane.f32.xlu0 %v142
    %v148 = vpop.xlane.xlu0 %147
    %149 = vadd.xlane.f32.xlu0 %v143
    %v150 = vpop.xlane.xlu0 %149
    %151 = vadd.xlane.f32.xlu0 %v144
    %v152 = vpop.xlane.xlu0 %151
    %v153 = vmul.f32 %v146, %v132
    %v154 = vmul.f32 %v148, %v132
    %v155 = vmul.f32 %v150, %v132
    %v156 = vmul.f32 %v152, %v132
    %v157 = vadd.f32 %v153, 1e-06
    %v158 = vadd.f32 %v154, 1e-06
    %v159 = vadd.f32 %v155, 1e-06
    %v160 = vadd.f32 %v156, 1e-06
    %v161 = vrsqrt.pop %v157
    %v162 = vrsqrt.pop %v158
    %v163 = vrsqrt.pop %v159
    %v164 = vrsqrt.pop %v160
    %v165 = vmul.f32 %v137, %v161
    %v166 = vmul.f32 %v138, %v162
    %v167 = vmul.f32 %v139, %v163
    %v168 = vmul.f32 %v140, %v164
    %v169 = vld [vmem:[#allocation7] sm:$0xff]
    %v170 = vld [vmem:[#allocation7 + $0x8] sm:$0xff]
    %v171 = vld [vmem:[#allocation7 + $0x10] sm:$0xff]
    %v172 = vld [vmem:[#allocation7 + $0x18] sm:$0xff]
    %v173 = vld [vmem:[#allocation7 + $0x20] sm:$0xff]
    %v174 = vld [vmem:[#allocation7 + $0x28] sm:$0xff]
    %v175 = vld [vmem:[#allocation7 + $0x30] sm:$0xff]
    %v176 = vld [vmem:[#allocation7 + $0x38] sm:$0xff]
    %v177 = vld [vmem:[#allocation7 + $0x40] sm:$0xff]
    %v178 = vld [vmem:[#allocation7 + $0x48] sm:$0xff]
    %v179 = vld [vmem:[#allocation7 + $0x50] sm:$0xff]
    %v180 = vld [vmem:[#allocation7 + $0x58] sm:$0xff]
    %v181 = vld [vmem:[#allocation7 + $0x60] sm:$0xff]
    %v182 = vld [vmem:[#allocation7 + $0x68] sm:$0xff]
    %v183 = vld [vmem:[#allocation7 + $0x70] sm:$0xff]
    %v184 = vld [vmem:[#allocation7 + $0x78] sm:$0xff]
    %v185 = vld [vmem:[#allocation7 + $0x80] sm:$0xff]
    %v186 = vld [vmem:[#allocation7 + $0x88] sm:$0xff]
    %v187 = vld [vmem:[#allocation7 + $0x90] sm:$0xff]
    %v188 = vld [vmem:[#allocation7 + $0x98] sm:$0xff]
    %v189 = vld [vmem:[#allocation7 + $0xa0] sm:$0xff]
    %v190 = vld [vmem:[#allocation7 + $0xa8] sm:$0xff]
    %v191 = vld [vmem:[#allocation7 + $0xb0] sm:$0xff]
    %v192 = vld [vmem:[#allocation7 + $0xb8] sm:$0xff]
    %v193 = vld [vmem:[#allocation7 + $0xc0] sm:$0xff]
    %v194 = vld [vmem:[#allocation7 + $0xc8] sm:$0xff]
    %v195 = vld [vmem:[#allocation7 + $0xd0] sm:$0xff]
    %v196 = vld [vmem:[#allocation7 + $0xd8] sm:$0xff]
    %v197 = vld [vmem:[#allocation7 + $0xe0] sm:$0xff]
    %v198 = vld [vmem:[#allocation7 + $0xe8] sm:$0xff]
    %v199 = vld [vmem:[#allocation7 + $0xf0] sm:$0xff]
    %v200 = vld [vmem:[#allocation7 + $0xf8] sm:$0xff]
    %v201 = vld [vmem:[#allocation7 + $0x100] sm:$0xff]
    %v202 = vld [vmem:[#allocation7 + $0x108] sm:$0xff]
    %v203 = vld [vmem:[#allocation7 + $0x110] sm:$0xff]
    %v204 = vld [vmem:[#allocation7 + $0x118] sm:$0xff]
    %v205 = vld [vmem:[#allocation7 + $0x120] sm:$0xff]
    %v206 = vld [vmem:[#allocation7 + $0x128] sm:$0xff]
    %v207 = vld [vmem:[#allocation7 + $0x130] sm:$0xff]
    %v208 = vld [vmem:[#allocation7 + $0x138] sm:$0xff]
    %v209 = vld [vmem:[#allocation7 + $0x140] sm:$0xff]
    %v210 = vld [vmem:[#allocation7 + $0x148] sm:$0xff]
    %v211 = vld [vmem:[#allocation7 + $0x150] sm:$0xff]
    %v212 = vld [vmem:[#allocation7 + $0x158] sm:$0xff]
    %v213 = vld [vmem:[#allocation7 + $0x160] sm:$0xff]
    %v214 = vld [vmem:[#allocation7 + $0x168] sm:$0xff]
    %v215 = vld [vmem:[#allocation7 + $0x170] sm:$0xff]
    %v216 = vld [vmem:[#allocation7 + $0x178] sm:$0xff]
    %v217 = vld [vmem:[%s3] sm:$0x7]
    %v219 = vlaneseq
    %v220 = vshrl.u32 %v219, 7
    %v221 = vsub.s32 0, %v220
    %v222 = vrot.slane %v217, %v221
    %v223 = vlaneseq
    %v224 = vshrl.u32 %v223, 7
    %v225 = vsub.s32 1, %v224
    %v226 = vrot.slane %v217, %v225
    %v227 = vlaneseq
    %v228 = vshrl.u32 %v227, 7
    %v229 = vsub.s32 2, %v228
    %v230 = vrot.slane %v217, %v229
    %234 = vmatprep.subr.mxu0 %v170
    %235 = vmatpush1.msra.mxu0 %v169
    %236 = vmatprep.subr.mxu0 %v173
    %237 = vmatpush1.msra.mxu0 %v172
    %238 = vmatprep.subr.mxu0 %v176
    %239 = vmatpush1.msra.mxu0 %v175
    %240 = vmatprep.subr.mxu0 %v179
    %241 = vmatpush1.msra.mxu0 %v178
    %242 = vmatprep.subr.mxu0 %v182
    %243 = vmatpush1.msra.mxu0 %v181
    %244 = vmatprep.subr.mxu0 %v185
    %245 = vmatpush1.msra.mxu0 %v184
    %246 = vmatprep.subr.mxu0 %v188
    %247 = vmatpush1.msra.mxu0 %v187
    %248 = vmatprep.subr.mxu0 %v191
    %249 = vmatpush1.msra.mxu0 %v190
    %250 = vmatprep.subr.mxu0 %v194
    %251 = vmatpush1.msra.mxu0 %v193
    %252 = vmatprep.subr.mxu0 %v197
    %253 = vmatpush1.msra.mxu0 %v196
    %254 = vmatprep.subr.mxu0 %v200
    %255 = vmatpush1.msra.mxu0 %v199
    %256 = vmatprep.subr.mxu0 %v203
    %257 = vmatpush1.msra.mxu0 %v202
    %258 = vmatprep.subr.mxu0 %v206
    %259 = vmatpush1.msra.mxu0 %v205
    %260 = vmatprep.subr.mxu0 %v209
    %261 = vmatpush1.msra.mxu0 %v208
    %262 = vmatprep.subr.mxu0 %v212
    %263 = vmatpush1.msra.mxu0 %v211
    %264 = vmatprep.subr.mxu0 %v215
    %265 = vmatpush1.msra.mxu0 %v214
    %266 = vmatprep.subr.mxu0 0.0
    %267 = vmatpush1.msra.mxu0 0.0
    %268 = vmatprep.subr.mxu0 0.0
    %269 = vmatpush1.msra.mxu0 0.0
    %270 = vmatprep.subr.mxu0 0.0
    %271 = vmatpush1.msra.mxu0 0.0
    %272 = vmatprep.subr.mxu0 0.0
    %273 = vmatpush1.msra.mxu0 0.0
    %274 = vmatprep.subr.mxu0 0.0
    %275 = vmatpush1.msra.mxu0 0.0
    %276 = vmatprep.subr.mxu0 0.0
    %277 = vmatpush1.msra.mxu0 0.0
    %278 = vmatprep.subr.mxu0 0.0
    %279 = vmatpush1.msra.mxu0 0.0
    %280 = vmatprep.subr.mxu0 0.0
    %281 = vmatpush1.msra.mxu0 0.0
    %282 = vmatprep.subr.mxu0 0.0
    %283 = vmatpush1.msra.mxu0 0.0
    %284 = vmatprep.subr.mxu0 0.0
    %285 = vmatpush1.msra.mxu0 0.0
    %286 = vmatprep.subr.mxu0 0.0
    %287 = vmatpush1.msra.mxu0 0.0
    %288 = vmatprep.subr.mxu0 0.0
    %289 = vmatpush1.msra.mxu0 0.0
    %290 = vmatprep.subr.mxu0 0.0
    %291 = vmatpush1.msra.mxu0 0.0
    %292 = vmatprep.subr.mxu0 0.0
    %293 = vmatpush1.msra.mxu0 0.0
    %294 = vmatprep.subr.mxu0 0.0
    %295 = vmatpush1.msra.mxu0 0.0
    %296 = vmatprep.subr.mxu0 0.0
    %297 = vmatpush1.msra.mxu0 0.0
    %298 = vmatprep.mubr.f32.mxu0 0.0
    %299 = vmatmul.mubr.f32.gmra.mrb[0].mxu0 %v165
    %v300 = vpop.f32.mrb[0].mxu0
    %v301 = vadd.f32 %v222, %v300
    %v302 = vpop.f32.mrb[0].mxu0
    %v303 = vadd.f32 %v226, %v302
    %304 = vmatprep.mubr.f32.mxu0 0.0
    %305 = vmatmul.mubr.f32.gmra.mrb[0].mxu0 %v166
    %v306 = vpop.f32.mrb[0].mxu0
    %v307 = vadd.f32 %v222, %v306
    %v308 = vpop.f32.mrb[0].mxu0
    %v309 = vadd.f32 %v226, %v308
    %310 = vmatprep.mubr.f32.mxu0 0.0
    %311 = vmatmul.mubr.f32.gmra.mrb[0].mxu0 %v167
    %v312 = vpop.f32.mrb[0].mxu0
    %v313 = vadd.f32 %v222, %v312
    %v314 = vpop.f32.mrb[0].mxu0
    %v315 = vadd.f32 %v226, %v314
    %316 = vmatprep.mubr.f32.mxu0 0.0
    %317 = vmatmul.mubr.f32.gmra.mrb[0].mxu0 %v168
    %v318 = vpop.f32.mrb[0].mxu0
    %v319 = vadd.f32 %v222, %v318
    %v320 = vpop.f32.mrb[0].mxu0
    %v321 = vadd.f32 %v226, %v320
    %322 = vdwg.mxu0
    %323 = vmatprep.subr.mxu0 0.0
    %324 = vmatpush1.msra.mxu0 %v171
    %325 = vmatprep.subr.mxu0 0.0
    %326 = vmatpush1.msra.mxu0 %v174
    %327 = vmatprep.subr.mxu0 0.0
    %328 = vmatpush1.msra.mxu0 %v177
    %329 = vmatprep.subr.mxu0 0.0
    %330 = vmatpush1.msra.mxu0 %v180
    %331 = vmatprep.subr.mxu0 0.0
    %332 = vmatpush1.msra.mxu0 %v183
    %333 = vmatprep.subr.mxu0 0.0
    %334 = vmatpush1.msra.mxu0 %v186
    %335 = vmatprep.subr.mxu0 0.0
    %336 = vmatpush1.msra.mxu0 %v189
    %337 = vmatprep.subr.mxu0 0.0
    %338 = vmatpush1.msra.mxu0 %v192
    %339 = vmatprep.subr.mxu0 0.0
    %340 = vmatpush1.msra.mxu0 %v195
    %341 = vmatprep.subr.mxu0 0.0
    %342 = vmatpush1.msra.mxu0 %v198
    %343 = vmatprep.subr.mxu0 0.0
    %344 = vmatpush1.msra.mxu0 %v201
    %345 = vmatprep.subr.mxu0 0.0
    %346 = vmatpush1.msra.mxu0 %v204
    %347 = vmatprep.subr.mxu0 0.0
    %348 = vmatpush1.msra.mxu0 %v207
    %349 = vmatprep.subr.mxu0 0.0
    %350 = vmatpush1.msra.mxu0 %v210
    %351 = vmatprep.subr.mxu0 0.0
    %352 = vmatpush1.msra.mxu0 %v213
    %353 = vmatprep.subr.mxu0 0.0
    %354 = vmatpush1.msra.mxu0 %v216
    %355 = vmatprep.subr.mxu0 0.0
    %356 = vmatpush1.msra.mxu0 0.0
    %357 = vmatprep.subr.mxu0 0.0
    %358 = vmatpush1.msra.mxu0 0.0
    %359 = vmatprep.subr.mxu0 0.0
    %360 = vmatpush1.msra.mxu0 0.0
    %361 = vmatprep.subr.mxu0 0.0
    %362 = vmatpush1.msra.mxu0 0.0
    %363 = vmatprep.subr.mxu0 0.0
    %364 = vmatpush1.msra.mxu0 0.0
    %365 = vmatprep.subr.mxu0 0.0
    %366 = vmatpush1.msra.mxu0 0.0
    %367 = vmatprep.subr.mxu0 0.0
    %368 = vmatpush1.msra.mxu0 0.0
    %369 = vmatprep.subr.mxu0 0.0
    %370 = vmatpush1.msra.mxu0 0.0
    %371 = vmatprep.subr.mxu0 0.0
    %372 = vmatpush1.msra.mxu0 0.0
    %373 = vmatprep.subr.mxu0 0.0
    %374 = vmatpush1.msra.mxu0 0.0
    %375 = vmatprep.subr.mxu0 0.0
    %376 = vmatpush1.msra.mxu0 0.0
    %377 = vmatprep.subr.mxu0 0.0
    %378 = vmatpush1.msra.mxu0 0.0
    %379 = vmatprep.subr.mxu0 0.0
    %380 = vmatpush1.msra.mxu0 0.0
    %381 = vmatprep.subr.mxu0 0.0
    %382 = vmatpush1.msra.mxu0 0.0
    %383 = vmatprep.subr.mxu0 0.0
    %384 = vmatpush1.msra.mxu0 0.0
    %385 = vmatprep.subr.mxu0 0.0
    %386 = vmatpush1.msra.mxu0 0.0
    %387 = vmatprep.mubr.f32.mxu0 0.0
    %388 = vmatmul.mubr.f32.gmra.mrb[0].mxu0 %v165
    %v389 = vpop.f32.mrb[0].mxu0
    %v390 = vadd.f32 %v230, %v389
    %v391 = vpop.f32.mrb[0].mxu0
    %392 = vmatprep.mubr.f32.mxu0 0.0
    %393 = vmatmul.mubr.f32.gmra.mrb[0].mxu0 %v166
    %v394 = vpop.f32.mrb[0].mxu0
    %v395 = vadd.f32 %v230, %v394
    %v396 = vpop.f32.mrb[0].mxu0
    %397 = vmatprep.mubr.f32.mxu0 0.0
    %398 = vmatmul.mubr.f32.gmra.mrb[0].mxu0 %v167
    %v399 = vpop.f32.mrb[0].mxu0
    %v400 = vadd.f32 %v230, %v399
    %v401 = vpop.f32.mrb[0].mxu0
    %402 = vmatprep.mubr.f32.mxu0 0.0
    %403 = vmatmul.mubr.f32.gmra.mrb[0].mxu0 %v168
    %v404 = vpop.f32.mrb[0].mxu0
    %v405 = vadd.f32 %v230, %v404
    %v406 = vpop.f32.mrb[0].mxu0
    %407 = vdwg.mxu0
    %v408 = vmul.f32 %v301, 0.17677669
    %v409 = vmul.f32 %v307, 0.17677669
    %v410 = vmul.f32 %v313, 0.17677669
    %v411 = vmul.f32 %v319, 0.17677669
    %vm412 = vcmask 261120
    %v414 = vsel %vm412, %v408, 0
    %v417 = vsel %vm412, %v409, 0
    %v420 = vsel %vm412, %v303, 0
    %v423 = vsel %vm412, %v309, 0
    %425 = vmatprep.subr.mxu0 0.0
    %426 = vmatpush1.xpose.msra.mxu0 %v420
    %427 = vmatprep.subr.mxu0 0.0
    %428 = vmatpush1.xpose.msra.mxu0 %v423
    %429 = vmatprep.subr.mxu0 0.0
    %430 = vmatpush1.xpose.msra.mxu0 0.0
    %431 = vmatprep.subr.mxu0 0.0
    %432 = vmatpush1.xpose.msra.mxu0 0.0
    %433 = vmatprep.subr.mxu0 0.0
    %434 = vmatpush1.xpose.msra.mxu0 0.0
    %435 = vmatprep.subr.mxu0 0.0
    %436 = vmatpush1.xpose.msra.mxu0 0.0
    %437 = vmatprep.subr.mxu0 0.0
    %438 = vmatpush1.xpose.msra.mxu0 0.0
    %439 = vmatprep.subr.mxu0 0.0
    %440 = vmatpush1.xpose.msra.mxu0 0.0
    %441 = vmatprep.subr.mxu0 0.0
    %442 = vmatpush1.xpose.msra.mxu0 0.0
    %443 = vmatprep.subr.mxu0 0.0
    %444 = vmatpush1.xpose.msra.mxu0 0.0
    %445 = vmatprep.subr.mxu0 0.0
    %446 = vmatpush1.xpose.msra.mxu0 0.0
    %447 = vmatprep.subr.mxu0 0.0
    %448 = vmatpush1.xpose.msra.mxu0 0.0
    %449 = vmatprep.subr.mxu0 0.0
    %450 = vmatpush1.xpose.msra.mxu0 0.0
    %451 = vmatprep.subr.mxu0 0.0
    %452 = vmatpush1.xpose.msra.mxu0 0.0
    %453 = vmatprep.subr.mxu0 0.0
    %454 = vmatpush1.xpose.msra.mxu0 0.0
    %455 = vmatprep.subr.mxu0 0.0
    %456 = vmatpush1.xpose.msra.mxu0 0.0
    %457 = vmatprep.subr.mxu0 0.0
    %458 = vmatpush1.xpose.msra.mxu0 0.0
    %459 = vmatprep.subr.mxu0 0.0
    %460 = vmatpush1.xpose.msra.mxu0 0.0
    %461 = vmatprep.subr.mxu0 0.0
    %462 = vmatpush1.xpose.msra.mxu0 0.0
    %463 = vmatprep.subr.mxu0 0.0
    %464 = vmatpush1.xpose.msra.mxu0 0.0
    %465 = vmatprep.subr.mxu0 0.0
    %466 = vmatpush1.xpose.msra.mxu0 0.0
    %467 = vmatprep.subr.mxu0 0.0
    %468 = vmatpush1.xpose.msra.mxu0 0.0
    %469 = vmatprep.subr.mxu0 0.0
    %470 = vmatpush1.xpose.msra.mxu0 0.0
    %471 = vmatprep.subr.mxu0 0.0
    %472 = vmatpush1.xpose.msra.mxu0 0.0
    %473 = vmatprep.subr.mxu0 0.0
    %474 = vmatpush1.xpose.msra.mxu0 0.0
    %475 = vmatprep.subr.mxu0 0.0
    %476 = vmatpush1.xpose.msra.mxu0 0.0
    %477 = vmatprep.subr.mxu0 0.0
    %478 = vmatpush1.xpose.msra.mxu0 0.0
    %479 = vmatprep.subr.mxu0 0.0
    %480 = vmatpush1.xpose.msra.mxu0 0.0
    %481 = vmatprep.subr.mxu0 0.0
    %482 = vmatpush1.xpose.msra.mxu0 0.0
    %483 = vmatprep.subr.mxu0 0.0
    %484 = vmatpush1.xpose.msra.mxu0 0.0
    %485 = vmatprep.subr.mxu0 0.0
    %486 = vmatpush1.xpose.msra.mxu0 0.0
    %487 = vmatprep.subr.mxu0 0.0
    %488 = vmatpush1.xpose.msra.mxu0 0.0
    %489 = vmatprep.mubr.f32.mxu0 0.0
    %490 = vmatmul.mubr.f32.gmra.mrb[0].mxu0 %v414
    %v491 = vpop.f32.mrb[0].mxu0
    %v492 = vadd.f32 0.0, %v491
    %v493 = vpop.f32.mrb[0].mxu0
    %494 = vmatprep.mubr.f32.mxu0 0.0
    %495 = vmatmul.mubr.f32.gmra.mrb[0].mxu0 %v417
    %v496 = vpop.f32.mrb[0].mxu0
    %v497 = vadd.f32 0.0, %v496
    %v498 = vpop.f32.mrb[0].mxu0
    %499 = vdwg.mxu0
    %v501 = vsel %vm412, %v410, 0
    %v504 = vsel %vm412, %v411, 0
    %v507 = vsel %vm412, %v315, 0
    %v510 = vsel %vm412, %v321, 0
    %512 = vmatprep.subr.mxu0 0.0
    %513 = vmatpush1.xpose.msra.mxu0 %v507
    %514 = vmatprep.subr.mxu0 0.0
    %515 = vmatpush1.xpose.msra.mxu0 %v510
    %516 = vmatprep.subr.mxu0 0.0
    %517 = vmatpush1.xpose.msra.mxu0 0.0
    %518 = vmatprep.subr.mxu0 0.0
    %519 = vmatpush1.xpose.msra.mxu0 0.0
    %520 = vmatprep.subr.mxu0 0.0
    %521 = vmatpush1.xpose.msra.mxu0 0.0
    %522 = vmatprep.subr.mxu0 0.0
    %523 = vmatpush1.xpose.msra.mxu0 0.0
    %524 = vmatprep.subr.mxu0 0.0
    %525 = vmatpush1.xpose.msra.mxu0 0.0
    %526 = vmatprep.subr.mxu0 0.0
    %527 = vmatpush1.xpose.msra.mxu0 0.0
    %528 = vmatprep.subr.mxu0 0.0
    %529 = vmatpush1.xpose.msra.mxu0 0.0
    %530 = vmatprep.subr.mxu0 0.0
    %531 = vmatpush1.xpose.msra.mxu0 0.0
    %532 = vmatprep.subr.mxu0 0.0
    %533 = vmatpush1.xpose.msra.mxu0 0.0
    %534 = vmatprep.subr.mxu0 0.0
    %535 = vmatpush1.xpose.msra.mxu0 0.0
    %536 = vmatprep.subr.mxu0 0.0
    %537 = vmatpush1.xpose.msra.mxu0 0.0
    %538 = vmatprep.subr.mxu0 0.0
    %539 = vmatpush1.xpose.msra.mxu0 0.0
    %540 = vmatprep.subr.mxu0 0.0
    %541 = vmatpush1.xpose.msra.mxu0 0.0
    %542 = vmatprep.subr.mxu0 0.0
    %543 = vmatpush1.xpose.msra.mxu0 0.0
    %544 = vmatprep.subr.mxu0 0.0
    %545 = vmatpush1.xpose.msra.mxu0 0.0
    %546 = vmatprep.subr.mxu0 0.0
    %547 = vmatpush1.xpose.msra.mxu0 0.0
    %548 = vmatprep.subr.mxu0 0.0
    %549 = vmatpush1.xpose.msra.mxu0 0.0
    %550 = vmatprep.subr.mxu0 0.0
    %551 = vmatpush1.xpose.msra.mxu0 0.0
    %552 = vmatprep.subr.mxu0 0.0
    %553 = vmatpush1.xpose.msra.mxu0 0.0
    %554 = vmatprep.subr.mxu0 0.0
    %555 = vmatpush1.xpose.msra.mxu0 0.0
    %556 = vmatprep.subr.mxu0 0.0
    %557 = vmatpush1.xpose.msra.mxu0 0.0
    %558 = vmatprep.subr.mxu0 0.0
    %559 = vmatpush1.xpose.msra.mxu0 0.0
    %560 = vmatprep.subr.mxu0 0.0
    %561 = vmatpush1.xpose.msra.mxu0 0.0
    %562 = vmatprep.subr.mxu0 0.0
    %563 = vmatpush1.xpose.msra.mxu0 0.0
    %564 = vmatprep.subr.mxu0 0.0
    %565 = vmatpush1.xpose.msra.mxu0 0.0
    %566 = vmatprep.subr.mxu0 0.0
    %567 = vmatpush1.xpose.msra.mxu0 0.0
    %568 = vmatprep.subr.mxu0 0.0
    %569 = vmatpush1.xpose.msra.mxu0 0.0
    %570 = vmatprep.subr.mxu0 0.0
    %571 = vmatpush1.xpose.msra.mxu0 0.0
    %572 = vmatprep.subr.mxu0 0.0
    %573 = vmatpush1.xpose.msra.mxu0 0.0
    %574 = vmatprep.subr.mxu0 0.0
    %575 = vmatpush1.xpose.msra.mxu0 0.0
    %576 = vmatprep.mubr.f32.mxu0 0.0
    %577 = vmatmul.mubr.f32.gmra.mrb[0].mxu0 %v501
    %v578 = vpop.f32.mrb[0].mxu0
    %v579 = vadd.f32 0.0, %v578
    %v580 = vpop.f32.mrb[0].mxu0
    %581 = vmatprep.mubr.f32.mxu0 0.0
    %582 = vmatmul.mubr.f32.gmra.mrb[0].mxu0 %v504
    %v583 = vpop.f32.mrb[0].mxu0
    %v584 = vadd.f32 0.0, %v583
    %v585 = vpop.f32.mrb[0].mxu0
    %586 = vdwg.mxu0
    %vm587 = vcmask 130048
    %v588 = vsel %vm587, %v492, -inf
    %589 = vmax.xlane.f32.xlu0 %v588
    %v590 = vpop.xlane.xlu0 %589
    %v591 = vsel %vm587, %v497, -inf
    %592 = vmax.xlane.f32.xlu0 %v591
    %v593 = vpop.xlane.xlu0 %592
    %v594 = vsel %vm587, %v579, -inf
    %595 = vmax.xlane.f32.xlu0 %v594
    %v596 = vpop.xlane.xlu0 %595
    %v597 = vsel %vm587, %v584, -inf
    %598 = vmax.xlane.f32.xlu0 %v597
    %v599 = vpop.xlane.xlu0 %598
    %v600 = vsub.f32 %v492, %v590
    %v601 = vsub.f32 %v497, %v593
    %v602 = vsub.f32 %v579, %v596
    %v603 = vsub.f32 %v584, %v599
    %v604 = vmul.f32 %v600, 1.442695
    %v605 = vpow.pop %v604
    %v606 = vmul.f32 %v601, 1.442695
    %v607 = vpow.pop %v606
    %v608 = vmul.f32 %v602, 1.442695
    %v609 = vpow.pop %v608
    %v610 = vmul.f32 %v603, 1.442695
    %v611 = vpow.pop %v610
    %v612 = vsel %vm587, %v605, 0.0
    %613 = vadd.xlane.f32.xlu0 %v612
    %v614 = vpop.xlane.xlu0 %613
    %v615 = vsel %vm587, %v607, 0.0
    %616 = vadd.xlane.f32.xlu0 %v615
    %v617 = vpop.xlane.xlu0 %616
    %v618 = vsel %vm587, %v609, 0.0
    %619 = vadd.xlane.f32.xlu0 %v618
    %v620 = vpop.xlane.xlu0 %619
    %v621 = vsel %vm587, %v611, 0.0
    %622 = vadd.xlane.f32.xlu0 %v621
    %v623 = vpop.xlane.xlu0 %622
    %v624 = vrcp.pop %v614
    %v625 = vrcp.pop %v617
    %v626 = vrcp.pop %v620
    %v627 = vrcp.pop %v623
    %v628 = vmul.f32 %v605, %v624
    %v629 = vmul.f32 %v607, %v625
    %v630 = vmul.f32 %v609, %v626
    %v631 = vmul.f32 %v611, %v627
    %v633 = vsel %vm587, %v628, 0
    %v636 = vsel %vm587, %v629, 0
    %638 = vmatprep.subr.mxu0 0.0
    %639 = vmatpush1.msra.mxu0 %v390
    %640 = vmatprep.subr.mxu0 0.0
    %641 = vmatpush1.msra.mxu0 %v395
    %642 = vmatprep.subr.mxu0 0.0
    %643 = vmatpush1.msra.mxu0 0.0
    %644 = vmatprep.subr.mxu0 0.0
    %645 = vmatpush1.msra.mxu0 0.0
    %646 = vmatprep.subr.mxu0 0.0
    %647 = vmatpush1.msra.mxu0 0.0
    %648 = vmatprep.subr.mxu0 0.0
    %649 = vmatpush1.msra.mxu0 0.0
    %650 = vmatprep.subr.mxu0 0.0
    %651 = vmatpush1.msra.mxu0 0.0
    %652 = vmatprep.subr.mxu0 0.0
    %653 = vmatpush1.msra.mxu0 0.0
    %654 = vmatprep.subr.mxu0 0.0
    %655 = vmatpush1.msra.mxu0 0.0
    %656 = vmatprep.subr.mxu0 0.0
    %657 = vmatpush1.msra.mxu0 0.0
    %658 = vmatprep.subr.mxu0 0.0
    %659 = vmatpush1.msra.mxu0 0.0
    %660 = vmatprep.subr.mxu0 0.0
    %661 = vmatpush1.msra.mxu0 0.0
    %662 = vmatprep.subr.mxu0 0.0
    %663 = vmatpush1.msra.mxu0 0.0
    %664 = vmatprep.subr.mxu0 0.0
    %665 = vmatpush1.msra.mxu0 0.0
    %666 = vmatprep.subr.mxu0 0.0
    %667 = vmatpush1.msra.mxu0 0.0
    %668 = vmatprep.subr.mxu0 0.0
    %669 = vmatpush1.msra.mxu0 0.0
    %670 = vmatprep.subr.mxu0 0.0
    %671 = vmatpush1.msra.mxu0 0.0
    %672 = vmatprep.subr.mxu0 0.0
    %673 = vmatpush1.msra.mxu0 0.0
    %674 = vmatprep.subr.mxu0 0.0
    %675 = vmatpush1.msra.mxu0 0.0
    %676 = vmatprep.subr.mxu0 0.0
    %677 = vmatpush1.msra.mxu0 0.0
    %678 = vmatprep.subr.mxu0 0.0
    %679 = vmatpush1.msra.mxu0 0.0
    %680 = vmatprep.subr.mxu0 0.0
    %681 = vmatpush1.msra.mxu0 0.0
    %682 = vmatprep.subr.mxu0 0.0
    %683 = vmatpush1.msra.mxu0 0.0
    %684 = vmatprep.subr.mxu0 0.0
    %685 = vmatpush1.msra.mxu0 0.0
    %686 = vmatprep.subr.mxu0 0.0
    %687 = vmatpush1.msra.mxu0 0.0
    %688 = vmatprep.subr.mxu0 0.0
    %689 = vmatpush1.msra.mxu0 0.0
    %690 = vmatprep.subr.mxu0 0.0
    %691 = vmatpush1.msra.mxu0 0.0
    %692 = vmatprep.subr.mxu0 0.0
    %693 = vmatpush1.msra.mxu0 0.0
    %694 = vmatprep.subr.mxu0 0.0
    %695 = vmatpush1.msra.mxu0 0.0
    %696 = vmatprep.subr.mxu0 0.0
    %697 = vmatpush1.msra.mxu0 0.0
    %698 = vmatprep.subr.mxu0 0.0
    %699 = vmatpush1.msra.mxu0 0.0
    %700 = vmatprep.subr.mxu0 0.0
    %701 = vmatpush1.msra.mxu0 0.0
    %702 = vmatprep.mubr.f32.mxu0 0.0
    %703 = vmatmul.mubr.f32.gmra.mrb[0].mxu0 %v633
    %v704 = vpop.f32.mrb[0].mxu0
    %v705 = vadd.f32 0.0, %v704
    %v706 = vpop.f32.mrb[0].mxu0
    %707 = vmatprep.mubr.f32.mxu0 0.0
    %708 = vmatmul.mubr.f32.gmra.mrb[0].mxu0 %v636
    %v709 = vpop.f32.mrb[0].mxu0
    %v710 = vadd.f32 0.0, %v709
    %v711 = vpop.f32.mrb[0].mxu0
    %712 = vdwg.mxu0
    %v714 = vsel %vm587, %v630, 0
    %v717 = vsel %vm587, %v631, 0
    %719 = vmatprep.subr.mxu0 0.0
    %720 = vmatpush1.msra.mxu0 %v400
    %721 = vmatprep.subr.mxu0 0.0
    %722 = vmatpush1.msra.mxu0 %v405
    %723 = vmatprep.subr.mxu0 0.0
    %724 = vmatpush1.msra.mxu0 0.0
    %725 = vmatprep.subr.mxu0 0.0
    %726 = vmatpush1.msra.mxu0 0.0
    %727 = vmatprep.subr.mxu0 0.0
    %728 = vmatpush1.msra.mxu0 0.0
    %729 = vmatprep.subr.mxu0 0.0
    %730 = vmatpush1.msra.mxu0 0.0
    %731 = vmatprep.subr.mxu0 0.0
    %732 = vmatpush1.msra.mxu0 0.0
    %733 = vmatprep.subr.mxu0 0.0
    %734 = vmatpush1.msra.mxu0 0.0
    %735 = vmatprep.subr.mxu0 0.0
    %736 = vmatpush1.msra.mxu0 0.0
    %737 = vmatprep.subr.mxu0 0.0
    %738 = vmatpush1.msra.mxu0 0.0
    %739 = vmatprep.subr.mxu0 0.0
    %740 = vmatpush1.msra.mxu0 0.0
    %741 = vmatprep.subr.mxu0 0.0
    %742 = vmatpush1.msra.mxu0 0.0
    %743 = vmatprep.subr.mxu0 0.0
    %744 = vmatpush1.msra.mxu0 0.0
    %745 = vmatprep.subr.mxu0 0.0
    %746 = vmatpush1.msra.mxu0 0.0
    %747 = vmatprep.subr.mxu0 0.0
    %748 = vmatpush1.msra.mxu0 0.0
    %749 = vmatprep.subr.mxu0 0.0
    %750 = vmatpush1.msra.mxu0 0.0
    %751 = vmatprep.subr.mxu0 0.0
    %752 = vmatpush1.msra.mxu0 0.0
    %753 = vmatprep.subr.mxu0 0.0
    %754 = vmatpush1.msra.mxu0 0.0
    %755 = vmatprep.subr.mxu0 0.0
    %756 = vmatpush1.msra.mxu0 0.0
    %757 = vmatprep.subr.mxu0 0.0
    %758 = vmatpush1.msra.mxu0 0.0
    %759 = vmatprep.subr.mxu0 0.0
    %760 = vmatpush1.msra.mxu0 0.0
    %761 = vmatprep.subr.mxu0 0.0
    %762 = vmatpush1.msra.mxu0 0.0
    %763 = vmatprep.subr.mxu0 0.0
    %764 = vmatpush1.msra.mxu0 0.0
    %765 = vmatprep.subr.mxu0 0.0
    %766 = vmatpush1.msra.mxu0 0.0
    %767 = vmatprep.subr.mxu0 0.0
    %768 = vmatpush1.msra.mxu0 0.0
    %769 = vmatprep.subr.mxu0 0.0
    %770 = vmatpush1.msra.mxu0 0.0
    %771 = vmatprep.subr.mxu0 0.0
    %772 = vmatpush1.msra.mxu0 0.0
    %773 = vmatprep.subr.mxu0 0.0
    %774 = vmatpush1.msra.mxu0 0.0
    %775 = vmatprep.subr.mxu0 0.0
    %776 = vmatpush1.msra.mxu0 0.0
    %777 = vmatprep.subr.mxu0 0.0
    %778 = vmatpush1.msra.mxu0 0.0
    %779 = vmatprep.subr.mxu0 0.0
    %780 = vmatpush1.msra.mxu0 0.0
    %781 = vmatprep.subr.mxu0 0.0
    %782 = vmatpush1.msra.mxu0 0.0
    %783 = vmatprep.mubr.f32.mxu0 0.0
    %784 = vmatmul.mubr.f32.gmra.mrb[0].mxu0 %v714
    %v785 = vpop.f32.mrb[0].mxu0
    %v786 = vadd.f32 0.0, %v785
    %v787 = vpop.f32.mrb[0].mxu0
    %788 = vmatprep.mubr.f32.mxu0 0.0
    %789 = vmatmul.mubr.f32.gmra.mrb[0].mxu0 %v717
    %v790 = vpop.f32.mrb[0].mxu0
    %v791 = vadd.f32 0.0, %v790
    %v792 = vpop.f32.mrb[0].mxu0
    %793 = vdwg.mxu0
    %794 = vrot.lane.b32.xlu0 %v408, 96
    %v795 = vpop.permute.xlu0 %794
    %796 = vrot.lane.b32.xlu0 %v409, 96
    %v797 = vpop.permute.xlu0 %796
    %798 = vrot.lane.b32.xlu0 %v303, 96
    %v799 = vpop.permute.xlu0 %798
    %800 = vrot.lane.b32.xlu0 %v309, 96
    %v801 = vpop.permute.xlu0 %800
    %v802 = vsel %vm412, %v795, 0
    %v804 = vsel %vm412, %v797, 0
    %v806 = vsel %vm412, %v799, 0
    %v808 = vsel %vm412, %v801, 0
    %810 = vmatprep.subr.mxu0 0.0
    %811 = vmatpush1.xpose.msra.mxu0 %v806
    %812 = vmatprep.subr.mxu0 0.0
    %813 = vmatpush1.xpose.msra.mxu0 %v808
    %814 = vmatprep.subr.mxu0 0.0
    %815 = vmatpush1.xpose.msra.mxu0 0.0
    %816 = vmatprep.subr.mxu0 0.0
    %817 = vmatpush1.xpose.msra.mxu0 0.0
    %818 = vmatprep.subr.mxu0 0.0
    %819 = vmatpush1.xpose.msra.mxu0 0.0
    %820 = vmatprep.subr.mxu0 0.0
    %821 = vmatpush1.xpose.msra.mxu0 0.0
    %822 = vmatprep.subr.mxu0 0.0
    %823 = vmatpush1.xpose.msra.mxu0 0.0
    %824 = vmatprep.subr.mxu0 0.0
    %825 = vmatpush1.xpose.msra.mxu0 0.0
    %826 = vmatprep.subr.mxu0 0.0
    %827 = vmatpush1.xpose.msra.mxu0 0.0
    %828 = vmatprep.subr.mxu0 0.0
    %829 = vmatpush1.xpose.msra.mxu0 0.0
    %830 = vmatprep.subr.mxu0 0.0
    %831 = vmatpush1.xpose.msra.mxu0 0.0
    %832 = vmatprep.subr.mxu0 0.0
    %833 = vmatpush1.xpose.msra.mxu0 0.0
    %834 = vmatprep.subr.mxu0 0.0
    %835 = vmatpush1.xpose.msra.mxu0 0.0
    %836 = vmatprep.subr.mxu0 0.0
    %837 = vmatpush1.xpose.msra.mxu0 0.0
    %838 = vmatprep.subr.mxu0 0.0
    %839 = vmatpush1.xpose.msra.mxu0 0.0
    %840 = vmatprep.subr.mxu0 0.0
    %841 = vmatpush1.xpose.msra.mxu0 0.0
    %842 = vmatprep.subr.mxu0 0.0
    %843 = vmatpush1.xpose.msra.mxu0 0.0
    %844 = vmatprep.subr.mxu0 0.0
    %845 = vmatpush1.xpose.msra.mxu0 0.0
    %846 = vmatprep.subr.mxu0 0.0
    %847 = vmatpush1.xpose.msra.mxu0 0.0
    %848 = vmatprep.subr.mxu0 0.0
    %849 = vmatpush1.xpose.msra.mxu0 0.0
    %850 = vmatprep.subr.mxu0 0.0
    %851 = vmatpush1.xpose.msra.mxu0 0.0
    %852 = vmatprep.subr.mxu0 0.0
    %853 = vmatpush1.xpose.msra.mxu0 0.0
    %854 = vmatprep.subr.mxu0 0.0
    %855 = vmatpush1.xpose.msra.mxu0 0.0
    %856 = vmatprep.subr.mxu0 0.0
    %857 = vmatpush1.xpose.msra.mxu0 0.0
    %858 = vmatprep.subr.mxu0 0.0
    %859 = vmatpush1.xpose.msra.mxu0 0.0
    %860 = vmatprep.subr.mxu0 0.0
    %861 = vmatpush1.xpose.msra.mxu0 0.0
    %862 = vmatprep.subr.mxu0 0.0
    %863 = vmatpush1.xpose.msra.mxu0 0.0
    %864 = vmatprep.subr.mxu0 0.0
    %865 = vmatpush1.xpose.msra.mxu0 0.0
    %866 = vmatprep.subr.mxu0 0.0
    %867 = vmatpush1.xpose.msra.mxu0 0.0
    %868 = vmatprep.subr.mxu0 0.0
    %869 = vmatpush1.xpose.msra.mxu0 0.0
    %870 = vmatprep.subr.mxu0 0.0
    %871 = vmatpush1.xpose.msra.mxu0 0.0
    %872 = vmatprep.subr.mxu0 0.0
    %873 = vmatpush1.xpose.msra.mxu0 0.0
    %874 = vmatprep.mubr.f32.mxu0 0.0
    %875 = vmatmul.mubr.f32.gmra.mrb[0].mxu0 %v802
    %v876 = vpop.f32.mrb[0].mxu0
    %v877 = vadd.f32 0.0, %v876
    %v878 = vpop.f32.mrb[0].mxu0
    %879 = vmatprep.mubr.f32.mxu0 0.0
    %880 = vmatmul.mubr.f32.gmra.mrb[0].mxu0 %v804
    %v881 = vpop.f32.mrb[0].mxu0
    %v882 = vadd.f32 0.0, %v881
    %v883 = vpop.f32.mrb[0].mxu0
    %884 = vdwg.mxu0
    %885 = vrot.lane.b32.xlu0 %v410, 96
    %v886 = vpop.permute.xlu0 %885
    %887 = vrot.lane.b32.xlu0 %v411, 96
    %v888 = vpop.permute.xlu0 %887
    %889 = vrot.lane.b32.xlu0 %v315, 96
    %v890 = vpop.permute.xlu0 %889
    %891 = vrot.lane.b32.xlu0 %v321, 96
    %v892 = vpop.permute.xlu0 %891
    %v893 = vsel %vm412, %v886, 0
    %v895 = vsel %vm412, %v888, 0
    %v897 = vsel %vm412, %v890, 0
    %v899 = vsel %vm412, %v892, 0
    %901 = vmatprep.subr.mxu0 0.0
    %902 = vmatpush1.xpose.msra.mxu0 %v897
    %903 = vmatprep.subr.mxu0 0.0
    %904 = vmatpush1.xpose.msra.mxu0 %v899
    %905 = vmatprep.subr.mxu0 0.0
    %906 = vmatpush1.xpose.msra.mxu0 0.0
    %907 = vmatprep.subr.mxu0 0.0
    %908 = vmatpush1.xpose.msra.mxu0 0.0
    %909 = vmatprep.subr.mxu0 0.0
    %910 = vmatpush1.xpose.msra.mxu0 0.0
    %911 = vmatprep.subr.mxu0 0.0
    %912 = vmatpush1.xpose.msra.mxu0 0.0
    %913 = vmatprep.subr.mxu0 0.0
    %914 = vmatpush1.xpose.msra.mxu0 0.0
    %915 = vmatprep.subr.mxu0 0.0
    %916 = vmatpush1.xpose.msra.mxu0 0.0
    %917 = vmatprep.subr.mxu0 0.0
    %918 = vmatpush1.xpose.msra.mxu0 0.0
    %919 = vmatprep.subr.mxu0 0.0
    %920 = vmatpush1.xpose.msra.mxu0 0.0
    %921 = vmatprep.subr.mxu0 0.0
    %922 = vmatpush1.xpose.msra.mxu0 0.0
    %923 = vmatprep.subr.mxu0 0.0
    %924 = vmatpush1.xpose.msra.mxu0 0.0
    %925 = vmatprep.subr.mxu0 0.0
    %926 = vmatpush1.xpose.msra.mxu0 0.0
    %927 = vmatprep.subr.mxu0 0.0
    %928 = vmatpush1.xpose.msra.mxu0 0.0
    %929 = vmatprep.subr.mxu0 0.0
    %930 = vmatpush1.xpose.msra.mxu0 0.0
    %931 = vmatprep.subr.mxu0 0.0
    %932 = vmatpush1.xpose.msra.mxu0 0.0
    %933 = vmatprep.subr.mxu0 0.0
    %934 = vmatpush1.xpose.msra.mxu0 0.0
    %935 = vmatprep.subr.mxu0 0.0
    %936 = vmatpush1.xpose.msra.mxu0 0.0
    %937 = vmatprep.subr.mxu0 0.0
    %938 = vmatpush1.xpose.msra.mxu0 0.0
    %939 = vmatprep.subr.mxu0 0.0
    %940 = vmatpush1.xpose.msra.mxu0 0.0
    %941 = vmatprep.subr.mxu0 0.0
    %942 = vmatpush1.xpose.msra.mxu0 0.0
    %943 = vmatprep.subr.mxu0 0.0
    %944 = vmatpush1.xpose.msra.mxu0 0.0
    %945 = vmatprep.subr.mxu0 0.0
    %946 = vmatpush1.xpose.msra.mxu0 0.0
    %947 = vmatprep.subr.mxu0 0.0
    %948 = vmatpush1.xpose.msra.mxu0 0.0
    %949 = vmatprep.subr.mxu0 0.0
    %950 = vmatpush1.xpose.msra.mxu0 0.0
    %951 = vmatprep.subr.mxu0 0.0
    %952 = vmatpush1.xpose.msra.mxu0 0.0
    %953 = vmatprep.subr.mxu0 0.0
    %954 = vmatpush1.xpose.msra.mxu0 0.0
    %955 = vmatprep.subr.mxu0 0.0
    %956 = vmatpush1.xpose.msra.mxu0 0.0
    %957 = vmatprep.subr.mxu0 0.0
    %958 = vmatpush1.xpose.msra.mxu0 0.0
    %959 = vmatprep.subr.mxu0 0.0
    %960 = vmatpush1.xpose.msra.mxu0 0.0
    %961 = vmatprep.subr.mxu0 0.0
    %962 = vmatpush1.xpose.msra.mxu0 0.0
    %963 = vmatprep.subr.mxu0 0.0
    %964 = vmatpush1.xpose.msra.mxu0 0.0
    %965 = vmatprep.mubr.f32.mxu0 0.0
    %966 = vmatmul.mubr.f32.gmra.mrb[0].mxu0 %v893
    %v967 = vpop.f32.mrb[0].mxu0
    %v968 = vadd.f32 0.0, %v967
    %v969 = vpop.f32.mrb[0].mxu0
    %970 = vmatprep.mubr.f32.mxu0 0.0
    %971 = vmatmul.mubr.f32.gmra.mrb[0].mxu0 %v895
    %v972 = vpop.f32.mrb[0].mxu0
    %v973 = vadd.f32 0.0, %v972
    %v974 = vpop.f32.mrb[0].mxu0
    %975 = vdwg.mxu0
    %v976 = vsel %vm587, %v877, -inf
    %977 = vmax.xlane.f32.xlu0 %v976
    %v978 = vpop.xlane.xlu0 %977
    %v979 = vsel %vm587, %v882, -inf
    %980 = vmax.xlane.f32.xlu0 %v979
    %v981 = vpop.xlane.xlu0 %980
    %v982 = vsel %vm587, %v968, -inf
    %983 = vmax.xlane.f32.xlu0 %v982
    %v984 = vpop.xlane.xlu0 %983
    %v985 = vsel %vm587, %v973, -inf
    %986 = vmax.xlane.f32.xlu0 %v985
    %v987 = vpop.xlane.xlu0 %986
    %v988 = vsub.f32 %v877, %v978
    %v989 = vsub.f32 %v882, %v981
    %v990 = vsub.f32 %v968, %v984
    %v991 = vsub.f32 %v973, %v987
    %v992 = vmul.f32 %v988, 1.442695
    %v993 = vpow.pop %v992
    %v994 = vmul.f32 %v989, 1.442695
    %v995 = vpow.pop %v994
    %v996 = vmul.f32 %v990, 1.442695
    %v997 = vpow.pop %v996
    %v998 = vmul.f32 %v991, 1.442695
    %v999 = vpow.pop %v998
    %v1000 = vsel %vm587, %v993, 0.0
    %1001 = vadd.xlane.f32.xlu0 %v1000
    %v1002 = vpop.xlane.xlu0 %1001
    %v1003 = vsel %vm587, %v995, 0.0
    %1004 = vadd.xlane.f32.xlu0 %v1003
    %v1005 = vpop.xlane.xlu0 %1004
    %v1006 = vsel %vm587, %v997, 0.0
    %1007 = vadd.xlane.f32.xlu0 %v1006
    %v1008 = vpop.xlane.xlu0 %1007
    %v1009 = vsel %vm587, %v999, 0.0
    %1010 = vadd.xlane.f32.xlu0 %v1009
    %v1011 = vpop.xlane.xlu0 %1010
    %v1012 = vrcp.pop %v1002
    %v1013 = vrcp.pop %v1005
    %v1014 = vrcp.pop %v1008
    %v1015 = vrcp.pop %v1011
    %v1016 = vmul.f32 %v993, %v1012
    %v1017 = vmul.f32 %v995, %v1013
    %v1018 = vmul.f32 %v997, %v1014
    %v1019 = vmul.f32 %v999, %v1015
    %1022 = vrot.lane.b32.xlu0 %v390, 96
    %v1023 = vpop.permute.xlu0 %1022
    %1024 = vrot.lane.b32.xlu0 %v395, 96
    %v1025 = vpop.permute.xlu0 %1024
    %v1029 = vsel %vm587, %v1016, 0
    %v1032 = vsel %vm587, %v1017, 0
    %1034 = vmatprep.subr.mxu0 0.0
    %1035 = vmatpush1.msra.mxu0 %v1023
    %1036 = vmatprep.subr.mxu0 0.0
    %1037 = vmatpush1.msra.mxu0 %v1025
    %1038 = vmatprep.subr.mxu0 0.0
    %1039 = vmatpush1.msra.mxu0 0.0
    %1040 = vmatprep.subr.mxu0 0.0
    %1041 = vmatpush1.msra.mxu0 0.0
    %1042 = vmatprep.subr.mxu0 0.0
    %1043 = vmatpush1.msra.mxu0 0.0
    %1044 = vmatprep.subr.mxu0 0.0
    %1045 = vmatpush1.msra.mxu0 0.0
    %1046 = vmatprep.subr.mxu0 0.0
    %1047 = vmatpush1.msra.mxu0 0.0
    %1048 = vmatprep.subr.mxu0 0.0
    %1049 = vmatpush1.msra.mxu0 0.0
    %1050 = vmatprep.subr.mxu0 0.0
    %1051 = vmatpush1.msra.mxu0 0.0
    %1052 = vmatprep.subr.mxu0 0.0
    %1053 = vmatpush1.msra.mxu0 0.0
    %1054 = vmatprep.subr.mxu0 0.0
    %1055 = vmatpush1.msra.mxu0 0.0
    %1056 = vmatprep.subr.mxu0 0.0
    %1057 = vmatpush1.msra.mxu0 0.0
    %1058 = vmatprep.subr.mxu0 0.0
    %1059 = vmatpush1.msra.mxu0 0.0
    %1060 = vmatprep.subr.mxu0 0.0
    %1061 = vmatpush1.msra.mxu0 0.0
    %1062 = vmatprep.subr.mxu0 0.0
    %1063 = vmatpush1.msra.mxu0 0.0
    %1064 = vmatprep.subr.mxu0 0.0
    %1065 = vmatpush1.msra.mxu0 0.0
    %1066 = vmatprep.subr.mxu0 0.0
    %1067 = vmatpush1.msra.mxu0 0.0
    %1068 = vmatprep.subr.mxu0 0.0
    %1069 = vmatpush1.msra.mxu0 0.0
    %1070 = vmatprep.subr.mxu0 0.0
    %1071 = vmatpush1.msra.mxu0 0.0
    %1072 = vmatprep.subr.mxu0 0.0
    %1073 = vmatpush1.msra.mxu0 0.0
    %1074 = vmatprep.subr.mxu0 0.0
    %1075 = vmatpush1.msra.mxu0 0.0
    %1076 = vmatprep.subr.mxu0 0.0
    %1077 = vmatpush1.msra.mxu0 0.0
    %1078 = vmatprep.subr.mxu0 0.0
    %1079 = vmatpush1.msra.mxu0 0.0
    %1080 = vmatprep.subr.mxu0 0.0
    %1081 = vmatpush1.msra.mxu0 0.0
    %1082 = vmatprep.subr.mxu0 0.0
    %1083 = vmatpush1.msra.mxu0 0.0
    %1084 = vmatprep.subr.mxu0 0.0
    %1085 = vmatpush1.msra.mxu0 0.0
    %1086 = vmatprep.subr.mxu0 0.0
    %1087 = vmatpush1.msra.mxu0 0.0
    %1088 = vmatprep.subr.mxu0 0.0
    %1089 = vmatpush1.msra.mxu0 0.0
    %1090 = vmatprep.subr.mxu0 0.0
    %1091 = vmatpush1.msra.mxu0 0.0
    %1092 = vmatprep.subr.mxu0 0.0
    %1093 = vmatpush1.msra.mxu0 0.0
    %1094 = vmatprep.subr.mxu0 0.0
    %1095 = vmatpush1.msra.mxu0 0.0
    %1096 = vmatprep.subr.mxu0 0.0
    %1097 = vmatpush1.msra.mxu0 0.0
    %1098 = vmatprep.mubr.f32.mxu0 0.0
    %1099 = vmatmul.mubr.f32.gmra.mrb[0].mxu0 %v1029
    %v1100 = vpop.f32.mrb[0].mxu0
    %v1101 = vadd.f32 0.0, %v1100
    %v1102 = vpop.f32.mrb[0].mxu0
    %1103 = vmatprep.mubr.f32.mxu0 0.0
    %1104 = vmatmul.mubr.f32.gmra.mrb[0].mxu0 %v1032
    %v1105 = vpop.f32.mrb[0].mxu0
    %v1106 = vadd.f32 0.0, %v1105
    %v1107 = vpop.f32.mrb[0].mxu0
    %1108 = vdwg.mxu0
    %1111 = vrot.lane.b32.xlu0 %v400, 96
    %v1112 = vpop.permute.xlu0 %1111
    %1113 = vrot.lane.b32.xlu0 %v405, 96
    %v1114 = vpop.permute.xlu0 %1113
    %v1118 = vsel %vm587, %v1018, 0
    %v1121 = vsel %vm587, %v1019, 0
    %1123 = vmatprep.subr.mxu0 0.0
    %1124 = vmatpush1.msra.mxu0 %v1112
    %1125 = vmatprep.subr.mxu0 0.0
    %1126 = vmatpush1.msra.mxu0 %v1114
    %1127 = vmatprep.subr.mxu0 0.0
    %1128 = vmatpush1.msra.mxu0 0.0
    %1129 = vmatprep.subr.mxu0 0.0
    %1130 = vmatpush1.msra.mxu0 0.0
    %1131 = vmatprep.subr.mxu0 0.0
    %1132 = vmatpush1.msra.mxu0 0.0
    %1133 = vmatprep.subr.mxu0 0.0
    %1134 = vmatpush1.msra.mxu0 0.0
    %1135 = vmatprep.subr.mxu0 0.0
    %1136 = vmatpush1.msra.mxu0 0.0
    %1137 = vmatprep.subr.mxu0 0.0
    %1138 = vmatpush1.msra.mxu0 0.0
    %1139 = vmatprep.subr.mxu0 0.0
    %1140 = vmatpush1.msra.mxu0 0.0
    %1141 = vmatprep.subr.mxu0 0.0
    %1142 = vmatpush1.msra.mxu0 0.0
    %1143 = vmatprep.subr.mxu0 0.0
    %1144 = vmatpush1.msra.mxu0 0.0
    %1145 = vmatprep.subr.mxu0 0.0
    %1146 = vmatpush1.msra.mxu0 0.0
    %1147 = vmatprep.subr.mxu0 0.0
    %1148 = vmatpush1.msra.mxu0 0.0
    %1149 = vmatprep.subr.mxu0 0.0
    %1150 = vmatpush1.msra.mxu0 0.0
    %1151 = vmatprep.subr.mxu0 0.0
    %1152 = vmatpush1.msra.mxu0 0.0
    %1153 = vmatprep.subr.mxu0 0.0
    %1154 = vmatpush1.msra.mxu0 0.0
    %1155 = vmatprep.subr.mxu0 0.0
    %1156 = vmatpush1.msra.mxu0 0.0
    %1157 = vmatprep.subr.mxu0 0.0
    %1158 = vmatpush1.msra.mxu0 0.0
    %1159 = vmatprep.subr.mxu0 0.0
    %1160 = vmatpush1.msra.mxu0 0.0
    %1161 = vmatprep.subr.mxu0 0.0
    %1162 = vmatpush1.msra.mxu0 0.0
    %1163 = vmatprep.subr.mxu0 0.0
    %1164 = vmatpush1.msra.mxu0 0.0
    %1165 = vmatprep.subr.mxu0 0.0
    %1166 = vmatpush1.msra.mxu0 0.0
    %1167 = vmatprep.subr.mxu0 0.0
    %1168 = vmatpush1.msra.mxu0 0.0
    %1169 = vmatprep.subr.mxu0 0.0
    %1170 = vmatpush1.msra.mxu0 0.0
    %1171 = vmatprep.subr.mxu0 0.0
    %1172 = vmatpush1.msra.mxu0 0.0
    %1173 = vmatprep.subr.mxu0 0.0
    %1174 = vmatpush1.msra.mxu0 0.0
    %1175 = vmatprep.subr.mxu0 0.0
    %1176 = vmatpush1.msra.mxu0 0.0
    %1177 = vmatprep.subr.mxu0 0.0
    %1178 = vmatpush1.msra.mxu0 0.0
    %1179 = vmatprep.subr.mxu0 0.0
    %1180 = vmatpush1.msra.mxu0 0.0
    %1181 = vmatprep.subr.mxu0 0.0
    %1182 = vmatpush1.msra.mxu0 0.0
    %1183 = vmatprep.subr.mxu0 0.0
    %1184 = vmatpush1.msra.mxu0 0.0
    %1185 = vmatprep.subr.mxu0 0.0
    %1186 = vmatpush1.msra.mxu0 0.0
    %1187 = vmatprep.mubr.f32.mxu0 0.0
    %1188 = vmatmul.mubr.f32.gmra.mrb[0].mxu0 %v1118
    %v1189 = vpop.f32.mrb[0].mxu0
    %v1190 = vadd.f32 0.0, %v1189
    %v1191 = vpop.f32.mrb[0].mxu0
    %1192 = vmatprep.mubr.f32.mxu0 0.0
    %1193 = vmatmul.mubr.f32.gmra.mrb[0].mxu0 %v1121
    %v1194 = vpop.f32.mrb[0].mxu0
    %v1195 = vadd.f32 0.0, %v1194
    %v1196 = vpop.f32.mrb[0].mxu0
    %1197 = vdwg.mxu0
    %1198 = vrot.lane.b32.xlu0 %v408, 64
    %v1199 = vpop.permute.xlu0 %1198
    %1200 = vrot.lane.b32.xlu0 %v409, 64
    %v1201 = vpop.permute.xlu0 %1200
    %1202 = vrot.lane.b32.xlu0 %v303, 64
    %v1203 = vpop.permute.xlu0 %1202
    %1204 = vrot.lane.b32.xlu0 %v309, 64
    %v1205 = vpop.permute.xlu0 %1204
    %v1206 = vsel %vm412, %v1199, 0
    %v1208 = vsel %vm412, %v1201, 0
    %v1210 = vsel %vm412, %v1203, 0
    %v1212 = vsel %vm412, %v1205, 0
    %1214 = vmatprep.subr.mxu0 0.0
    %1215 = vmatpush1.xpose.msra.mxu0 %v1210
    %1216 = vmatprep.subr.mxu0 0.0
    %1217 = vmatpush1.xpose.msra.mxu0 %v1212
    %1218 = vmatprep.subr.mxu0 0.0
    %1219 = vmatpush1.xpose.msra.mxu0 0.0
    %1220 = vmatprep.subr.mxu0 0.0
    %1221 = vmatpush1.xpose.msra.mxu0 0.0
    %1222 = vmatprep.subr.mxu0 0.0
    %1223 = vmatpush1.xpose.msra.mxu0 0.0
    %1224 = vmatprep.subr.mxu0 0.0
    %1225 = vmatpush1.xpose.msra.mxu0 0.0
    %1226 = vmatprep.subr.mxu0 0.0
    %1227 = vmatpush1.xpose.msra.mxu0 0.0
    %1228 = vmatprep.subr.mxu0 0.0
    %1229 = vmatpush1.xpose.msra.mxu0 0.0
    %1230 = vmatprep.subr.mxu0 0.0
    %1231 = vmatpush1.xpose.msra.mxu0 0.0
    %1232 = vmatprep.subr.mxu0 0.0
    %1233 = vmatpush1.xpose.msra.mxu0 0.0
    %1234 = vmatprep.subr.mxu0 0.0
    %1235 = vmatpush1.xpose.msra.mxu0 0.0
    %1236 = vmatprep.subr.mxu0 0.0
    %1237 = vmatpush1.xpose.msra.mxu0 0.0
    %1238 = vmatprep.subr.mxu0 0.0
    %1239 = vmatpush1.xpose.msra.mxu0 0.0
    %1240 = vmatprep.subr.mxu0 0.0
    %1241 = vmatpush1.xpose.msra.mxu0 0.0
    %1242 = vmatprep.subr.mxu0 0.0
    %1243 = vmatpush1.xpose.msra.mxu0 0.0
    %1244 = vmatprep.subr.mxu0 0.0
    %1245 = vmatpush1.xpose.msra.mxu0 0.0
    %1246 = vmatprep.subr.mxu0 0.0
    %1247 = vmatpush1.xpose.msra.mxu0 0.0
    %1248 = vmatprep.subr.mxu0 0.0
    %1249 = vmatpush1.xpose.msra.mxu0 0.0
    %1250 = vmatprep.subr.mxu0 0.0
    %1251 = vmatpush1.xpose.msra.mxu0 0.0
    %1252 = vmatprep.subr.mxu0 0.0
    %1253 = vmatpush1.xpose.msra.mxu0 0.0
    %1254 = vmatprep.subr.mxu0 0.0
    %1255 = vmatpush1.xpose.msra.mxu0 0.0
    %1256 = vmatprep.subr.mxu0 0.0
    %1257 = vmatpush1.xpose.msra.mxu0 0.0
    %1258 = vmatprep.subr.mxu0 0.0
    %1259 = vmatpush1.xpose.msra.mxu0 0.0
    %1260 = vmatprep.subr.mxu0 0.0
    %1261 = vmatpush1.xpose.msra.mxu0 0.0
    %1262 = vmatprep.subr.mxu0 0.0
    %1263 = vmatpush1.xpose.msra.mxu0 0.0
    %1264 = vmatprep.subr.mxu0 0.0
    %1265 = vmatpush1.xpose.msra.mxu0 0.0
    %1266 = vmatprep.subr.mxu0 0.0
    %1267 = vmatpush1.xpose.msra.mxu0 0.0
    %1268 = vmatprep.subr.mxu0 0.0
    %1269 = vmatpush1.xpose.msra.mxu0 0.0
    %1270 = vmatprep.subr.mxu0 0.0
    %1271 = vmatpush1.xpose.msra.mxu0 0.0
    %1272 = vmatprep.subr.mxu0 0.0
    %1273 = vmatpush1.xpose.msra.mxu0 0.0
    %1274 = vmatprep.subr.mxu0 0.0
    %1275 = vmatpush1.xpose.msra.mxu0 0.0
    %1276 = vmatprep.subr.mxu0 0.0
    %1277 = vmatpush1.xpose.msra.mxu0 0.0
    %1278 = vmatprep.mubr.f32.mxu0 0.0
    %1279 = vmatmul.mubr.f32.gmra.mrb[0].mxu0 %v1206
    %v1280 = vpop.f32.mrb[0].mxu0
    %v1281 = vadd.f32 0.0, %v1280
    %v1282 = vpop.f32.mrb[0].mxu0
    %1283 = vmatprep.mubr.f32.mxu0 0.0
    %1284 = vmatmul.mubr.f32.gmra.mrb[0].mxu0 %v1208
    %v1285 = vpop.f32.mrb[0].mxu0
    %v1286 = vadd.f32 0.0, %v1285
    %v1287 = vpop.f32.mrb[0].mxu0
    %1288 = vdwg.mxu0
    %1289 = vrot.lane.b32.xlu0 %v410, 64
    %v1290 = vpop.permute.xlu0 %1289
    %1291 = vrot.lane.b32.xlu0 %v411, 64
    %v1292 = vpop.permute.xlu0 %1291
    %1293 = vrot.lane.b32.xlu0 %v315, 64
    %v1294 = vpop.permute.xlu0 %1293
    %1295 = vrot.lane.b32.xlu0 %v321, 64
    %v1296 = vpop.permute.xlu0 %1295
    %v1297 = vsel %vm412, %v1290, 0
    %v1299 = vsel %vm412, %v1292, 0
    %v1301 = vsel %vm412, %v1294, 0
    %v1303 = vsel %vm412, %v1296, 0
    %1305 = vmatprep.subr.mxu0 0.0
    %1306 = vmatpush1.xpose.msra.mxu0 %v1301
    %1307 = vmatprep.subr.mxu0 0.0
    %1308 = vmatpush1.xpose.msra.mxu0 %v1303
    %1309 = vmatprep.subr.mxu0 0.0
    %1310 = vmatpush1.xpose.msra.mxu0 0.0
    %1311 = vmatprep.subr.mxu0 0.0
    %1312 = vmatpush1.xpose.msra.mxu0 0.0
    %1313 = vmatprep.subr.mxu0 0.0
    %1314 = vmatpush1.xpose.msra.mxu0 0.0
    %1315 = vmatprep.subr.mxu0 0.0
    %1316 = vmatpush1.xpose.msra.mxu0 0.0
    %1317 = vmatprep.subr.mxu0 0.0
    %1318 = vmatpush1.xpose.msra.mxu0 0.0
    %1319 = vmatprep.subr.mxu0 0.0
    %1320 = vmatpush1.xpose.msra.mxu0 0.0
    %1321 = vmatprep.subr.mxu0 0.0
    %1322 = vmatpush1.xpose.msra.mxu0 0.0
    %1323 = vmatprep.subr.mxu0 0.0
    %1324 = vmatpush1.xpose.msra.mxu0 0.0
    %1325 = vmatprep.subr.mxu0 0.0
    %1326 = vmatpush1.xpose.msra.mxu0 0.0
    %1327 = vmatprep.subr.mxu0 0.0
    %1328 = vmatpush1.xpose.msra.mxu0 0.0
    %1329 = vmatprep.subr.mxu0 0.0
    %1330 = vmatpush1.xpose.msra.mxu0 0.0
    %1331 = vmatprep.subr.mxu0 0.0
    %1332 = vmatpush1.xpose.msra.mxu0 0.0
    %1333 = vmatprep.subr.mxu0 0.0
    %1334 = vmatpush1.xpose.msra.mxu0 0.0
    %1335 = vmatprep.subr.mxu0 0.0
    %1336 = vmatpush1.xpose.msra.mxu0 0.0
    %1337 = vmatprep.subr.mxu0 0.0
    %1338 = vmatpush1.xpose.msra.mxu0 0.0
    %1339 = vmatprep.subr.mxu0 0.0
    %1340 = vmatpush1.xpose.msra.mxu0 0.0
    %1341 = vmatprep.subr.mxu0 0.0
    %1342 = vmatpush1.xpose.msra.mxu0 0.0
    %1343 = vmatprep.subr.mxu0 0.0
    %1344 = vmatpush1.xpose.msra.mxu0 0.0
    %1345 = vmatprep.subr.mxu0 0.0
    %1346 = vmatpush1.xpose.msra.mxu0 0.0
    %1347 = vmatprep.subr.mxu0 0.0
    %1348 = vmatpush1.xpose.msra.mxu0 0.0
    %1349 = vmatprep.subr.mxu0 0.0
    %1350 = vmatpush1.xpose.msra.mxu0 0.0
    %1351 = vmatprep.subr.mxu0 0.0
    %1352 = vmatpush1.xpose.msra.mxu0 0.0
    %1353 = vmatprep.subr.mxu0 0.0
    %1354 = vmatpush1.xpose.msra.mxu0 0.0
    %1355 = vmatprep.subr.mxu0 0.0
    %1356 = vmatpush1.xpose.msra.mxu0 0.0
    %1357 = vmatprep.subr.mxu0 0.0
    %1358 = vmatpush1.xpose.msra.mxu0 0.0
    %1359 = vmatprep.subr.mxu0 0.0
    %1360 = vmatpush1.xpose.msra.mxu0 0.0
    %1361 = vmatprep.subr.mxu0 0.0
    %1362 = vmatpush1.xpose.msra.mxu0 0.0
    %1363 = vmatprep.subr.mxu0 0.0
    %1364 = vmatpush1.xpose.msra.mxu0 0.0
    %1365 = vmatprep.subr.mxu0 0.0
    %1366 = vmatpush1.xpose.msra.mxu0 0.0
    %1367 = vmatprep.subr.mxu0 0.0
    %1368 = vmatpush1.xpose.msra.mxu0 0.0
    %1369 = vmatprep.mubr.f32.mxu0 0.0
    %1370 = vmatmul.mubr.f32.gmra.mrb[0].mxu0 %v1297
    %v1371 = vpop.f32.mrb[0].mxu0
    %v1372 = vadd.f32 0.0, %v1371
    %v1373 = vpop.f32.mrb[0].mxu0
    %1374 = vmatprep.mubr.f32.mxu0 0.0
    %1375 = vmatmul.mubr.f32.gmra.mrb[0].mxu0 %v1299
    %v1376 = vpop.f32.mrb[0].mxu0
    %v1377 = vadd.f32 0.0, %v1376
    %v1378 = vpop.f32.mrb[0].mxu0
    %1379 = vdwg.mxu0
    %v1380 = vsel %vm587, %v1281, -inf
    %1381 = vmax.xlane.f32.xlu0 %v1380
    %v1382 = vpop.xlane.xlu0 %1381
    %v1383 = vsel %vm587, %v1286, -inf
    %1384 = vmax.xlane.f32.xlu0 %v1383
    %v1385 = vpop.xlane.xlu0 %1384
    %v1386 = vsel %vm587, %v1372, -inf
    %1387 = vmax.xlane.f32.xlu0 %v1386
    %v1388 = vpop.xlane.xlu0 %1387
    %v1389 = vsel %vm587, %v1377, -inf
    %1390 = vmax.xlane.f32.xlu0 %v1389
    %v1391 = vpop.xlane.xlu0 %1390
    %v1392 = vsub.f32 %v1281, %v1382
    %v1393 = vsub.f32 %v1286, %v1385
    %v1394 = vsub.f32 %v1372, %v1388
    %v1395 = vsub.f32 %v1377, %v1391
    %v1396 = vmul.f32 %v1392, 1.442695
    %v1397 = vpow.pop %v1396
    %v1398 = vmul.f32 %v1393, 1.442695
    %v1399 = vpow.pop %v1398
    %v1400 = vmul.f32 %v1394, 1.442695
    %v1401 = vpow.pop %v1400
    %v1402 = vmul.f32 %v1395, 1.442695
    %v1403 = vpow.pop %v1402
    %v1404 = vsel %vm587, %v1397, 0.0
    %1405 = vadd.xlane.f32.xlu0 %v1404
    %v1406 = vpop.xlane.xlu0 %1405
    %v1407 = vsel %vm587, %v1399, 0.0
    %1408 = vadd.xlane.f32.xlu0 %v1407
    %v1409 = vpop.xlane.xlu0 %1408
    %v1410 = vsel %vm587, %v1401, 0.0
    %1411 = vadd.xlane.f32.xlu0 %v1410
    %v1412 = vpop.xlane.xlu0 %1411
    %v1413 = vsel %vm587, %v1403, 0.0
    %1414 = vadd.xlane.f32.xlu0 %v1413
    %v1415 = vpop.xlane.xlu0 %1414
    %v1416 = vrcp.pop %v1406
    %v1417 = vrcp.pop %v1409
    %v1418 = vrcp.pop %v1412
    %v1419 = vrcp.pop %v1415
    %v1420 = vmul.f32 %v1397, %v1416
    %v1421 = vmul.f32 %v1399, %v1417
    %v1422 = vmul.f32 %v1401, %v1418
    %v1423 = vmul.f32 %v1403, %v1419
    %1424 = vrot.lane.b32.xlu0 %v390, 64
    %v1425 = vpop.permute.xlu0 %1424
    %1426 = vrot.lane.b32.xlu0 %v395, 64
    %v1427 = vpop.permute.xlu0 %1426
    %v1431 = vsel %vm587, %v1420, 0
    %v1434 = vsel %vm587, %v1421, 0
    %1436 = vmatprep.subr.mxu0 0.0
    %1437 = vmatpush1.msra.mxu0 %v1425
    %1438 = vmatprep.subr.mxu0 0.0
    %1439 = vmatpush1.msra.mxu0 %v1427
    %1440 = vmatprep.subr.mxu0 0.0
    %1441 = vmatpush1.msra.mxu0 0.0
    %1442 = vmatprep.subr.mxu0 0.0
    %1443 = vmatpush1.msra.mxu0 0.0
    %1444 = vmatprep.subr.mxu0 0.0
    %1445 = vmatpush1.msra.mxu0 0.0
    %1446 = vmatprep.subr.mxu0 0.0
    %1447 = vmatpush1.msra.mxu0 0.0
    %1448 = vmatprep.subr.mxu0 0.0
    %1449 = vmatpush1.msra.mxu0 0.0
    %1450 = vmatprep.subr.mxu0 0.0
    %1451 = vmatpush1.msra.mxu0 0.0
    %1452 = vmatprep.subr.mxu0 0.0
    %1453 = vmatpush1.msra.mxu0 0.0
    %1454 = vmatprep.subr.mxu0 0.0
    %1455 = vmatpush1.msra.mxu0 0.0
    %1456 = vmatprep.subr.mxu0 0.0
    %1457 = vmatpush1.msra.mxu0 0.0
    %1458 = vmatprep.subr.mxu0 0.0
    %1459 = vmatpush1.msra.mxu0 0.0
    %1460 = vmatprep.subr.mxu0 0.0
    %1461 = vmatpush1.msra.mxu0 0.0
    %1462 = vmatprep.subr.mxu0 0.0
    %1463 = vmatpush1.msra.mxu0 0.0
    %1464 = vmatprep.subr.mxu0 0.0
    %1465 = vmatpush1.msra.mxu0 0.0
    %1466 = vmatprep.subr.mxu0 0.0
    %1467 = vmatpush1.msra.mxu0 0.0
    %1468 = vmatprep.subr.mxu0 0.0
    %1469 = vmatpush1.msra.mxu0 0.0
    %1470 = vmatprep.subr.mxu0 0.0
    %1471 = vmatpush1.msra.mxu0 0.0
    %1472 = vmatprep.subr.mxu0 0.0
    %1473 = vmatpush1.msra.mxu0 0.0
    %1474 = vmatprep.subr.mxu0 0.0
    %1475 = vmatpush1.msra.mxu0 0.0
    %1476 = vmatprep.subr.mxu0 0.0
    %1477 = vmatpush1.msra.mxu0 0.0
    %1478 = vmatprep.subr.mxu0 0.0
    %1479 = vmatpush1.msra.mxu0 0.0
    %1480 = vmatprep.subr.mxu0 0.0
    %1481 = vmatpush1.msra.mxu0 0.0
    %1482 = vmatprep.subr.mxu0 0.0
    %1483 = vmatpush1.msra.mxu0 0.0
    %1484 = vmatprep.subr.mxu0 0.0
    %1485 = vmatpush1.msra.mxu0 0.0
    %1486 = vmatprep.subr.mxu0 0.0
    %1487 = vmatpush1.msra.mxu0 0.0
    %1488 = vmatprep.subr.mxu0 0.0
    %1489 = vmatpush1.msra.mxu0 0.0
    %1490 = vmatprep.subr.mxu0 0.0
    %1491 = vmatpush1.msra.mxu0 0.0
    %1492 = vmatprep.subr.mxu0 0.0
    %1493 = vmatpush1.msra.mxu0 0.0
    %1494 = vmatprep.subr.mxu0 0.0
    %1495 = vmatpush1.msra.mxu0 0.0
    %1496 = vmatprep.subr.mxu0 0.0
    %1497 = vmatpush1.msra.mxu0 0.0
    %1498 = vmatprep.subr.mxu0 0.0
    %1499 = vmatpush1.msra.mxu0 0.0
    %1500 = vmatprep.mubr.f32.mxu0 0.0
    %1501 = vmatmul.mubr.f32.gmra.mrb[0].mxu0 %v1431
    %v1502 = vpop.f32.mrb[0].mxu0
    %v1503 = vadd.f32 0.0, %v1502
    %v1504 = vpop.f32.mrb[0].mxu0
    %1505 = vmatprep.mubr.f32.mxu0 0.0
    %1506 = vmatmul.mubr.f32.gmra.mrb[0].mxu0 %v1434
    %v1507 = vpop.f32.mrb[0].mxu0
    %v1508 = vadd.f32 0.0, %v1507
    %v1509 = vpop.f32.mrb[0].mxu0
    %1510 = vdwg.mxu0
    %1511 = vrot.lane.b32.xlu0 %v400, 64
    %v1512 = vpop.permute.xlu0 %1511
    %1513 = vrot.lane.b32.xlu0 %v405, 64
    %v1514 = vpop.permute.xlu0 %1513
    %v1518 = vsel %vm587, %v1422, 0
    %v1521 = vsel %vm587, %v1423, 0
    %1523 = vmatprep.subr.mxu0 0.0
    %1524 = vmatpush1.msra.mxu0 %v1512
    %1525 = vmatprep.subr.mxu0 0.0
    %1526 = vmatpush1.msra.mxu0 %v1514
    %1527 = vmatprep.subr.mxu0 0.0
    %1528 = vmatpush1.msra.mxu0 0.0
    %1529 = vmatprep.subr.mxu0 0.0
    %1530 = vmatpush1.msra.mxu0 0.0
    %1531 = vmatprep.subr.mxu0 0.0
    %1532 = vmatpush1.msra.mxu0 0.0
    %1533 = vmatprep.subr.mxu0 0.0
    %1534 = vmatpush1.msra.mxu0 0.0
    %1535 = vmatprep.subr.mxu0 0.0
    %1536 = vmatpush1.msra.mxu0 0.0
    %1537 = vmatprep.subr.mxu0 0.0
    %1538 = vmatpush1.msra.mxu0 0.0
    %1539 = vmatprep.subr.mxu0 0.0
    %1540 = vmatpush1.msra.mxu0 0.0
    %1541 = vmatprep.subr.mxu0 0.0
    %1542 = vmatpush1.msra.mxu0 0.0
    %1543 = vmatprep.subr.mxu0 0.0
    %1544 = vmatpush1.msra.mxu0 0.0
    %1545 = vmatprep.subr.mxu0 0.0
    %1546 = vmatpush1.msra.mxu0 0.0
    %1547 = vmatprep.subr.mxu0 0.0
    %1548 = vmatpush1.msra.mxu0 0.0
    %1549 = vmatprep.subr.mxu0 0.0
    %1550 = vmatpush1.msra.mxu0 0.0
    %1551 = vmatprep.subr.mxu0 0.0
    %1552 = vmatpush1.msra.mxu0 0.0
    %1553 = vmatprep.subr.mxu0 0.0
    %1554 = vmatpush1.msra.mxu0 0.0
    %1555 = vmatprep.subr.mxu0 0.0
    %1556 = vmatpush1.msra.mxu0 0.0
    %1557 = vmatprep.subr.mxu0 0.0
    %1558 = vmatpush1.msra.mxu0 0.0
    %1559 = vmatprep.subr.mxu0 0.0
    %1560 = vmatpush1.msra.mxu0 0.0
    %1561 = vmatprep.subr.mxu0 0.0
    %1562 = vmatpush1.msra.mxu0 0.0
    %1563 = vmatprep.subr.mxu0 0.0
    %1564 = vmatpush1.msra.mxu0 0.0
    %1565 = vmatprep.subr.mxu0 0.0
    %1566 = vmatpush1.msra.mxu0 0.0
    %1567 = vmatprep.subr.mxu0 0.0
    %1568 = vmatpush1.msra.mxu0 0.0
    %1569 = vmatprep.subr.mxu0 0.0
    %1570 = vmatpush1.msra.mxu0 0.0
    %1571 = vmatprep.subr.mxu0 0.0
    %1572 = vmatpush1.msra.mxu0 0.0
    %1573 = vmatprep.subr.mxu0 0.0
    %1574 = vmatpush1.msra.mxu0 0.0
    %1575 = vmatprep.subr.mxu0 0.0
    %1576 = vmatpush1.msra.mxu0 0.0
    %1577 = vmatprep.subr.mxu0 0.0
    %1578 = vmatpush1.msra.mxu0 0.0
    %1579 = vmatprep.subr.mxu0 0.0
    %1580 = vmatpush1.msra.mxu0 0.0
    %1581 = vmatprep.subr.mxu0 0.0
    %1582 = vmatpush1.msra.mxu0 0.0
    %1583 = vmatprep.subr.mxu0 0.0
    %1584 = vmatpush1.msra.mxu0 0.0
    %1585 = vmatprep.subr.mxu0 0.0
    %1586 = vmatpush1.msra.mxu0 0.0
    %1587 = vmatprep.mubr.f32.mxu0 0.0
    %1588 = vmatmul.mubr.f32.gmra.mrb[0].mxu0 %v1518
    %v1589 = vpop.f32.mrb[0].mxu0
    %v1590 = vadd.f32 0.0, %v1589
    %v1591 = vpop.f32.mrb[0].mxu0
    %1592 = vmatprep.mubr.f32.mxu0 0.0
    %1593 = vmatmul.mubr.f32.gmra.mrb[0].mxu0 %v1521
    %v1594 = vpop.f32.mrb[0].mxu0
    %v1595 = vadd.f32 0.0, %v1594
    %v1596 = vpop.f32.mrb[0].mxu0
    %1597 = vdwg.mxu0
    %1598 = vrot.lane.b32.xlu0 %v408, 32
    %v1599 = vpop.permute.xlu0 %1598
    %1600 = vrot.lane.b32.xlu0 %v409, 32
    %v1601 = vpop.permute.xlu0 %1600
    %1602 = vrot.lane.b32.xlu0 %v303, 32
    %v1603 = vpop.permute.xlu0 %1602
    %1604 = vrot.lane.b32.xlu0 %v309, 32
    %v1605 = vpop.permute.xlu0 %1604
    %v1606 = vsel %vm412, %v1599, 0
    %v1608 = vsel %vm412, %v1601, 0
    %v1610 = vsel %vm412, %v1603, 0
    %v1612 = vsel %vm412, %v1605, 0
    %1614 = vmatprep.subr.mxu0 0.0
    %1615 = vmatpush1.xpose.msra.mxu0 %v1610
    %1616 = vmatprep.subr.mxu0 0.0
    %1617 = vmatpush1.xpose.msra.mxu0 %v1612
    %1618 = vmatprep.subr.mxu0 0.0
    %1619 = vmatpush1.xpose.msra.mxu0 0.0
    %1620 = vmatprep.subr.mxu0 0.0
    %1621 = vmatpush1.xpose.msra.mxu0 0.0
    %1622 = vmatprep.subr.mxu0 0.0
    %1623 = vmatpush1.xpose.msra.mxu0 0.0
    %1624 = vmatprep.subr.mxu0 0.0
    %1625 = vmatpush1.xpose.msra.mxu0 0.0
    %1626 = vmatprep.subr.mxu0 0.0
    %1627 = vmatpush1.xpose.msra.mxu0 0.0
    %1628 = vmatprep.subr.mxu0 0.0
    %1629 = vmatpush1.xpose.msra.mxu0 0.0
    %1630 = vmatprep.subr.mxu0 0.0
    %1631 = vmatpush1.xpose.msra.mxu0 0.0
    %1632 = vmatprep.subr.mxu0 0.0
    %1633 = vmatpush1.xpose.msra.mxu0 0.0
    %1634 = vmatprep.subr.mxu0 0.0
    %1635 = vmatpush1.xpose.msra.mxu0 0.0
    %1636 = vmatprep.subr.mxu0 0.0
    %1637 = vmatpush1.xpose.msra.mxu0 0.0
    %1638 = vmatprep.subr.mxu0 0.0
    %1639 = vmatpush1.xpose.msra.mxu0 0.0
    %1640 = vmatprep.subr.mxu0 0.0
    %1641 = vmatpush1.xpose.msra.mxu0 0.0
    %1642 = vmatprep.subr.mxu0 0.0
    %1643 = vmatpush1.xpose.msra.mxu0 0.0
    %1644 = vmatprep.subr.mxu0 0.0
    %1645 = vmatpush1.xpose.msra.mxu0 0.0
    %1646 = vmatprep.subr.mxu0 0.0
    %1647 = vmatpush1.xpose.msra.mxu0 0.0
    %1648 = vmatprep.subr.mxu0 0.0
    %1649 = vmatpush1.xpose.msra.mxu0 0.0
    %1650 = vmatprep.subr.mxu0 0.0
    %1651 = vmatpush1.xpose.msra.mxu0 0.0
    %1652 = vmatprep.subr.mxu0 0.0
    %1653 = vmatpush1.xpose.msra.mxu0 0.0
    %1654 = vmatprep.subr.mxu0 0.0
    %1655 = vmatpush1.xpose.msra.mxu0 0.0
    %1656 = vmatprep.subr.mxu0 0.0
    %1657 = vmatpush1.xpose.msra.mxu0 0.0
    %1658 = vmatprep.subr.mxu0 0.0
    %1659 = vmatpush1.xpose.msra.mxu0 0.0
    %1660 = vmatprep.subr.mxu0 0.0
    %1661 = vmatpush1.xpose.msra.mxu0 0.0
    %1662 = vmatprep.subr.mxu0 0.0
    %1663 = vmatpush1.xpose.msra.mxu0 0.0
    %1664 = vmatprep.subr.mxu0 0.0
    %1665 = vmatpush1.xpose.msra.mxu0 0.0
    %1666 = vmatprep.subr.mxu0 0.0
    %1667 = vmatpush1.xpose.msra.mxu0 0.0
    %1668 = vmatprep.subr.mxu0 0.0
    %1669 = vmatpush1.xpose.msra.mxu0 0.0
    %1670 = vmatprep.subr.mxu0 0.0
    %1671 = vmatpush1.xpose.msra.mxu0 0.0
    %1672 = vmatprep.subr.mxu0 0.0
    %1673 = vmatpush1.xpose.msra.mxu0 0.0
    %1674 = vmatprep.subr.mxu0 0.0
    %1675 = vmatpush1.xpose.msra.mxu0 0.0
    %1676 = vmatprep.subr.mxu0 0.0
    %1677 = vmatpush1.xpose.msra.mxu0 0.0
    %1678 = vmatprep.mubr.f32.mxu0 0.0
    %1679 = vmatmul.mubr.f32.gmra.mrb[0].mxu0 %v1606
    %v1680 = vpop.f32.mrb[0].mxu0
    %v1681 = vadd.f32 0.0, %v1680
    %v1682 = vpop.f32.mrb[0].mxu0
    %1683 = vmatprep.mubr.f32.mxu0 0.0
    %1684 = vmatmul.mubr.f32.gmra.mrb[0].mxu0 %v1608
    %v1685 = vpop.f32.mrb[0].mxu0
    %v1686 = vadd.f32 0.0, %v1685
    %v1687 = vpop.f32.mrb[0].mxu0
    %1688 = vdwg.mxu0
    %1689 = vrot.lane.b32.xlu0 %v410, 32
    %v1690 = vpop.permute.xlu0 %1689
    %1691 = vrot.lane.b32.xlu0 %v411, 32
    %v1692 = vpop.permute.xlu0 %1691
    %1693 = vrot.lane.b32.xlu0 %v315, 32
    %v1694 = vpop.permute.xlu0 %1693
    %1695 = vrot.lane.b32.xlu0 %v321, 32
    %v1696 = vpop.permute.xlu0 %1695
    %v1697 = vsel %vm412, %v1690, 0
    %v1699 = vsel %vm412, %v1692, 0
    %v1701 = vsel %vm412, %v1694, 0
    %v1703 = vsel %vm412, %v1696, 0
    %1705 = vmatprep.subr.mxu0 0.0
    %1706 = vmatpush1.xpose.msra.mxu0 %v1701
    %1707 = vmatprep.subr.mxu0 0.0
    %1708 = vmatpush1.xpose.msra.mxu0 %v1703
    %1709 = vmatprep.subr.mxu0 0.0
    %1710 = vmatpush1.xpose.msra.mxu0 0.0
    %1711 = vmatprep.subr.mxu0 0.0
    %1712 = vmatpush1.xpose.msra.mxu0 0.0
    %1713 = vmatprep.subr.mxu0 0.0
    %1714 = vmatpush1.xpose.msra.mxu0 0.0
    %1715 = vmatprep.subr.mxu0 0.0
    %1716 = vmatpush1.xpose.msra.mxu0 0.0
    %1717 = vmatprep.subr.mxu0 0.0
    %1718 = vmatpush1.xpose.msra.mxu0 0.0
    %1719 = vmatprep.subr.mxu0 0.0
    %1720 = vmatpush1.xpose.msra.mxu0 0.0
    %1721 = vmatprep.subr.mxu0 0.0
    %1722 = vmatpush1.xpose.msra.mxu0 0.0
    %1723 = vmatprep.subr.mxu0 0.0
    %1724 = vmatpush1.xpose.msra.mxu0 0.0
    %1725 = vmatprep.subr.mxu0 0.0
    %1726 = vmatpush1.xpose.msra.mxu0 0.0
    %1727 = vmatprep.subr.mxu0 0.0
    %1728 = vmatpush1.xpose.msra.mxu0 0.0
    %1729 = vmatprep.subr.mxu0 0.0
    %1730 = vmatpush1.xpose.msra.mxu0 0.0
    %1731 = vmatprep.subr.mxu0 0.0
    %1732 = vmatpush1.xpose.msra.mxu0 0.0
    %1733 = vmatprep.subr.mxu0 0.0
    %1734 = vmatpush1.xpose.msra.mxu0 0.0
    %1735 = vmatprep.subr.mxu0 0.0
    %1736 = vmatpush1.xpose.msra.mxu0 0.0
    %1737 = vmatprep.subr.mxu0 0.0
    %1738 = vmatpush1.xpose.msra.mxu0 0.0
    %1739 = vmatprep.subr.mxu0 0.0
    %1740 = vmatpush1.xpose.msra.mxu0 0.0
    %1741 = vmatprep.subr.mxu0 0.0
    %1742 = vmatpush1.xpose.msra.mxu0 0.0
    %1743 = vmatprep.subr.mxu0 0.0
    %1744 = vmatpush1.xpose.msra.mxu0 0.0
    %1745 = vmatprep.subr.mxu0 0.0
    %1746 = vmatpush1.xpose.msra.mxu0 0.0
    %1747 = vmatprep.subr.mxu0 0.0
    %1748 = vmatpush1.xpose.msra.mxu0 0.0
    %1749 = vmatprep.subr.mxu0 0.0
    %1750 = vmatpush1.xpose.msra.mxu0 0.0
    %1751 = vmatprep.subr.mxu0 0.0
    %1752 = vmatpush1.xpose.msra.mxu0 0.0
    %1753 = vmatprep.subr.mxu0 0.0
    %1754 = vmatpush1.xpose.msra.mxu0 0.0
    %1755 = vmatprep.subr.mxu0 0.0
    %1756 = vmatpush1.xpose.msra.mxu0 0.0
    %1757 = vmatprep.subr.mxu0 0.0
    %1758 = vmatpush1.xpose.msra.mxu0 0.0
    %1759 = vmatprep.subr.mxu0 0.0
    %1760 = vmatpush1.xpose.msra.mxu0 0.0
    %1761 = vmatprep.subr.mxu0 0.0
    %1762 = vmatpush1.xpose.msra.mxu0 0.0
    %1763 = vmatprep.subr.mxu0 0.0
    %1764 = vmatpush1.xpose.msra.mxu0 0.0
    %1765 = vmatprep.subr.mxu0 0.0
    %1766 = vmatpush1.xpose.msra.mxu0 0.0
    %1767 = vmatprep.subr.mxu0 0.0
    %1768 = vmatpush1.xpose.msra.mxu0 0.0
    %1769 = vmatprep.mubr.f32.mxu0 0.0
    %1770 = vmatmul.mubr.f32.gmra.mrb[0].mxu0 %v1697
    %v1771 = vpop.f32.mrb[0].mxu0
    %v1772 = vadd.f32 0.0, %v1771
    %v1773 = vpop.f32.mrb[0].mxu0
    %1774 = vmatprep.mubr.f32.mxu0 0.0
    %1775 = vmatmul.mubr.f32.gmra.mrb[0].mxu0 %v1699
    %v1776 = vpop.f32.mrb[0].mxu0
    %v1777 = vadd.f32 0.0, %v1776
    %v1778 = vpop.f32.mrb[0].mxu0
    %1779 = vdwg.mxu0
    %v1780 = vsel %vm587, %v1681, -inf
    %1781 = vmax.xlane.f32.xlu0 %v1780
    %v1782 = vpop.xlane.xlu0 %1781
    %v1783 = vsel %vm587, %v1686, -inf
    %1784 = vmax.xlane.f32.xlu0 %v1783
    %v1785 = vpop.xlane.xlu0 %1784
    %v1786 = vsel %vm587, %v1772, -inf
    %1787 = vmax.xlane.f32.xlu0 %v1786
    %v1788 = vpop.xlane.xlu0 %1787
    %v1789 = vsel %vm587, %v1777, -inf
    %1790 = vmax.xlane.f32.xlu0 %v1789
    %v1791 = vpop.xlane.xlu0 %1790
    %v1792 = vsub.f32 %v1681, %v1782
    %v1793 = vsub.f32 %v1686, %v1785
    %v1794 = vsub.f32 %v1772, %v1788
    %v1795 = vsub.f32 %v1777, %v1791
    %v1796 = vmul.f32 %v1792, 1.442695
    %v1797 = vpow.pop %v1796
    %v1798 = vmul.f32 %v1793, 1.442695
    %v1799 = vpow.pop %v1798
    %v1800 = vmul.f32 %v1794, 1.442695
    %v1801 = vpow.pop %v1800
    %v1802 = vmul.f32 %v1795, 1.442695
    %v1803 = vpow.pop %v1802
    %v1804 = vsel %vm587, %v1797, 0.0
    %1805 = vadd.xlane.f32.xlu0 %v1804
    %v1806 = vpop.xlane.xlu0 %1805
    %v1807 = vsel %vm587, %v1799, 0.0
    %1808 = vadd.xlane.f32.xlu0 %v1807
    %v1809 = vpop.xlane.xlu0 %1808
    %v1810 = vsel %vm587, %v1801, 0.0
    %1811 = vadd.xlane.f32.xlu0 %v1810
    %v1812 = vpop.xlane.xlu0 %1811
    %v1813 = vsel %vm587, %v1803, 0.0
    %1814 = vadd.xlane.f32.xlu0 %v1813
    %v1815 = vpop.xlane.xlu0 %1814
    %v1816 = vrcp.pop %v1806
    %v1817 = vrcp.pop %v1809
    %v1818 = vrcp.pop %v1812
    %v1819 = vrcp.pop %v1815
    %v1820 = vmul.f32 %v1797, %v1816
    %v1821 = vmul.f32 %v1799, %v1817
    %v1822 = vmul.f32 %v1801, %v1818
    %v1823 = vmul.f32 %v1803, %v1819
    %1824 = vrot.lane.b32.xlu0 %v390, 32
    %v1825 = vpop.permute.xlu0 %1824
    %1826 = vrot.lane.b32.xlu0 %v395, 32
    %v1827 = vpop.permute.xlu0 %1826
    %v1831 = vsel %vm587, %v1820, 0
    %v1834 = vsel %vm587, %v1821, 0
    %1836 = vmatprep.subr.mxu0 0.0
    %1837 = vmatpush1.msra.mxu0 %v1825
    %1838 = vmatprep.subr.mxu0 0.0
    %1839 = vmatpush1.msra.mxu0 %v1827
    %1840 = vmatprep.subr.mxu0 0.0
    %1841 = vmatpush1.msra.mxu0 0.0
    %1842 = vmatprep.subr.mxu0 0.0
    %1843 = vmatpush1.msra.mxu0 0.0
    %1844 = vmatprep.subr.mxu0 0.0
    %1845 = vmatpush1.msra.mxu0 0.0
    %1846 = vmatprep.subr.mxu0 0.0
    %1847 = vmatpush1.msra.mxu0 0.0
    %1848 = vmatprep.subr.mxu0 0.0
    %1849 = vmatpush1.msra.mxu0 0.0
    %1850 = vmatprep.subr.mxu0 0.0
    %1851 = vmatpush1.msra.mxu0 0.0
    %1852 = vmatprep.subr.mxu0 0.0
    %1853 = vmatpush1.msra.mxu0 0.0
    %1854 = vmatprep.subr.mxu0 0.0
    %1855 = vmatpush1.msra.mxu0 0.0
    %1856 = vmatprep.subr.mxu0 0.0
    %1857 = vmatpush1.msra.mxu0 0.0
    %1858 = vmatprep.subr.mxu0 0.0
    %1859 = vmatpush1.msra.mxu0 0.0
    %1860 = vmatprep.subr.mxu0 0.0
    %1861 = vmatpush1.msra.mxu0 0.0
    %1862 = vmatprep.subr.mxu0 0.0
    %1863 = vmatpush1.msra.mxu0 0.0
    %1864 = vmatprep.subr.mxu0 0.0
    %1865 = vmatpush1.msra.mxu0 0.0
    %1866 = vmatprep.subr.mxu0 0.0
    %1867 = vmatpush1.msra.mxu0 0.0
    %1868 = vmatprep.subr.mxu0 0.0
    %1869 = vmatpush1.msra.mxu0 0.0
    %1870 = vmatprep.subr.mxu0 0.0
    %1871 = vmatpush1.msra.mxu0 0.0
    %1872 = vmatprep.subr.mxu0 0.0
    %1873 = vmatpush1.msra.mxu0 0.0
    %1874 = vmatprep.subr.mxu0 0.0
    %1875 = vmatpush1.msra.mxu0 0.0
    %1876 = vmatprep.subr.mxu0 0.0
    %1877 = vmatpush1.msra.mxu0 0.0
    %1878 = vmatprep.subr.mxu0 0.0
    %1879 = vmatpush1.msra.mxu0 0.0
    %1880 = vmatprep.subr.mxu0 0.0
    %1881 = vmatpush1.msra.mxu0 0.0
    %1882 = vmatprep.subr.mxu0 0.0
    %1883 = vmatpush1.msra.mxu0 0.0
    %1884 = vmatprep.subr.mxu0 0.0
    %1885 = vmatpush1.msra.mxu0 0.0
    %1886 = vmatprep.subr.mxu0 0.0
    %1887 = vmatpush1.msra.mxu0 0.0
    %1888 = vmatprep.subr.mxu0 0.0
    %1889 = vmatpush1.msra.mxu0 0.0
    %1890 = vmatprep.subr.mxu0 0.0
    %1891 = vmatpush1.msra.mxu0 0.0
    %1892 = vmatprep.subr.mxu0 0.0
    %1893 = vmatpush1.msra.mxu0 0.0
    %1894 = vmatprep.subr.mxu0 0.0
    %1895 = vmatpush1.msra.mxu0 0.0
    %1896 = vmatprep.subr.mxu0 0.0
    %1897 = vmatpush1.msra.mxu0 0.0
    %1898 = vmatprep.subr.mxu0 0.0
    %1899 = vmatpush1.msra.mxu0 0.0
    %1900 = vmatprep.mubr.f32.mxu0 0.0
    %1901 = vmatmul.mubr.f32.gmra.mrb[0].mxu0 %v1831
    %v1902 = vpop.f32.mrb[0].mxu0
    %v1903 = vadd.f32 0.0, %v1902
    %v1904 = vpop.f32.mrb[0].mxu0
    %1905 = vmatprep.mubr.f32.mxu0 0.0
    %1906 = vmatmul.mubr.f32.gmra.mrb[0].mxu0 %v1834
    %v1907 = vpop.f32.mrb[0].mxu0
    %v1908 = vadd.f32 0.0, %v1907
    %v1909 = vpop.f32.mrb[0].mxu0
    %1910 = vdwg.mxu0
    %1911 = vrot.lane.b32.xlu0 %v400, 32
    %v1912 = vpop.permute.xlu0 %1911
    %1913 = vrot.lane.b32.xlu0 %v405, 32
    %v1914 = vpop.permute.xlu0 %1913
    %v1918 = vsel %vm587, %v1822, 0
    %v1921 = vsel %vm587, %v1823, 0
    %1923 = vmatprep.subr.mxu0 0.0
    %1924 = vmatpush1.msra.mxu0 %v1912
    %1925 = vmatprep.subr.mxu0 0.0
    %1926 = vmatpush1.msra.mxu0 %v1914
    %1927 = vmatprep.subr.mxu0 0.0
    %1928 = vmatpush1.msra.mxu0 0.0
    %1929 = vmatprep.subr.mxu0 0.0
    %1930 = vmatpush1.msra.mxu0 0.0
    %1931 = vmatprep.subr.mxu0 0.0
    %1932 = vmatpush1.msra.mxu0 0.0
    %1933 = vmatprep.subr.mxu0 0.0
    %1934 = vmatpush1.msra.mxu0 0.0
    %1935 = vmatprep.subr.mxu0 0.0
    %1936 = vmatpush1.msra.mxu0 0.0
    %1937 = vmatprep.subr.mxu0 0.0
    %1938 = vmatpush1.msra.mxu0 0.0
    %1939 = vmatprep.subr.mxu0 0.0
    %1940 = vmatpush1.msra.mxu0 0.0
    %1941 = vmatprep.subr.mxu0 0.0
    %1942 = vmatpush1.msra.mxu0 0.0
    %1943 = vmatprep.subr.mxu0 0.0
    %1944 = vmatpush1.msra.mxu0 0.0
    %1945 = vmatprep.subr.mxu0 0.0
    %1946 = vmatpush1.msra.mxu0 0.0
    %1947 = vmatprep.subr.mxu0 0.0
    %1948 = vmatpush1.msra.mxu0 0.0
    %1949 = vmatprep.subr.mxu0 0.0
    %1950 = vmatpush1.msra.mxu0 0.0
    %1951 = vmatprep.subr.mxu0 0.0
    %1952 = vmatpush1.msra.mxu0 0.0
    %1953 = vmatprep.subr.mxu0 0.0
    %1954 = vmatpush1.msra.mxu0 0.0
    %1955 = vmatprep.subr.mxu0 0.0
    %1956 = vmatpush1.msra.mxu0 0.0
    %1957 = vmatprep.subr.mxu0 0.0
    %1958 = vmatpush1.msra.mxu0 0.0
    %1959 = vmatprep.subr.mxu0 0.0
    %1960 = vmatpush1.msra.mxu0 0.0
    %1961 = vmatprep.subr.mxu0 0.0
    %1962 = vmatpush1.msra.mxu0 0.0
    %1963 = vmatprep.subr.mxu0 0.0
    %1964 = vmatpush1.msra.mxu0 0.0
    %1965 = vmatprep.subr.mxu0 0.0
    %1966 = vmatpush1.msra.mxu0 0.0
    %1967 = vmatprep.subr.mxu0 0.0
    %1968 = vmatpush1.msra.mxu0 0.0
    %1969 = vmatprep.subr.mxu0 0.0
    %1970 = vmatpush1.msra.mxu0 0.0
    %1971 = vmatprep.subr.mxu0 0.0
    %1972 = vmatpush1.msra.mxu0 0.0
    %1973 = vmatprep.subr.mxu0 0.0
    %1974 = vmatpush1.msra.mxu0 0.0
    %1975 = vmatprep.subr.mxu0 0.0
    %1976 = vmatpush1.msra.mxu0 0.0
    %1977 = vmatprep.subr.mxu0 0.0
    %1978 = vmatpush1.msra.mxu0 0.0
    %1979 = vmatprep.subr.mxu0 0.0
    %1980 = vmatpush1.msra.mxu0 0.0
    %1981 = vmatprep.subr.mxu0 0.0
    %1982 = vmatpush1.msra.mxu0 0.0
    %1983 = vmatprep.subr.mxu0 0.0
    %1984 = vmatpush1.msra.mxu0 0.0
    %1985 = vmatprep.subr.mxu0 0.0
    %1986 = vmatpush1.msra.mxu0 0.0
    %1987 = vmatprep.mubr.f32.mxu0 0.0
    %1988 = vmatmul.mubr.f32.gmra.mrb[0].mxu0 %v1918
    %v1989 = vpop.f32.mrb[0].mxu0
    %v1990 = vadd.f32 0.0, %v1989
    %v1991 = vpop.f32.mrb[0].mxu0
    %1992 = vmatprep.mubr.f32.mxu0 0.0
    %1993 = vmatmul.mubr.f32.gmra.mrb[0].mxu0 %v1921
    %v1994 = vpop.f32.mrb[0].mxu0
    %v1995 = vadd.f32 0.0, %v1994
    %v1996 = vpop.f32.mrb[0].mxu0
    %1997 = vdwg.mxu0
    %2002 = vrot.lane.b32.xlu0 %v1101, 32
    %v2003 = vpop.permute.xlu0 %2002
    %2004 = vrot.lane.b32.xlu0 %v1106, 32
    %v2005 = vpop.permute.xlu0 %2004
    %2006 = vrot.lane.b32.xlu0 %v1190, 32
    %v2007 = vpop.permute.xlu0 %2006
    %2008 = vrot.lane.b32.xlu0 %v1195, 32
    %v2009 = vpop.permute.xlu0 %2008
    %2018 = vrot.lane.b32.xlu0 %v1503, 64
    %v2019 = vpop.permute.xlu0 %2018
    %2020 = vrot.lane.b32.xlu0 %v1508, 64
    %v2021 = vpop.permute.xlu0 %2020
    %2022 = vrot.lane.b32.xlu0 %v1590, 64
    %v2023 = vpop.permute.xlu0 %2022
    %2024 = vrot.lane.b32.xlu0 %v1595, 64
    %v2025 = vpop.permute.xlu0 %2024
    %2034 = vrot.lane.b32.xlu0 %v1903, 96
    %v2035 = vpop.permute.xlu0 %2034
    %2036 = vrot.lane.b32.xlu0 %v1908, 96
    %v2037 = vpop.permute.xlu0 %2036
    %2038 = vrot.lane.b32.xlu0 %v1990, 96
    %v2039 = vpop.permute.xlu0 %2038
    %2040 = vrot.lane.b32.xlu0 %v1995, 96
    %v2041 = vpop.permute.xlu0 %2040
    %v2046 = vsel %vm412, %v705, %v2003
    %v2047 = vsel %vm412, %v710, %v2005
    %v2048 = vsel %vm412, %v786, %v2007
    %v2049 = vsel %vm412, %v791, %v2009
    %vm2050 = vcmask 523264
    %v2051 = vsel %vm2050, %v2046, %v2019
    %v2052 = vsel %vm2050, %v2047, %v2021
    %v2053 = vsel %vm2050, %v2048, %v2023
    %v2054 = vsel %vm2050, %v2049, %v2025
    %vm2055 = vcmask 785408
    %v2056 = vsel %vm2055, %v2051, %v2035
    %v2057 = vsel %vm2055, %v2052, %v2037
    %v2058 = vsel %vm2055, %v2053, %v2039
    %v2059 = vsel %vm2055, %v2054, %v2041
    %v2060 = vld [vmem:[#allocation8] sm:$0xff]
    %v2061 = vld [vmem:[#allocation8 + $0x8] sm:$0xff]
    %v2062 = vld [vmem:[#allocation8 + $0x10] sm:$0xff]
    %v2063 = vld [vmem:[#allocation8 + $0x18] sm:$0xff]
    %v2064 = vld [vmem:[#allocation8 + $0x20] sm:$0xff]
    %v2065 = vld [vmem:[#allocation8 + $0x28] sm:$0xff]
    %v2066 = vld [vmem:[#allocation8 + $0x30] sm:$0xff]
    %v2067 = vld [vmem:[#allocation8 + $0x38] sm:$0xff]
    %v2068 = vld [vmem:[#allocation8 + $0x40] sm:$0xff]
    %v2069 = vld [vmem:[#allocation8 + $0x48] sm:$0xff]
    %v2070 = vld [vmem:[#allocation8 + $0x50] sm:$0xff]
    %v2071 = vld [vmem:[#allocation8 + $0x58] sm:$0xff]
    %v2072 = vld [vmem:[#allocation8 + $0x60] sm:$0xff]
    %v2073 = vld [vmem:[#allocation8 + $0x68] sm:$0xff]
    %v2074 = vld [vmem:[#allocation8 + $0x70] sm:$0xff]
    %v2075 = vld [vmem:[#allocation8 + $0x78] sm:$0xff]
    %v2076 = vld [vmem:[%s5] sm:$0x1]
    %v2078 = vlaneseq
    %v2079 = vshrl.u32 %v2078, 7
    %v2080 = vsub.s32 0, %v2079
    %v2081 = vrot.slane %v2076, %v2080
    %2083 = vmatprep.subr.mxu0 0.0
    %2084 = vmatpush1.msra.mxu0 %v2060
    %2085 = vmatprep.subr.mxu0 0.0
    %2086 = vmatpush1.msra.mxu0 %v2061
    %2087 = vmatprep.subr.mxu0 0.0
    %2088 = vmatpush1.msra.mxu0 %v2062
    %2089 = vmatprep.subr.mxu0 0.0
    %2090 = vmatpush1.msra.mxu0 %v2063
    %2091 = vmatprep.subr.mxu0 0.0
    %2092 = vmatpush1.msra.mxu0 %v2064
    %2093 = vmatprep.subr.mxu0 0.0
    %2094 = vmatpush1.msra.mxu0 %v2065
    %2095 = vmatprep.subr.mxu0 0.0
    %2096 = vmatpush1.msra.mxu0 %v2066
    %2097 = vmatprep.subr.mxu0 0.0
    %2098 = vmatpush1.msra.mxu0 %v2067
    %2099 = vmatprep.subr.mxu0 0.0
    %2100 = vmatpush1.msra.mxu0 %v2068
    %2101 = vmatprep.subr.mxu0 0.0
    %2102 = vmatpush1.msra.mxu0 %v2069
    %2103 = vmatprep.subr.mxu0 0.0
    %2104 = vmatpush1.msra.mxu0 %v2070
    %2105 = vmatprep.subr.mxu0 0.0
    %2106 = vmatpush1.msra.mxu0 %v2071
    %2107 = vmatprep.subr.mxu0 0.0
    %2108 = vmatpush1.msra.mxu0 %v2072
    %2109 = vmatprep.subr.mxu0 0.0
    %2110 = vmatpush1.msra.mxu0 %v2073
    %2111 = vmatprep.subr.mxu0 0.0
    %2112 = vmatpush1.msra.mxu0 %v2074
    %2113 = vmatprep.subr.mxu0 0.0
    %2114 = vmatpush1.msra.mxu0 %v2075
    %2115 = vmatprep.subr.mxu0 0.0
    %2116 = vmatpush1.msra.mxu0 0.0
    %2117 = vmatprep.subr.mxu0 0.0
    %2118 = vmatpush1.msra.mxu0 0.0
    %2119 = vmatprep.subr.mxu0 0.0
    %2120 = vmatpush1.msra.mxu0 0.0
    %2121 = vmatprep.subr.mxu0 0.0
    %2122 = vmatpush1.msra.mxu0 0.0
    %2123 = vmatprep.subr.mxu0 0.0
    %2124 = vmatpush1.msra.mxu0 0.0
    %2125 = vmatprep.subr.mxu0 0.0
    %2126 = vmatpush1.msra.mxu0 0.0
    %2127 = vmatprep.subr.mxu0 0.0
    %2128 = vmatpush1.msra.mxu0 0.0
    %2129 = vmatprep.subr.mxu0 0.0
    %2130 = vmatpush1.msra.mxu0 0.0
    %2131 = vmatprep.subr.mxu0 0.0
    %2132 = vmatpush1.msra.mxu0 0.0
    %2133 = vmatprep.subr.mxu0 0.0
    %2134 = vmatpush1.msra.mxu0 0.0
    %2135 = vmatprep.subr.mxu0 0.0
    %2136 = vmatpush1.msra.mxu0 0.0
    %2137 = vmatprep.subr.mxu0 0.0
    %2138 = vmatpush1.msra.mxu0 0.0
    %2139 = vmatprep.subr.mxu0 0.0
    %2140 = vmatpush1.msra.mxu0 0.0
    %2141 = vmatprep.subr.mxu0 0.0
    %2142 = vmatpush1.msra.mxu0 0.0
    %2143 = vmatprep.subr.mxu0 0.0
    %2144 = vmatpush1.msra.mxu0 0.0
    %2145 = vmatprep.subr.mxu0 0.0
    %2146 = vmatpush1.msra.mxu0 0.0
    %2147 = vmatprep.mubr.f32.mxu0 0.0
    %2148 = vmatmul.mubr.f32.gmra.mrb[0].mxu0 %v2056
    %v2149 = vpop.f32.mrb[0].mxu0
    %v2150 = vadd.f32 %v2081, %v2149
    %v2151 = vpop.f32.mrb[0].mxu0
    %2152 = vmatprep.mubr.f32.mxu0 0.0
    %2153 = vmatmul.mubr.f32.gmra.mrb[0].mxu0 %v2057
    %v2154 = vpop.f32.mrb[0].mxu0
    %v2155 = vadd.f32 %v2081, %v2154
    %v2156 = vpop.f32.mrb[0].mxu0
    %2157 = vmatprep.mubr.f32.mxu0 0.0
    %2158 = vmatmul.mubr.f32.gmra.mrb[0].mxu0 %v2058
    %v2159 = vpop.f32.mrb[0].mxu0
    %v2160 = vadd.f32 %v2081, %v2159
    %v2161 = vpop.f32.mrb[0].mxu0
    %2162 = vmatprep.mubr.f32.mxu0 0.0
    %2163 = vmatmul.mubr.f32.gmra.mrb[0].mxu0 %v2059
    %v2164 = vpop.f32.mrb[0].mxu0
    %v2165 = vadd.f32 %v2081, %v2164
    %v2166 = vpop.f32.mrb[0].mxu0
    %2167 = vdwg.mxu0
    %v2168 = vadd.f32 %v122, 1.0
    %v2169 = vadd.f32 %v123, 1.0
    %v2170 = vlaneseq
    %v2171 = vshrl.u32 %v2170, 7
    %v2172 = vsub.s32 2, %v2171
    %v2173 = vrot.slane %v2168, %v2172
    %v2174 = vlaneseq
    %v2175 = vshrl.u32 %v2174, 7
    %v2176 = vsub.s32 2, %v2175
    %v2177 = vrot.slane %v2169, %v2176
    %v2178 = vmul.f32 %v2150, %v2173
    %v2179 = vmul.f32 %v2155, %v2173
    %v2180 = vmul.f32 %v2160, %v2177
    %v2181 = vmul.f32 %v2165, %v2177
    %v2182 = vlaneseq
    %v2183 = vshrl.u32 %v2182, 7
    %v2184 = vsub.s32 1, %v2183
    %v2185 = vrot.slane %v122, %v2184
    %v2186 = vlaneseq
    %v2187 = vshrl.u32 %v2186, 7
    %v2188 = vsub.s32 1, %v2187
    %v2189 = vrot.slane %v123, %v2188
    %v2190 = vadd.f32 %v2178, %v2185
    %v2191 = vadd.f32 %v2179, %v2185
    %v2192 = vadd.f32 %v2180, %v2189
    %v2193 = vadd.f32 %v2181, %v2189
    %v2194 = vlaneseq
    %v2195 = vshrl.u32 %v2194, 7
    %v2196 = vsub.s32 0, %v2195
    %v2197 = vrot.slane %v122, %v2196
    %v2198 = vlaneseq
    %v2199 = vshrl.u32 %v2198, 7
    %v2200 = vsub.s32 0, %v2199
    %v2201 = vrot.slane %v123, %v2200
    %v2202 = vmul.f32 %v2197, %v2190
    %v2203 = vmul.f32 %v2197, %v2191
    %v2204 = vmul.f32 %v2201, %v2192
    %v2205 = vmul.f32 %v2201, %v2193
    %v2206 = vadd.f32 %v2150, %v2202
    %v2207 = vadd.f32 %v2155, %v2203
    %v2208 = vadd.f32 %v2160, %v2204
    %v2209 = vadd.f32 %v2165, %v2205
    %v2210 = vadd.f32 %v118, %v2206
    %v2211 = vadd.f32 %v119, %v2207
    %v2212 = vadd.f32 %v120, %v2208
    %v2213 = vadd.f32 %v121, %v2209
    %2214 = vadd.xlane.f32.xlu0 %v2210
    %v2215 = vpop.xlane.xlu0 %2214
    %2216 = vadd.xlane.f32.xlu0 %v2211
    %v2217 = vpop.xlane.xlu0 %2216
    %2218 = vadd.xlane.f32.xlu0 %v2212
    %v2219 = vpop.xlane.xlu0 %2218
    %2220 = vadd.xlane.f32.xlu0 %v2213
    %v2221 = vpop.xlane.xlu0 %2220
    %v2222 = vmul.f32 %v2215, %v132
    %v2223 = vmul.f32 %v2217, %v132
    %v2224 = vmul.f32 %v2219, %v132
    %v2225 = vmul.f32 %v2221, %v132
    %v2226 = vsub.f32 %v2210, %v2222
    %v2227 = vsub.f32 %v2211, %v2223
    %v2228 = vsub.f32 %v2212, %v2224
    %v2229 = vsub.f32 %v2213, %v2225
    %v2230 = vmul.f32 %v2226, %v2226
    %v2231 = vmul.f32 %v2227, %v2227
    %v2232 = vmul.f32 %v2228, %v2228
    %v2233 = vmul.f32 %v2229, %v2229
    %2234 = vadd.xlane.f32.xlu0 %v2230
    %v2235 = vpop.xlane.xlu0 %2234
    %2236 = vadd.xlane.f32.xlu0 %v2231
    %v2237 = vpop.xlane.xlu0 %2236
    %2238 = vadd.xlane.f32.xlu0 %v2232
    %v2239 = vpop.xlane.xlu0 %2238
    %2240 = vadd.xlane.f32.xlu0 %v2233
    %v2241 = vpop.xlane.xlu0 %2240
    %v2242 = vmul.f32 %v2235, %v132
    %v2243 = vmul.f32 %v2237, %v132
    %v2244 = vmul.f32 %v2239, %v132
    %v2245 = vmul.f32 %v2241, %v132
    %v2246 = vadd.f32 %v2242, 1e-06
    %v2247 = vadd.f32 %v2243, 1e-06
    %v2248 = vadd.f32 %v2244, 1e-06
    %v2249 = vadd.f32 %v2245, 1e-06
    %v2250 = vrsqrt.pop %v2246
    %v2251 = vrsqrt.pop %v2247
    %v2252 = vrsqrt.pop %v2248
    %v2253 = vrsqrt.pop %v2249
    %v2254 = vmul.f32 %v2226, %v2250
    %v2255 = vmul.f32 %v2227, %v2251
    %v2256 = vmul.f32 %v2228, %v2252
    %v2257 = vmul.f32 %v2229, %v2253
    %v2258 = vld [vmem:[#allocation10] sm:$0xff]
    %v2259 = vld [vmem:[#allocation10 + $0x8] sm:$0xff]
    %v2260 = vld [vmem:[#allocation10 + $0x10] sm:$0xff]
    %v2261 = vld [vmem:[#allocation10 + $0x18] sm:$0xff]
    %v2262 = vld [vmem:[#allocation10 + $0x20] sm:$0xff]
    %v2263 = vld [vmem:[#allocation10 + $0x28] sm:$0xff]
    %v2264 = vld [vmem:[#allocation10 + $0x30] sm:$0xff]
    %v2265 = vld [vmem:[#allocation10 + $0x38] sm:$0xff]
    %v2266 = vld [vmem:[#allocation10 + $0x40] sm:$0xff]
    %v2267 = vld [vmem:[#allocation10 + $0x48] sm:$0xff]
    %v2268 = vld [vmem:[#allocation10 + $0x50] sm:$0xff]
    %v2269 = vld [vmem:[#allocation10 + $0x58] sm:$0xff]
    %v2270 = vld [vmem:[#allocation10 + $0x60] sm:$0xff]
    %v2271 = vld [vmem:[#allocation10 + $0x68] sm:$0xff]
    %v2272 = vld [vmem:[#allocation10 + $0x70] sm:$0xff]
    %v2273 = vld [vmem:[#allocation10 + $0x78] sm:$0xff]
    %v2274 = vld [vmem:[#allocation10 + $0x80] sm:$0xff]
    %v2275 = vld [vmem:[#allocation10 + $0x88] sm:$0xff]
    %v2276 = vld [vmem:[#allocation10 + $0x90] sm:$0xff]
    %v2277 = vld [vmem:[#allocation10 + $0x98] sm:$0xff]
    %v2278 = vld [vmem:[#allocation10 + $0xa0] sm:$0xff]
    %v2279 = vld [vmem:[#allocation10 + $0xa8] sm:$0xff]
    %v2280 = vld [vmem:[#allocation10 + $0xb0] sm:$0xff]
    %v2281 = vld [vmem:[#allocation10 + $0xb8] sm:$0xff]
    %v2282 = vld [vmem:[#allocation10 + $0xc0] sm:$0xff]
    %v2283 = vld [vmem:[#allocation10 + $0xc8] sm:$0xff]
    %v2284 = vld [vmem:[#allocation10 + $0xd0] sm:$0xff]
    %v2285 = vld [vmem:[#allocation10 + $0xd8] sm:$0xff]
    %v2286 = vld [vmem:[#allocation10 + $0xe0] sm:$0xff]
    %v2287 = vld [vmem:[#allocation10 + $0xe8] sm:$0xff]
    %v2288 = vld [vmem:[#allocation10 + $0xf0] sm:$0xff]
    %v2289 = vld [vmem:[#allocation10 + $0xf8] sm:$0xff]
    %v2290 = vld [vmem:[%s7] sm:$0x3]
    %v2292 = vlaneseq
    %v2293 = vshrl.u32 %v2292, 7
    %v2294 = vsub.s32 0, %v2293
    %v2295 = vrot.slane %v2290, %v2294
    %v2296 = vlaneseq
    %v2297 = vshrl.u32 %v2296, 7
    %v2298 = vsub.s32 1, %v2297
    %v2299 = vrot.slane %v2290, %v2298
    %2302 = vmatprep.subr.mxu0 %v2259
    %2303 = vmatpush1.msra.mxu0 %v2258
    %2304 = vmatprep.subr.mxu0 %v2261
    %2305 = vmatpush1.msra.mxu0 %v2260
    %2306 = vmatprep.subr.mxu0 %v2263
    %2307 = vmatpush1.msra.mxu0 %v2262
    %2308 = vmatprep.subr.mxu0 %v2265
    %2309 = vmatpush1.msra.mxu0 %v2264
    %2310 = vmatprep.subr.mxu0 %v2267
    %2311 = vmatpush1.msra.mxu0 %v2266
    %2312 = vmatprep.subr.mxu0 %v2269
    %2313 = vmatpush1.msra.mxu0 %v2268
    %2314 = vmatprep.subr.mxu0 %v2271
    %2315 = vmatpush1.msra.mxu0 %v2270
    %2316 = vmatprep.subr.mxu0 %v2273
    %2317 = vmatpush1.msra.mxu0 %v2272
    %2318 = vmatprep.subr.mxu0 %v2275
    %2319 = vmatpush1.msra.mxu0 %v2274
    %2320 = vmatprep.subr.mxu0 %v2277
    %2321 = vmatpush1.msra.mxu0 %v2276
    %2322 = vmatprep.subr.mxu0 %v2279
    %2323 = vmatpush1.msra.mxu0 %v2278
    %2324 = vmatprep.subr.mxu0 %v2281
    %2325 = vmatpush1.msra.mxu0 %v2280
    %2326 = vmatprep.subr.mxu0 %v2283
    %2327 = vmatpush1.msra.mxu0 %v2282
    %2328 = vmatprep.subr.mxu0 %v2285
    %2329 = vmatpush1.msra.mxu0 %v2284
    %2330 = vmatprep.subr.mxu0 %v2287
    %2331 = vmatpush1.msra.mxu0 %v2286
    %2332 = vmatprep.subr.mxu0 %v2289
    %2333 = vmatpush1.msra.mxu0 %v2288
    %2334 = vmatprep.subr.mxu0 0.0
    %2335 = vmatpush1.msra.mxu0 0.0
    %2336 = vmatprep.subr.mxu0 0.0
    %2337 = vmatpush1.msra.mxu0 0.0
    %2338 = vmatprep.subr.mxu0 0.0
    %2339 = vmatpush1.msra.mxu0 0.0
    %2340 = vmatprep.subr.mxu0 0.0
    %2341 = vmatpush1.msra.mxu0 0.0
    %2342 = vmatprep.subr.mxu0 0.0
    %2343 = vmatpush1.msra.mxu0 0.0
    %2344 = vmatprep.subr.mxu0 0.0
    %2345 = vmatpush1.msra.mxu0 0.0
    %2346 = vmatprep.subr.mxu0 0.0
    %2347 = vmatpush1.msra.mxu0 0.0
    %2348 = vmatprep.subr.mxu0 0.0
    %2349 = vmatpush1.msra.mxu0 0.0
    %2350 = vmatprep.subr.mxu0 0.0
    %2351 = vmatpush1.msra.mxu0 0.0
    %2352 = vmatprep.subr.mxu0 0.0
    %2353 = vmatpush1.msra.mxu0 0.0
    %2354 = vmatprep.subr.mxu0 0.0
    %2355 = vmatpush1.msra.mxu0 0.0
    %2356 = vmatprep.subr.mxu0 0.0
    %2357 = vmatpush1.msra.mxu0 0.0
    %2358 = vmatprep.subr.mxu0 0.0
    %2359 = vmatpush1.msra.mxu0 0.0
    %2360 = vmatprep.subr.mxu0 0.0
    %2361 = vmatpush1.msra.mxu0 0.0
    %2362 = vmatprep.subr.mxu0 0.0
    %2363 = vmatpush1.msra.mxu0 0.0
    %2364 = vmatprep.subr.mxu0 0.0
    %2365 = vmatpush1.msra.mxu0 0.0
    %2366 = vmatprep.mubr.f32.mxu0 0.0
    %2367 = vmatmul.mubr.f32.gmra.mrb[0].mxu0 %v2254
    %v2368 = vpop.f32.mrb[0].mxu0
    %v2369 = vadd.f32 %v2295, %v2368
    %v2370 = vpop.f32.mrb[0].mxu0
    %v2371 = vadd.f32 %v2299, %v2370
    %2372 = vmatprep.mubr.f32.mxu0 0.0
    %2373 = vmatmul.mubr.f32.gmra.mrb[0].mxu0 %v2255
    %v2374 = vpop.f32.mrb[0].mxu0
    %v2375 = vadd.f32 %v2295, %v2374
    %v2376 = vpop.f32.mrb[0].mxu0
    %v2377 = vadd.f32 %v2299, %v2376
    %2378 = vmatprep.mubr.f32.mxu0 0.0
    %2379 = vmatmul.mubr.f32.gmra.mrb[0].mxu0 %v2256
    %v2380 = vpop.f32.mrb[0].mxu0
    %v2381 = vadd.f32 %v2295, %v2380
    %v2382 = vpop.f32.mrb[0].mxu0
    %v2383 = vadd.f32 %v2299, %v2382
    %2384 = vmatprep.mubr.f32.mxu0 0.0
    %2385 = vmatmul.mubr.f32.gmra.mrb[0].mxu0 %v2257
    %v2386 = vpop.f32.mrb[0].mxu0
    %v2387 = vadd.f32 %v2295, %v2386
    %v2388 = vpop.f32.mrb[0].mxu0
    %v2389 = vadd.f32 %v2299, %v2388
    %2390 = vdwg.mxu0
    %v2391 = vmul.f32 %v2369, 0.5
    %v2392 = vmul.f32 %v2371, 0.5
    %v2393 = vmul.f32 %v2375, 0.5
    %v2394 = vmul.f32 %v2377, 0.5
    %v2395 = vmul.f32 %v2381, 0.5
    %v2396 = vmul.f32 %v2383, 0.5
    %v2397 = vmul.f32 %v2387, 0.5
    %v2398 = vmul.f32 %v2389, 0.5
    %v2399 = vmul.f32 %v2369, 0.70710677
    %v2400 = vmul.f32 %v2371, 0.70710677
    %v2401 = vmul.f32 %v2375, 0.70710677
    %v2402 = vmul.f32 %v2377, 0.70710677
    %v2403 = vmul.f32 %v2381, 0.70710677
    %v2404 = vmul.f32 %v2383, 0.70710677
    %v2405 = vmul.f32 %v2387, 0.70710677
    %v2406 = vmul.f32 %v2389, 0.70710677
    %vm2407 = vcmp.ge.f32.partialorder %v2399, 0.0
    %vm2408 = vcmp.ge.f32.partialorder %v2400, 0.0
    %vm2409 = vcmp.ge.f32.partialorder %v2401, 0.0
    %vm2410 = vcmp.ge.f32.partialorder %v2402, 0.0
    %vm2411 = vcmp.ge.f32.partialorder %v2403, 0.0
    %vm2412 = vcmp.ge.f32.partialorder %v2404, 0.0
    %vm2413 = vcmp.ge.f32.partialorder %v2405, 0.0
    %vm2414 = vcmp.ge.f32.partialorder %v2406, 0.0
    %v2415 = vsel %vm2407, 1.0, -1.0
    %v2416 = vsel %vm2408, 1.0, -1.0
    %v2417 = vsel %vm2409, 1.0, -1.0
    %v2418 = vsel %vm2410, 1.0, -1.0
    %v2419 = vsel %vm2411, 1.0, -1.0
    %v2420 = vsel %vm2412, 1.0, -1.0
    %v2421 = vsel %vm2413, 1.0, -1.0
    %v2422 = vsel %vm2414, 1.0, -1.0
    %v2423 = vand.u32 2147483647, %v2399
    %v2424 = vand.u32 2147483647, %v2400
    %v2425 = vand.u32 2147483647, %v2401
    %v2426 = vand.u32 2147483647, %v2402
    %v2427 = vand.u32 2147483647, %v2403
    %v2428 = vand.u32 2147483647, %v2404
    %v2429 = vand.u32 2147483647, %v2405
    %v2430 = vand.u32 2147483647, %v2406
    %v2431 = vmul.f32 %v2423, 0.3275911
    %v2432 = vmul.f32 %v2424, 0.3275911
    %v2433 = vmul.f32 %v2425, 0.3275911
    %v2434 = vmul.f32 %v2426, 0.3275911
    %v2435 = vmul.f32 %v2427, 0.3275911
    %v2436 = vmul.f32 %v2428, 0.3275911
    %v2437 = vmul.f32 %v2429, 0.3275911
    %v2438 = vmul.f32 %v2430, 0.3275911
    %v2439 = vadd.f32 %v2431, 1.0
    %v2440 = vadd.f32 %v2432, 1.0
    %v2441 = vadd.f32 %v2433, 1.0
    %v2442 = vadd.f32 %v2434, 1.0
    %v2443 = vadd.f32 %v2435, 1.0
    %v2444 = vadd.f32 %v2436, 1.0
    %v2445 = vadd.f32 %v2437, 1.0
    %v2446 = vadd.f32 %v2438, 1.0
    %v2447 = vrcp.pop %v2439
    %v2448 = vrcp.pop %v2440
    %v2449 = vrcp.pop %v2441
    %v2450 = vrcp.pop %v2442
    %v2451 = vrcp.pop %v2443
    %v2452 = vrcp.pop %v2444
    %v2453 = vrcp.pop %v2445
    %v2454 = vrcp.pop %v2446
    %v2455 = vmul.f32 %v2447, 1.0614054
    %v2456 = vmul.f32 %v2448, 1.0614054
    %v2457 = vmul.f32 %v2449, 1.0614054
    %v2458 = vmul.f32 %v2450, 1.0614054
    %v2459 = vmul.f32 %v2451, 1.0614054
    %v2460 = vmul.f32 %v2452, 1.0614054
    %v2461 = vmul.f32 %v2453, 1.0614054
    %v2462 = vmul.f32 %v2454, 1.0614054
    %v2463 = vadd.f32 %v2455, -1.4531521
    %v2464 = vadd.f32 %v2456, -1.4531521
    %v2465 = vadd.f32 %v2457, -1.4531521
    %v2466 = vadd.f32 %v2458, -1.4531521
    %v2467 = vadd.f32 %v2459, -1.4531521
    %v2468 = vadd.f32 %v2460, -1.4531521
    %v2469 = vadd.f32 %v2461, -1.4531521
    %v2470 = vadd.f32 %v2462, -1.4531521
    %v2471 = vmul.f32 %v2447, %v2463
    %v2472 = vmul.f32 %v2448, %v2464
    %v2473 = vmul.f32 %v2449, %v2465
    %v2474 = vmul.f32 %v2450, %v2466
    %v2475 = vmul.f32 %v2451, %v2467
    %v2476 = vmul.f32 %v2452, %v2468
    %v2477 = vmul.f32 %v2453, %v2469
    %v2478 = vmul.f32 %v2454, %v2470
    %v2479 = vadd.f32 %v2471, 1.4214138
    %v2480 = vadd.f32 %v2472, 1.4214138
    %v2481 = vadd.f32 %v2473, 1.4214138
    %v2482 = vadd.f32 %v2474, 1.4214138
    %v2483 = vadd.f32 %v2475, 1.4214138
    %v2484 = vadd.f32 %v2476, 1.4214138
    %v2485 = vadd.f32 %v2477, 1.4214138
    %v2486 = vadd.f32 %v2478, 1.4214138
    %v2487 = vmul.f32 %v2447, %v2479
    %v2488 = vmul.f32 %v2448, %v2480
    %v2489 = vmul.f32 %v2449, %v2481
    %v2490 = vmul.f32 %v2450, %v2482
    %v2491 = vmul.f32 %v2451, %v2483
    %v2492 = vmul.f32 %v2452, %v2484
    %v2493 = vmul.f32 %v2453, %v2485
    %v2494 = vmul.f32 %v2454, %v2486
    %v2495 = vadd.f32 %v2487, -0.28449672
    %v2496 = vadd.f32 %v2488, -0.28449672
    %v2497 = vadd.f32 %v2489, -0.28449672
    %v2498 = vadd.f32 %v2490, -0.28449672
    %v2499 = vadd.f32 %v2491, -0.28449672
    %v2500 = vadd.f32 %v2492, -0.28449672
    %v2501 = vadd.f32 %v2493, -0.28449672
    %v2502 = vadd.f32 %v2494, -0.28449672
    %v2503 = vmul.f32 %v2447, %v2495
    %v2504 = vmul.f32 %v2448, %v2496
    %v2505 = vmul.f32 %v2449, %v2497
    %v2506 = vmul.f32 %v2450, %v2498
    %v2507 = vmul.f32 %v2451, %v2499
    %v2508 = vmul.f32 %v2452, %v2500
    %v2509 = vmul.f32 %v2453, %v2501
    %v2510 = vmul.f32 %v2454, %v2502
    %v2511 = vadd.f32 %v2503, 0.2548296
    %v2512 = vadd.f32 %v2504, 0.2548296
    %v2513 = vadd.f32 %v2505, 0.2548296
    %v2514 = vadd.f32 %v2506, 0.2548296
    %v2515 = vadd.f32 %v2507, 0.2548296
    %v2516 = vadd.f32 %v2508, 0.2548296
    %v2517 = vadd.f32 %v2509, 0.2548296
    %v2518 = vadd.f32 %v2510, 0.2548296
    %v2519 = vmul.f32 %v2447, %v2511
    %v2520 = vmul.f32 %v2448, %v2512
    %v2521 = vmul.f32 %v2449, %v2513
    %v2522 = vmul.f32 %v2450, %v2514
    %v2523 = vmul.f32 %v2451, %v2515
    %v2524 = vmul.f32 %v2452, %v2516
    %v2525 = vmul.f32 %v2453, %v2517
    %v2526 = vmul.f32 %v2454, %v2518
    %v2527 = vsub.f32 0.0, %v2423
    %v2528 = vsub.f32 0.0, %v2424
    %v2529 = vsub.f32 0.0, %v2425
    %v2530 = vsub.f32 0.0, %v2426
    %v2531 = vsub.f32 0.0, %v2427
    %v2532 = vsub.f32 0.0, %v2428
    %v2533 = vsub.f32 0.0, %v2429
    %v2534 = vsub.f32 0.0, %v2430
    %v2535 = vmul.f32 %v2527, %v2423
    %v2536 = vmul.f32 %v2528, %v2424
    %v2537 = vmul.f32 %v2529, %v2425
    %v2538 = vmul.f32 %v2530, %v2426
    %v2539 = vmul.f32 %v2531, %v2427
    %v2540 = vmul.f32 %v2532, %v2428
    %v2541 = vmul.f32 %v2533, %v2429
    %v2542 = vmul.f32 %v2534, %v2430
    %v2543 = vmul.f32 %v2535, 1.442695
    %v2544 = vpow.pop %v2543
    %v2545 = vmul.f32 %v2536, 1.442695
    %v2546 = vpow.pop %v2545
    %v2547 = vmul.f32 %v2537, 1.442695
    %v2548 = vpow.pop %v2547
    %v2549 = vmul.f32 %v2538, 1.442695
    %v2550 = vpow.pop %v2549
    %v2551 = vmul.f32 %v2539, 1.442695
    %v2552 = vpow.pop %v2551
    %v2553 = vmul.f32 %v2540, 1.442695
    %v2554 = vpow.pop %v2553
    %v2555 = vmul.f32 %v2541, 1.442695
    %v2556 = vpow.pop %v2555
    %v2557 = vmul.f32 %v2542, 1.442695
    %v2558 = vpow.pop %v2557
    %v2559 = vmul.f32 %v2519, %v2544
    %v2560 = vmul.f32 %v2520, %v2546
    %v2561 = vmul.f32 %v2521, %v2548
    %v2562 = vmul.f32 %v2522, %v2550
    %v2563 = vmul.f32 %v2523, %v2552
    %v2564 = vmul.f32 %v2524, %v2554
    %v2565 = vmul.f32 %v2525, %v2556
    %v2566 = vmul.f32 %v2526, %v2558
    %v2567 = vsub.f32 1.0, %v2559
    %v2568 = vsub.f32 1.0, %v2560
    %v2569 = vsub.f32 1.0, %v2561
    %v2570 = vsub.f32 1.0, %v2562
    %v2571 = vsub.f32 1.0, %v2563
    %v2572 = vsub.f32 1.0, %v2564
    %v2573 = vsub.f32 1.0, %v2565
    %v2574 = vsub.f32 1.0, %v2566
    %v2575 = vmul.f32 %v2415, %v2567
    %v2576 = vmul.f32 %v2416, %v2568
    %v2577 = vmul.f32 %v2417, %v2569
    %v2578 = vmul.f32 %v2418, %v2570
    %v2579 = vmul.f32 %v2419, %v2571
    %v2580 = vmul.f32 %v2420, %v2572
    %v2581 = vmul.f32 %v2421, %v2573
    %v2582 = vmul.f32 %v2422, %v2574
    %v2583 = vadd.f32 %v2575, 1.0
    %v2584 = vadd.f32 %v2576, 1.0
    %v2585 = vadd.f32 %v2577, 1.0
    %v2586 = vadd.f32 %v2578, 1.0
    %v2587 = vadd.f32 %v2579, 1.0
    %v2588 = vadd.f32 %v2580, 1.0
    %v2589 = vadd.f32 %v2581, 1.0
    %v2590 = vadd.f32 %v2582, 1.0
    %v2591 = vmul.f32 %v2391, %v2583
    %v2592 = vmul.f32 %v2392, %v2584
    %v2593 = vmul.f32 %v2393, %v2585
    %v2594 = vmul.f32 %v2394, %v2586
    %v2595 = vmul.f32 %v2395, %v2587
    %v2596 = vmul.f32 %v2396, %v2588
    %v2597 = vmul.f32 %v2397, %v2589
    %v2598 = vmul.f32 %v2398, %v2590
    %v2599 = vld [vmem:[#allocation11] sm:$0xff]
    %v2600 = vld [vmem:[#allocation11 + $0x8] sm:$0xff]
    %v2601 = vld [vmem:[#allocation11 + $0x10] sm:$0xff]
    %v2602 = vld [vmem:[#allocation11 + $0x18] sm:$0xff]
    %v2603 = vld [vmem:[#allocation11 + $0x20] sm:$0xff]
    %v2604 = vld [vmem:[#allocation11 + $0x28] sm:$0xff]
    %v2605 = vld [vmem:[#allocation11 + $0x30] sm:$0xff]
    %v2606 = vld [vmem:[#allocation11 + $0x38] sm:$0xff]
    %v2607 = vld [vmem:[#allocation11 + $0x40] sm:$0xff]
    %v2608 = vld [vmem:[#allocation11 + $0x48] sm:$0xff]
    %v2609 = vld [vmem:[#allocation11 + $0x50] sm:$0xff]
    %v2610 = vld [vmem:[#allocation11 + $0x58] sm:$0xff]
    %v2611 = vld [vmem:[#allocation11 + $0x60] sm:$0xff]
    %v2612 = vld [vmem:[#allocation11 + $0x68] sm:$0xff]
    %v2613 = vld [vmem:[#allocation11 + $0x70] sm:$0xff]
    %v2614 = vld [vmem:[#allocation11 + $0x78] sm:$0xff]
    %v2615 = vld [vmem:[#allocation11 + $0x80] sm:$0xff]
    %v2616 = vld [vmem:[#allocation11 + $0x88] sm:$0xff]
    %v2617 = vld [vmem:[#allocation11 + $0x90] sm:$0xff]
    %v2618 = vld [vmem:[#allocation11 + $0x98] sm:$0xff]
    %v2619 = vld [vmem:[#allocation11 + $0xa0] sm:$0xff]
    %v2620 = vld [vmem:[#allocation11 + $0xa8] sm:$0xff]
    %v2621 = vld [vmem:[#allocation11 + $0xb0] sm:$0xff]
    %v2622 = vld [vmem:[#allocation11 + $0xb8] sm:$0xff]
    %v2623 = vld [vmem:[#allocation11 + $0xc0] sm:$0xff]
    %v2624 = vld [vmem:[#allocation11 + $0xc8] sm:$0xff]
    %v2625 = vld [vmem:[#allocation11 + $0xd0] sm:$0xff]
    %v2626 = vld [vmem:[#allocation11 + $0xd8] sm:$0xff]
    %v2627 = vld [vmem:[#allocation11 + $0xe0] sm:$0xff]
    %v2628 = vld [vmem:[#allocation11 + $0xe8] sm:$0xff]
    %v2629 = vld [vmem:[#allocation11 + $0xf0] sm:$0xff]
    %v2630 = vld [vmem:[#allocation11 + $0xf8] sm:$0xff]
    %v2631 = vld [vmem:[%s9] sm:$0x1]
    %v2633 = vlaneseq
    %v2634 = vshrl.u32 %v2633, 7
    %v2635 = vsub.s32 0, %v2634
    %v2636 = vrot.slane %v2631, %v2635
    %2638 = vmatprep.subr.mxu0 0.0
    %2639 = vmatpush1.msra.mxu0 %v2599
    %2640 = vmatprep.subr.mxu0 0.0
    %2641 = vmatpush1.msra.mxu0 %v2600
    %2642 = vmatprep.subr.mxu0 0.0
    %2643 = vmatpush1.msra.mxu0 %v2601
    %2644 = vmatprep.subr.mxu0 0.0
    %2645 = vmatpush1.msra.mxu0 %v2602
    %2646 = vmatprep.subr.mxu0 0.0
    %2647 = vmatpush1.msra.mxu0 %v2603
    %2648 = vmatprep.subr.mxu0 0.0
    %2649 = vmatpush1.msra.mxu0 %v2604
    %2650 = vmatprep.subr.mxu0 0.0
    %2651 = vmatpush1.msra.mxu0 %v2605
    %2652 = vmatprep.subr.mxu0 0.0
    %2653 = vmatpush1.msra.mxu0 %v2606
    %2654 = vmatprep.subr.mxu0 0.0
    %2655 = vmatpush1.msra.mxu0 %v2607
    %2656 = vmatprep.subr.mxu0 0.0
    %2657 = vmatpush1.msra.mxu0 %v2608
    %2658 = vmatprep.subr.mxu0 0.0
    %2659 = vmatpush1.msra.mxu0 %v2609
    %2660 = vmatprep.subr.mxu0 0.0
    %2661 = vmatpush1.msra.mxu0 %v2610
    %2662 = vmatprep.subr.mxu0 0.0
    %2663 = vmatpush1.msra.mxu0 %v2611
    %2664 = vmatprep.subr.mxu0 0.0
    %2665 = vmatpush1.msra.mxu0 %v2612
    %2666 = vmatprep.subr.mxu0 0.0
    %2667 = vmatpush1.msra.mxu0 %v2613
    %2668 = vmatprep.subr.mxu0 0.0
    %2669 = vmatpush1.msra.mxu0 %v2614
    %2670 = vmatprep.subr.mxu0 0.0
    %2671 = vmatpush1.msra.mxu0 %v2615
    %2672 = vmatprep.subr.mxu0 0.0
    %2673 = vmatpush1.msra.mxu0 %v2616
    %2674 = vmatprep.subr.mxu0 0.0
    %2675 = vmatpush1.msra.mxu0 %v2617
    %2676 = vmatprep.subr.mxu0 0.0
    %2677 = vmatpush1.msra.mxu0 %v2618
    %2678 = vmatprep.subr.mxu0 0.0
    %2679 = vmatpush1.msra.mxu0 %v2619
    %2680 = vmatprep.subr.mxu0 0.0
    %2681 = vmatpush1.msra.mxu0 %v2620
    %2682 = vmatprep.subr.mxu0 0.0
    %2683 = vmatpush1.msra.mxu0 %v2621
    %2684 = vmatprep.subr.mxu0 0.0
    %2685 = vmatpush1.msra.mxu0 %v2622
    %2686 = vmatprep.subr.mxu0 0.0
    %2687 = vmatpush1.msra.mxu0 %v2623
    %2688 = vmatprep.subr.mxu0 0.0
    %2689 = vmatpush1.msra.mxu0 %v2624
    %2690 = vmatprep.subr.mxu0 0.0
    %2691 = vmatpush1.msra.mxu0 %v2625
    %2692 = vmatprep.subr.mxu0 0.0
    %2693 = vmatpush1.msra.mxu0 %v2626
    %2694 = vmatprep.subr.mxu0 0.0
    %2695 = vmatpush1.msra.mxu0 %v2627
    %2696 = vmatprep.subr.mxu0 0.0
    %2697 = vmatpush1.msra.mxu0 %v2628
    %2698 = vmatprep.subr.mxu0 0.0
    %2699 = vmatpush1.msra.mxu0 %v2629
    %2700 = vmatprep.subr.mxu0 0.0
    %2701 = vmatpush1.msra.mxu0 %v2630
    %2702 = vmatprep.mubr.f32.mxu0 %v2592
    %2703 = vmatmul.mubr.f32.gmra.mrb[0].mxu0 %v2591
    %v2704 = vpop.f32.mrb[0].mxu0
    %v2705 = vadd.f32 %v2636, %v2704
    %v2706 = vpop.f32.mrb[0].mxu0
    %2707 = vmatprep.mubr.f32.mxu0 %v2594
    %2708 = vmatmul.mubr.f32.gmra.mrb[0].mxu0 %v2593
    %v2709 = vpop.f32.mrb[0].mxu0
    %v2710 = vadd.f32 %v2636, %v2709
    %v2711 = vpop.f32.mrb[0].mxu0
    %2712 = vmatprep.mubr.f32.mxu0 %v2596
    %2713 = vmatmul.mubr.f32.gmra.mrb[0].mxu0 %v2595
    %v2714 = vpop.f32.mrb[0].mxu0
    %v2715 = vadd.f32 %v2636, %v2714
    %v2716 = vpop.f32.mrb[0].mxu0
    %2717 = vmatprep.mubr.f32.mxu0 %v2598
    %2718 = vmatmul.mubr.f32.gmra.mrb[0].mxu0 %v2597
    %v2719 = vpop.f32.mrb[0].mxu0
    %v2720 = vadd.f32 %v2636, %v2719
    %v2721 = vpop.f32.mrb[0].mxu0
    %2722 = vdwg.mxu0
    %v2723 = vlaneseq
    %v2724 = vshrl.u32 %v2723, 7
    %v2725 = vsub.s32 5, %v2724
    %v2726 = vrot.slane %v2168, %v2725
    %v2727 = vlaneseq
    %v2728 = vshrl.u32 %v2727, 7
    %v2729 = vsub.s32 5, %v2728
    %v2730 = vrot.slane %v2169, %v2729
    %v2731 = vmul.f32 %v2705, %v2726
    %v2732 = vmul.f32 %v2710, %v2726
    %v2733 = vmul.f32 %v2715, %v2730
    %v2734 = vmul.f32 %v2720, %v2730
    %v2735 = vlaneseq
    %v2736 = vshrl.u32 %v2735, 7
    %v2737 = vsub.s32 4, %v2736
    %v2738 = vrot.slane %v122, %v2737
    %v2739 = vlaneseq
    %v2740 = vshrl.u32 %v2739, 7
    %v2741 = vsub.s32 4, %v2740
    %v2742 = vrot.slane %v123, %v2741
    %v2743 = vadd.f32 %v2731, %v2738
    %v2744 = vadd.f32 %v2732, %v2738
    %v2745 = vadd.f32 %v2733, %v2742
    %v2746 = vadd.f32 %v2734, %v2742
    %v2747 = vlaneseq
    %v2748 = vshrl.u32 %v2747, 7
    %v2749 = vsub.s32 3, %v2748
    %v2750 = vrot.slane %v122, %v2749
    %v2751 = vlaneseq
    %v2752 = vshrl.u32 %v2751, 7
    %v2753 = vsub.s32 3, %v2752
    %v2754 = vrot.slane %v123, %v2753
    %v2755 = vmul.f32 %v2750, %v2743
    %v2756 = vmul.f32 %v2750, %v2744
    %v2757 = vmul.f32 %v2754, %v2745
    %v2758 = vmul.f32 %v2754, %v2746
    %v2759 = vadd.f32 %v2705, %v2755
    %v2760 = vadd.f32 %v2710, %v2756
    %v2761 = vadd.f32 %v2715, %v2757
    %v2762 = vadd.f32 %v2720, %v2758
    %v2763 = vadd.f32 %v2210, %v2759
    %v2764 = vadd.f32 %v2211, %v2760
    %v2765 = vadd.f32 %v2212, %v2761
    %v2766 = vadd.f32 %v2213, %v2762
    %2767 = vst [vmem:[#allocation13] sm:$0xff] %v2763
    %2768 = vst [vmem:[#allocation13 + $0x8] sm:$0xff] %v2764
    %2769 = vst [vmem:[#allocation13 + $0x10] sm:$0xff] %v2765
    %2770 = vst [vmem:[#allocation13 + $0x18] sm:$0xff] %v2766
    // Predicated region
    $region66: #{tpu_custom_call.1} parent=1 // pred_check
      _
    $region67: #{tpu_custom_call.1} parent=1 // pred_check_branch
      %2772 = sbr.rel (0) target = $region69
    $region68: #{tpu_custom_call.1} parent=1 // pred_region
      %s2774 = ssub.s32 512, 512
      %2775 = vsyncadd [#allocation4], %s2774
      %s2776 = sshll.u32 [#allocation13], 4
      %s2777 = int_to_ptr.vmem [resolvable:$true] %s2776
      %2782 = dma.vmem_to_hbm [thread:$0]  %s2777, 512, %s10, [#allocation4], 128, 128, 8
    $region69: #{tpu_custom_call.1} parent=1 // pred_fallthru
      _
    // Predicated region
    $region70: #{tpu_custom_call.1} parent=1 // pred_check
      _
    $region71: #{tpu_custom_call.1} parent=1 // pred_check_branch
      %2784 = sbr.rel (0) target = $region73
    $region72: #{tpu_custom_call.1} parent=1 // pred_region
      %2785 = dma.done [#allocation4], 512
    $region73: #{tpu_custom_call.1} parent=1 // pred_fallthru
      _
    %2786 = vsyncpa [#allocation3], 1
    %2787 = vsyncpa [#allocation6], 1
    %2788 = vsyncpa [#allocation9], 1
    %2789 = vsyncpa [#allocation12], 1
    %2790 = vsyncpa [#allocation4], 1

// kernel: tpu_custom_call.1
$region0: #{tpu_custom_call.1}
  #allocation0 [shape = 'u32[]', space=smem, size = 0x4, offset = 0x4, fixed_abs, tag = 'smem constant byte address 0x4 - core index']
  #allocation1 [shape = 'u32[144,128]{1,0:T(1,128)}', space=vmem, size = 0x12000, scoped, tag = 'internal scratch']
  %s0 = inlined_call_operand.hbm [shape: f32[2,16,128], index: 0, kind: input, shape index: {}]
  %s1 = inlined_call_operand.hbm [shape: f32[2,8,128], index: 1, kind: input, shape index: {}]
  %s2 = inlined_call_operand.hbm [shape: f32[128,384], index: 2, kind: input, shape index: {}]
  %s3 = inlined_call_operand.vmem [shape: f32[1,384], index: 3, kind: input, shape index: {}]
  %s4 = inlined_call_operand.hbm [shape: f32[128,128], index: 4, kind: input, shape index: {}]
  %s5 = inlined_call_operand.vmem [shape: f32[1,128], index: 5, kind: input, shape index: {}]
  %s6 = inlined_call_operand.hbm [shape: f32[128,256], index: 6, kind: input, shape index: {}]
  %s7 = inlined_call_operand.vmem [shape: f32[1,256], index: 7, kind: input, shape index: {}]
  %s8 = inlined_call_operand.hbm [shape: f32[256,128], index: 8, kind: input, shape index: {}]
  %s9 = inlined_call_operand.vmem [shape: f32[1,128], index: 9, kind: input, shape index: {}]
  %s10 = inlined_call_operand.hbm [shape: f32[2,16,128], index: 10, kind: output, shape index: {}]
  %s11 = sld [smem:[#allocation0]]
  $region74: #{tpu_custom_call.1} parent=0
    _
  %s13 = ssub.s32 1, %s11
  %s14 = scalar_select 0, %s13, %s11
  $region1: #{tpu_custom_call.1} parent=0
    #allocation2 [shape = 'u8[16384]{0}', space=vmem, size = 0x4000, scoped, tag = 'input window, operand 0, single buffered']
    #allocation3 [shape = 's32[1]{0}', space=sflag, size = 0x4, scoped, tag = 'scoped memory for tpu_custom_call.1']
    #allocation4 [shape = 's32[1]{0}', space=sflag, size = 0x4, scoped, tag = 'scoped memory for tpu_custom_call.1']
    #allocation5 [shape = 'u8[8192]{0}', space=vmem, size = 0x2000, scoped, tag = 'input window, operand 1, single buffered']
    #allocation6 [shape = 's32[1]{0}', space=sflag, size = 0x4, scoped, tag = 'scoped memory for tpu_custom_call.1']
    #allocation7 [shape = 'u8[196608]{0}', space=vmem, size = 0x30000, scoped, tag = 'input window, operand 2, single buffered']
    #allocation8 [shape = 'u8[65536]{0}', space=vmem, size = 0x10000, scoped, tag = 'input window, operand 4, single buffered']
    #allocation9 [shape = 's32[1]{0}', space=sflag, size = 0x4, scoped, tag = 'scoped memory for tpu_custom_call.1']
    #allocation10 [shape = 'u8[131072]{0}', space=vmem, size = 0x20000, scoped, tag = 'input window, operand 6, single buffered']
    #allocation11 [shape = 'u8[131072]{0}', space=vmem, size = 0x20000, scoped, tag = 'input window, operand 8, single buffered']
    #allocation12 [shape = 's32[1]{0}', space=sflag, size = 0x4, scoped, tag = 'scoped memory for tpu_custom_call.1']
    #allocation13 [shape = 'u8[16384]{0}', space=vmem, size = 0x4000, scoped, tag = 'output window, operand 0, single buffered']
    %15 = vsyncpa [#allocation3], 0
    %16 = vsyncpa [#allocation6], 0
    %17 = vsyncpa [#allocation9], 0
    %18 = vsyncpa [#allocation12], 0
    %19 = vsyncpa [#allocation4], 0
    // Predicated region
    $region2: #{tpu_custom_call.1} parent=1 // pred_check
      _
    $region3: #{tpu_custom_call.1} parent=1 // pred_check_branch
      %21 = sbr.rel (0) target = $region5
    $region4: #{tpu_custom_call.1} parent=1 // pred_region
      %s23 = ssub.s32 512, 512
      %24 = vsyncadd [#allocation3], %s23
      %s25 = sshll.u32 [#allocation2], 4
      %s26 = int_to_ptr.vmem [resolvable:$true] %s25
      %31 = dma.hbm_to_vmem [thread:$0]  %s0, 512, %s26, [#allocation3], 128, 128, 8
    $region5: #{tpu_custom_call.1} parent=1 // pred_fallthru
      _
    // Predicated region
    $region6: #{tpu_custom_call.1} parent=1 // pred_check
      _
    $region7: #{tpu_custom_call.1} parent=1 // pred_check_branch
      %33 = sbr.rel (0) target = $region9
    $region8: #{tpu_custom_call.1} parent=1 // pred_region
      %s35 = ssub.s32 256, 256
      %36 = vsyncadd [#allocation6], %s35
      %s37 = sshll.u32 [#allocation5], 4
      %s38 = int_to_ptr.vmem [resolvable:$true] %s37
      %43 = dma.hbm_to_vmem [thread:$0]  %s1, 256, %s38, [#allocation6], 128, 128, 8
    $region9: #{tpu_custom_call.1} parent=1 // pred_fallthru
      _
    // Predicated region
    $region10: #{tpu_custom_call.1} parent=1 // pred_check
      _
    $region11: #{tpu_custom_call.1} parent=1 // pred_check_branch
      %45 = sbr.rel (0) target = $region13
    $region12: #{tpu_custom_call.1} parent=1 // pred_region
      %s47 = ssub.s32 6144, 6144
      %48 = vsyncadd [#allocation6], %s47
      %s49 = sshll.u32 [#allocation7], 4
      %s50 = int_to_ptr.vmem [resolvable:$true] %s49
      %55 = dma.hbm_to_vmem [thread:$0]  %s2, 6144, %s50, [#allocation6], 384, 384, 24
    $region13: #{tpu_custom_call.1} parent=1 // pred_fallthru
      _
    // Predicated region
    $region14: #{tpu_custom_call.1} parent=1 // pred_check
      _
    $region15: #{tpu_custom_call.1} parent=1 // pred_check_branch
      %57 = sbr.rel (0) target = $region17
    $region16: #{tpu_custom_call.1} parent=1 // pred_region
      _
    $region17: #{tpu_custom_call.1} parent=1 // pred_fallthru
      _
    // Predicated region
    $region18: #{tpu_custom_call.1} parent=1 // pred_check
      _
    $region19: #{tpu_custom_call.1} parent=1 // pred_check_branch
      %59 = sbr.rel (0) target = $region21
    $region20: #{tpu_custom_call.1} parent=1 // pred_region
      %s61 = ssub.s32 2048, 2048
      %62 = vsyncadd [#allocation9], %s61
      %s63 = sshll.u32 [#allocation8], 4
      %s64 = int_to_ptr.vmem [resolvable:$true] %s63
      %69 = dma.hbm_to_vmem [thread:$0]  %s4, 2048, %s64, [#allocation9], 128, 128, 8
    $region21: #{tpu_custom_call.1} parent=1 // pred_fallthru
      _
    // Predicated region
    $region22: #{tpu_custom_call.1} parent=1 // pred_check
      _
    $region23: #{tpu_custom_call.1} parent=1 // pred_check_branch
      %71 = sbr.rel (0) target = $region25
    $region24: #{tpu_custom_call.1} parent=1 // pred_region
      _
    $region25: #{tpu_custom_call.1} parent=1 // pred_fallthru
      _
    // Predicated region
    $region26: #{tpu_custom_call.1} parent=1 // pred_check
      _
    $region27: #{tpu_custom_call.1} parent=1 // pred_check_branch
      %73 = sbr.rel (0) target = $region29
    $region28: #{tpu_custom_call.1} parent=1 // pred_region
      %s75 = ssub.s32 4096, 4096
      %76 = vsyncadd [#allocation9], %s75
      %s77 = sshll.u32 [#allocation10], 4
      %s78 = int_to_ptr.vmem [resolvable:$true] %s77
      %83 = dma.hbm_to_vmem [thread:$0]  %s6, 4096, %s78, [#allocation9], 256, 256, 16
    $region29: #{tpu_custom_call.1} parent=1 // pred_fallthru
      _
    // Predicated region
    $region30: #{tpu_custom_call.1} parent=1 // pred_check
      _
    $region31: #{tpu_custom_call.1} parent=1 // pred_check_branch
      %85 = sbr.rel (0) target = $region33
    $region32: #{tpu_custom_call.1} parent=1 // pred_region
      _
    $region33: #{tpu_custom_call.1} parent=1 // pred_fallthru
      _
    // Predicated region
    $region34: #{tpu_custom_call.1} parent=1 // pred_check
      _
    $region35: #{tpu_custom_call.1} parent=1 // pred_check_branch
      %87 = sbr.rel (0) target = $region37
    $region36: #{tpu_custom_call.1} parent=1 // pred_region
      %s89 = ssub.s32 4096, 4096
      %90 = vsyncadd [#allocation12], %s89
      %s91 = sshll.u32 [#allocation11], 4
      %s92 = int_to_ptr.vmem [resolvable:$true] %s91
      %97 = dma.hbm_to_vmem [thread:$0]  %s8, 4096, %s92, [#allocation12], 128, 128, 8
    $region37: #{tpu_custom_call.1} parent=1 // pred_fallthru
      _
    // Predicated region
    $region38: #{tpu_custom_call.1} parent=1 // pred_check
      _
    $region39: #{tpu_custom_call.1} parent=1 // pred_check_branch
      %99 = sbr.rel (0) target = $region41
    $region40: #{tpu_custom_call.1} parent=1 // pred_region
      _
    $region41: #{tpu_custom_call.1} parent=1 // pred_fallthru
      _
    // Predicated region
    $region42: #{tpu_custom_call.1} parent=1 // pred_check
      _
    $region43: #{tpu_custom_call.1} parent=1 // pred_check_branch
      %101 = sbr.rel (0) target = $region45
    $region44: #{tpu_custom_call.1} parent=1 // pred_region
      %102 = dma.done [#allocation3], 512
    $region45: #{tpu_custom_call.1} parent=1 // pred_fallthru
      _
    // Predicated region
    $region46: #{tpu_custom_call.1} parent=1 // pred_check
      _
    $region47: #{tpu_custom_call.1} parent=1 // pred_check_branch
      %104 = sbr.rel (0) target = $region49
    $region48: #{tpu_custom_call.1} parent=1 // pred_region
      %105 = dma.done [#allocation6], 256
    $region49: #{tpu_custom_call.1} parent=1 // pred_fallthru
      _
    // Predicated region
    $region50: #{tpu_custom_call.1} parent=1 // pred_check
      _
    $region51: #{tpu_custom_call.1} parent=1 // pred_check_branch
      %107 = sbr.rel (0) target = $region53
    $region52: #{tpu_custom_call.1} parent=1 // pred_region
      %108 = dma.done [#allocation6], 6144
    $region53: #{tpu_custom_call.1} parent=1 // pred_fallthru
      _
    // Predicated region
    $region54: #{tpu_custom_call.1} parent=1 // pred_check
      _
    $region55: #{tpu_custom_call.1} parent=1 // pred_check_branch
      %110 = sbr.rel (0) target = $region57
    $region56: #{tpu_custom_call.1} parent=1 // pred_region
      %111 = dma.done [#allocation9], 2048
    $region57: #{tpu_custom_call.1} parent=1 // pred_fallthru
      _
    // Predicated region
    $region58: #{tpu_custom_call.1} parent=1 // pred_check
      _
    $region59: #{tpu_custom_call.1} parent=1 // pred_check_branch
      %113 = sbr.rel (0) target = $region61
    $region60: #{tpu_custom_call.1} parent=1 // pred_region
      %114 = dma.done [#allocation9], 4096
    $region61: #{tpu_custom_call.1} parent=1 // pred_fallthru
      _
    // Predicated region
    $region62: #{tpu_custom_call.1} parent=1 // pred_check
      _
    $region63: #{tpu_custom_call.1} parent=1 // pred_check_branch
      %116 = sbr.rel (0) target = $region65
    $region64: #{tpu_custom_call.1} parent=1 // pred_region
      %117 = dma.done [#allocation12], 4096
    $region65: #{tpu_custom_call.1} parent=1 // pred_fallthru
      _
    %v118 = vld [vmem:[#allocation2] sm:$0xff]
    %v119 = vld [vmem:[#allocation2 + $0x8] sm:$0xff]
    %v120 = vld [vmem:[#allocation2 + $0x10] sm:$0xff]
    %v121 = vld [vmem:[#allocation2 + $0x18] sm:$0xff]
    %v122 = vld [vmem:[#allocation5] sm:$0xff]
    %v123 = vld [vmem:[#allocation5 + $0x8] sm:$0xff]
    %124 = vadd.xlane.f32.xlu0 %v118
    %v125 = vpop.xlane.xlu0 %124
    %126 = vadd.xlane.f32.xlu0 %v119
    %v127 = vpop.xlane.xlu0 %126
    %128 = vadd.xlane.f32.xlu0 %v120
    %v129 = vpop.xlane.xlu0 %128
    %130 = vadd.xlane.f32.xlu0 %v121
    %v131 = vpop.xlane.xlu0 %130
    %v132 = vrcp.pop 128.0
    %v133 = vmul.f32 %v125, %v132
    %v134 = vmul.f32 %v127, %v132
    %v135 = vmul.f32 %v129, %v132
    %v136 = vmul.f32 %v131, %v132
    %v137 = vsub.f32 %v118, %v133
    %v138 = vsub.f32 %v119, %v134
    %v139 = vsub.f32 %v120, %v135
    %v140 = vsub.f32 %v121, %v136
    %v141 = vmul.f32 %v137, %v137
    %v142 = vmul.f32 %v138, %v138
    %v143 = vmul.f32 %v139, %v139
    %v144 = vmul.f32 %v140, %v140
    %145 = vadd.xlane.f32.xlu0 %v141
    %v146 = vpop.xlane.xlu0 %145
    %147 = vadd.xlane.f32.xlu0 %v142
    %v148 = vpop.xlane.xlu0 %147
    %149 = vadd.xlane.f32.xlu0 %v143
    %v150 = vpop.xlane.xlu0 %149
    %151 = vadd.xlane.f32.xlu0 %v144
    %v152 = vpop.xlane.xlu0 %151
    %v153 = vmul.f32 %v146, %v132
    %v154 = vmul.f32 %v148, %v132
    %v155 = vmul.f32 %v150, %v132
    %v156 = vmul.f32 %v152, %v132
    %v157 = vadd.f32 %v153, 1e-06
    %v158 = vadd.f32 %v154, 1e-06
    %v159 = vadd.f32 %v155, 1e-06
    %v160 = vadd.f32 %v156, 1e-06
    %v161 = vrsqrt.pop %v157
    %v162 = vrsqrt.pop %v158
    %v163 = vrsqrt.pop %v159
    %v164 = vrsqrt.pop %v160
    %v165 = vmul.f32 %v137, %v161
    %v166 = vmul.f32 %v138, %v162
    %v167 = vmul.f32 %v139, %v163
    %v168 = vmul.f32 %v140, %v164
    %v169 = vld [vmem:[#allocation7] sm:$0xff]
    %v170 = vld [vmem:[#allocation7 + $0x8] sm:$0xff]
    %v171 = vld [vmem:[#allocation7 + $0x10] sm:$0xff]
    %v172 = vld [vmem:[#allocation7 + $0x18] sm:$0xff]
    %v173 = vld [vmem:[#allocation7 + $0x20] sm:$0xff]
    %v174 = vld [vmem:[#allocation7 + $0x28] sm:$0xff]
    %v175 = vld [vmem:[#allocation7 + $0x30] sm:$0xff]
    %v176 = vld [vmem:[#allocation7 + $0x38] sm:$0xff]
    %v177 = vld [vmem:[#allocation7 + $0x40] sm:$0xff]
    %v178 = vld [vmem:[#allocation7 + $0x48] sm:$0xff]
    %v179 = vld [vmem:[#allocation7 + $0x50] sm:$0xff]
    %v180 = vld [vmem:[#allocation7 + $0x58] sm:$0xff]
    %v181 = vld [vmem:[#allocation7 + $0x60] sm:$0xff]
    %v182 = vld [vmem:[#allocation7 + $0x68] sm:$0xff]
    %v183 = vld [vmem:[#allocation7 + $0x70] sm:$0xff]
    %v184 = vld [vmem:[#allocation7 + $0x78] sm:$0xff]
    %v185 = vld [vmem:[#allocation7 + $0x80] sm:$0xff]
    %v186 = vld [vmem:[#allocation7 + $0x88] sm:$0xff]
    %v187 = vld [vmem:[#allocation7 + $0x90] sm:$0xff]
    %v188 = vld [vmem:[#allocation7 + $0x98] sm:$0xff]
    %v189 = vld [vmem:[#allocation7 + $0xa0] sm:$0xff]
    %v190 = vld [vmem:[#allocation7 + $0xa8] sm:$0xff]
    %v191 = vld [vmem:[#allocation7 + $0xb0] sm:$0xff]
    %v192 = vld [vmem:[#allocation7 + $0xb8] sm:$0xff]
    %v193 = vld [vmem:[#allocation7 + $0xc0] sm:$0xff]
    %v194 = vld [vmem:[#allocation7 + $0xc8] sm:$0xff]
    %v195 = vld [vmem:[#allocation7 + $0xd0] sm:$0xff]
    %v196 = vld [vmem:[#allocation7 + $0xd8] sm:$0xff]
    %v197 = vld [vmem:[#allocation7 + $0xe0] sm:$0xff]
    %v198 = vld [vmem:[#allocation7 + $0xe8] sm:$0xff]
    %v199 = vld [vmem:[#allocation7 + $0xf0] sm:$0xff]
    %v200 = vld [vmem:[#allocation7 + $0xf8] sm:$0xff]
    %v201 = vld [vmem:[#allocation7 + $0x100] sm:$0xff]
    %v202 = vld [vmem:[#allocation7 + $0x108] sm:$0xff]
    %v203 = vld [vmem:[#allocation7 + $0x110] sm:$0xff]
    %v204 = vld [vmem:[#allocation7 + $0x118] sm:$0xff]
    %v205 = vld [vmem:[#allocation7 + $0x120] sm:$0xff]
    %v206 = vld [vmem:[#allocation7 + $0x128] sm:$0xff]
    %v207 = vld [vmem:[#allocation7 + $0x130] sm:$0xff]
    %v208 = vld [vmem:[#allocation7 + $0x138] sm:$0xff]
    %v209 = vld [vmem:[#allocation7 + $0x140] sm:$0xff]
    %v210 = vld [vmem:[#allocation7 + $0x148] sm:$0xff]
    %v211 = vld [vmem:[#allocation7 + $0x150] sm:$0xff]
    %v212 = vld [vmem:[#allocation7 + $0x158] sm:$0xff]
    %v213 = vld [vmem:[#allocation7 + $0x160] sm:$0xff]
    %v214 = vld [vmem:[#allocation7 + $0x168] sm:$0xff]
    %v215 = vld [vmem:[#allocation7 + $0x170] sm:$0xff]
    %v216 = vld [vmem:[#allocation7 + $0x178] sm:$0xff]
    %v217 = vld [vmem:[%s3] sm:$0x7]
    %v219 = vlaneseq
    %v220 = vshrl.u32 %v219, 7
    %v221 = vsub.s32 0, %v220
    %v222 = vrot.slane %v217, %v221
    %v223 = vlaneseq
    %v224 = vshrl.u32 %v223, 7
    %v225 = vsub.s32 1, %v224
    %v226 = vrot.slane %v217, %v225
    %v227 = vlaneseq
    %v228 = vshrl.u32 %v227, 7
    %v229 = vsub.s32 2, %v228
    %v230 = vrot.slane %v217, %v229
    %234 = vmatprep.subr.mxu0 %v170
    %235 = vmatpush1.msra.mxu0 %v169
    %236 = vmatprep.subr.mxu0 %v173
    %237 = vmatpush1.msra.mxu0 %v172
    %238 = vmatprep.subr.mxu0 %v176
    %239 = vmatpush1.msra.mxu0 %v175
    %240 = vmatprep.subr.mxu0 %v179
    %241 = vmatpush1.msra.mxu0 %v178
    %242 = vmatprep.subr.mxu0 %v182
    %243 = vmatpush1.msra.mxu0 %v181
    %244 = vmatprep.subr.mxu0 %v185
    %245 = vmatpush1.msra.mxu0 %v184
    %246 = vmatprep.subr.mxu0 %v188
    %247 = vmatpush1.msra.mxu0 %v187
    %248 = vmatprep.subr.mxu0 %v191
    %249 = vmatpush1.msra.mxu0 %v190
    %250 = vmatprep.subr.mxu0 %v194
    %251 = vmatpush1.msra.mxu0 %v193
    %252 = vmatprep.subr.mxu0 %v197
    %253 = vmatpush1.msra.mxu0 %v196
    %254 = vmatprep.subr.mxu0 %v200
    %255 = vmatpush1.msra.mxu0 %v199
    %256 = vmatprep.subr.mxu0 %v203
    %257 = vmatpush1.msra.mxu0 %v202
    %258 = vmatprep.subr.mxu0 %v206
    %259 = vmatpush1.msra.mxu0 %v205
    %260 = vmatprep.subr.mxu0 %v209
    %261 = vmatpush1.msra.mxu0 %v208
    %262 = vmatprep.subr.mxu0 %v212
    %263 = vmatpush1.msra.mxu0 %v211
    %264 = vmatprep.subr.mxu0 %v215
    %265 = vmatpush1.msra.mxu0 %v214
    %266 = vmatprep.subr.mxu0 0.0
    %267 = vmatpush1.msra.mxu0 0.0
    %268 = vmatprep.subr.mxu0 0.0
    %269 = vmatpush1.msra.mxu0 0.0
    %270 = vmatprep.subr.mxu0 0.0
    %271 = vmatpush1.msra.mxu0 0.0
    %272 = vmatprep.subr.mxu0 0.0
    %273 = vmatpush1.msra.mxu0 0.0
    %274 = vmatprep.subr.mxu0 0.0
    %275 = vmatpush1.msra.mxu0 0.0
    %276 = vmatprep.subr.mxu0 0.0
    %277 = vmatpush1.msra.mxu0 0.0
    %278 = vmatprep.subr.mxu0 0.0
    %279 = vmatpush1.msra.mxu0 0.0
    %280 = vmatprep.subr.mxu0 0.0
    %281 = vmatpush1.msra.mxu0 0.0
    %282 = vmatprep.subr.mxu0 0.0
    %283 = vmatpush1.msra.mxu0 0.0
    %284 = vmatprep.subr.mxu0 0.0
    %285 = vmatpush1.msra.mxu0 0.0
    %286 = vmatprep.subr.mxu0 0.0
    %287 = vmatpush1.msra.mxu0 0.0
    %288 = vmatprep.subr.mxu0 0.0
    %289 = vmatpush1.msra.mxu0 0.0
    %290 = vmatprep.subr.mxu0 0.0
    %291 = vmatpush1.msra.mxu0 0.0
    %292 = vmatprep.subr.mxu0 0.0
    %293 = vmatpush1.msra.mxu0 0.0
    %294 = vmatprep.subr.mxu0 0.0
    %295 = vmatpush1.msra.mxu0 0.0
    %296 = vmatprep.subr.mxu0 0.0
    %297 = vmatpush1.msra.mxu0 0.0
    %298 = vmatprep.mubr.f32.mxu0 0.0
    %299 = vmatmul.mubr.f32.gmra.mrb[0].mxu0 %v165
    %v300 = vpop.f32.mrb[0].mxu0
    %v301 = vadd.f32 %v222, %v300
    %v302 = vpop.f32.mrb[0].mxu0
    %v303 = vadd.f32 %v226, %v302
    %304 = vmatprep.mubr.f32.mxu0 0.0
    %305 = vmatmul.mubr.f32.gmra.mrb[0].mxu0 %v166
    %v306 = vpop.f32.mrb[0].mxu0
    %v307 = vadd.f32 %v222, %v306
    %v308 = vpop.f32.mrb[0].mxu0
    %v309 = vadd.f32 %v226, %v308
    %310 = vmatprep.mubr.f32.mxu0 0.0
    %311 = vmatmul.mubr.f32.gmra.mrb[0].mxu0 %v167
    %v312 = vpop.f32.mrb[0].mxu0
    %v313 = vadd.f32 %v222, %v312
    %v314 = vpop.f32.mrb[0].mxu0
    %v315 = vadd.f32 %v226, %v314
    %316 = vmatprep.mubr.f32.mxu0 0.0
    %317 = vmatmul.mubr.f32.gmra.mrb[0].mxu0 %v168
    %v318 = vpop.f32.mrb[0].mxu0
    %v319 = vadd.f32 %v222, %v318
    %v320 = vpop.f32.mrb[0].mxu0
    %v321 = vadd.f32 %v226, %v320
    %322 = vdwg.mxu0
    %323 = vmatprep.subr.mxu0 0.0
    %324 = vmatpush1.msra.mxu0 %v171
    %325 = vmatprep.subr.mxu0 0.0
    %326 = vmatpush1.msra.mxu0 %v174
    %327 = vmatprep.subr.mxu0 0.0
    %328 = vmatpush1.msra.mxu0 %v177
    %329 = vmatprep.subr.mxu0 0.0
    %330 = vmatpush1.msra.mxu0 %v180
    %331 = vmatprep.subr.mxu0 0.0
    %332 = vmatpush1.msra.mxu0 %v183
    %333 = vmatprep.subr.mxu0 0.0
    %334 = vmatpush1.msra.mxu0 %v186
    %335 = vmatprep.subr.mxu0 0.0
    %336 = vmatpush1.msra.mxu0 %v189
    %337 = vmatprep.subr.mxu0 0.0
    %338 = vmatpush1.msra.mxu0 %v192
    %339 = vmatprep.subr.mxu0 0.0
    %340 = vmatpush1.msra.mxu0 %v195
    %341 = vmatprep.subr.mxu0 0.0
    %342 = vmatpush1.msra.mxu0 %v198
    %343 = vmatprep.subr.mxu0 0.0
    %344 = vmatpush1.msra.mxu0 %v201
    %345 = vmatprep.subr.mxu0 0.0
    %346 = vmatpush1.msra.mxu0 %v204
    %347 = vmatprep.subr.mxu0 0.0
    %348 = vmatpush1.msra.mxu0 %v207
    %349 = vmatprep.subr.mxu0 0.0
    %350 = vmatpush1.msra.mxu0 %v210
    %351 = vmatprep.subr.mxu0 0.0
    %352 = vmatpush1.msra.mxu0 %v213
    %353 = vmatprep.subr.mxu0 0.0
    %354 = vmatpush1.msra.mxu0 %v216
    %355 = vmatprep.subr.mxu0 0.0
    %356 = vmatpush1.msra.mxu0 0.0
    %357 = vmatprep.subr.mxu0 0.0
    %358 = vmatpush1.msra.mxu0 0.0
    %359 = vmatprep.subr.mxu0 0.0
    %360 = vmatpush1.msra.mxu0 0.0
    %361 = vmatprep.subr.mxu0 0.0
    %362 = vmatpush1.msra.mxu0 0.0
    %363 = vmatprep.subr.mxu0 0.0
    %364 = vmatpush1.msra.mxu0 0.0
    %365 = vmatprep.subr.mxu0 0.0
    %366 = vmatpush1.msra.mxu0 0.0
    %367 = vmatprep.subr.mxu0 0.0
    %368 = vmatpush1.msra.mxu0 0.0
    %369 = vmatprep.subr.mxu0 0.0
    %370 = vmatpush1.msra.mxu0 0.0
    %371 = vmatprep.subr.mxu0 0.0
    %372 = vmatpush1.msra.mxu0 0.0
    %373 = vmatprep.subr.mxu0 0.0
    %374 = vmatpush1.msra.mxu0 0.0
    %375 = vmatprep.subr.mxu0 0.0
    %376 = vmatpush1.msra.mxu0 0.0
    %377 = vmatprep.subr.mxu0 0.0
    %378 = vmatpush1.msra.mxu0 0.0
    %379 = vmatprep.subr.mxu0 0.0
    %380 = vmatpush1.msra.mxu0 0.0
    %381 = vmatprep.subr.mxu0 0.0
    %382 = vmatpush1.msra.mxu0 0.0
    %383 = vmatprep.subr.mxu0 0.0
    %384 = vmatpush1.msra.mxu0 0.0
    %385 = vmatprep.subr.mxu0 0.0
    %386 = vmatpush1.msra.mxu0 0.0
    %387 = vmatprep.mubr.f32.mxu0 0.0
    %388 = vmatmul.mubr.f32.gmra.mrb[0].mxu0 %v165
    %v389 = vpop.f32.mrb[0].mxu0
    %v390 = vadd.f32 %v230, %v389
    %v391 = vpop.f32.mrb[0].mxu0
    %392 = vmatprep.mubr.f32.mxu0 0.0
    %393 = vmatmul.mubr.f32.gmra.mrb[0].mxu0 %v166
    %v394 = vpop.f32.mrb[0].mxu0
    %v395 = vadd.f32 %v230, %v394
    %v396 = vpop.f32.mrb[0].mxu0
    %397 = vmatprep.mubr.f32.mxu0 0.0
    %398 = vmatmul.mubr.f32.gmra.mrb[0].mxu0 %v167
    %v399 = vpop.f32.mrb[0].mxu0
    %v400 = vadd.f32 %v230, %v399
    %v401 = vpop.f32.mrb[0].mxu0
    %402 = vmatprep.mubr.f32.mxu0 0.0
    %403 = vmatmul.mubr.f32.gmra.mrb[0].mxu0 %v168
    %v404 = vpop.f32.mrb[0].mxu0
    %v405 = vadd.f32 %v230, %v404
    %v406 = vpop.f32.mrb[0].mxu0
    %407 = vdwg.mxu0
    %v408 = vmul.f32 %v301, 0.17677669
    %v409 = vmul.f32 %v307, 0.17677669
    %v410 = vmul.f32 %v313, 0.17677669
    %v411 = vmul.f32 %v319, 0.17677669
    %vm412 = vcmask 261120
    %v414 = vsel %vm412, %v408, 0
    %v417 = vsel %vm412, %v409, 0
    %v420 = vsel %vm412, %v303, 0
    %v423 = vsel %vm412, %v309, 0
    %425 = vmatprep.subr.mxu0 0.0
    %426 = vmatpush1.xpose.msra.mxu0 %v420
    %427 = vmatprep.subr.mxu0 0.0
    %428 = vmatpush1.xpose.msra.mxu0 %v423
    %429 = vmatprep.subr.mxu0 0.0
    %430 = vmatpush1.xpose.msra.mxu0 0.0
    %431 = vmatprep.subr.mxu0 0.0
    %432 = vmatpush1.xpose.msra.mxu0 0.0
    %433 = vmatprep.subr.mxu0 0.0
    %434 = vmatpush1.xpose.msra.mxu0 0.0
    %435 = vmatprep.subr.mxu0 0.0
    %436 = vmatpush1.xpose.msra.mxu0 0.0
    %437 = vmatprep.subr.mxu0 0.0
    %438 = vmatpush1.xpose.msra.mxu0 0.0
    %439 = vmatprep.subr.mxu0 0.0
    %440 = vmatpush1.xpose.msra.mxu0 0.0
    %441 = vmatprep.subr.mxu0 0.0
    %442 = vmatpush1.xpose.msra.mxu0 0.0
    %443 = vmatprep.subr.mxu0 0.0
    %444 = vmatpush1.xpose.msra.mxu0 0.0
    %445 = vmatprep.subr.mxu0 0.0
    %446 = vmatpush1.xpose.msra.mxu0 0.0
    %447 = vmatprep.subr.mxu0 0.0
    %448 = vmatpush1.xpose.msra.mxu0 0.0
    %449 = vmatprep.subr.mxu0 0.0
    %450 = vmatpush1.xpose.msra.mxu0 0.0
    %451 = vmatprep.subr.mxu0 0.0
    %452 = vmatpush1.xpose.msra.mxu0 0.0
    %453 = vmatprep.subr.mxu0 0.0
    %454 = vmatpush1.xpose.msra.mxu0 0.0
    %455 = vmatprep.subr.mxu0 0.0
    %456 = vmatpush1.xpose.msra.mxu0 0.0
    %457 = vmatprep.subr.mxu0 0.0
    %458 = vmatpush1.xpose.msra.mxu0 0.0
    %459 = vmatprep.subr.mxu0 0.0
    %460 = vmatpush1.xpose.msra.mxu0 0.0
    %461 = vmatprep.subr.mxu0 0.0
    %462 = vmatpush1.xpose.msra.mxu0 0.0
    %463 = vmatprep.subr.mxu0 0.0
    %464 = vmatpush1.xpose.msra.mxu0 0.0
    %465 = vmatprep.subr.mxu0 0.0
    %466 = vmatpush1.xpose.msra.mxu0 0.0
    %467 = vmatprep.subr.mxu0 0.0
    %468 = vmatpush1.xpose.msra.mxu0 0.0
    %469 = vmatprep.subr.mxu0 0.0
    %470 = vmatpush1.xpose.msra.mxu0 0.0
    %471 = vmatprep.subr.mxu0 0.0
    %472 = vmatpush1.xpose.msra.mxu0 0.0
    %473 = vmatprep.subr.mxu0 0.0
    %474 = vmatpush1.xpose.msra.mxu0 0.0
    %475 = vmatprep.subr.mxu0 0.0
    %476 = vmatpush1.xpose.msra.mxu0 0.0
    %477 = vmatprep.subr.mxu0 0.0
    %478 = vmatpush1.xpose.msra.mxu0 0.0
    %479 = vmatprep.subr.mxu0 0.0
    %480 = vmatpush1.xpose.msra.mxu0 0.0
    %481 = vmatprep.subr.mxu0 0.0
    %482 = vmatpush1.xpose.msra.mxu0 0.0
    %483 = vmatprep.subr.mxu0 0.0
    %484 = vmatpush1.xpose.msra.mxu0 0.0
    %485 = vmatprep.subr.mxu0 0.0
    %486 = vmatpush1.xpose.msra.mxu0 0.0
    %487 = vmatprep.subr.mxu0 0.0
    %488 = vmatpush1.xpose.msra.mxu0 0.0
    %489 = vmatprep.mubr.f32.mxu0 0.0
    %490 = vmatmul.mubr.f32.gmra.mrb[0].mxu0 %v414
    %v491 = vpop.f32.mrb[0].mxu0
    %v492 = vadd.f32 0.0, %v491
    %v493 = vpop.f32.mrb[0].mxu0
    %494 = vmatprep.mubr.f32.mxu0 0.0
    %495 = vmatmul.mubr.f32.gmra.mrb[0].mxu0 %v417
    %v496 = vpop.f32.mrb[0].mxu0
    %v497 = vadd.f32 0.0, %v496
    %v498 = vpop.f32.mrb[0].mxu0
    %499 = vdwg.mxu0
    %v501 = vsel %vm412, %v410, 0
    %v504 = vsel %vm412, %v411, 0
    %v507 = vsel %vm412, %v315, 0
    %v510 = vsel %vm412, %v321, 0
    %512 = vmatprep.subr.mxu0 0.0
    %513 = vmatpush1.xpose.msra.mxu0 %v507
    %514 = vmatprep.subr.mxu0 0.0
    %515 = vmatpush1.xpose.msra.mxu0 %v510
    %516 = vmatprep.subr.mxu0 0.0
    %517 = vmatpush1.xpose.msra.mxu0 0.0
    %518 = vmatprep.subr.mxu0 0.0
    %519 = vmatpush1.xpose.msra.mxu0 0.0
    %520 = vmatprep.subr.mxu0 0.0
    %521 = vmatpush1.xpose.msra.mxu0 0.0
    %522 = vmatprep.subr.mxu0 0.0
    %523 = vmatpush1.xpose.msra.mxu0 0.0
    %524 = vmatprep.subr.mxu0 0.0
    %525 = vmatpush1.xpose.msra.mxu0 0.0
    %526 = vmatprep.subr.mxu0 0.0
    %527 = vmatpush1.xpose.msra.mxu0 0.0
    %528 = vmatprep.subr.mxu0 0.0
    %529 = vmatpush1.xpose.msra.mxu0 0.0
    %530 = vmatprep.subr.mxu0 0.0
    %531 = vmatpush1.xpose.msra.mxu0 0.0
    %532 = vmatprep.subr.mxu0 0.0
    %533 = vmatpush1.xpose.msra.mxu0 0.0
    %534 = vmatprep.subr.mxu0 0.0
    %535 = vmatpush1.xpose.msra.mxu0 0.0
    %536 = vmatprep.subr.mxu0 0.0
    %537 = vmatpush1.xpose.msra.mxu0 0.0
    %538 = vmatprep.subr.mxu0 0.0
    %539 = vmatpush1.xpose.msra.mxu0 0.0
    %540 = vmatprep.subr.mxu0 0.0
    %541 = vmatpush1.xpose.msra.mxu0 0.0
    %542 = vmatprep.subr.mxu0 0.0
    %543 = vmatpush1.xpose.msra.mxu0 0.0
    %544 = vmatprep.subr.mxu0 0.0
    %545 = vmatpush1.xpose.msra.mxu0 0.0
    %546 = vmatprep.subr.mxu0 0.0
    %547 = vmatpush1.xpose.msra.mxu0 0.0
    %548 = vmatprep.subr.mxu0 0.0
    %549 = vmatpush1.xpose.msra.mxu0 0.0
    %550 = vmatprep.subr.mxu0 0.0
    %551 = vmatpush1.xpose.msra.mxu0 0.0
    %552 = vmatprep.subr.mxu0 0.0
    %553 = vmatpush1.xpose.msra.mxu0 0.0
    %554 = vmatprep.subr.mxu0 0.0
    %555 = vmatpush1.xpose.msra.mxu0 0.0
    %556 = vmatprep.subr.mxu0 0.0
    %557 = vmatpush1.xpose.msra.mxu0 0.0
    %558 = vmatprep.subr.mxu0 0.0
    %559 = vmatpush1.xpose.msra.mxu0 0.0
    %560 = vmatprep.subr.mxu0 0.0
    %561 = vmatpush1.xpose.msra.mxu0 0.0
    %562 = vmatprep.subr.mxu0 0.0
    %563 = vmatpush1.xpose.msra.mxu0 0.0
    %564 = vmatprep.subr.mxu0 0.0
    %565 = vmatpush1.xpose.msra.mxu0 0.0
    %566 = vmatprep.subr.mxu0 0.0
    %567 = vmatpush1.xpose.msra.mxu0 0.0
    %568 = vmatprep.subr.mxu0 0.0
    %569 = vmatpush1.xpose.msra.mxu0 0.0
    %570 = vmatprep.subr.mxu0 0.0
    %571 = vmatpush1.xpose.msra.mxu0 0.0
    %572 = vmatprep.subr.mxu0 0.0
    %573 = vmatpush1.xpose.msra.mxu0 0.0
    %574 = vmatprep.subr.mxu0 0.0
    %575 = vmatpush1.xpose.msra.mxu0 0.0
    %576 = vmatprep.mubr.f32.mxu0 0.0
    %577 = vmatmul.mubr.f32.gmra.mrb[0].mxu0 %v501
    %v578 = vpop.f32.mrb[0].mxu0
    %v579 = vadd.f32 0.0, %v578
    %v580 = vpop.f32.mrb[0].mxu0
    %581 = vmatprep.mubr.f32.mxu0 0.0
    %582 = vmatmul.mubr.f32.gmra.mrb[0].mxu0 %v504
    %v583 = vpop.f32.mrb[0].mxu0
    %v584 = vadd.f32 0.0, %v583
    %v585 = vpop.f32.mrb[0].mxu0
    %586 = vdwg.mxu0
    %vm587 = vcmask 130048
    %v588 = vsel %vm587, %v492, -inf
    %589 = vmax.xlane.f32.xlu0 %v588
    %v590 = vpop.xlane.xlu0 %589
    %v591 = vsel %vm587, %v497, -inf
    %592 = vmax.xlane.f32.xlu0 %v591
    %v593 = vpop.xlane.xlu0 %592
    %v594 = vsel %vm587, %v579, -inf
    %595 = vmax.xlane.f32.xlu0 %v594
    %v596 = vpop.xlane.xlu0 %595
    %v597 = vsel %vm587, %v584, -inf
    %598 = vmax.xlane.f32.xlu0 %v597
    %v599 = vpop.xlane.xlu0 %598
    %v600 = vsub.f32 %v492, %v590
    %v601 = vsub.f32 %v497, %v593
    %v602 = vsub.f32 %v579, %v596
    %v603 = vsub.f32 %v584, %v599
    %v604 = vmul.f32 %v600, 1.442695
    %v605 = vpow.pop %v604
    %v606 = vmul.f32 %v601, 1.442695
    %v607 = vpow.pop %v606
    %v608 = vmul.f32 %v602, 1.442695
    %v609 = vpow.pop %v608
    %v610 = vmul.f32 %v603, 1.442695
    %v611 = vpow.pop %v610
    %v612 = vsel %vm587, %v605, 0.0
    %613 = vadd.xlane.f32.xlu0 %v612
    %v614 = vpop.xlane.xlu0 %613
    %v615 = vsel %vm587, %v607, 0.0
    %616 = vadd.xlane.f32.xlu0 %v615
    %v617 = vpop.xlane.xlu0 %616
    %v618 = vsel %vm587, %v609, 0.0
    %619 = vadd.xlane.f32.xlu0 %v618
    %v620 = vpop.xlane.xlu0 %619
    %v621 = vsel %vm587, %v611, 0.0
    %622 = vadd.xlane.f32.xlu0 %v621
    %v623 = vpop.xlane.xlu0 %622
    %v624 = vrcp.pop %v614
    %v625 = vrcp.pop %v617
    %v626 = vrcp.pop %v620
    %v627 = vrcp.pop %v623
    %v628 = vmul.f32 %v605, %v624
    %v629 = vmul.f32 %v607, %v625
    %v630 = vmul.f32 %v609, %v626
    %v631 = vmul.f32 %v611, %v627
    %v633 = vsel %vm587, %v628, 0
    %v636 = vsel %vm587, %v629, 0
    %638 = vmatprep.subr.mxu0 0.0
    %639 = vmatpush1.msra.mxu0 %v390
    %640 = vmatprep.subr.mxu0 0.0
    %641 = vmatpush1.msra.mxu0 %v395
    %642 = vmatprep.subr.mxu0 0.0
    %643 = vmatpush1.msra.mxu0 0.0
    %644 = vmatprep.subr.mxu0 0.0
    %645 = vmatpush1.msra.mxu0 0.0
    %646 = vmatprep.subr.mxu0 0.0
    %647 = vmatpush1.msra.mxu0 0.0
    %648 = vmatprep.subr.mxu0 0.0
    %649 = vmatpush1.msra.mxu0 0.0
    %650 = vmatprep.subr.mxu0 0.0
    %651 = vmatpush1.msra.mxu0 0.0
    %652 = vmatprep.subr.mxu0 0.0
    %653 = vmatpush1.msra.mxu0 0.0
    %654 = vmatprep.subr.mxu0 0.0
    %655 = vmatpush1.msra.mxu0 0.0
    %656 = vmatprep.subr.mxu0 0.0
    %657 = vmatpush1.msra.mxu0 0.0
    %658 = vmatprep.subr.mxu0 0.0
    %659 = vmatpush1.msra.mxu0 0.0
    %660 = vmatprep.subr.mxu0 0.0
    %661 = vmatpush1.msra.mxu0 0.0
    %662 = vmatprep.subr.mxu0 0.0
    %663 = vmatpush1.msra.mxu0 0.0
    %664 = vmatprep.subr.mxu0 0.0
    %665 = vmatpush1.msra.mxu0 0.0
    %666 = vmatprep.subr.mxu0 0.0
    %667 = vmatpush1.msra.mxu0 0.0
    %668 = vmatprep.subr.mxu0 0.0
    %669 = vmatpush1.msra.mxu0 0.0
    %670 = vmatprep.subr.mxu0 0.0
    %671 = vmatpush1.msra.mxu0 0.0
    %672 = vmatprep.subr.mxu0 0.0
    %673 = vmatpush1.msra.mxu0 0.0
    %674 = vmatprep.subr.mxu0 0.0
    %675 = vmatpush1.msra.mxu0 0.0
    %676 = vmatprep.subr.mxu0 0.0
    %677 = vmatpush1.msra.mxu0 0.0
    %678 = vmatprep.subr.mxu0 0.0
    %679 = vmatpush1.msra.mxu0 0.0
    %680 = vmatprep.subr.mxu0 0.0
    %681 = vmatpush1.msra.mxu0 0.0
    %682 = vmatprep.subr.mxu0 0.0
    %683 = vmatpush1.msra.mxu0 0.0
    %684 = vmatprep.subr.mxu0 0.0
    %685 = vmatpush1.msra.mxu0 0.0
    %686 = vmatprep.subr.mxu0 0.0
    %687 = vmatpush1.msra.mxu0 0.0
    %688 = vmatprep.subr.mxu0 0.0
    %689 = vmatpush1.msra.mxu0 0.0
    %690 = vmatprep.subr.mxu0 0.0
    %691 = vmatpush1.msra.mxu0 0.0
    %692 = vmatprep.subr.mxu0 0.0
    %693 = vmatpush1.msra.mxu0 0.0
    %694 = vmatprep.subr.mxu0 0.0
    %695 = vmatpush1.msra.mxu0 0.0
    %696 = vmatprep.subr.mxu0 0.0
    %697 = vmatpush1.msra.mxu0 0.0
    %698 = vmatprep.subr.mxu0 0.0
    %699 = vmatpush1.msra.mxu0 0.0
    %700 = vmatprep.subr.mxu0 0.0
    %701 = vmatpush1.msra.mxu0 0.0
    %702 = vmatprep.mubr.f32.mxu0 0.0
    %703 = vmatmul.mubr.f32.gmra.mrb[0].mxu0 %v633
    %v704 = vpop.f32.mrb[0].mxu0
    %v705 = vadd.f32 0.0, %v704
    %v706 = vpop.f32.mrb[0].mxu0
    %707 = vmatprep.mubr.f32.mxu0 0.0
    %708 = vmatmul.mubr.f32.gmra.mrb[0].mxu0 %v636
    %v709 = vpop.f32.mrb[0].mxu0
    %v710 = vadd.f32 0.0, %v709
    %v711 = vpop.f32.mrb[0].mxu0
    %712 = vdwg.mxu0
    %v714 = vsel %vm587, %v630, 0
    %v717 = vsel %vm587, %v631, 0
    %719 = vmatprep.subr.mxu0 0.0
    %720 = vmatpush1.msra.mxu0 %v400
    %721 = vmatprep.subr.mxu0 0.0
    %722 = vmatpush1.msra.mxu0 %v405
    %723 = vmatprep.subr.mxu0 0.0
    %724 = vmatpush1.msra.mxu0 0.0
    %725 = vmatprep.subr.mxu0 0.0
    %726 = vmatpush1.msra.mxu0 0.0
    %727 = vmatprep.subr.mxu0 0.0
    %728 = vmatpush1.msra.mxu0 0.0
    %729 = vmatprep.subr.mxu0 0.0
    %730 = vmatpush1.msra.mxu0 0.0
    %731 = vmatprep.subr.mxu0 0.0
    %732 = vmatpush1.msra.mxu0 0.0
    %733 = vmatprep.subr.mxu0 0.0
    %734 = vmatpush1.msra.mxu0 0.0
    %735 = vmatprep.subr.mxu0 0.0
    %736 = vmatpush1.msra.mxu0 0.0
    %737 = vmatprep.subr.mxu0 0.0
    %738 = vmatpush1.msra.mxu0 0.0
    %739 = vmatprep.subr.mxu0 0.0
    %740 = vmatpush1.msra.mxu0 0.0
    %741 = vmatprep.subr.mxu0 0.0
    %742 = vmatpush1.msra.mxu0 0.0
    %743 = vmatprep.subr.mxu0 0.0
    %744 = vmatpush1.msra.mxu0 0.0
    %745 = vmatprep.subr.mxu0 0.0
    %746 = vmatpush1.msra.mxu0 0.0
    %747 = vmatprep.subr.mxu0 0.0
    %748 = vmatpush1.msra.mxu0 0.0
    %749 = vmatprep.subr.mxu0 0.0
    %750 = vmatpush1.msra.mxu0 0.0
    %751 = vmatprep.subr.mxu0 0.0
    %752 = vmatpush1.msra.mxu0 0.0
    %753 = vmatprep.subr.mxu0 0.0
    %754 = vmatpush1.msra.mxu0 0.0
    %755 = vmatprep.subr.mxu0 0.0
    %756 = vmatpush1.msra.mxu0 0.0
    %757 = vmatprep.subr.mxu0 0.0
    %758 = vmatpush1.msra.mxu0 0.0
    %759 = vmatprep.subr.mxu0 0.0
    %760 = vmatpush1.msra.mxu0 0.0
    %761 = vmatprep.subr.mxu0 0.0
    %762 = vmatpush1.msra.mxu0 0.0
    %763 = vmatprep.subr.mxu0 0.0
    %764 = vmatpush1.msra.mxu0 0.0
    %765 = vmatprep.subr.mxu0 0.0
    %766 = vmatpush1.msra.mxu0 0.0
    %767 = vmatprep.subr.mxu0 0.0
    %768 = vmatpush1.msra.mxu0 0.0
    %769 = vmatprep.subr.mxu0 0.0
    %770 = vmatpush1.msra.mxu0 0.0
    %771 = vmatprep.subr.mxu0 0.0
    %772 = vmatpush1.msra.mxu0 0.0
    %773 = vmatprep.subr.mxu0 0.0
    %774 = vmatpush1.msra.mxu0 0.0
    %775 = vmatprep.subr.mxu0 0.0
    %776 = vmatpush1.msra.mxu0 0.0
    %777 = vmatprep.subr.mxu0 0.0
    %778 = vmatpush1.msra.mxu0 0.0
    %779 = vmatprep.subr.mxu0 0.0
    %780 = vmatpush1.msra.mxu0 0.0
    %781 = vmatprep.subr.mxu0 0.0
    %782 = vmatpush1.msra.mxu0 0.0
    %783 = vmatprep.mubr.f32.mxu0 0.0
    %784 = vmatmul.mubr.f32.gmra.mrb[0].mxu0 %v714
    %v785 = vpop.f32.mrb[0].mxu0
    %v786 = vadd.f32 0.0, %v785
    %v787 = vpop.f32.mrb[0].mxu0
    %788 = vmatprep.mubr.f32.mxu0 0.0
    %789 = vmatmul.mubr.f32.gmra.mrb[0].mxu0 %v717
    %v790 = vpop.f32.mrb[0].mxu0
    %v791 = vadd.f32 0.0, %v790
    %v792 = vpop.f32.mrb[0].mxu0
    %793 = vdwg.mxu0
    %794 = vrot.lane.b32.xlu0 %v408, 96
    %v795 = vpop.permute.xlu0 %794
    %796 = vrot.lane.b32.xlu0 %v409, 96
    %v797 = vpop.permute.xlu0 %796
    %798 = vrot.lane.b32.xlu0 %v303, 96
    %v799 = vpop.permute.xlu0 %798
    %800 = vrot.lane.b32.xlu0 %v309, 96
    %v801 = vpop.permute.xlu0 %800
    %v802 = vsel %vm412, %v795, 0
    %v804 = vsel %vm412, %v797, 0
    %v806 = vsel %vm412, %v799, 0
    %v808 = vsel %vm412, %v801, 0
    %810 = vmatprep.subr.mxu0 0.0
    %811 = vmatpush1.xpose.msra.mxu0 %v806
    %812 = vmatprep.subr.mxu0 0.0
    %813 = vmatpush1.xpose.msra.mxu0 %v808
    %814 = vmatprep.subr.mxu0 0.0
    %815 = vmatpush1.xpose.msra.mxu0 0.0
    %816 = vmatprep.subr.mxu0 0.0
    %817 = vmatpush1.xpose.msra.mxu0 0.0
    %818 = vmatprep.subr.mxu0 0.0
    %819 = vmatpush1.xpose.msra.mxu0 0.0
    %820 = vmatprep.subr.mxu0 0.0
    %821 = vmatpush1.xpose.msra.mxu0 0.0
    %822 = vmatprep.subr.mxu0 0.0
    %823 = vmatpush1.xpose.msra.mxu0 0.0
    %824 = vmatprep.subr.mxu0 0.0
    %825 = vmatpush1.xpose.msra.mxu0 0.0
    %826 = vmatprep.subr.mxu0 0.0
    %827 = vmatpush1.xpose.msra.mxu0 0.0
    %828 = vmatprep.subr.mxu0 0.0
    %829 = vmatpush1.xpose.msra.mxu0 0.0
    %830 = vmatprep.subr.mxu0 0.0
    %831 = vmatpush1.xpose.msra.mxu0 0.0
    %832 = vmatprep.subr.mxu0 0.0
    %833 = vmatpush1.xpose.msra.mxu0 0.0
    %834 = vmatprep.subr.mxu0 0.0
    %835 = vmatpush1.xpose.msra.mxu0 0.0
    %836 = vmatprep.subr.mxu0 0.0
    %837 = vmatpush1.xpose.msra.mxu0 0.0
    %838 = vmatprep.subr.mxu0 0.0
    %839 = vmatpush1.xpose.msra.mxu0 0.0
    %840 = vmatprep.subr.mxu0 0.0
    %841 = vmatpush1.xpose.msra.mxu0 0.0
    %842 = vmatprep.subr.mxu0 0.0
    %843 = vmatpush1.xpose.msra.mxu0 0.0
    %844 = vmatprep.subr.mxu0 0.0
    %845 = vmatpush1.xpose.msra.mxu0 0.0
    %846 = vmatprep.subr.mxu0 0.0
    %847 = vmatpush1.xpose.msra.mxu0 0.0
    %848 = vmatprep.subr.mxu0 0.0
    %849 = vmatpush1.xpose.msra.mxu0 0.0
    %850 = vmatprep.subr.mxu0 0.0
    %851 = vmatpush1.xpose.msra.mxu0 0.0
    %852 = vmatprep.subr.mxu0 0.0
    %853 = vmatpush1.xpose.msra.mxu0 0.0
    %854 = vmatprep.subr.mxu0 0.0
    %855 = vmatpush1.xpose.msra.mxu0 0.0
    %856 = vmatprep.subr.mxu0 0.0
    %857 = vmatpush1.xpose.msra.mxu0 0.0
    %858 = vmatprep.subr.mxu0 0.0
    %859 = vmatpush1.xpose.msra.mxu0 0.0
    %860 = vmatprep.subr.mxu0 0.0
    %861 = vmatpush1.xpose.msra.mxu0 0.0
    %862 = vmatprep.subr.mxu0 0.0
    %863 = vmatpush1.xpose.msra.mxu0 0.0
    %864 = vmatprep.subr.mxu0 0.0
    %865 = vmatpush1.xpose.msra.mxu0 0.0
    %866 = vmatprep.subr.mxu0 0.0
    %867 = vmatpush1.xpose.msra.mxu0 0.0
    %868 = vmatprep.subr.mxu0 0.0
    %869 = vmatpush1.xpose.msra.mxu0 0.0
    %870 = vmatprep.subr.mxu0 0.0
    %871 = vmatpush1.xpose.msra.mxu0 0.0
    %872 = vmatprep.subr.mxu0 0.0
    %873 = vmatpush1.xpose.msra.mxu0 0.0
    %874 = vmatprep.mubr.f32.mxu0 0.0
    %875 = vmatmul.mubr.f32.gmra.mrb[0].mxu0 %v802
    %v876 = vpop.f32.mrb[0].mxu0
    %v877 = vadd.f32 0.0, %v876
    %v878 = vpop.f32.mrb[0].mxu0
    %879 = vmatprep.mubr.f32.mxu0 0.0
    %880 = vmatmul.mubr.f32.gmra.mrb[0].mxu0 %v804
    %v881 = vpop.f32.mrb[0].mxu0
    %v882 = vadd.f32 0.0, %v881
    %v883 = vpop.f32.mrb[0].mxu0
    %884 = vdwg.mxu0
    %885 = vrot.lane.b32.xlu0 %v410, 96
    %v886 = vpop.permute.xlu0 %885
    %887 = vrot.lane.b32.xlu0 %v411, 96
    %v888 = vpop.permute.xlu0 %887
    %889 = vrot.lane.b32.xlu0 %v315, 96
    %v890 = vpop.permute.xlu0 %889
    %891 = vrot.lane.b32.xlu0 %v321, 96
    %v892 = vpop.permute.xlu0 %891
    %v893 = vsel %vm412, %v886, 0
    %v895 = vsel %vm412, %v888, 0
    %v897 = vsel %vm412, %v890, 0
    %v899 = vsel %vm412, %v892, 0
    %901 = vmatprep.subr.mxu0 0.0
    %902 = vmatpush1.xpose.msra.mxu0 %v897
    %903 = vmatprep.subr.mxu0 0.0
    %904 = vmatpush1.xpose.msra.mxu0 %v899
    %905 = vmatprep.subr.mxu0 0.0
    %906 = vmatpush1.xpose.msra.mxu0 0.0
    %907 = vmatprep.subr.mxu0 0.0
    %908 = vmatpush1.xpose.msra.mxu0 0.0
    %909 = vmatprep.subr.mxu0 0.0
    %910 = vmatpush1.xpose.msra.mxu0 0.0
    %911 = vmatprep.subr.mxu0 0.0
    %912 = vmatpush1.xpose.msra.mxu0 0.0
    %913 = vmatprep.subr.mxu0 0.0
    %914 = vmatpush1.xpose.msra.mxu0 0.0
    %915 = vmatprep.subr.mxu0 0.0
    %916 = vmatpush1.xpose.msra.mxu0 0.0
    %917 = vmatprep.subr.mxu0 0.0
    %918 = vmatpush1.xpose.msra.mxu0 0.0
    %919 = vmatprep.subr.mxu0 0.0
    %920 = vmatpush1.xpose.msra.mxu0 0.0
    %921 = vmatprep.subr.mxu0 0.0
    %922 = vmatpush1.xpose.msra.mxu0 0.0
    %923 = vmatprep.subr.mxu0 0.0
    %924 = vmatpush1.xpose.msra.mxu0 0.0
    %925 = vmatprep.subr.mxu0 0.0
    %926 = vmatpush1.xpose.msra.mxu0 0.0
    %927 = vmatprep.subr.mxu0 0.0
    %928 = vmatpush1.xpose.msra.mxu0 0.0
    %929 = vmatprep.subr.mxu0 0.0
    %930 = vmatpush1.xpose.msra.mxu0 0.0
    %931 = vmatprep.subr.mxu0 0.0
    %932 = vmatpush1.xpose.msra.mxu0 0.0
    %933 = vmatprep.subr.mxu0 0.0
    %934 = vmatpush1.xpose.msra.mxu0 0.0
    %935 = vmatprep.subr.mxu0 0.0
    %936 = vmatpush1.xpose.msra.mxu0 0.0
    %937 = vmatprep.subr.mxu0 0.0
    %938 = vmatpush1.xpose.msra.mxu0 0.0
    %939 = vmatprep.subr.mxu0 0.0
    %940 = vmatpush1.xpose.msra.mxu0 0.0
    %941 = vmatprep.subr.mxu0 0.0
    %942 = vmatpush1.xpose.msra.mxu0 0.0
    %943 = vmatprep.subr.mxu0 0.0
    %944 = vmatpush1.xpose.msra.mxu0 0.0
    %945 = vmatprep.subr.mxu0 0.0
    %946 = vmatpush1.xpose.msra.mxu0 0.0
    %947 = vmatprep.subr.mxu0 0.0
    %948 = vmatpush1.xpose.msra.mxu0 0.0
    %949 = vmatprep.subr.mxu0 0.0
    %950 = vmatpush1.xpose.msra.mxu0 0.0
    %951 = vmatprep.subr.mxu0 0.0
    %952 = vmatpush1.xpose.msra.mxu0 0.0
    %953 = vmatprep.subr.mxu0 0.0
    %954 = vmatpush1.xpose.msra.mxu0 0.0
    %955 = vmatprep.subr.mxu0 0.0
    %956 = vmatpush1.xpose.msra.mxu0 0.0
    %957 = vmatprep.subr.mxu0 0.0
    %958 = vmatpush1.xpose.msra.mxu0 0.0
    %959 = vmatprep.subr.mxu0 0.0
    %960 = vmatpush1.xpose.msra.mxu0 0.0
    %961 = vmatprep.subr.mxu0 0.0
    %962 = vmatpush1.xpose.msra.mxu0 0.0
    %963 = vmatprep.subr.mxu0 0.0
    %964 = vmatpush1.xpose.msra.mxu0 0.0
    %965 = vmatprep.mubr.f32.mxu0 0.0
    %966 = vmatmul.mubr.f32.gmra.mrb[0].mxu0 %v893
    %v967 = vpop.f32.mrb[0].mxu0
    %v968 = vadd.f32 0.0, %v967
    %v969 = vpop.f32.mrb[0].mxu0
    %970 = vmatprep.mubr.f32.mxu0 0.0
    %971 = vmatmul.mubr.f32.gmra.mrb[0].mxu0 %v895
    %v972 = vpop.f32.mrb[0].mxu0
    %v973 = vadd.f32 0.0, %v972
    %v974 = vpop.f32.mrb[0].mxu0
    %975 = vdwg.mxu0
    %v976 = vsel %vm587, %v877, -inf
    %977 = vmax.xlane.f32.xlu0 %v976
    %v978 = vpop.xlane.xlu0 %977
    %v979 = vsel %vm587, %v882, -inf
    %980 = vmax.xlane.f32.xlu0 %v979
    %v981 = vpop.xlane.xlu0 %980
    %v982 = vsel %vm587, %v968, -inf
    %983 = vmax.xlane.f32.xlu0 %v982
    %v984 = vpop.xlane.xlu0 %983
    %v985 = vsel %vm587, %v973, -inf
    %986 = vmax.xlane.f32.xlu0 %v985
    %v987 = vpop.xlane.xlu0 %986
    %v988 = vsub.f32 %v877, %v978
    %v989 = vsub.f32 %v882, %v981
    %v990 = vsub.f32 %v968, %v984
    %v991 = vsub.f32 %v973, %v987
    %v992 = vmul.f32 %v988, 1.442695
    %v993 = vpow.pop %v992
    %v994 = vmul.f32 %v989, 1.442695
    %v995 = vpow.pop %v994
    %v996 = vmul.f32 %v990, 1.442695
    %v997 = vpow.pop %v996
    %v998 = vmul.f32 %v991, 1.442695
    %v999 = vpow.pop %v998
    %v1000 = vsel %vm587, %v993, 0.0
    %1001 = vadd.xlane.f32.xlu0 %v1000
    %v1002 = vpop.xlane.xlu0 %1001
    %v1003 = vsel %vm587, %v995, 0.0
    %1004 = vadd.xlane.f32.xlu0 %v1003
    %v1005 = vpop.xlane.xlu0 %1004
    %v1006 = vsel %vm587, %v997, 0.0
    %1007 = vadd.xlane.f32.xlu0 %v1006
    %v1008 = vpop.xlane.xlu0 %1007
    %v1009 = vsel %vm587, %v999, 0.0
    %1010 = vadd.xlane.f32.xlu0 %v1009
    %v1011 = vpop.xlane.xlu0 %1010
    %v1012 = vrcp.pop %v1002
    %v1013 = vrcp.pop %v1005
    %v1014 = vrcp.pop %v1008
    %v1015 = vrcp.pop %v1011
    %v1016 = vmul.f32 %v993, %v1012
    %v1017 = vmul.f32 %v995, %v1013
    %v1018 = vmul.f32 %v997, %v1014
    %v1019 = vmul.f32 %v999, %v1015
    %1022 = vrot.lane.b32.xlu0 %v390, 96
    %v1023 = vpop.permute.xlu0 %1022
    %1024 = vrot.lane.b32.xlu0 %v395, 96
    %v1025 = vpop.permute.xlu0 %1024
    %v1029 = vsel %vm587, %v1016, 0
    %v1032 = vsel %vm587, %v1017, 0
    %1034 = vmatprep.subr.mxu0 0.0
    %1035 = vmatpush1.msra.mxu0 %v1023
    %1036 = vmatprep.subr.mxu0 0.0
    %1037 = vmatpush1.msra.mxu0 %v1025
    %1038 = vmatprep.subr.mxu0 0.0
    %1039 = vmatpush1.msra.mxu0 0.0
    %1040 = vmatprep.subr.mxu0 0.0
    %1041 = vmatpush1.msra.mxu0 0.0
    %1042 = vmatprep.subr.mxu0 0.0
    %1043 = vmatpush1.msra.mxu0 0.0
    %1044 = vmatprep.subr.mxu0 0.0
    %1045 = vmatpush1.msra.mxu0 0.0
    %1046 = vmatprep.subr.mxu0 0.0
    %1047 = vmatpush1.msra.mxu0 0.0
    %1048 = vmatprep.subr.mxu0 0.0
    %1049 = vmatpush1.msra.mxu0 0.0
    %1050 = vmatprep.subr.mxu0 0.0
    %1051 = vmatpush1.msra.mxu0 0.0
    %1052 = vmatprep.subr.mxu0 0.0
    %1053 = vmatpush1.msra.mxu0 0.0
    %1054 = vmatprep.subr.mxu0 0.0
    %1055 = vmatpush1.msra.mxu0 0.0
    %1056 = vmatprep.subr.mxu0 0.0
    %1057 = vmatpush1.msra.mxu0 0.0
    %1058 = vmatprep.subr.mxu0 0.0
    %1059 = vmatpush1.msra.mxu0 0.0
    %1060 = vmatprep.subr.mxu0 0.0
    %1061 = vmatpush1.msra.mxu0 0.0
    %1062 = vmatprep.subr.mxu0 0.0
    %1063 = vmatpush1.msra.mxu0 0.0
    %1064 = vmatprep.subr.mxu0 0.0
    %1065 = vmatpush1.msra.mxu0 0.0
    %1066 = vmatprep.subr.mxu0 0.0
    %1067 = vmatpush1.msra.mxu0 0.0
    %1068 = vmatprep.subr.mxu0 0.0
    %1069 = vmatpush1.msra.mxu0 0.0
    %1070 = vmatprep.subr.mxu0 0.0
    %1071 = vmatpush1.msra.mxu0 0.0
    %1072 = vmatprep.subr.mxu0 0.0
    %1073 = vmatpush1.msra.mxu0 0.0
    %1074 = vmatprep.subr.mxu0 0.0
    %1075 = vmatpush1.msra.mxu0 0.0
    %1076 = vmatprep.subr.mxu0 0.0
    %1077 = vmatpush1.msra.mxu0 0.0
    %1078 = vmatprep.subr.mxu0 0.0
    %1079 = vmatpush1.msra.mxu0 0.0
    %1080 = vmatprep.subr.mxu0 0.0
    %1081 = vmatpush1.msra.mxu0 0.0
    %1082 = vmatprep.subr.mxu0 0.0
    %1083 = vmatpush1.msra.mxu0 0.0
    %1084 = vmatprep.subr.mxu0 0.0
    %1085 = vmatpush1.msra.mxu0 0.0
    %1086 = vmatprep.subr.mxu0 0.0
    %1087 = vmatpush1.msra.mxu0 0.0
    %1088 = vmatprep.subr.mxu0 0.0
    %1089 = vmatpush1.msra.mxu0 0.0
    %1090 = vmatprep.subr.mxu0 0.0
    %1091 = vmatpush1.msra.mxu0 0.0
    %1092 = vmatprep.subr.mxu0 0.0
    %1093 = vmatpush1.msra.mxu0 0.0
    %1094 = vmatprep.subr.mxu0 0.0
    %1095 = vmatpush1.msra.mxu0 0.0
    %1096 = vmatprep.subr.mxu0 0.0
    %1097 = vmatpush1.msra.mxu0 0.0
    %1098 = vmatprep.mubr.f32.mxu0 0.0
    %1099 = vmatmul.mubr.f32.gmra.mrb[0].mxu0 %v1029
    %v1100 = vpop.f32.mrb[0].mxu0
    %v1101 = vadd.f32 0.0, %v1100
    %v1102 = vpop.f32.mrb[0].mxu0
    %1103 = vmatprep.mubr.f32.mxu0 0.0
    %1104 = vmatmul.mubr.f32.gmra.mrb[0].mxu0 %v1032
    %v1105 = vpop.f32.mrb[0].mxu0
    %v1106 = vadd.f32 0.0, %v1105
    %v1107 = vpop.f32.mrb[0].mxu0
    %1108 = vdwg.mxu0
    %1111 = vrot.lane.b32.xlu0 %v400, 96
    %v1112 = vpop.permute.xlu0 %1111
    %1113 = vrot.lane.b32.xlu0 %v405, 96
    %v1114 = vpop.permute.xlu0 %1113
    %v1118 = vsel %vm587, %v1018, 0
    %v1121 = vsel %vm587, %v1019, 0
    %1123 = vmatprep.subr.mxu0 0.0
    %1124 = vmatpush1.msra.mxu0 %v1112
    %1125 = vmatprep.subr.mxu0 0.0
    %1126 = vmatpush1.msra.mxu0 %v1114
    %1127 = vmatprep.subr.mxu0 0.0
    %1128 = vmatpush1.msra.mxu0 0.0
    %1129 = vmatprep.subr.mxu0 0.0
    %1130 = vmatpush1.msra.mxu0 0.0
    %1131 = vmatprep.subr.mxu0 0.0
    %1132 = vmatpush1.msra.mxu0 0.0
    %1133 = vmatprep.subr.mxu0 0.0
    %1134 = vmatpush1.msra.mxu0 0.0
    %1135 = vmatprep.subr.mxu0 0.0
    %1136 = vmatpush1.msra.mxu0 0.0
    %1137 = vmatprep.subr.mxu0 0.0
    %1138 = vmatpush1.msra.mxu0 0.0
    %1139 = vmatprep.subr.mxu0 0.0
    %1140 = vmatpush1.msra.mxu0 0.0
    %1141 = vmatprep.subr.mxu0 0.0
    %1142 = vmatpush1.msra.mxu0 0.0
    %1143 = vmatprep.subr.mxu0 0.0
    %1144 = vmatpush1.msra.mxu0 0.0
    %1145 = vmatprep.subr.mxu0 0.0
    %1146 = vmatpush1.msra.mxu0 0.0
    %1147 = vmatprep.subr.mxu0 0.0
    %1148 = vmatpush1.msra.mxu0 0.0
    %1149 = vmatprep.subr.mxu0 0.0
    %1150 = vmatpush1.msra.mxu0 0.0
    %1151 = vmatprep.subr.mxu0 0.0
    %1152 = vmatpush1.msra.mxu0 0.0
    %1153 = vmatprep.subr.mxu0 0.0
    %1154 = vmatpush1.msra.mxu0 0.0
    %1155 = vmatprep.subr.mxu0 0.0
    %1156 = vmatpush1.msra.mxu0 0.0
    %1157 = vmatprep.subr.mxu0 0.0
    %1158 = vmatpush1.msra.mxu0 0.0
    %1159 = vmatprep.subr.mxu0 0.0
    %1160 = vmatpush1.msra.mxu0 0.0
    %1161 = vmatprep.subr.mxu0 0.0
    %1162 = vmatpush1.msra.mxu0 0.0
    %1163 = vmatprep.subr.mxu0 0.0
    %1164 = vmatpush1.msra.mxu0 0.0
    %1165 = vmatprep.subr.mxu0 0.0
    %1166 = vmatpush1.msra.mxu0 0.0
    %1167 = vmatprep.subr.mxu0 0.0
    %1168 = vmatpush1.msra.mxu0 0.0
    %1169 = vmatprep.subr.mxu0 0.0
    %1170 = vmatpush1.msra.mxu0 0.0
    %1171 = vmatprep.subr.mxu0 0.0
    %1172 = vmatpush1.msra.mxu0 0.0
    %1173 = vmatprep.subr.mxu0 0.0
    %1174 = vmatpush1.msra.mxu0 0.0
    %1175 = vmatprep.subr.mxu0 0.0
    %1176 = vmatpush1.msra.mxu0 0.0
    %1177 = vmatprep.subr.mxu0 0.0
    %1178 = vmatpush1.msra.mxu0 0.0
    %1179 = vmatprep.subr.mxu0 0.0
    %1180 = vmatpush1.msra.mxu0 0.0
    %1181 = vmatprep.subr.mxu0 0.0
    %1182 = vmatpush1.msra.mxu0 0.0
    %1183 = vmatprep.subr.mxu0 0.0
    %1184 = vmatpush1.msra.mxu0 0.0
    %1185 = vmatprep.subr.mxu0 0.0
    %1186 = vmatpush1.msra.mxu0 0.0
    %1187 = vmatprep.mubr.f32.mxu0 0.0
    %1188 = vmatmul.mubr.f32.gmra.mrb[0].mxu0 %v1118
    %v1189 = vpop.f32.mrb[0].mxu0
    %v1190 = vadd.f32 0.0, %v1189
    %v1191 = vpop.f32.mrb[0].mxu0
    %1192 = vmatprep.mubr.f32.mxu0 0.0
    %1193 = vmatmul.mubr.f32.gmra.mrb[0].mxu0 %v1121
    %v1194 = vpop.f32.mrb[0].mxu0
    %v1195 = vadd.f32 0.0, %v1194
    %v1196 = vpop.f32.mrb[0].mxu0
    %1197 = vdwg.mxu0
    %1198 = vrot.lane.b32.xlu0 %v408, 64
    %v1199 = vpop.permute.xlu0 %1198
    %1200 = vrot.lane.b32.xlu0 %v409, 64
    %v1201 = vpop.permute.xlu0 %1200
    %1202 = vrot.lane.b32.xlu0 %v303, 64
    %v1203 = vpop.permute.xlu0 %1202
    %1204 = vrot.lane.b32.xlu0 %v309, 64
    %v1205 = vpop.permute.xlu0 %1204
    %v1206 = vsel %vm412, %v1199, 0
    %v1208 = vsel %vm412, %v1201, 0
    %v1210 = vsel %vm412, %v1203, 0
    %v1212 = vsel %vm412, %v1205, 0
    %1214 = vmatprep.subr.mxu0 0.0
    %1215 = vmatpush1.xpose.msra.mxu0 %v1210
    %1216 = vmatprep.subr.mxu0 0.0
    %1217 = vmatpush1.xpose.msra.mxu0 %v1212
    %1218 = vmatprep.subr.mxu0 0.0
    %1219 = vmatpush1.xpose.msra.mxu0 0.0
    %1220 = vmatprep.subr.mxu0 0.0
    %1221 = vmatpush1.xpose.msra.mxu0 0.0
    %1222 = vmatprep.subr.mxu0 0.0
    %1223 = vmatpush1.xpose.msra.mxu0 0.0
    %1224 = vmatprep.subr.mxu0 0.0
    %1225 = vmatpush1.xpose.msra.mxu0 0.0
    %1226 = vmatprep.subr.mxu0 0.0
    %1227 = vmatpush1.xpose.msra.mxu0 0.0
    %1228 = vmatprep.subr.mxu0 0.0
    %1229 = vmatpush1.xpose.msra.mxu0 0.0
    %1230 = vmatprep.subr.mxu0 0.0
    %1231 = vmatpush1.xpose.msra.mxu0 0.0
    %1232 = vmatprep.subr.mxu0 0.0
    %1233 = vmatpush1.xpose.msra.mxu0 0.0
    %1234 = vmatprep.subr.mxu0 0.0
    %1235 = vmatpush1.xpose.msra.mxu0 0.0
    %1236 = vmatprep.subr.mxu0 0.0
    %1237 = vmatpush1.xpose.msra.mxu0 0.0
    %1238 = vmatprep.subr.mxu0 0.0
    %1239 = vmatpush1.xpose.msra.mxu0 0.0
    %1240 = vmatprep.subr.mxu0 0.0
    %1241 = vmatpush1.xpose.msra.mxu0 0.0
    %1242 = vmatprep.subr.mxu0 0.0
    %1243 = vmatpush1.xpose.msra.mxu0 0.0
    %1244 = vmatprep.subr.mxu0 0.0
    %1245 = vmatpush1.xpose.msra.mxu0 0.0
    %1246 = vmatprep.subr.mxu0 0.0
    %1247 = vmatpush1.xpose.msra.mxu0 0.0
    %1248 = vmatprep.subr.mxu0 0.0
    %1249 = vmatpush1.xpose.msra.mxu0 0.0
    %1250 = vmatprep.subr.mxu0 0.0
    %1251 = vmatpush1.xpose.msra.mxu0 0.0
    %1252 = vmatprep.subr.mxu0 0.0
    %1253 = vmatpush1.xpose.msra.mxu0 0.0
    %1254 = vmatprep.subr.mxu0 0.0
    %1255 = vmatpush1.xpose.msra.mxu0 0.0
    %1256 = vmatprep.subr.mxu0 0.0
    %1257 = vmatpush1.xpose.msra.mxu0 0.0
    %1258 = vmatprep.subr.mxu0 0.0
    %1259 = vmatpush1.xpose.msra.mxu0 0.0
    %1260 = vmatprep.subr.mxu0 0.0
    %1261 = vmatpush1.xpose.msra.mxu0 0.0
    %1262 = vmatprep.subr.mxu0 0.0
    %1263 = vmatpush1.xpose.msra.mxu0 0.0
    %1264 = vmatprep.subr.mxu0 0.0
    %1265 = vmatpush1.xpose.msra.mxu0 0.0
    %1266 = vmatprep.subr.mxu0 0.0
    %1267 = vmatpush1.xpose.msra.mxu0 0.0
    %1268 = vmatprep.subr.mxu0 0.0
    %1269 = vmatpush1.xpose.msra.mxu0 0.0
    %1270 = vmatprep.subr.mxu0 0.0
    %1271 = vmatpush1.xpose.msra.mxu0 0.0
    %1272 = vmatprep.subr.mxu0 0.0
    %1273 = vmatpush1.xpose.msra.mxu0 0.0
    %1274 = vmatprep.subr.mxu0 0.0
    %1275 = vmatpush1.xpose.msra.mxu0 0.0
    %1276 = vmatprep.subr.mxu0 0.0
    %1277 = vmatpush1.xpose.msra.mxu0 0.0
    %1278 = vmatprep.mubr.f32.mxu0 0.0
    %1279 = vmatmul.mubr.f32.gmra.mrb[0].mxu0 %v1206
    %v1280 = vpop.f32.mrb[0].mxu0
    %v1281 = vadd.f32 0.0, %v1280
    %v1282 = vpop.f32.mrb[0].mxu0
    %1283 = vmatprep.mubr.f32.mxu0 0.0
    %1284 = vmatmul.mubr.f32.gmra.mrb[0].mxu0 %v1208
    %v1285 = vpop.f32.mrb[0].mxu0
    %v1286 = vadd.f32 0.0, %v1285
    %v1287 = vpop.f32.mrb[0].mxu0
    %1288 = vdwg.mxu0
    %1289 = vrot.lane.b32.xlu0 %v410, 64
    %v1290 = vpop.permute.xlu0 %1289
    %1291 = vrot.lane.b32.xlu0 %v411, 64
    %v1292 = vpop.permute.xlu0 %1291
    %1293 = vrot.lane.b32.xlu0 %v315, 64
    %v1294 = vpop.permute.xlu0 %1293
    %1295 = vrot.lane.b32.xlu0 %v321, 64
    %v1296 = vpop.permute.xlu0 %1295
    %v1297 = vsel %vm412, %v1290, 0
    %v1299 = vsel %vm412, %v1292, 0
    %v1301 = vsel %vm412, %v1294, 0
    %v1303 = vsel %vm412, %v1296, 0
    %1305 = vmatprep.subr.mxu0 0.0
    %1306 = vmatpush1.xpose.msra.mxu0 %v1301
    %1307 = vmatprep.subr.mxu0 0.0
    %1308 = vmatpush1.xpose.msra.mxu0 %v1303
    %1309 = vmatprep.subr.mxu0 0.0
    %1310 = vmatpush1.xpose.msra.mxu0 0.0
    %1311 = vmatprep.subr.mxu0 0.0
    %1312 = vmatpush1.xpose.msra.mxu0 0.0
    %1313 = vmatprep.subr.mxu0 0.0
    %1314 = vmatpush1.xpose.msra.mxu0 0.0
    %1315 = vmatprep.subr.mxu0 0.0
    %1316 = vmatpush1.xpose.msra.mxu0 0.0
    %1317 = vmatprep.subr.mxu0 0.0
    %1318 = vmatpush1.xpose.msra.mxu0 0.0
    %1319 = vmatprep.subr.mxu0 0.0
    %1320 = vmatpush1.xpose.msra.mxu0 0.0
    %1321 = vmatprep.subr.mxu0 0.0
    %1322 = vmatpush1.xpose.msra.mxu0 0.0
    %1323 = vmatprep.subr.mxu0 0.0
    %1324 = vmatpush1.xpose.msra.mxu0 0.0
    %1325 = vmatprep.subr.mxu0 0.0
    %1326 = vmatpush1.xpose.msra.mxu0 0.0
    %1327 = vmatprep.subr.mxu0 0.0
    %1328 = vmatpush1.xpose.msra.mxu0 0.0
    %1329 = vmatprep.subr.mxu0 0.0
    %1330 = vmatpush1.xpose.msra.mxu0 0.0
    %1331 = vmatprep.subr.mxu0 0.0
    %1332 = vmatpush1.xpose.msra.mxu0 0.0
    %1333 = vmatprep.subr.mxu0 0.0
    %1334 = vmatpush1.xpose.msra.mxu0 0.0
    %1335 = vmatprep.subr.mxu0 0.0
    %1336 = vmatpush1.xpose.msra.mxu0 0.0
    %1337 = vmatprep.subr.mxu0 0.0
    %1338 = vmatpush1.xpose.msra.mxu0 0.0
    %1339 = vmatprep.subr.mxu0 0.0
    %1340 = vmatpush1.xpose.msra.mxu0 0.0
    %1341 = vmatprep.subr.mxu0 0.0
    %1342 = vmatpush1.xpose.msra.mxu0 0.0
    %1343 = vmatprep.subr.mxu0 0.0
    %1344 = vmatpush1.xpose.msra.mxu0 0.0
    %1345 = vmatprep.subr.mxu0 0.0
    %1346 = vmatpush1.xpose.msra.mxu0 0.0
    %1347 = vmatprep.subr.mxu0 0.0
    %1348 = vmatpush1.xpose.msra.mxu0 0.0
    %1349 = vmatprep.subr.mxu0 0.0
    %1350 = vmatpush1.xpose.msra.mxu0 0.0
    %1351 = vmatprep.subr.mxu0 0.0
    %1352 = vmatpush1.xpose.msra.mxu0 0.0
    %1353 = vmatprep.subr.mxu0 0.0
    %1354 = vmatpush1.xpose.msra.mxu0 0.0
    %1355 = vmatprep.subr.mxu0 0.0
    %1356 = vmatpush1.xpose.msra.mxu0 0.0
    %1357 = vmatprep.subr.mxu0 0.0
    %1358 = vmatpush1.xpose.msra.mxu0 0.0
    %1359 = vmatprep.subr.mxu0 0.0
    %1360 = vmatpush1.xpose.msra.mxu0 0.0
    %1361 = vmatprep.subr.mxu0 0.0
    %1362 = vmatpush1.xpose.msra.mxu0 0.0
    %1363 = vmatprep.subr.mxu0 0.0
    %1364 = vmatpush1.xpose.msra.mxu0 0.0
    %1365 = vmatprep.subr.mxu0 0.0
    %1366 = vmatpush1.xpose.msra.mxu0 0.0
    %1367 = vmatprep.subr.mxu0 0.0
    %1368 = vmatpush1.xpose.msra.mxu0 0.0
    %1369 = vmatprep.mubr.f32.mxu0 0.0
    %1370 = vmatmul.mubr.f32.gmra.mrb[0].mxu0 %v1297
    %v1371 = vpop.f32.mrb[0].mxu0
    %v1372 = vadd.f32 0.0, %v1371
    %v1373 = vpop.f32.mrb[0].mxu0
    %1374 = vmatprep.mubr.f32.mxu0 0.0
    %1375 = vmatmul.mubr.f32.gmra.mrb[0].mxu0 %v1299
    %v1376 = vpop.f32.mrb[0].mxu0
    %v1377 = vadd.f32 0.0, %v1376
    %v1378 = vpop.f32.mrb[0].mxu0
    %1379 = vdwg.mxu0
    %v1380 = vsel %vm587, %v1281, -inf
    %1381 = vmax.xlane.f32.xlu0 %v1380
    %v1382 = vpop.xlane.xlu0 %1381
    %v1383 = vsel %vm587, %v1286, -inf
    %1384 = vmax.xlane.f32.xlu0 %v1383
    %v1385 = vpop.xlane.xlu0 %1384
    %v1386 = vsel %vm587, %v1372, -inf
    %1387 = vmax.xlane.f32.xlu0 %v1386
    %v1388 = vpop.xlane.xlu0 %1387
    %v1389 = vsel %vm587, %v1377, -inf
    %1390 = vmax.xlane.f32.xlu0 %v1389
    %v1391 = vpop.xlane.xlu0 %1390
    %v1392 = vsub.f32 %v1281, %v1382
    %v1393 = vsub.f32 %v1286, %v1385
    %v1394 = vsub.f32 %v1372, %v1388
    %v1395 = vsub.f32 %v1377, %v1391
    %v1396 = vmul.f32 %v1392, 1.442695
    %v1397 = vpow.pop %v1396
    %v1398 = vmul.f32 %v1393, 1.442695
    %v1399 = vpow.pop %v1398
    %v1400 = vmul.f32 %v1394, 1.442695
    %v1401 = vpow.pop %v1400
    %v1402 = vmul.f32 %v1395, 1.442695
    %v1403 = vpow.pop %v1402
    %v1404 = vsel %vm587, %v1397, 0.0
    %1405 = vadd.xlane.f32.xlu0 %v1404
    %v1406 = vpop.xlane.xlu0 %1405
    %v1407 = vsel %vm587, %v1399, 0.0
    %1408 = vadd.xlane.f32.xlu0 %v1407
    %v1409 = vpop.xlane.xlu0 %1408
    %v1410 = vsel %vm587, %v1401, 0.0
    %1411 = vadd.xlane.f32.xlu0 %v1410
    %v1412 = vpop.xlane.xlu0 %1411
    %v1413 = vsel %vm587, %v1403, 0.0
    %1414 = vadd.xlane.f32.xlu0 %v1413
    %v1415 = vpop.xlane.xlu0 %1414
    %v1416 = vrcp.pop %v1406
    %v1417 = vrcp.pop %v1409
    %v1418 = vrcp.pop %v1412
    %v1419 = vrcp.pop %v1415
    %v1420 = vmul.f32 %v1397, %v1416
    %v1421 = vmul.f32 %v1399, %v1417
    %v1422 = vmul.f32 %v1401, %v1418
    %v1423 = vmul.f32 %v1403, %v1419
    %1424 = vrot.lane.b32.xlu0 %v390, 64
    %v1425 = vpop.permute.xlu0 %1424
    %1426 = vrot.lane.b32.xlu0 %v395, 64
    %v1427 = vpop.permute.xlu0 %1426
    %v1431 = vsel %vm587, %v1420, 0
    %v1434 = vsel %vm587, %v1421, 0
    %1436 = vmatprep.subr.mxu0 0.0
    %1437 = vmatpush1.msra.mxu0 %v1425
    %1438 = vmatprep.subr.mxu0 0.0
    %1439 = vmatpush1.msra.mxu0 %v1427
    %1440 = vmatprep.subr.mxu0 0.0
    %1441 = vmatpush1.msra.mxu0 0.0
    %1442 = vmatprep.subr.mxu0 0.0
    %1443 = vmatpush1.msra.mxu0 0.0
    %1444 = vmatprep.subr.mxu0 0.0
    %1445 = vmatpush1.msra.mxu0 0.0
    %1446 = vmatprep.subr.mxu0 0.0
    %1447 = vmatpush1.msra.mxu0 0.0
    %1448 = vmatprep.subr.mxu0 0.0
    %1449 = vmatpush1.msra.mxu0 0.0
    %1450 = vmatprep.subr.mxu0 0.0
    %1451 = vmatpush1.msra.mxu0 0.0
    %1452 = vmatprep.subr.mxu0 0.0
    %1453 = vmatpush1.msra.mxu0 0.0
    %1454 = vmatprep.subr.mxu0 0.0
    %1455 = vmatpush1.msra.mxu0 0.0
    %1456 = vmatprep.subr.mxu0 0.0
    %1457 = vmatpush1.msra.mxu0 0.0
    %1458 = vmatprep.subr.mxu0 0.0
    %1459 = vmatpush1.msra.mxu0 0.0
    %1460 = vmatprep.subr.mxu0 0.0
    %1461 = vmatpush1.msra.mxu0 0.0
    %1462 = vmatprep.subr.mxu0 0.0
    %1463 = vmatpush1.msra.mxu0 0.0
    %1464 = vmatprep.subr.mxu0 0.0
    %1465 = vmatpush1.msra.mxu0 0.0
    %1466 = vmatprep.subr.mxu0 0.0
    %1467 = vmatpush1.msra.mxu0 0.0
    %1468 = vmatprep.subr.mxu0 0.0
    %1469 = vmatpush1.msra.mxu0 0.0
    %1470 = vmatprep.subr.mxu0 0.0
    %1471 = vmatpush1.msra.mxu0 0.0
    %1472 = vmatprep.subr.mxu0 0.0
    %1473 = vmatpush1.msra.mxu0 0.0
    %1474 = vmatprep.subr.mxu0 0.0
    %1475 = vmatpush1.msra.mxu0 0.0
    %1476 = vmatprep.subr.mxu0 0.0
    %1477 = vmatpush1.msra.mxu0 0.0
    %1478 = vmatprep.subr.mxu0 0.0
    %1479 = vmatpush1.msra.mxu0 0.0
    %1480 = vmatprep.subr.mxu0 0.0
    %1481 = vmatpush1.msra.mxu0 0.0
    %1482 = vmatprep.subr.mxu0 0.0
    %1483 = vmatpush1.msra.mxu0 0.0
    %1484 = vmatprep.subr.mxu0 0.0
    %1485 = vmatpush1.msra.mxu0 0.0
    %1486 = vmatprep.subr.mxu0 0.0
    %1487 = vmatpush1.msra.mxu0 0.0
    %1488 = vmatprep.subr.mxu0 0.0
    %1489 = vmatpush1.msra.mxu0 0.0
    %1490 = vmatprep.subr.mxu0 0.0
    %1491 = vmatpush1.msra.mxu0 0.0
    %1492 = vmatprep.subr.mxu0 0.0
    %1493 = vmatpush1.msra.mxu0 0.0
    %1494 = vmatprep.subr.mxu0 0.0
    %1495 = vmatpush1.msra.mxu0 0.0
    %1496 = vmatprep.subr.mxu0 0.0
    %1497 = vmatpush1.msra.mxu0 0.0
    %1498 = vmatprep.subr.mxu0 0.0
    %1499 = vmatpush1.msra.mxu0 0.0
    %1500 = vmatprep.mubr.f32.mxu0 0.0
    %1501 = vmatmul.mubr.f32.gmra.mrb[0].mxu0 %v1431
    %v1502 = vpop.f32.mrb[0].mxu0
    %v1503 = vadd.f32 0.0, %v1502
    %v1504 = vpop.f32.mrb[0].mxu0
    %1505 = vmatprep.mubr.f32.mxu0 0.0
    %1506 = vmatmul.mubr.f32.gmra.mrb[0].mxu0 %v1434
    %v1507 = vpop.f32.mrb[0].mxu0
    %v1508 = vadd.f32 0.0, %v1507
    %v1509 = vpop.f32.mrb[0].mxu0
    %1510 = vdwg.mxu0
    %1511 = vrot.lane.b32.xlu0 %v400, 64
    %v1512 = vpop.permute.xlu0 %1511
    %1513 = vrot.lane.b32.xlu0 %v405, 64
    %v1514 = vpop.permute.xlu0 %1513
    %v1518 = vsel %vm587, %v1422, 0
    %v1521 = vsel %vm587, %v1423, 0
    %1523 = vmatprep.subr.mxu0 0.0
    %1524 = vmatpush1.msra.mxu0 %v1512
    %1525 = vmatprep.subr.mxu0 0.0
    %1526 = vmatpush1.msra.mxu0 %v1514
    %1527 = vmatprep.subr.mxu0 0.0
    %1528 = vmatpush1.msra.mxu0 0.0
    %1529 = vmatprep.subr.mxu0 0.0
    %1530 = vmatpush1.msra.mxu0 0.0
    %1531 = vmatprep.subr.mxu0 0.0
    %1532 = vmatpush1.msra.mxu0 0.0
    %1533 = vmatprep.subr.mxu0 0.0
    %1534 = vmatpush1.msra.mxu0 0.0
    %1535 = vmatprep.subr.mxu0 0.0
    %1536 = vmatpush1.msra.mxu0 0.0
    %1537 = vmatprep.subr.mxu0 0.0
    %1538 = vmatpush1.msra.mxu0 0.0
    %1539 = vmatprep.subr.mxu0 0.0
    %1540 = vmatpush1.msra.mxu0 0.0
    %1541 = vmatprep.subr.mxu0 0.0
    %1542 = vmatpush1.msra.mxu0 0.0
    %1543 = vmatprep.subr.mxu0 0.0
    %1544 = vmatpush1.msra.mxu0 0.0
    %1545 = vmatprep.subr.mxu0 0.0
    %1546 = vmatpush1.msra.mxu0 0.0
    %1547 = vmatprep.subr.mxu0 0.0
    %1548 = vmatpush1.msra.mxu0 0.0
    %1549 = vmatprep.subr.mxu0 0.0
    %1550 = vmatpush1.msra.mxu0 0.0
    %1551 = vmatprep.subr.mxu0 0.0
    %1552 = vmatpush1.msra.mxu0 0.0
    %1553 = vmatprep.subr.mxu0 0.0
    %1554 = vmatpush1.msra.mxu0 0.0
    %1555 = vmatprep.subr.mxu0 0.0
    %1556 = vmatpush1.msra.mxu0 0.0
    %1557 = vmatprep.subr.mxu0 0.0
    %1558 = vmatpush1.msra.mxu0 0.0
    %1559 = vmatprep.subr.mxu0 0.0
    %1560 = vmatpush1.msra.mxu0 0.0
    %1561 = vmatprep.subr.mxu0 0.0
    %1562 = vmatpush1.msra.mxu0 0.0
    %1563 = vmatprep.subr.mxu0 0.0
    %1564 = vmatpush1.msra.mxu0 0.0
    %1565 = vmatprep.subr.mxu0 0.0
    %1566 = vmatpush1.msra.mxu0 0.0
    %1567 = vmatprep.subr.mxu0 0.0
    %1568 = vmatpush1.msra.mxu0 0.0
    %1569 = vmatprep.subr.mxu0 0.0
    %1570 = vmatpush1.msra.mxu0 0.0
    %1571 = vmatprep.subr.mxu0 0.0
    %1572 = vmatpush1.msra.mxu0 0.0
    %1573 = vmatprep.subr.mxu0 0.0
    %1574 = vmatpush1.msra.mxu0 0.0
    %1575 = vmatprep.subr.mxu0 0.0
    %1576 = vmatpush1.msra.mxu0 0.0
    %1577 = vmatprep.subr.mxu0 0.0
    %1578 = vmatpush1.msra.mxu0 0.0
    %1579 = vmatprep.subr.mxu0 0.0
    %1580 = vmatpush1.msra.mxu0 0.0
    %1581 = vmatprep.subr.mxu0 0.0
    %1582 = vmatpush1.msra.mxu0 0.0
    %1583 = vmatprep.subr.mxu0 0.0
    %1584 = vmatpush1.msra.mxu0 0.0
    %1585 = vmatprep.subr.mxu0 0.0
    %1586 = vmatpush1.msra.mxu0 0.0
    %1587 = vmatprep.mubr.f32.mxu0 0.0
    %1588 = vmatmul.mubr.f32.gmra.mrb[0].mxu0 %v1518
    %v1589 = vpop.f32.mrb[0].mxu0
    %v1590 = vadd.f32 0.0, %v1589
    %v1591 = vpop.f32.mrb[0].mxu0
    %1592 = vmatprep.mubr.f32.mxu0 0.0
    %1593 = vmatmul.mubr.f32.gmra.mrb[0].mxu0 %v1521
    %v1594 = vpop.f32.mrb[0].mxu0
    %v1595 = vadd.f32 0.0, %v1594
    %v1596 = vpop.f32.mrb[0].mxu0
    %1597 = vdwg.mxu0
    %1598 = vrot.lane.b32.xlu0 %v408, 32
    %v1599 = vpop.permute.xlu0 %1598
    %1600 = vrot.lane.b32.xlu0 %v409, 32
    %v1601 = vpop.permute.xlu0 %1600
    %1602 = vrot.lane.b32.xlu0 %v303, 32
    %v1603 = vpop.permute.xlu0 %1602
    %1604 = vrot.lane.b32.xlu0 %v309, 32
    %v1605 = vpop.permute.xlu0 %1604
    %v1606 = vsel %vm412, %v1599, 0
    %v1608 = vsel %vm412, %v1601, 0
    %v1610 = vsel %vm412, %v1603, 0
    %v1612 = vsel %vm412, %v1605, 0
    %1614 = vmatprep.subr.mxu0 0.0
    %1615 = vmatpush1.xpose.msra.mxu0 %v1610
    %1616 = vmatprep.subr.mxu0 0.0
    %1617 = vmatpush1.xpose.msra.mxu0 %v1612
    %1618 = vmatprep.subr.mxu0 0.0
    %1619 = vmatpush1.xpose.msra.mxu0 0.0
    %1620 = vmatprep.subr.mxu0 0.0
    %1621 = vmatpush1.xpose.msra.mxu0 0.0
    %1622 = vmatprep.subr.mxu0 0.0
    %1623 = vmatpush1.xpose.msra.mxu0 0.0
    %1624 = vmatprep.subr.mxu0 0.0
    %1625 = vmatpush1.xpose.msra.mxu0 0.0
    %1626 = vmatprep.subr.mxu0 0.0
    %1627 = vmatpush1.xpose.msra.mxu0 0.0
    %1628 = vmatprep.subr.mxu0 0.0
    %1629 = vmatpush1.xpose.msra.mxu0 0.0
    %1630 = vmatprep.subr.mxu0 0.0
    %1631 = vmatpush1.xpose.msra.mxu0 0.0
    %1632 = vmatprep.subr.mxu0 0.0
    %1633 = vmatpush1.xpose.msra.mxu0 0.0
    %1634 = vmatprep.subr.mxu0 0.0
    %1635 = vmatpush1.xpose.msra.mxu0 0.0
    %1636 = vmatprep.subr.mxu0 0.0
    %1637 = vmatpush1.xpose.msra.mxu0 0.0
    %1638 = vmatprep.subr.mxu0 0.0
    %1639 = vmatpush1.xpose.msra.mxu0 0.0
    %1640 = vmatprep.subr.mxu0 0.0
    %1641 = vmatpush1.xpose.msra.mxu0 0.0
    %1642 = vmatprep.subr.mxu0 0.0
    %1643 = vmatpush1.xpose.msra.mxu0 0.0
    %1644 = vmatprep.subr.mxu0 0.0
    %1645 = vmatpush1.xpose.msra.mxu0 0.0
    %1646 = vmatprep.subr.mxu0 0.0
    %1647 = vmatpush1.xpose.msra.mxu0 0.0
    %1648 = vmatprep.subr.mxu0 0.0
    %1649 = vmatpush1.xpose.msra.mxu0 0.0
    %1650 = vmatprep.subr.mxu0 0.0
    %1651 = vmatpush1.xpose.msra.mxu0 0.0
    %1652 = vmatprep.subr.mxu0 0.0
    %1653 = vmatpush1.xpose.msra.mxu0 0.0
    %1654 = vmatprep.subr.mxu0 0.0
    %1655 = vmatpush1.xpose.msra.mxu0 0.0
    %1656 = vmatprep.subr.mxu0 0.0
    %1657 = vmatpush1.xpose.msra.mxu0 0.0
    %1658 = vmatprep.subr.mxu0 0.0
    %1659 = vmatpush1.xpose.msra.mxu0 0.0
    %1660 = vmatprep.subr.mxu0 0.0
    %1661 = vmatpush1.xpose.msra.mxu0 0.0
    %1662 = vmatprep.subr.mxu0 0.0
    %1663 = vmatpush1.xpose.msra.mxu0 0.0
    %1664 = vmatprep.subr.mxu0 0.0
    %1665 = vmatpush1.xpose.msra.mxu0 0.0
    %1666 = vmatprep.subr.mxu0 0.0
    %1667 = vmatpush1.xpose.msra.mxu0 0.0
    %1668 = vmatprep.subr.mxu0 0.0
    %1669 = vmatpush1.xpose.msra.mxu0 0.0
    %1670 = vmatprep.subr.mxu0 0.0
    %1671 = vmatpush1.xpose.msra.mxu0 0.0
    %1672 = vmatprep.subr.mxu0 0.0
    %1673 = vmatpush1.xpose.msra.mxu0 0.0
    %1674 = vmatprep.subr.mxu0 0.0
    %1675 = vmatpush1.xpose.msra.mxu0 0.0
    %1676 = vmatprep.subr.mxu0 0.0
    %1677 = vmatpush1.xpose.msra.mxu0 0.0
    %1678 = vmatprep.mubr.f32.mxu0 0.0
    %1679 = vmatmul.mubr.f32.gmra.mrb[0].mxu0 %v1606
    %v1680 = vpop.f32.mrb[0].mxu0
    %v1681 = vadd.f32 0.0, %v1680
    %v1682 = vpop.f32.mrb[0].mxu0
    %1683 = vmatprep.mubr.f32.mxu0 0.0
    %1684 = vmatmul.mubr.f32.gmra.mrb[0].mxu0 %v1608
    %v1685 = vpop.f32.mrb[0].mxu0
    %v1686 = vadd.f32 0.0, %v1685
    %v1687 = vpop.f32.mrb[0].mxu0
    %1688 = vdwg.mxu0
    %1689 = vrot.lane.b32.xlu0 %v410, 32
    %v1690 = vpop.permute.xlu0 %1689
    %1691 = vrot.lane.b32.xlu0 %v411, 32
    %v1692 = vpop.permute.xlu0 %1691
    %1693 = vrot.lane.b32.xlu0 %v315, 32
    %v1694 = vpop.permute.xlu0 %1693
    %1695 = vrot.lane.b32.xlu0 %v321, 32
    %v1696 = vpop.permute.xlu0 %1695
    %v1697 = vsel %vm412, %v1690, 0
    %v1699 = vsel %vm412, %v1692, 0
    %v1701 = vsel %vm412, %v1694, 0
    %v1703 = vsel %vm412, %v1696, 0
    %1705 = vmatprep.subr.mxu0 0.0
    %1706 = vmatpush1.xpose.msra.mxu0 %v1701
    %1707 = vmatprep.subr.mxu0 0.0
    %1708 = vmatpush1.xpose.msra.mxu0 %v1703
    %1709 = vmatprep.subr.mxu0 0.0
    %1710 = vmatpush1.xpose.msra.mxu0 0.0
    %1711 = vmatprep.subr.mxu0 0.0
    %1712 = vmatpush1.xpose.msra.mxu0 0.0
    %1713 = vmatprep.subr.mxu0 0.0
    %1714 = vmatpush1.xpose.msra.mxu0 0.0
    %1715 = vmatprep.subr.mxu0 0.0
    %1716 = vmatpush1.xpose.msra.mxu0 0.0
    %1717 = vmatprep.subr.mxu0 0.0
    %1718 = vmatpush1.xpose.msra.mxu0 0.0
    %1719 = vmatprep.subr.mxu0 0.0
    %1720 = vmatpush1.xpose.msra.mxu0 0.0
    %1721 = vmatprep.subr.mxu0 0.0
    %1722 = vmatpush1.xpose.msra.mxu0 0.0
    %1723 = vmatprep.subr.mxu0 0.0
    %1724 = vmatpush1.xpose.msra.mxu0 0.0
    %1725 = vmatprep.subr.mxu0 0.0
    %1726 = vmatpush1.xpose.msra.mxu0 0.0
    %1727 = vmatprep.subr.mxu0 0.0
    %1728 = vmatpush1.xpose.msra.mxu0 0.0
    %1729 = vmatprep.subr.mxu0 0.0
    %1730 = vmatpush1.xpose.msra.mxu0 0.0
    %1731 = vmatprep.subr.mxu0 0.0
    %1732 = vmatpush1.xpose.msra.mxu0 0.0
    %1733 = vmatprep.subr.mxu0 0.0
    %1734 = vmatpush1.xpose.msra.mxu0 0.0
    %1735 = vmatprep.subr.mxu0 0.0
    %1736 = vmatpush1.xpose.msra.mxu0 0.0
    %1737 = vmatprep.subr.mxu0 0.0
    %1738 = vmatpush1.xpose.msra.mxu0 0.0
    %1739 = vmatprep.subr.mxu0 0.0
    %1740 = vmatpush1.xpose.msra.mxu0 0.0
    %1741 = vmatprep.subr.mxu0 0.0
    %1742 = vmatpush1.xpose.msra.mxu0 0.0
    %1743 = vmatprep.subr.mxu0 0.0
    %1744 = vmatpush1.xpose.msra.mxu0 0.0
    %1745 = vmatprep.subr.mxu0 0.0
    %1746 = vmatpush1.xpose.msra.mxu0 0.0
    %1747 = vmatprep.subr.mxu0 0.0
    %1748 = vmatpush1.xpose.msra.mxu0 0.0
    %1749 = vmatprep.subr.mxu0 0.0
    %1750 = vmatpush1.xpose.msra.mxu0 0.0
    %1751 = vmatprep.subr.mxu0 0.0
    %1752 = vmatpush1.xpose.msra.mxu0 0.0
    %1753 = vmatprep.subr.mxu0 0.0
    %1754 = vmatpush1.xpose.msra.mxu0 0.0
    %1755 = vmatprep.subr.mxu0 0.0
    %1756 = vmatpush1.xpose.msra.mxu0 0.0
    %1757 = vmatprep.subr.mxu0 0.0
    %1758 = vmatpush1.xpose.msra.mxu0 0.0
    %1759 = vmatprep.subr.mxu0 0.0
    %1760 = vmatpush1.xpose.msra.mxu0 0.0
    %1761 = vmatprep.subr.mxu0 0.0
    %1762 = vmatpush1.xpose.msra.mxu0 0.0
    %1763 = vmatprep.subr.mxu0 0.0
    %1764 = vmatpush1.xpose.msra.mxu0 0.0
    %1765 = vmatprep.subr.mxu0 0.0
    %1766 = vmatpush1.xpose.msra.mxu0 0.0
    %1767 = vmatprep.subr.mxu0 0.0
    %1768 = vmatpush1.xpose.msra.mxu0 0.0
    %1769 = vmatprep.mubr.f32.mxu0 0.0
    %1770 = vmatmul.mubr.f32.gmra.mrb[0].mxu0 %v1697
    %v1771 = vpop.f32.mrb[0].mxu0
    %v1772 = vadd.f32 0.0, %v1771
    %v1773 = vpop.f32.mrb[0].mxu0
    %1774 = vmatprep.mubr.f32.mxu0 0.0
    %1775 = vmatmul.mubr.f32.gmra.mrb[0].mxu0 %v1699
    %v1776 = vpop.f32.mrb[0].mxu0
    %v1777 = vadd.f32 0.0, %v1776
    %v1778 = vpop.f32.mrb[0].mxu0
    %1779 = vdwg.mxu0
    %v1780 = vsel %vm587, %v1681, -inf
    %1781 = vmax.xlane.f32.xlu0 %v1780
    %v1782 = vpop.xlane.xlu0 %1781
    %v1783 = vsel %vm587, %v1686, -inf
    %1784 = vmax.xlane.f32.xlu0 %v1783
    %v1785 = vpop.xlane.xlu0 %1784
    %v1786 = vsel %vm587, %v1772, -inf
    %1787 = vmax.xlane.f32.xlu0 %v1786
    %v1788 = vpop.xlane.xlu0 %1787
    %v1789 = vsel %vm587, %v1777, -inf
    %1790 = vmax.xlane.f32.xlu0 %v1789
    %v1791 = vpop.xlane.xlu0 %1790
    %v1792 = vsub.f32 %v1681, %v1782
    %v1793 = vsub.f32 %v1686, %v1785
    %v1794 = vsub.f32 %v1772, %v1788
    %v1795 = vsub.f32 %v1777, %v1791
    %v1796 = vmul.f32 %v1792, 1.442695
    %v1797 = vpow.pop %v1796
    %v1798 = vmul.f32 %v1793, 1.442695
    %v1799 = vpow.pop %v1798
    %v1800 = vmul.f32 %v1794, 1.442695
    %v1801 = vpow.pop %v1800
    %v1802 = vmul.f32 %v1795, 1.442695
    %v1803 = vpow.pop %v1802
    %v1804 = vsel %vm587, %v1797, 0.0
    %1805 = vadd.xlane.f32.xlu0 %v1804
    %v1806 = vpop.xlane.xlu0 %1805
    %v1807 = vsel %vm587, %v1799, 0.0
    %1808 = vadd.xlane.f32.xlu0 %v1807
    %v1809 = vpop.xlane.xlu0 %1808
    %v1810 = vsel %vm587, %v1801, 0.0
    %1811 = vadd.xlane.f32.xlu0 %v1810
    %v1812 = vpop.xlane.xlu0 %1811
    %v1813 = vsel %vm587, %v1803, 0.0
    %1814 = vadd.xlane.f32.xlu0 %v1813
    %v1815 = vpop.xlane.xlu0 %1814
    %v1816 = vrcp.pop %v1806
    %v1817 = vrcp.pop %v1809
    %v1818 = vrcp.pop %v1812
    %v1819 = vrcp.pop %v1815
    %v1820 = vmul.f32 %v1797, %v1816
    %v1821 = vmul.f32 %v1799, %v1817
    %v1822 = vmul.f32 %v1801, %v1818
    %v1823 = vmul.f32 %v1803, %v1819
    %1824 = vrot.lane.b32.xlu0 %v390, 32
    %v1825 = vpop.permute.xlu0 %1824
    %1826 = vrot.lane.b32.xlu0 %v395, 32
    %v1827 = vpop.permute.xlu0 %1826
    %v1831 = vsel %vm587, %v1820, 0
    %v1834 = vsel %vm587, %v1821, 0
    %1836 = vmatprep.subr.mxu0 0.0
    %1837 = vmatpush1.msra.mxu0 %v1825
    %1838 = vmatprep.subr.mxu0 0.0
    %1839 = vmatpush1.msra.mxu0 %v1827
    %1840 = vmatprep.subr.mxu0 0.0
    %1841 = vmatpush1.msra.mxu0 0.0
    %1842 = vmatprep.subr.mxu0 0.0
    %1843 = vmatpush1.msra.mxu0 0.0
    %1844 = vmatprep.subr.mxu0 0.0
    %1845 = vmatpush1.msra.mxu0 0.0
    %1846 = vmatprep.subr.mxu0 0.0
    %1847 = vmatpush1.msra.mxu0 0.0
    %1848 = vmatprep.subr.mxu0 0.0
    %1849 = vmatpush1.msra.mxu0 0.0
    %1850 = vmatprep.subr.mxu0 0.0
    %1851 = vmatpush1.msra.mxu0 0.0
    %1852 = vmatprep.subr.mxu0 0.0
    %1853 = vmatpush1.msra.mxu0 0.0
    %1854 = vmatprep.subr.mxu0 0.0
    %1855 = vmatpush1.msra.mxu0 0.0
    %1856 = vmatprep.subr.mxu0 0.0
    %1857 = vmatpush1.msra.mxu0 0.0
    %1858 = vmatprep.subr.mxu0 0.0
    %1859 = vmatpush1.msra.mxu0 0.0
    %1860 = vmatprep.subr.mxu0 0.0
    %1861 = vmatpush1.msra.mxu0 0.0
    %1862 = vmatprep.subr.mxu0 0.0
    %1863 = vmatpush1.msra.mxu0 0.0
    %1864 = vmatprep.subr.mxu0 0.0
    %1865 = vmatpush1.msra.mxu0 0.0
    %1866 = vmatprep.subr.mxu0 0.0
    %1867 = vmatpush1.msra.mxu0 0.0
    %1868 = vmatprep.subr.mxu0 0.0
    %1869 = vmatpush1.msra.mxu0 0.0
    %1870 = vmatprep.subr.mxu0 0.0
    %1871 = vmatpush1.msra.mxu0 0.0
    %1872 = vmatprep.subr.mxu0 0.0
    %1873 = vmatpush1.msra.mxu0 0.0
    %1874 = vmatprep.subr.mxu0 0.0
    %1875 = vmatpush1.msra.mxu0 0.0
    %1876 = vmatprep.subr.mxu0 0.0
    %1877 = vmatpush1.msra.mxu0 0.0
    %1878 = vmatprep.subr.mxu0 0.0
    %1879 = vmatpush1.msra.mxu0 0.0
    %1880 = vmatprep.subr.mxu0 0.0
    %1881 = vmatpush1.msra.mxu0 0.0
    %1882 = vmatprep.subr.mxu0 0.0
    %1883 = vmatpush1.msra.mxu0 0.0
    %1884 = vmatprep.subr.mxu0 0.0
    %1885 = vmatpush1.msra.mxu0 0.0
    %1886 = vmatprep.subr.mxu0 0.0
    %1887 = vmatpush1.msra.mxu0 0.0
    %1888 = vmatprep.subr.mxu0 0.0
    %1889 = vmatpush1.msra.mxu0 0.0
    %1890 = vmatprep.subr.mxu0 0.0
    %1891 = vmatpush1.msra.mxu0 0.0
    %1892 = vmatprep.subr.mxu0 0.0
    %1893 = vmatpush1.msra.mxu0 0.0
    %1894 = vmatprep.subr.mxu0 0.0
    %1895 = vmatpush1.msra.mxu0 0.0
    %1896 = vmatprep.subr.mxu0 0.0
    %1897 = vmatpush1.msra.mxu0 0.0
    %1898 = vmatprep.subr.mxu0 0.0
    %1899 = vmatpush1.msra.mxu0 0.0
    %1900 = vmatprep.mubr.f32.mxu0 0.0
    %1901 = vmatmul.mubr.f32.gmra.mrb[0].mxu0 %v1831
    %v1902 = vpop.f32.mrb[0].mxu0
    %v1903 = vadd.f32 0.0, %v1902
    %v1904 = vpop.f32.mrb[0].mxu0
    %1905 = vmatprep.mubr.f32.mxu0 0.0
    %1906 = vmatmul.mubr.f32.gmra.mrb[0].mxu0 %v1834
    %v1907 = vpop.f32.mrb[0].mxu0
    %v1908 = vadd.f32 0.0, %v1907
    %v1909 = vpop.f32.mrb[0].mxu0
    %1910 = vdwg.mxu0
    %1911 = vrot.lane.b32.xlu0 %v400, 32
    %v1912 = vpop.permute.xlu0 %1911
    %1913 = vrot.lane.b32.xlu0 %v405, 32
    %v1914 = vpop.permute.xlu0 %1913
    %v1918 = vsel %vm587, %v1822, 0
    %v1921 = vsel %vm587, %v1823, 0
    %1923 = vmatprep.subr.mxu0 0.0
    %1924 = vmatpush1.msra.mxu0 %v1912
    %1925 = vmatprep.subr.mxu0 0.0
    %1926 = vmatpush1.msra.mxu0 %v1914
    %1927 = vmatprep.subr.mxu0 0.0
    %1928 = vmatpush1.msra.mxu0 0.0
    %1929 = vmatprep.subr.mxu0 0.0
    %1930 = vmatpush1.msra.mxu0 0.0
    %1931 = vmatprep.subr.mxu0 0.0
    %1932 = vmatpush1.msra.mxu0 0.0
    %1933 = vmatprep.subr.mxu0 0.0
    %1934 = vmatpush1.msra.mxu0 0.0
    %1935 = vmatprep.subr.mxu0 0.0
    %1936 = vmatpush1.msra.mxu0 0.0
    %1937 = vmatprep.subr.mxu0 0.0
    %1938 = vmatpush1.msra.mxu0 0.0
    %1939 = vmatprep.subr.mxu0 0.0
    %1940 = vmatpush1.msra.mxu0 0.0
    %1941 = vmatprep.subr.mxu0 0.0
    %1942 = vmatpush1.msra.mxu0 0.0
    %1943 = vmatprep.subr.mxu0 0.0
    %1944 = vmatpush1.msra.mxu0 0.0
    %1945 = vmatprep.subr.mxu0 0.0
    %1946 = vmatpush1.msra.mxu0 0.0
    %1947 = vmatprep.subr.mxu0 0.0
    %1948 = vmatpush1.msra.mxu0 0.0
    %1949 = vmatprep.subr.mxu0 0.0
    %1950 = vmatpush1.msra.mxu0 0.0
    %1951 = vmatprep.subr.mxu0 0.0
    %1952 = vmatpush1.msra.mxu0 0.0
    %1953 = vmatprep.subr.mxu0 0.0
    %1954 = vmatpush1.msra.mxu0 0.0
    %1955 = vmatprep.subr.mxu0 0.0
    %1956 = vmatpush1.msra.mxu0 0.0
    %1957 = vmatprep.subr.mxu0 0.0
    %1958 = vmatpush1.msra.mxu0 0.0
    %1959 = vmatprep.subr.mxu0 0.0
    %1960 = vmatpush1.msra.mxu0 0.0
    %1961 = vmatprep.subr.mxu0 0.0
    %1962 = vmatpush1.msra.mxu0 0.0
    %1963 = vmatprep.subr.mxu0 0.0
    %1964 = vmatpush1.msra.mxu0 0.0
    %1965 = vmatprep.subr.mxu0 0.0
    %1966 = vmatpush1.msra.mxu0 0.0
    %1967 = vmatprep.subr.mxu0 0.0
    %1968 = vmatpush1.msra.mxu0 0.0
    %1969 = vmatprep.subr.mxu0 0.0
    %1970 = vmatpush1.msra.mxu0 0.0
    %1971 = vmatprep.subr.mxu0 0.0
    %1972 = vmatpush1.msra.mxu0 0.0
    %1973 = vmatprep.subr.mxu0 0.0
    %1974 = vmatpush1.msra.mxu0 0.0
    %1975 = vmatprep.subr.mxu0 0.0
    %1976 = vmatpush1.msra.mxu0 0.0
    %1977 = vmatprep.subr.mxu0 0.0
    %1978 = vmatpush1.msra.mxu0 0.0
    %1979 = vmatprep.subr.mxu0 0.0
    %1980 = vmatpush1.msra.mxu0 0.0
    %1981 = vmatprep.subr.mxu0 0.0
    %1982 = vmatpush1.msra.mxu0 0.0
    %1983 = vmatprep.subr.mxu0 0.0
    %1984 = vmatpush1.msra.mxu0 0.0
    %1985 = vmatprep.subr.mxu0 0.0
    %1986 = vmatpush1.msra.mxu0 0.0
    %1987 = vmatprep.mubr.f32.mxu0 0.0
    %1988 = vmatmul.mubr.f32.gmra.mrb[0].mxu0 %v1918
    %v1989 = vpop.f32.mrb[0].mxu0
    %v1990 = vadd.f32 0.0, %v1989
    %v1991 = vpop.f32.mrb[0].mxu0
    %1992 = vmatprep.mubr.f32.mxu0 0.0
    %1993 = vmatmul.mubr.f32.gmra.mrb[0].mxu0 %v1921
    %v1994 = vpop.f32.mrb[0].mxu0
    %v1995 = vadd.f32 0.0, %v1994
    %v1996 = vpop.f32.mrb[0].mxu0
    %1997 = vdwg.mxu0
    %2002 = vrot.lane.b32.xlu0 %v1101, 32
    %v2003 = vpop.permute.xlu0 %2002
    %2004 = vrot.lane.b32.xlu0 %v1106, 32
    %v2005 = vpop.permute.xlu0 %2004
    %2006 = vrot.lane.b32.xlu0 %v1190, 32
    %v2007 = vpop.permute.xlu0 %2006
    %2008 = vrot.lane.b32.xlu0 %v1195, 32
    %v2009 = vpop.permute.xlu0 %2008
    %2018 = vrot.lane.b32.xlu0 %v1503, 64
    %v2019 = vpop.permute.xlu0 %2018
    %2020 = vrot.lane.b32.xlu0 %v1508, 64
    %v2021 = vpop.permute.xlu0 %2020
    %2022 = vrot.lane.b32.xlu0 %v1590, 64
    %v2023 = vpop.permute.xlu0 %2022
    %2024 = vrot.lane.b32.xlu0 %v1595, 64
    %v2025 = vpop.permute.xlu0 %2024
    %2034 = vrot.lane.b32.xlu0 %v1903, 96
    %v2035 = vpop.permute.xlu0 %2034
    %2036 = vrot.lane.b32.xlu0 %v1908, 96
    %v2037 = vpop.permute.xlu0 %2036
    %2038 = vrot.lane.b32.xlu0 %v1990, 96
    %v2039 = vpop.permute.xlu0 %2038
    %2040 = vrot.lane.b32.xlu0 %v1995, 96
    %v2041 = vpop.permute.xlu0 %2040
    %v2046 = vsel %vm412, %v705, %v2003
    %v2047 = vsel %vm412, %v710, %v2005
    %v2048 = vsel %vm412, %v786, %v2007
    %v2049 = vsel %vm412, %v791, %v2009
    %vm2050 = vcmask 523264
    %v2051 = vsel %vm2050, %v2046, %v2019
    %v2052 = vsel %vm2050, %v2047, %v2021
    %v2053 = vsel %vm2050, %v2048, %v2023
    %v2054 = vsel %vm2050, %v2049, %v2025
    %vm2055 = vcmask 785408
    %v2056 = vsel %vm2055, %v2051, %v2035
    %v2057 = vsel %vm2055, %v2052, %v2037
    %v2058 = vsel %vm2055, %v2053, %v2039
    %v2059 = vsel %vm2055, %v2054, %v2041
    %v2060 = vld [vmem:[#allocation8] sm:$0xff]
    %v2061 = vld [vmem:[#allocation8 + $0x8] sm:$0xff]
    %v2062 = vld [vmem:[#allocation8 + $0x10] sm:$0xff]
    %v2063 = vld [vmem:[#allocation8 + $0x18] sm:$0xff]
    %v2064 = vld [vmem:[#allocation8 + $0x20] sm:$0xff]
    %v2065 = vld [vmem:[#allocation8 + $0x28] sm:$0xff]
    %v2066 = vld [vmem:[#allocation8 + $0x30] sm:$0xff]
    %v2067 = vld [vmem:[#allocation8 + $0x38] sm:$0xff]
    %v2068 = vld [vmem:[#allocation8 + $0x40] sm:$0xff]
    %v2069 = vld [vmem:[#allocation8 + $0x48] sm:$0xff]
    %v2070 = vld [vmem:[#allocation8 + $0x50] sm:$0xff]
    %v2071 = vld [vmem:[#allocation8 + $0x58] sm:$0xff]
    %v2072 = vld [vmem:[#allocation8 + $0x60] sm:$0xff]
    %v2073 = vld [vmem:[#allocation8 + $0x68] sm:$0xff]
    %v2074 = vld [vmem:[#allocation8 + $0x70] sm:$0xff]
    %v2075 = vld [vmem:[#allocation8 + $0x78] sm:$0xff]
    %v2076 = vld [vmem:[%s5] sm:$0x1]
    %v2078 = vlaneseq
    %v2079 = vshrl.u32 %v2078, 7
    %v2080 = vsub.s32 0, %v2079
    %v2081 = vrot.slane %v2076, %v2080
    %2083 = vmatprep.subr.mxu0 0.0
    %2084 = vmatpush1.msra.mxu0 %v2060
    %2085 = vmatprep.subr.mxu0 0.0
    %2086 = vmatpush1.msra.mxu0 %v2061
    %2087 = vmatprep.subr.mxu0 0.0
    %2088 = vmatpush1.msra.mxu0 %v2062
    %2089 = vmatprep.subr.mxu0 0.0
    %2090 = vmatpush1.msra.mxu0 %v2063
    %2091 = vmatprep.subr.mxu0 0.0
    %2092 = vmatpush1.msra.mxu0 %v2064
    %2093 = vmatprep.subr.mxu0 0.0
    %2094 = vmatpush1.msra.mxu0 %v2065
    %2095 = vmatprep.subr.mxu0 0.0
    %2096 = vmatpush1.msra.mxu0 %v2066
    %2097 = vmatprep.subr.mxu0 0.0
    %2098 = vmatpush1.msra.mxu0 %v2067
    %2099 = vmatprep.subr.mxu0 0.0
    %2100 = vmatpush1.msra.mxu0 %v2068
    %2101 = vmatprep.subr.mxu0 0.0
    %2102 = vmatpush1.msra.mxu0 %v2069
    %2103 = vmatprep.subr.mxu0 0.0
    %2104 = vmatpush1.msra.mxu0 %v2070
    %2105 = vmatprep.subr.mxu0 0.0
    %2106 = vmatpush1.msra.mxu0 %v2071
    %2107 = vmatprep.subr.mxu0 0.0
    %2108 = vmatpush1.msra.mxu0 %v2072
    %2109 = vmatprep.subr.mxu0 0.0
    %2110 = vmatpush1.msra.mxu0 %v2073
    %2111 = vmatprep.subr.mxu0 0.0
    %2112 = vmatpush1.msra.mxu0 %v2074
    %2113 = vmatprep.subr.mxu0 0.0
    %2114 = vmatpush1.msra.mxu0 %v2075
    %2115 = vmatprep.subr.mxu0 0.0
    %2116 = vmatpush1.msra.mxu0 0.0
    %2117 = vmatprep.subr.mxu0 0.0
    %2118 = vmatpush1.msra.mxu0 0.0
    %2119 = vmatprep.subr.mxu0 0.0
    %2120 = vmatpush1.msra.mxu0 0.0
    %2121 = vmatprep.subr.mxu0 0.0
    %2122 = vmatpush1.msra.mxu0 0.0
    %2123 = vmatprep.subr.mxu0 0.0
    %2124 = vmatpush1.msra.mxu0 0.0
    %2125 = vmatprep.subr.mxu0 0.0
    %2126 = vmatpush1.msra.mxu0 0.0
    %2127 = vmatprep.subr.mxu0 0.0
    %2128 = vmatpush1.msra.mxu0 0.0
    %2129 = vmatprep.subr.mxu0 0.0
    %2130 = vmatpush1.msra.mxu0 0.0
    %2131 = vmatprep.subr.mxu0 0.0
    %2132 = vmatpush1.msra.mxu0 0.0
    %2133 = vmatprep.subr.mxu0 0.0
    %2134 = vmatpush1.msra.mxu0 0.0
    %2135 = vmatprep.subr.mxu0 0.0
    %2136 = vmatpush1.msra.mxu0 0.0
    %2137 = vmatprep.subr.mxu0 0.0
    %2138 = vmatpush1.msra.mxu0 0.0
    %2139 = vmatprep.subr.mxu0 0.0
    %2140 = vmatpush1.msra.mxu0 0.0
    %2141 = vmatprep.subr.mxu0 0.0
    %2142 = vmatpush1.msra.mxu0 0.0
    %2143 = vmatprep.subr.mxu0 0.0
    %2144 = vmatpush1.msra.mxu0 0.0
    %2145 = vmatprep.subr.mxu0 0.0
    %2146 = vmatpush1.msra.mxu0 0.0
    %2147 = vmatprep.mubr.f32.mxu0 0.0
    %2148 = vmatmul.mubr.f32.gmra.mrb[0].mxu0 %v2056
    %v2149 = vpop.f32.mrb[0].mxu0
    %v2150 = vadd.f32 %v2081, %v2149
    %v2151 = vpop.f32.mrb[0].mxu0
    %2152 = vmatprep.mubr.f32.mxu0 0.0
    %2153 = vmatmul.mubr.f32.gmra.mrb[0].mxu0 %v2057
    %v2154 = vpop.f32.mrb[0].mxu0
    %v2155 = vadd.f32 %v2081, %v2154
    %v2156 = vpop.f32.mrb[0].mxu0
    %2157 = vmatprep.mubr.f32.mxu0 0.0
    %2158 = vmatmul.mubr.f32.gmra.mrb[0].mxu0 %v2058
    %v2159 = vpop.f32.mrb[0].mxu0
    %v2160 = vadd.f32 %v2081, %v2159
    %v2161 = vpop.f32.mrb[0].mxu0
    %2162 = vmatprep.mubr.f32.mxu0 0.0
    %2163 = vmatmul.mubr.f32.gmra.mrb[0].mxu0 %v2059
    %v2164 = vpop.f32.mrb[0].mxu0
    %v2165 = vadd.f32 %v2081, %v2164
    %v2166 = vpop.f32.mrb[0].mxu0
    %2167 = vdwg.mxu0
    %v2168 = vadd.f32 %v122, 1.0
    %v2169 = vadd.f32 %v123, 1.0
    %v2170 = vlaneseq
    %v2171 = vshrl.u32 %v2170, 7
    %v2172 = vsub.s32 2, %v2171
    %v2173 = vrot.slane %v2168, %v2172
    %v2174 = vlaneseq
    %v2175 = vshrl.u32 %v2174, 7
    %v2176 = vsub.s32 2, %v2175
    %v2177 = vrot.slane %v2169, %v2176
    %v2178 = vmul.f32 %v2150, %v2173
    %v2179 = vmul.f32 %v2155, %v2173
    %v2180 = vmul.f32 %v2160, %v2177
    %v2181 = vmul.f32 %v2165, %v2177
    %v2182 = vlaneseq
    %v2183 = vshrl.u32 %v2182, 7
    %v2184 = vsub.s32 1, %v2183
    %v2185 = vrot.slane %v122, %v2184
    %v2186 = vlaneseq
    %v2187 = vshrl.u32 %v2186, 7
    %v2188 = vsub.s32 1, %v2187
    %v2189 = vrot.slane %v123, %v2188
    %v2190 = vadd.f32 %v2178, %v2185
    %v2191 = vadd.f32 %v2179, %v2185
    %v2192 = vadd.f32 %v2180, %v2189
    %v2193 = vadd.f32 %v2181, %v2189
    %v2194 = vlaneseq
    %v2195 = vshrl.u32 %v2194, 7
    %v2196 = vsub.s32 0, %v2195
    %v2197 = vrot.slane %v122, %v2196
    %v2198 = vlaneseq
    %v2199 = vshrl.u32 %v2198, 7
    %v2200 = vsub.s32 0, %v2199
    %v2201 = vrot.slane %v123, %v2200
    %v2202 = vmul.f32 %v2197, %v2190
    %v2203 = vmul.f32 %v2197, %v2191
    %v2204 = vmul.f32 %v2201, %v2192
    %v2205 = vmul.f32 %v2201, %v2193
    %v2206 = vadd.f32 %v2150, %v2202
    %v2207 = vadd.f32 %v2155, %v2203
    %v2208 = vadd.f32 %v2160, %v2204
    %v2209 = vadd.f32 %v2165, %v2205
    %v2210 = vadd.f32 %v118, %v2206
    %v2211 = vadd.f32 %v119, %v2207
    %v2212 = vadd.f32 %v120, %v2208
    %v2213 = vadd.f32 %v121, %v2209
    %2214 = vadd.xlane.f32.xlu0 %v2210
    %v2215 = vpop.xlane.xlu0 %2214
    %2216 = vadd.xlane.f32.xlu0 %v2211
    %v2217 = vpop.xlane.xlu0 %2216
    %2218 = vadd.xlane.f32.xlu0 %v2212
    %v2219 = vpop.xlane.xlu0 %2218
    %2220 = vadd.xlane.f32.xlu0 %v2213
    %v2221 = vpop.xlane.xlu0 %2220
    %v2222 = vmul.f32 %v2215, %v132
    %v2223 = vmul.f32 %v2217, %v132
    %v2224 = vmul.f32 %v2219, %v132
    %v2225 = vmul.f32 %v2221, %v132
    %v2226 = vsub.f32 %v2210, %v2222
    %v2227 = vsub.f32 %v2211, %v2223
    %v2228 = vsub.f32 %v2212, %v2224
    %v2229 = vsub.f32 %v2213, %v2225
    %v2230 = vmul.f32 %v2226, %v2226
    %v2231 = vmul.f32 %v2227, %v2227
    %v2232 = vmul.f32 %v2228, %v2228
    %v2233 = vmul.f32 %v2229, %v2229
    %2234 = vadd.xlane.f32.xlu0 %v2230
    %v2235 = vpop.xlane.xlu0 %2234
    %2236 = vadd.xlane.f32.xlu0 %v2231
    %v2237 = vpop.xlane.xlu0 %2236
    %2238 = vadd.xlane.f32.xlu0 %v2232
    %v2239 = vpop.xlane.xlu0 %2238
    %2240 = vadd.xlane.f32.xlu0 %v2233
    %v2241 = vpop.xlane.xlu0 %2240
    %v2242 = vmul.f32 %v2235, %v132
    %v2243 = vmul.f32 %v2237, %v132
    %v2244 = vmul.f32 %v2239, %v132
    %v2245 = vmul.f32 %v2241, %v132
    %v2246 = vadd.f32 %v2242, 1e-06
    %v2247 = vadd.f32 %v2243, 1e-06
    %v2248 = vadd.f32 %v2244, 1e-06
    %v2249 = vadd.f32 %v2245, 1e-06
    %v2250 = vrsqrt.pop %v2246
    %v2251 = vrsqrt.pop %v2247
    %v2252 = vrsqrt.pop %v2248
    %v2253 = vrsqrt.pop %v2249
    %v2254 = vmul.f32 %v2226, %v2250
    %v2255 = vmul.f32 %v2227, %v2251
    %v2256 = vmul.f32 %v2228, %v2252
    %v2257 = vmul.f32 %v2229, %v2253
    %v2258 = vld [vmem:[#allocation10] sm:$0xff]
    %v2259 = vld [vmem:[#allocation10 + $0x8] sm:$0xff]
    %v2260 = vld [vmem:[#allocation10 + $0x10] sm:$0xff]
    %v2261 = vld [vmem:[#allocation10 + $0x18] sm:$0xff]
    %v2262 = vld [vmem:[#allocation10 + $0x20] sm:$0xff]
    %v2263 = vld [vmem:[#allocation10 + $0x28] sm:$0xff]
    %v2264 = vld [vmem:[#allocation10 + $0x30] sm:$0xff]
    %v2265 = vld [vmem:[#allocation10 + $0x38] sm:$0xff]
    %v2266 = vld [vmem:[#allocation10 + $0x40] sm:$0xff]
    %v2267 = vld [vmem:[#allocation10 + $0x48] sm:$0xff]
    %v2268 = vld [vmem:[#allocation10 + $0x50] sm:$0xff]
    %v2269 = vld [vmem:[#allocation10 + $0x58] sm:$0xff]
    %v2270 = vld [vmem:[#allocation10 + $0x60] sm:$0xff]
    %v2271 = vld [vmem:[#allocation10 + $0x68] sm:$0xff]
    %v2272 = vld [vmem:[#allocation10 + $0x70] sm:$0xff]
    %v2273 = vld [vmem:[#allocation10 + $0x78] sm:$0xff]
    %v2274 = vld [vmem:[#allocation10 + $0x80] sm:$0xff]
    %v2275 = vld [vmem:[#allocation10 + $0x88] sm:$0xff]
    %v2276 = vld [vmem:[#allocation10 + $0x90] sm:$0xff]
    %v2277 = vld [vmem:[#allocation10 + $0x98] sm:$0xff]
    %v2278 = vld [vmem:[#allocation10 + $0xa0] sm:$0xff]
    %v2279 = vld [vmem:[#allocation10 + $0xa8] sm:$0xff]
    %v2280 = vld [vmem:[#allocation10 + $0xb0] sm:$0xff]
    %v2281 = vld [vmem:[#allocation10 + $0xb8] sm:$0xff]
    %v2282 = vld [vmem:[#allocation10 + $0xc0] sm:$0xff]
    %v2283 = vld [vmem:[#allocation10 + $0xc8] sm:$0xff]
    %v2284 = vld [vmem:[#allocation10 + $0xd0] sm:$0xff]
    %v2285 = vld [vmem:[#allocation10 + $0xd8] sm:$0xff]
    %v2286 = vld [vmem:[#allocation10 + $0xe0] sm:$0xff]
    %v2287 = vld [vmem:[#allocation10 + $0xe8] sm:$0xff]
    %v2288 = vld [vmem:[#allocation10 + $0xf0] sm:$0xff]
    %v2289 = vld [vmem:[#allocation10 + $0xf8] sm:$0xff]
    %v2290 = vld [vmem:[%s7] sm:$0x3]
    %v2292 = vlaneseq
    %v2293 = vshrl.u32 %v2292, 7
    %v2294 = vsub.s32 0, %v2293
    %v2295 = vrot.slane %v2290, %v2294
    %v2296 = vlaneseq
    %v2297 = vshrl.u32 %v2296, 7
    %v2298 = vsub.s32 1, %v2297
    %v2299 = vrot.slane %v2290, %v2298
    %2302 = vmatprep.subr.mxu0 %v2259
    %2303 = vmatpush1.msra.mxu0 %v2258
    %2304 = vmatprep.subr.mxu0 %v2261
    %2305 = vmatpush1.msra.mxu0 %v2260
    %2306 = vmatprep.subr.mxu0 %v2263
    %2307 = vmatpush1.msra.mxu0 %v2262
    %2308 = vmatprep.subr.mxu0 %v2265
    %2309 = vmatpush1.msra.mxu0 %v2264
    %2310 = vmatprep.subr.mxu0 %v2267
    %2311 = vmatpush1.msra.mxu0 %v2266
    %2312 = vmatprep.subr.mxu0 %v2269
    %2313 = vmatpush1.msra.mxu0 %v2268
    %2314 = vmatprep.subr.mxu0 %v2271
    %2315 = vmatpush1.msra.mxu0 %v2270
    %2316 = vmatprep.subr.mxu0 %v2273
    %2317 = vmatpush1.msra.mxu0 %v2272
    %2318 = vmatprep.subr.mxu0 %v2275
    %2319 = vmatpush1.msra.mxu0 %v2274
    %2320 = vmatprep.subr.mxu0 %v2277
    %2321 = vmatpush1.msra.mxu0 %v2276
    %2322 = vmatprep.subr.mxu0 %v2279
    %2323 = vmatpush1.msra.mxu0 %v2278
    %2324 = vmatprep.subr.mxu0 %v2281
    %2325 = vmatpush1.msra.mxu0 %v2280
    %2326 = vmatprep.subr.mxu0 %v2283
    %2327 = vmatpush1.msra.mxu0 %v2282
    %2328 = vmatprep.subr.mxu0 %v2285
    %2329 = vmatpush1.msra.mxu0 %v2284
    %2330 = vmatprep.subr.mxu0 %v2287
    %2331 = vmatpush1.msra.mxu0 %v2286
    %2332 = vmatprep.subr.mxu0 %v2289
    %2333 = vmatpush1.msra.mxu0 %v2288
    %2334 = vmatprep.subr.mxu0 0.0
    %2335 = vmatpush1.msra.mxu0 0.0
    %2336 = vmatprep.subr.mxu0 0.0
    %2337 = vmatpush1.msra.mxu0 0.0
    %2338 = vmatprep.subr.mxu0 0.0
    %2339 = vmatpush1.msra.mxu0 0.0
    %2340 = vmatprep.subr.mxu0 0.0
    %2341 = vmatpush1.msra.mxu0 0.0
    %2342 = vmatprep.subr.mxu0 0.0
    %2343 = vmatpush1.msra.mxu0 0.0
    %2344 = vmatprep.subr.mxu0 0.0
    %2345 = vmatpush1.msra.mxu0 0.0
    %2346 = vmatprep.subr.mxu0 0.0
    %2347 = vmatpush1.msra.mxu0 0.0
    %2348 = vmatprep.subr.mxu0 0.0
    %2349 = vmatpush1.msra.mxu0 0.0
    %2350 = vmatprep.subr.mxu0 0.0
    %2351 = vmatpush1.msra.mxu0 0.0
    %2352 = vmatprep.subr.mxu0 0.0
    %2353 = vmatpush1.msra.mxu0 0.0
    %2354 = vmatprep.subr.mxu0 0.0
    %2355 = vmatpush1.msra.mxu0 0.0
    %2356 = vmatprep.subr.mxu0 0.0
    %2357 = vmatpush1.msra.mxu0 0.0
    %2358 = vmatprep.subr.mxu0 0.0
    %2359 = vmatpush1.msra.mxu0 0.0
    %2360 = vmatprep.subr.mxu0 0.0
    %2361 = vmatpush1.msra.mxu0 0.0
    %2362 = vmatprep.subr.mxu0 0.0
    %2363 = vmatpush1.msra.mxu0 0.0
    %2364 = vmatprep.subr.mxu0 0.0
    %2365 = vmatpush1.msra.mxu0 0.0
    %2366 = vmatprep.mubr.f32.mxu0 0.0
    %2367 = vmatmul.mubr.f32.gmra.mrb[0].mxu0 %v2254
    %v2368 = vpop.f32.mrb[0].mxu0
    %v2369 = vadd.f32 %v2295, %v2368
    %v2370 = vpop.f32.mrb[0].mxu0
    %v2371 = vadd.f32 %v2299, %v2370
    %2372 = vmatprep.mubr.f32.mxu0 0.0
    %2373 = vmatmul.mubr.f32.gmra.mrb[0].mxu0 %v2255
    %v2374 = vpop.f32.mrb[0].mxu0
    %v2375 = vadd.f32 %v2295, %v2374
    %v2376 = vpop.f32.mrb[0].mxu0
    %v2377 = vadd.f32 %v2299, %v2376
    %2378 = vmatprep.mubr.f32.mxu0 0.0
    %2379 = vmatmul.mubr.f32.gmra.mrb[0].mxu0 %v2256
    %v2380 = vpop.f32.mrb[0].mxu0
    %v2381 = vadd.f32 %v2295, %v2380
    %v2382 = vpop.f32.mrb[0].mxu0
    %v2383 = vadd.f32 %v2299, %v2382
    %2384 = vmatprep.mubr.f32.mxu0 0.0
    %2385 = vmatmul.mubr.f32.gmra.mrb[0].mxu0 %v2257
    %v2386 = vpop.f32.mrb[0].mxu0
    %v2387 = vadd.f32 %v2295, %v2386
    %v2388 = vpop.f32.mrb[0].mxu0
    %v2389 = vadd.f32 %v2299, %v2388
    %2390 = vdwg.mxu0
    %v2391 = vmul.f32 %v2369, 0.5
    %v2392 = vmul.f32 %v2371, 0.5
    %v2393 = vmul.f32 %v2375, 0.5
    %v2394 = vmul.f32 %v2377, 0.5
    %v2395 = vmul.f32 %v2381, 0.5
    %v2396 = vmul.f32 %v2383, 0.5
    %v2397 = vmul.f32 %v2387, 0.5
    %v2398 = vmul.f32 %v2389, 0.5
    %v2399 = vmul.f32 %v2369, 0.70710677
    %v2400 = vmul.f32 %v2371, 0.70710677
    %v2401 = vmul.f32 %v2375, 0.70710677
    %v2402 = vmul.f32 %v2377, 0.70710677
    %v2403 = vmul.f32 %v2381, 0.70710677
    %v2404 = vmul.f32 %v2383, 0.70710677
    %v2405 = vmul.f32 %v2387, 0.70710677
    %v2406 = vmul.f32 %v2389, 0.70710677
    %vm2407 = vcmp.ge.f32.partialorder %v2399, 0.0
    %vm2408 = vcmp.ge.f32.partialorder %v2400, 0.0
    %vm2409 = vcmp.ge.f32.partialorder %v2401, 0.0
    %vm2410 = vcmp.ge.f32.partialorder %v2402, 0.0
    %vm2411 = vcmp.ge.f32.partialorder %v2403, 0.0
    %vm2412 = vcmp.ge.f32.partialorder %v2404, 0.0
    %vm2413 = vcmp.ge.f32.partialorder %v2405, 0.0
    %vm2414 = vcmp.ge.f32.partialorder %v2406, 0.0
    %v2415 = vsel %vm2407, 1.0, -1.0
    %v2416 = vsel %vm2408, 1.0, -1.0
    %v2417 = vsel %vm2409, 1.0, -1.0
    %v2418 = vsel %vm2410, 1.0, -1.0
    %v2419 = vsel %vm2411, 1.0, -1.0
    %v2420 = vsel %vm2412, 1.0, -1.0
    %v2421 = vsel %vm2413, 1.0, -1.0
    %v2422 = vsel %vm2414, 1.0, -1.0
    %v2423 = vand.u32 2147483647, %v2399
    %v2424 = vand.u32 2147483647, %v2400
    %v2425 = vand.u32 2147483647, %v2401
    %v2426 = vand.u32 2147483647, %v2402
    %v2427 = vand.u32 2147483647, %v2403
    %v2428 = vand.u32 2147483647, %v2404
    %v2429 = vand.u32 2147483647, %v2405
    %v2430 = vand.u32 2147483647, %v2406
    %v2431 = vmul.f32 %v2423, 0.3275911
    %v2432 = vmul.f32 %v2424, 0.3275911
    %v2433 = vmul.f32 %v2425, 0.3275911
    %v2434 = vmul.f32 %v2426, 0.3275911
    %v2435 = vmul.f32 %v2427, 0.3275911
    %v2436 = vmul.f32 %v2428, 0.3275911
    %v2437 = vmul.f32 %v2429, 0.3275911
    %v2438 = vmul.f32 %v2430, 0.3275911
    %v2439 = vadd.f32 %v2431, 1.0
    %v2440 = vadd.f32 %v2432, 1.0
    %v2441 = vadd.f32 %v2433, 1.0
    %v2442 = vadd.f32 %v2434, 1.0
    %v2443 = vadd.f32 %v2435, 1.0
    %v2444 = vadd.f32 %v2436, 1.0
    %v2445 = vadd.f32 %v2437, 1.0
    %v2446 = vadd.f32 %v2438, 1.0
    %v2447 = vrcp.pop %v2439
    %v2448 = vrcp.pop %v2440
    %v2449 = vrcp.pop %v2441
    %v2450 = vrcp.pop %v2442
    %v2451 = vrcp.pop %v2443
    %v2452 = vrcp.pop %v2444
    %v2453 = vrcp.pop %v2445
    %v2454 = vrcp.pop %v2446
    %v2455 = vmul.f32 %v2447, 1.0614054
    %v2456 = vmul.f32 %v2448, 1.0614054
    %v2457 = vmul.f32 %v2449, 1.0614054
    %v2458 = vmul.f32 %v2450, 1.0614054
    %v2459 = vmul.f32 %v2451, 1.0614054
    %v2460 = vmul.f32 %v2452, 1.0614054
    %v2461 = vmul.f32 %v2453, 1.0614054
    %v2462 = vmul.f32 %v2454, 1.0614054
    %v2463 = vadd.f32 %v2455, -1.4531521
    %v2464 = vadd.f32 %v2456, -1.4531521
    %v2465 = vadd.f32 %v2457, -1.4531521
    %v2466 = vadd.f32 %v2458, -1.4531521
    %v2467 = vadd.f32 %v2459, -1.4531521
    %v2468 = vadd.f32 %v2460, -1.4531521
    %v2469 = vadd.f32 %v2461, -1.4531521
    %v2470 = vadd.f32 %v2462, -1.4531521
    %v2471 = vmul.f32 %v2447, %v2463
    %v2472 = vmul.f32 %v2448, %v2464
    %v2473 = vmul.f32 %v2449, %v2465
    %v2474 = vmul.f32 %v2450, %v2466
    %v2475 = vmul.f32 %v2451, %v2467
    %v2476 = vmul.f32 %v2452, %v2468
    %v2477 = vmul.f32 %v2453, %v2469
    %v2478 = vmul.f32 %v2454, %v2470
    %v2479 = vadd.f32 %v2471, 1.4214138
    %v2480 = vadd.f32 %v2472, 1.4214138
    %v2481 = vadd.f32 %v2473, 1.4214138
    %v2482 = vadd.f32 %v2474, 1.4214138
    %v2483 = vadd.f32 %v2475, 1.4214138
    %v2484 = vadd.f32 %v2476, 1.4214138
    %v2485 = vadd.f32 %v2477, 1.4214138
    %v2486 = vadd.f32 %v2478, 1.4214138
    %v2487 = vmul.f32 %v2447, %v2479
    %v2488 = vmul.f32 %v2448, %v2480
    %v2489 = vmul.f32 %v2449, %v2481
    %v2490 = vmul.f32 %v2450, %v2482
    %v2491 = vmul.f32 %v2451, %v2483
    %v2492 = vmul.f32 %v2452, %v2484
    %v2493 = vmul.f32 %v2453, %v2485
    %v2494 = vmul.f32 %v2454, %v2486
    %v2495 = vadd.f32 %v2487, -0.28449672
    %v2496 = vadd.f32 %v2488, -0.28449672
    %v2497 = vadd.f32 %v2489, -0.28449672
    %v2498 = vadd.f32 %v2490, -0.28449672
    %v2499 = vadd.f32 %v2491, -0.28449672
    %v2500 = vadd.f32 %v2492, -0.28449672
    %v2501 = vadd.f32 %v2493, -0.28449672
    %v2502 = vadd.f32 %v2494, -0.28449672
    %v2503 = vmul.f32 %v2447, %v2495
    %v2504 = vmul.f32 %v2448, %v2496
    %v2505 = vmul.f32 %v2449, %v2497
    %v2506 = vmul.f32 %v2450, %v2498
    %v2507 = vmul.f32 %v2451, %v2499
    %v2508 = vmul.f32 %v2452, %v2500
    %v2509 = vmul.f32 %v2453, %v2501
    %v2510 = vmul.f32 %v2454, %v2502
    %v2511 = vadd.f32 %v2503, 0.2548296
    %v2512 = vadd.f32 %v2504, 0.2548296
    %v2513 = vadd.f32 %v2505, 0.2548296
    %v2514 = vadd.f32 %v2506, 0.2548296
    %v2515 = vadd.f32 %v2507, 0.2548296
    %v2516 = vadd.f32 %v2508, 0.2548296
    %v2517 = vadd.f32 %v2509, 0.2548296
    %v2518 = vadd.f32 %v2510, 0.2548296
    %v2519 = vmul.f32 %v2447, %v2511
    %v2520 = vmul.f32 %v2448, %v2512
    %v2521 = vmul.f32 %v2449, %v2513
    %v2522 = vmul.f32 %v2450, %v2514
    %v2523 = vmul.f32 %v2451, %v2515
    %v2524 = vmul.f32 %v2452, %v2516
    %v2525 = vmul.f32 %v2453, %v2517
    %v2526 = vmul.f32 %v2454, %v2518
    %v2527 = vsub.f32 0.0, %v2423
    %v2528 = vsub.f32 0.0, %v2424
    %v2529 = vsub.f32 0.0, %v2425
    %v2530 = vsub.f32 0.0, %v2426
    %v2531 = vsub.f32 0.0, %v2427
    %v2532 = vsub.f32 0.0, %v2428
    %v2533 = vsub.f32 0.0, %v2429
    %v2534 = vsub.f32 0.0, %v2430
    %v2535 = vmul.f32 %v2527, %v2423
    %v2536 = vmul.f32 %v2528, %v2424
    %v2537 = vmul.f32 %v2529, %v2425
    %v2538 = vmul.f32 %v2530, %v2426
    %v2539 = vmul.f32 %v2531, %v2427
    %v2540 = vmul.f32 %v2532, %v2428
    %v2541 = vmul.f32 %v2533, %v2429
    %v2542 = vmul.f32 %v2534, %v2430
    %v2543 = vmul.f32 %v2535, 1.442695
    %v2544 = vpow.pop %v2543
    %v2545 = vmul.f32 %v2536, 1.442695
    %v2546 = vpow.pop %v2545
    %v2547 = vmul.f32 %v2537, 1.442695
    %v2548 = vpow.pop %v2547
    %v2549 = vmul.f32 %v2538, 1.442695
    %v2550 = vpow.pop %v2549
    %v2551 = vmul.f32 %v2539, 1.442695
    %v2552 = vpow.pop %v2551
    %v2553 = vmul.f32 %v2540, 1.442695
    %v2554 = vpow.pop %v2553
    %v2555 = vmul.f32 %v2541, 1.442695
    %v2556 = vpow.pop %v2555
    %v2557 = vmul.f32 %v2542, 1.442695
    %v2558 = vpow.pop %v2557
    %v2559 = vmul.f32 %v2519, %v2544
    %v2560 = vmul.f32 %v2520, %v2546
    %v2561 = vmul.f32 %v2521, %v2548
    %v2562 = vmul.f32 %v2522, %v2550
    %v2563 = vmul.f32 %v2523, %v2552
    %v2564 = vmul.f32 %v2524, %v2554
    %v2565 = vmul.f32 %v2525, %v2556
    %v2566 = vmul.f32 %v2526, %v2558
    %v2567 = vsub.f32 1.0, %v2559
    %v2568 = vsub.f32 1.0, %v2560
    %v2569 = vsub.f32 1.0, %v2561
    %v2570 = vsub.f32 1.0, %v2562
    %v2571 = vsub.f32 1.0, %v2563
    %v2572 = vsub.f32 1.0, %v2564
    %v2573 = vsub.f32 1.0, %v2565
    %v2574 = vsub.f32 1.0, %v2566
    %v2575 = vmul.f32 %v2415, %v2567
    %v2576 = vmul.f32 %v2416, %v2568
    %v2577 = vmul.f32 %v2417, %v2569
    %v2578 = vmul.f32 %v2418, %v2570
    %v2579 = vmul.f32 %v2419, %v2571
    %v2580 = vmul.f32 %v2420, %v2572
    %v2581 = vmul.f32 %v2421, %v2573
    %v2582 = vmul.f32 %v2422, %v2574
    %v2583 = vadd.f32 %v2575, 1.0
    %v2584 = vadd.f32 %v2576, 1.0
    %v2585 = vadd.f32 %v2577, 1.0
    %v2586 = vadd.f32 %v2578, 1.0
    %v2587 = vadd.f32 %v2579, 1.0
    %v2588 = vadd.f32 %v2580, 1.0
    %v2589 = vadd.f32 %v2581, 1.0
    %v2590 = vadd.f32 %v2582, 1.0
    %v2591 = vmul.f32 %v2391, %v2583
    %v2592 = vmul.f32 %v2392, %v2584
    %v2593 = vmul.f32 %v2393, %v2585
    %v2594 = vmul.f32 %v2394, %v2586
    %v2595 = vmul.f32 %v2395, %v2587
    %v2596 = vmul.f32 %v2396, %v2588
    %v2597 = vmul.f32 %v2397, %v2589
    %v2598 = vmul.f32 %v2398, %v2590
    %v2599 = vld [vmem:[#allocation11] sm:$0xff]
    %v2600 = vld [vmem:[#allocation11 + $0x8] sm:$0xff]
    %v2601 = vld [vmem:[#allocation11 + $0x10] sm:$0xff]
    %v2602 = vld [vmem:[#allocation11 + $0x18] sm:$0xff]
    %v2603 = vld [vmem:[#allocation11 + $0x20] sm:$0xff]
    %v2604 = vld [vmem:[#allocation11 + $0x28] sm:$0xff]
    %v2605 = vld [vmem:[#allocation11 + $0x30] sm:$0xff]
    %v2606 = vld [vmem:[#allocation11 + $0x38] sm:$0xff]
    %v2607 = vld [vmem:[#allocation11 + $0x40] sm:$0xff]
    %v2608 = vld [vmem:[#allocation11 + $0x48] sm:$0xff]
    %v2609 = vld [vmem:[#allocation11 + $0x50] sm:$0xff]
    %v2610 = vld [vmem:[#allocation11 + $0x58] sm:$0xff]
    %v2611 = vld [vmem:[#allocation11 + $0x60] sm:$0xff]
    %v2612 = vld [vmem:[#allocation11 + $0x68] sm:$0xff]
    %v2613 = vld [vmem:[#allocation11 + $0x70] sm:$0xff]
    %v2614 = vld [vmem:[#allocation11 + $0x78] sm:$0xff]
    %v2615 = vld [vmem:[#allocation11 + $0x80] sm:$0xff]
    %v2616 = vld [vmem:[#allocation11 + $0x88] sm:$0xff]
    %v2617 = vld [vmem:[#allocation11 + $0x90] sm:$0xff]
    %v2618 = vld [vmem:[#allocation11 + $0x98] sm:$0xff]
    %v2619 = vld [vmem:[#allocation11 + $0xa0] sm:$0xff]
    %v2620 = vld [vmem:[#allocation11 + $0xa8] sm:$0xff]
    %v2621 = vld [vmem:[#allocation11 + $0xb0] sm:$0xff]
    %v2622 = vld [vmem:[#allocation11 + $0xb8] sm:$0xff]
    %v2623 = vld [vmem:[#allocation11 + $0xc0] sm:$0xff]
    %v2624 = vld [vmem:[#allocation11 + $0xc8] sm:$0xff]
    %v2625 = vld [vmem:[#allocation11 + $0xd0] sm:$0xff]
    %v2626 = vld [vmem:[#allocation11 + $0xd8] sm:$0xff]
    %v2627 = vld [vmem:[#allocation11 + $0xe0] sm:$0xff]
    %v2628 = vld [vmem:[#allocation11 + $0xe8] sm:$0xff]
    %v2629 = vld [vmem:[#allocation11 + $0xf0] sm:$0xff]
    %v2630 = vld [vmem:[#allocation11 + $0xf8] sm:$0xff]
    %v2631 = vld [vmem:[%s9] sm:$0x1]
    %v2633 = vlaneseq
    %v2634 = vshrl.u32 %v2633, 7
    %v2635 = vsub.s32 0, %v2634
    %v2636 = vrot.slane %v2631, %v2635
    %2638 = vmatprep.subr.mxu0 0.0
    %2639 = vmatpush1.msra.mxu0 %v2599
    %2640 = vmatprep.subr.mxu0 0.0
    %2641 = vmatpush1.msra.mxu0 %v2600
    %2642 = vmatprep.subr.mxu0 0.0
    %2643 = vmatpush1.msra.mxu0 %v2601
    %2644 = vmatprep.subr.mxu0 0.0
    %2645 = vmatpush1.msra.mxu0 %v2602
    %2646 = vmatprep.subr.mxu0 0.0
    %2647 = vmatpush1.msra.mxu0 %v2603
    %2648 = vmatprep.subr.mxu0 0.0
    %2649 = vmatpush1.msra.mxu0 %v2604
    %2650 = vmatprep.subr.mxu0 0.0
    %2651 = vmatpush1.msra.mxu0 %v2605
    %2652 = vmatprep.subr.mxu0 0.0
    %2653 = vmatpush1.msra.mxu0 %v2606
    %2654 = vmatprep.subr.mxu0 0.0
    %2655 = vmatpush1.msra.mxu0 %v2607
    %2656 = vmatprep.subr.mxu0 0.0
    %2657 = vmatpush1.msra.mxu0 %v2608
    %2658 = vmatprep.subr.mxu0 0.0
    %2659 = vmatpush1.msra.mxu0 %v2609
    %2660 = vmatprep.subr.mxu0 0.0
    %2661 = vmatpush1.msra.mxu0 %v2610
    %2662 = vmatprep.subr.mxu0 0.0
    %2663 = vmatpush1.msra.mxu0 %v2611
    %2664 = vmatprep.subr.mxu0 0.0
    %2665 = vmatpush1.msra.mxu0 %v2612
    %2666 = vmatprep.subr.mxu0 0.0
    %2667 = vmatpush1.msra.mxu0 %v2613
    %2668 = vmatprep.subr.mxu0 0.0
    %2669 = vmatpush1.msra.mxu0 %v2614
    %2670 = vmatprep.subr.mxu0 0.0
    %2671 = vmatpush1.msra.mxu0 %v2615
    %2672 = vmatprep.subr.mxu0 0.0
    %2673 = vmatpush1.msra.mxu0 %v2616
    %2674 = vmatprep.subr.mxu0 0.0
    %2675 = vmatpush1.msra.mxu0 %v2617
    %2676 = vmatprep.subr.mxu0 0.0
    %2677 = vmatpush1.msra.mxu0 %v2618
    %2678 = vmatprep.subr.mxu0 0.0
    %2679 = vmatpush1.msra.mxu0 %v2619
    %2680 = vmatprep.subr.mxu0 0.0
    %2681 = vmatpush1.msra.mxu0 %v2620
    %2682 = vmatprep.subr.mxu0 0.0
    %2683 = vmatpush1.msra.mxu0 %v2621
    %2684 = vmatprep.subr.mxu0 0.0
    %2685 = vmatpush1.msra.mxu0 %v2622
    %2686 = vmatprep.subr.mxu0 0.0
    %2687 = vmatpush1.msra.mxu0 %v2623
    %2688 = vmatprep.subr.mxu0 0.0
    %2689 = vmatpush1.msra.mxu0 %v2624
    %2690 = vmatprep.subr.mxu0 0.0
    %2691 = vmatpush1.msra.mxu0 %v2625
    %2692 = vmatprep.subr.mxu0 0.0
    %2693 = vmatpush1.msra.mxu0 %v2626
    %2694 = vmatprep.subr.mxu0 0.0
    %2695 = vmatpush1.msra.mxu0 %v2627
    %2696 = vmatprep.subr.mxu0 0.0
    %2697 = vmatpush1.msra.mxu0 %v2628
    %2698 = vmatprep.subr.mxu0 0.0
    %2699 = vmatpush1.msra.mxu0 %v2629
    %2700 = vmatprep.subr.mxu0 0.0
    %2701 = vmatpush1.msra.mxu0 %v2630
    %2702 = vmatprep.mubr.f32.mxu0 %v2592
    %2703 = vmatmul.mubr.f32.gmra.mrb[0].mxu0 %v2591
    %v2704 = vpop.f32.mrb[0].mxu0
    %v2705 = vadd.f32 %v2636, %v2704
    %v2706 = vpop.f32.mrb[0].mxu0
    %2707 = vmatprep.mubr.f32.mxu0 %v2594
    %2708 = vmatmul.mubr.f32.gmra.mrb[0].mxu0 %v2593
    %v2709 = vpop.f32.mrb[0].mxu0
    %v2710 = vadd.f32 %v2636, %v2709
    %v2711 = vpop.f32.mrb[0].mxu0
    %2712 = vmatprep.mubr.f32.mxu0 %v2596
    %2713 = vmatmul.mubr.f32.gmra.mrb[0].mxu0 %v2595
    %v2714 = vpop.f32.mrb[0].mxu0
    %v2715 = vadd.f32 %v2636, %v2714
    %v2716 = vpop.f32.mrb[0].mxu0
    %2717 = vmatprep.mubr.f32.mxu0 %v2598
    %2718 = vmatmul.mubr.f32.gmra.mrb[0].mxu0 %v2597
    %v2719 = vpop.f32.mrb[0].mxu0
    %v2720 = vadd.f32 %v2636, %v2719
    %v2721 = vpop.f32.mrb[0].mxu0
    %2722 = vdwg.mxu0
    %v2723 = vlaneseq
    %v2724 = vshrl.u32 %v2723, 7
    %v2725 = vsub.s32 5, %v2724
    %v2726 = vrot.slane %v2168, %v2725
    %v2727 = vlaneseq
    %v2728 = vshrl.u32 %v2727, 7
    %v2729 = vsub.s32 5, %v2728
    %v2730 = vrot.slane %v2169, %v2729
    %v2731 = vmul.f32 %v2705, %v2726
    %v2732 = vmul.f32 %v2710, %v2726
    %v2733 = vmul.f32 %v2715, %v2730
    %v2734 = vmul.f32 %v2720, %v2730
    %v2735 = vlaneseq
    %v2736 = vshrl.u32 %v2735, 7
    %v2737 = vsub.s32 4, %v2736
    %v2738 = vrot.slane %v122, %v2737
    %v2739 = vlaneseq
    %v2740 = vshrl.u32 %v2739, 7
    %v2741 = vsub.s32 4, %v2740
    %v2742 = vrot.slane %v123, %v2741
    %v2743 = vadd.f32 %v2731, %v2738
    %v2744 = vadd.f32 %v2732, %v2738
    %v2745 = vadd.f32 %v2733, %v2742
    %v2746 = vadd.f32 %v2734, %v2742
    %v2747 = vlaneseq
    %v2748 = vshrl.u32 %v2747, 7
    %v2749 = vsub.s32 3, %v2748
    %v2750 = vrot.slane %v122, %v2749
    %v2751 = vlaneseq
    %v2752 = vshrl.u32 %v2751, 7
    %v2753 = vsub.s32 3, %v2752
    %v2754 = vrot.slane %v123, %v2753
    %v2755 = vmul.f32 %v2750, %v2743
    %v2756 = vmul.f32 %v2750, %v2744
    %v2757 = vmul.f32 %v2754, %v2745
    %v2758 = vmul.f32 %v2754, %v2746
    %v2759 = vadd.f32 %v2705, %v2755
    %v2760 = vadd.f32 %v2710, %v2756
    %v2761 = vadd.f32 %v2715, %v2757
    %v2762 = vadd.f32 %v2720, %v2758
    %v2763 = vadd.f32 %v2210, %v2759
    %v2764 = vadd.f32 %v2211, %v2760
    %v2765 = vadd.f32 %v2212, %v2761
    %v2766 = vadd.f32 %v2213, %v2762
    %2767 = vst [vmem:[#allocation13] sm:$0xff] %v2763
    %2768 = vst [vmem:[#allocation13 + $0x8] sm:$0xff] %v2764
    %2769 = vst [vmem:[#allocation13 + $0x10] sm:$0xff] %v2765
    %2770 = vst [vmem:[#allocation13 + $0x18] sm:$0xff] %v2766
    // Predicated region
    $region66: #{tpu_custom_call.1} parent=1 // pred_check
      _
    $region67: #{tpu_custom_call.1} parent=1 // pred_check_branch
      %2772 = sbr.rel (0) target = $region69
    $region68: #{tpu_custom_call.1} parent=1 // pred_region
      %s2774 = ssub.s32 512, 512
      %2775 = vsyncadd [#allocation4], %s2774
      %s2776 = sshll.u32 [#allocation13], 4
      %s2777 = int_to_ptr.vmem [resolvable:$true] %s2776
      %2782 = dma.vmem_to_hbm [thread:$0]  %s2777, 512, %s10, [#allocation4], 128, 128, 8
    $region69: #{tpu_custom_call.1} parent=1 // pred_fallthru
      _
    // Predicated region
    $region70: #{tpu_custom_call.1} parent=1 // pred_check
      _
    $region71: #{tpu_custom_call.1} parent=1 // pred_check_branch
      %2784 = sbr.rel (0) target = $region73
    $region72: #{tpu_custom_call.1} parent=1 // pred_region
      %2785 = dma.done [#allocation4], 512
    $region73: #{tpu_custom_call.1} parent=1 // pred_fallthru
      _
    %2786 = vsyncpa [#allocation3], 1
    %2787 = vsyncpa [#allocation6], 1
    %2788 = vsyncpa [#allocation9], 1
    %2789 = vsyncpa [#allocation12], 1
    %2790 = vsyncpa [#allocation4], 1

</llo_original>
